<compile_context>
chip_gen: v6e
topology: v6e:2x2x1
jax: 0.10.0
libtpu: 0.0.40
codegen_flags: <defaults>
</compile_context>

<pallas_src>
import numpy as np
import jax
import jax.numpy as jnp
from jax.experimental import pallas as pl
from jax.experimental.pallas import tpu as pltpu

H = W = 16          # input spatial size
CIN = 3             # input channels
C1 = 8              # conv0 out / ConvBlock in
C2 = 16             # ConvBlock out
HO, WO = H // 2, W // 2
BN_EPS = 1e-5

LANES_IN = (WO + 2) * CIN     # 30  : haloed (col, ch) lanes of the input planes
LANES_MID = (WO + 2) * C1     # 80  : haloed (col, ch) lanes of the hidden planes


# --------------------------------- kernel -----------------------------------
def feature_extractor_kernel(x_ref, t0_ref, b0_ref, t1_ref, b1_ref,
                             t2_ref, b2_ref, t3_ref, b3_ref,
                             wsk_ref, bsk_ref, bn_s_ref, bn_t_ref,
                             o_ref, scr_ref):
    b = x_ref.shape[0]          # images per grid step
    bh = b * HO                 # matmul M dimension

    # Re-zero only the halo strips of the activation scratch.  The interior is
    # fully overwritten below each layer; doing this every step (instead of
    # under program_id==0) keeps it correct when the parallel grid axis is
    # split across TensorCores.  Cost: a handful of tiny stores.
    zrow = jnp.zeros((2, 2, b, LANES_MID), scr_ref.dtype)
    scr_ref[:, :, :, 0, :] = zrow
    scr_ref[:, :, :, HO + 1, :] = zrow
    zcol = jnp.zeros((2, 2, b, HO, C1), scr_ref.dtype)
    scr_ref[:, :, :, 1:HO + 1, 0:C1] = zcol
    scr_ref[:, :, :, 1:HO + 1, (WO + 1) * C1:(WO + 2) * C1] = zcol

    def slab_x(py, px, a):
        # haloed parity plane (py,px) of the input, rows a..a+HO-1 (plane coords)
        v = x_ref[:, py, px, a + 1:a + 1 + HO, :]          # (b, HO, 30)
        return v.reshape(bh, LANES_IN)

    def slab_s(py, px, a):
        v = scr_ref[py, px, :, a + 1:a + 1 + HO, :]        # (b, HO, 80)
        return v.reshape(bh, LANES_MID)

    def conv(load_slab, t_ref, bias_ref, relu):
        """3x3 stride-1 'same' conv on parity-class planes.

        Returns [Y_oy0, Y_oy1], each (b*HO, 2*WO*Cout) f32 with lane layout
        (ox, jp, cout): class (oy, ox) holds output pixels (2k+oy, 2jp+ox).
        """
        bias = bias_ref[...]                                # hoisted, once/layer
        cache = {}

        def slab(py, px, a):
            key = (py, px, a)
            if key not in cache:
                cache[key] = load_slab(py, px, a).astype(jnp.bfloat16)
            return cache[key]

        outs = []
        for oy in range(2):
            acc = None
            for dy in range(3):
                vy = oy + dy - 1
                py = vy % 2                 # input row-parity plane
                a = (vy - py) // 2          # plane-row offset in {-1, 0, 1}
                for px in range(2):         # input column-parity plane
                    part = jnp.dot(slab(py, px, a), t_ref[dy, px, :, :],
                                   preferred_element_type=jnp.float32)
                    acc = part if acc is None else acc + part
            acc = acc + bias
            if relu:
                acc = jnp.maximum(acc, 0.0)
            outs.append(acc)
        return outs

    def store(outs):
        # write the four parity classes back into the haloed scratch interior
        for oy in range(2):
            for ox in range(2):
                val = outs[oy][:, ox * WO * C1:(ox + 1) * WO * C1]
                scr_ref[oy, ox, :, 1:HO + 1, C1:(WO + 1) * C1] = (
                    val.reshape(b, HO, WO * C1).astype(scr_ref.dtype))

    # ---- Conv2d(3->8, k3 s1 p1) with eval-mode BatchNorm2d(8) folded in ----
    h0 = conv(slab_x, t0_ref, b0_ref, relu=False)

    # ---- skipconv: Conv2d(8->16, k=2, s=2) on the ConvBlock input ----------
    # one block-diagonal lane-dense matmul per parity class
    skip = bsk_ref[...]
    for oy in range(2):
        for ox in range(2):
            cls = h0[oy][:, ox * WO * C1:(ox + 1) * WO * C1]
            skip = skip + jnp.dot(cls.astype(jnp.bfloat16),
                                  wsk_ref[oy * 2 + ox, :, :],
                                  preferred_element_type=jnp.float32)

    # ---- ConvBlock main path -----------------------------------------------
    store(h0)
    h1 = conv(slab_s, t1_ref, b1_ref, relu=True)
    store(h1)
    h2 = conv(slab_s, t2_ref, b2_ref, relu=True)
    store(h2)
    h3 = conv(slab_s, t3_ref, b3_ref, relu=True)   # per oy: (b*HO, 2*WO*C2)

    # MaxPool2d(2,2) == elementwise max over the four spatial parity classes.
    cw = WO * C2
    pooled = jnp.maximum(jnp.maximum(h3[0][:, :cw], h3[0][:, cw:]),
                         jnp.maximum(h3[1][:, :cw], h3[1][:, cw:]))

    # ---- BatchNorm2d(16), eval mode (per-channel scale/shift) ---------------
    out = (pooled + skip) * bn_s_ref[...] + bn_t_ref[...]
    o_ref[...] = out.reshape(b, HO, WO * C2).astype(o_ref.dtype)


# ----------------------------- weight prepacking ----------------------------
def _toeplitz_weights(w_hwio):
    """(3,3,Cin,Cout) 'same' conv kernel -> banded weights (3, 2, (WO+2)*Cin,
    2*WO*Cout): for each (dy, input-column-parity px) a matrix that maps a
    haloed parity-plane row slab with (col, ch) lanes directly to both output
    column classes (lane layout (ox, jp, cout))."""
    _, _, cin, cout = w_hwio.shape
    sel = np.zeros((3, 2, WO + 2, 2, WO), np.float32)      # [dx, px, jc, ox, jp]
    for ox in range(2):
        for dx in range(3):
            vx = ox + dx - 1
            px = vx % 2
            e = (vx - px) // 2
            for jp in range(WO):
                sel[dx, px, jp + e + 1, ox, jp] = 1.0
    t = jnp.einsum('abio,bpjcq->apjicqo', w_hwio, jnp.asarray(sel))
    return t.reshape(3, 2, (WO + 2) * cin, 2 * WO * cout)


def _skip_blockdiag(wsk_hwio):
    """(2,2,C1,C2) stride-2 kernel -> (4, WO*C1, WO*C2) block-diagonal weights
    consumed per parity class of the ConvBlock input."""
    eye = jnp.eye(WO, dtype=wsk_hwio.dtype)
    t = jnp.einsum('jJ,abio->abjiJo', eye, wsk_hwio)
    return t.reshape(4, WO * C1, WO * C2)


# --------------------------------- wrapper ----------------------------------
def conv_feature_extractor_forward(x_nchw, params, block_b=8):
    """x_nchw: (N, 3, 16, 16) float32 -> (N, 16, 8, 8) float32 (NCHW).

    block_b = images per grid step.  ~2 MiB VMEM at block_b=8; raise to 32-64
    for large batches on v5e/v6e (128 MiB VMEM) and ~32 on v7x (64 MiB).
    """
    (w0, b0, g1, be1, m1, v1,
     w1, b1, w2, b2, w3, b3, wsk, bsk,
     g2, be2, m2, v2) = params

    n = x_nchw.shape[0]
    pad_n = (-n) % block_b
    np_total = n + pad_n

    x = jnp.transpose(x_nchw, (0, 2, 3, 1)).astype(jnp.float32)     # NHWC
    if pad_n:
        x = jnp.concatenate(
            [x, jnp.zeros((pad_n, H, W, CIN), jnp.float32)], axis=0)

    # Haloed spatial-parity planes with (col, channel) flattened into the lane
    # dim: plane[b, py, px, a, jc*CIN+ci] = x[b, 2(a-1)+py, 2(jc-1)+px, ci]
    # (zero outside the image -> realizes the p=1 'same' padding).  Pure layout
    # plumbing, done once in the wrapper.
    xp = jnp.pad(x, ((0, 0), (2, 2), (2, 2), (0, 0)))               # (Np,20,20,3)
    planes = jnp.stack(
        [jnp.stack([xp[:, py::2, px::2, :] for px in range(2)], axis=1)
         for py in range(2)], axis=1)                               # (Np,2,2,10,10,3)
    planes = planes.reshape(np_total, 2, 2, HO + 2, LANES_IN)

    # Fold eval-mode BatchNorm2d(8) into conv0 (linear -> exact).
    s1 = g1 / jnp.sqrt(v1 + BN_EPS)
    w0f = w0 * s1
    b0f = b0 * s1 + (be1 - m1 * s1)
    # Eval-mode BatchNorm2d(16) as per-channel scale/shift after pool+skip.
    s2 = g2 / jnp.sqrt(v2 + BN_EPS)
    t2 = be2 - m2 * s2

    weights = (
        _toeplitz_weights(w0f).astype(jnp.bfloat16),                  # (3,2,30,128)
        jnp.tile(b0f, 2 * WO).reshape(1, -1).astype(jnp.float32),     # (1,128)
        _toeplitz_weights(w1).astype(jnp.bfloat16),                   # (3,2,80,128)
        jnp.tile(b1, 2 * WO).reshape(1, -1).astype(jnp.float32),
        _toeplitz_weights(w2).astype(jnp.bfloat16),                   # (3,2,80,128)
        jnp.tile(b2, 2 * WO).reshape(1, -1).astype(jnp.float32),
        _toeplitz_weights(w3).astype(jnp.bfloat16),                   # (3,2,80,256)
        jnp.tile(b3, 2 * WO).reshape(1, -1).astype(jnp.float32),      # (1,256)
        _skip_blockdiag(wsk).astype(jnp.bfloat16),                    # (4,64,128)
        jnp.tile(bsk, WO).reshape(1, -1).astype(jnp.float32),         # (1,128)
        jnp.tile(s2, WO).reshape(1, -1).astype(jnp.float32),          # (1,128)
        jnp.tile(t2, WO).reshape(1, -1).astype(jnp.float32),          # (1,128)
    )

    def _resident(a):
        nd = a.ndim
        return pl.BlockSpec(a.shape, lambda i, _nd=nd: (0,) * _nd)

    out = pl.pallas_call(
        feature_extractor_kernel,
        out_shape=jax.ShapeDtypeStruct((np_total, HO, WO * C2), jnp.float32),
        grid=(np_total // block_b,),
        in_specs=[pl.BlockSpec((block_b, 2, 2, HO + 2, LANES_IN),
                               lambda i: (i, 0, 0, 0, 0))]
                 + [_resident(a) for a in weights],
        out_specs=pl.BlockSpec((block_b, HO, WO * C2), lambda i: (i, 0, 0)),
        scratch_shapes=[pltpu.VMEM((2, 2, block_b, HO + 2, LANES_MID),
                                   jnp.float32)],
        compiler_params=pltpu.CompilerParams(
            dimension_semantics=("parallel",),
            vmem_limit_bytes=32 * 1024 * 1024),
    )(planes, *weights)

    out = out.reshape(np_total, HO, WO, C2)[:n]
    return jnp.transpose(out, (0, 3, 1, 2))                 # NCHW (N, 16, 8, 8)


# ----------------------------- parameter init --------------------------------
def init_params(key):
    ks = jax.random.split(key, 18)

    def conv_init(key_w, key_b, kh, kw, cin, cout):
        lim = (cin * kh * kw) ** -0.5
        w = jax.random.uniform(key_w, (kh, kw, cin, cout), jnp.float32, -lim, lim)
        b = jax.random.uniform(key_b, (cout,), jnp.float32, -lim, lim)
        return w, b

    w0, b0 = conv_init(ks[0], ks[1], 3, 3, CIN, C1)
    w1, b1 = conv_init(ks[2], ks[3], 3, 3, C1, C1)
    w2, b2 = conv_init(ks[4], ks[5], 3, 3, C1, C1)
    w3, b3 = conv_init(ks[6], ks[7], 3, 3, C1, C2)
    wsk, bsk = conv_init(ks[8], ks[9], 2, 2, C1, C2)

    def bn_init(kg, kb, km, kv, ch):
        g = 1.0 + 0.1 * jax.random.normal(kg, (ch,), jnp.float32)
        b = 0.1 * jax.random.normal(kb, (ch,), jnp.float32)
        m = 0.1 * jax.random.normal(km, (ch,), jnp.float32)
        v = 1.0 + 0.2 * jax.random.uniform(kv, (ch,), jnp.float32)
        return g, b, m, v

    g1, be1, m1, v1 = bn_init(ks[10], ks[11], ks[12], ks[13], C1)
    g2, be2, m2, v2 = bn_init(ks[14], ks[15], ks[16], ks[17], C2)

    return (w0, b0, g1, be1, m1, v1,
            w1, b1, w2, b2, w3, b3, wsk, bsk,
            g2, be2, m2, v2)


# ----------------------------- pure-JAX reference ----------------------------
def _conv_ref(x, w, b, stride, pad):
    y = jax.lax.conv_general_dilated(
        x, w, window_strides=(stride, stride),
        padding=((pad, pad), (pad, pad)),
        dimension_numbers=('NCHW', 'HWIO', 'NCHW'),
        precision=jax.lax.Precision.HIGHEST)
    return y + b.reshape(1, -1, 1, 1)


def _bn_ref(x, g, b, m, v):
    s = g / jnp.sqrt(v + BN_EPS)
    return x * s.reshape(1, -1, 1, 1) + (b - m * s).reshape(1, -1, 1, 1)


def reference_forward(x, params):
    (w0, b0, g1, be1, m1, v1,
     w1, b1, w2, b2, w3, b3, wsk, bsk,
     g2, be2, m2, v2) = params
    h = _conv_ref(x, w0, b0, 1, 1)
    h = _bn_ref(h, g1, be1, m1, v1)
    x1 = h
    h = jax.nn.relu(_conv_ref(h, w1, b1, 1, 1))
    h = jax.nn.relu(_conv_ref(h, w2, b2, 1, 1))
    h = jax.nn.relu(_conv_ref(h, w3, b3, 1, 1))
    n, c, hh, ww = h.shape
    pooled = h.reshape(n, c, hh // 2, 2, ww // 2, 2).max(axis=(3, 5))
    h = pooled + _conv_ref(x1, wsk, bsk, 2, 0)
    return _bn_ref(h, g2, be2, m2, v2)


if __name__ == "__main__":
    key = jax.random.PRNGKey(0)
    kx, kp = jax.random.split(key)

    x = jax.random.normal(kx, (2, CIN, H, W), jnp.float32)   # NCHW (2, 3, 16, 16)
    params = init_params(kp)

    out = conv_feature_extractor_forward(x, params)
    out = jax.block_until_ready(out)

    ref = reference_forward(x, params)
    assert out.shape == (2, C2, HO, WO), out.shape
    err = float(jnp.max(jnp.abs(out - ref)) / (jnp.max(jnp.abs(ref)) + 1e-6))
    # bf16 MXU operands -> a slightly looser tolerance than pure-f32.
    assert err < 3e-2, f"mismatch vs reference: rel-max err {err}"
    print("KERNEL_OK")
</pallas_src>

<mosaic_0001>
module attributes {stable_mosaic.version = 11 : i64} {
  func.func @feature_extractor_kernel(%arg0: i32, %arg1: memref<8x2x2x10x30xf32, #tpu.memory_space<vmem>>, %arg2: memref<3x2x30x128xbf16, #tpu.memory_space<vmem>>, %arg3: memref<1x128xf32, #tpu.memory_space<vmem>>, %arg4: memref<3x2x80x128xbf16, #tpu.memory_space<vmem>>, %arg5: memref<1x128xf32, #tpu.memory_space<vmem>>, %arg6: memref<3x2x80x128xbf16, #tpu.memory_space<vmem>>, %arg7: memref<1x128xf32, #tpu.memory_space<vmem>>, %arg8: memref<3x2x80x256xbf16, #tpu.memory_space<vmem>>, %arg9: memref<1x256xf32, #tpu.memory_space<vmem>>, %arg10: memref<4x64x128xbf16, #tpu.memory_space<vmem>>, %arg11: memref<1x128xf32, #tpu.memory_space<vmem>>, %arg12: memref<1x128xf32, #tpu.memory_space<vmem>>, %arg13: memref<1x128xf32, #tpu.memory_space<vmem>>, %arg14: memref<8x8x128xf32, #tpu.memory_space<vmem>>, %arg15: memref<2x2x8x10x80xf32, #tpu.memory_space<vmem>>) attributes {dimension_semantics = [#tpu.dimension_semantics<parallel>], iteration_bounds = array<i64: 1>, scalar_prefetch = 0 : i64, scratch_operands = 1 : i64, tpu.core_type = #tpu.core_type<tc>, window_params = [{transform_indices = @transform_0, window_bounds = array<i64: 8, 2, 2, 10, 30>}, {pipeline_mode = #tpu.pipeline_mode<synchronous>, transform_indices = @transform_1, window_bounds = array<i64: 3, 2, 30, 128>}, {pipeline_mode = #tpu.pipeline_mode<synchronous>, transform_indices = @transform_2, window_bounds = array<i64: 1, 128>}, {pipeline_mode = #tpu.pipeline_mode<synchronous>, transform_indices = @transform_3, window_bounds = array<i64: 3, 2, 80, 128>}, {pipeline_mode = #tpu.pipeline_mode<synchronous>, transform_indices = @transform_4, window_bounds = array<i64: 1, 128>}, {pipeline_mode = #tpu.pipeline_mode<synchronous>, transform_indices = @transform_5, window_bounds = array<i64: 3, 2, 80, 128>}, {pipeline_mode = #tpu.pipeline_mode<synchronous>, transform_indices = @transform_6, window_bounds = array<i64: 1, 128>}, {pipeline_mode = #tpu.pipeline_mode<synchronous>, transform_indices = @transform_7, window_bounds = array<i64: 3, 2, 80, 256>}, {pipeline_mode = #tpu.pipeline_mode<synchronous>, transform_indices = @transform_8, window_bounds = array<i64: 1, 256>}, {pipeline_mode = #tpu.pipeline_mode<synchronous>, transform_indices = @transform_9, window_bounds = array<i64: 4, 64, 128>}, {pipeline_mode = #tpu.pipeline_mode<synchronous>, transform_indices = @transform_10, window_bounds = array<i64: 1, 128>}, {pipeline_mode = #tpu.pipeline_mode<synchronous>, transform_indices = @transform_11, window_bounds = array<i64: 1, 128>}, {pipeline_mode = #tpu.pipeline_mode<synchronous>, transform_indices = @transform_12, window_bounds = array<i64: 1, 128>}, {transform_indices = @transform_13, window_bounds = array<i64: 8, 8, 128>}]} {
    %cst = arith.constant 0.000000e+00 : f32
    %0 = vector.broadcast %cst : f32 to vector<2x2x8x80xf32>
    %c0 = arith.constant 0 : index
    %c0_0 = arith.constant 0 : index
    %c0_1 = arith.constant 0 : index
    %c0_2 = arith.constant 0 : index
    %c0_3 = arith.constant 0 : index
    %1 = vector.load %arg15[%c0, %c0_0, %c0_1, %c0_2, %c0_3] : memref<2x2x8x10x80xf32, #tpu.memory_space<vmem>>, vector<2x2x8x1x80xf32>
    %2 = vector.shape_cast %1 : vector<2x2x8x1x80xf32> to vector<2x2x8x80xf32>
    %3 = vector.shape_cast %0 : vector<2x2x8x80xf32> to vector<2x2x8x1x80xf32>
    tpu.vector_store %arg15[%c0, %c0_0, %c0_1, %c0_2, %c0_3], %3 {strides = array<i32>} : memref<2x2x8x10x80xf32, #tpu.memory_space<vmem>>, vector<2x2x8x1x80xf32>,
    %c0_4 = arith.constant 0 : index
    %c0_5 = arith.constant 0 : index
    %c0_6 = arith.constant 0 : index
    %c9 = arith.constant 9 : index
    %c0_7 = arith.constant 0 : index
    %4 = vector.load %arg15[%c0_4, %c0_5, %c0_6, %c9, %c0_7] : memref<2x2x8x10x80xf32, #tpu.memory_space<vmem>>, vector<2x2x8x1x80xf32>
    %5 = vector.shape_cast %4 : vector<2x2x8x1x80xf32> to vector<2x2x8x80xf32>
    %6 = vector.shape_cast %0 : vector<2x2x8x80xf32> to vector<2x2x8x1x80xf32>
    tpu.vector_store %arg15[%c0_4, %c0_5, %c0_6, %c9, %c0_7], %6 {strides = array<i32>} : memref<2x2x8x10x80xf32, #tpu.memory_space<vmem>>, vector<2x2x8x1x80xf32>,
    %cst_8 = arith.constant 0.000000e+00 : f32
    %7 = vector.broadcast %cst_8 : f32 to vector<2x2x8x8x8xf32>
    %c0_9 = arith.constant 0 : index
    %c0_10 = arith.constant 0 : index
    %c0_11 = arith.constant 0 : index
    %c1 = arith.constant 1 : index
    %c0_12 = arith.constant 0 : index
    %8 = vector.load %arg15[%c0_9, %c0_10, %c0_11, %c1, %c0_12] : memref<2x2x8x10x80xf32, #tpu.memory_space<vmem>>, vector<2x2x8x8x8xf32>
    tpu.vector_store %arg15[%c0_9, %c0_10, %c0_11, %c1, %c0_12], %7 {strides = array<i32>} : memref<2x2x8x10x80xf32, #tpu.memory_space<vmem>>, vector<2x2x8x8x8xf32>,
    %c0_13 = arith.constant 0 : index
    %c0_14 = arith.constant 0 : index
    %c0_15 = arith.constant 0 : index
    %c1_16 = arith.constant 1 : index
    %c72 = arith.constant 72 : index
    %9 = vector.load %arg15[%c0_13, %c0_14, %c0_15, %c1_16, %c72] : memref<2x2x8x10x80xf32, #tpu.memory_space<vmem>>, vector<2x2x8x8x8xf32>
    tpu.vector_store %arg15[%c0_13, %c0_14, %c0_15, %c1_16, %c72], %7 {strides = array<i32>} : memref<2x2x8x10x80xf32, #tpu.memory_space<vmem>>, vector<2x2x8x8x8xf32>,
    %c0_17 = arith.constant 0 : index
    %c0_18 = arith.constant 0 : index
    %10 = vector.load %arg3[%c0_17, %c0_18] : memref<1x128xf32, #tpu.memory_space<vmem>>, vector<1x128xf32>
    %c0_19 = arith.constant 0 : index
    %c1_20 = arith.constant 1 : index
    %c0_21 = arith.constant 0 : index
    %c0_22 = arith.constant 0 : index
    %c0_23 = arith.constant 0 : index
    %11 = vector.load %arg1[%c0_19, %c1_20, %c0_21, %c0_22, %c0_23] : memref<8x2x2x10x30xf32, #tpu.memory_space<vmem>>, vector<8x1x1x8x30xf32>
    %12 = vector.shape_cast %11 : vector<8x1x1x8x30xf32> to vector<8x8x30xf32>
    %13 = vector.shape_cast %12 : vector<8x8x30xf32> to vector<64x30xf32>
    %14 = arith.truncf %13 : vector<64x30xf32> to vector<64x30xbf16>
    %c0_24 = arith.constant 0 : index
    %c0_25 = arith.constant 0 : index
    %c0_26 = arith.constant 0 : index
    %c0_27 = arith.constant 0 : index
    %15 = vector.load %arg2[%c0_24, %c0_25, %c0_26, %c0_27] : memref<3x2x30x128xbf16, #tpu.memory_space<vmem>>, vector<1x1x30x128xbf16>
    %16 = vector.shape_cast %15 : vector<1x1x30x128xbf16> to vector<30x128xbf16>
    %cst_28 = arith.constant dense<0.000000e+00> : vector<64x128xf32>
    %17 = tpu.matmul %14, %16, %cst_28 {dimension_numbers = #tpu.dot_dimension_numbers<[1], [0], [0], [1], [0, 0, 1, 1], [], []>} : vector<64x30xbf16>, vector<30x128xbf16>, vector<64x128xf32> -> vector<64x128xf32>
    %c0_29 = arith.constant 0 : index
    %c1_30 = arith.constant 1 : index
    %c1_31 = arith.constant 1 : index
    %c0_32 = arith.constant 0 : index
    %c0_33 = arith.constant 0 : index
    %18 = vector.load %arg1[%c0_29, %c1_30, %c1_31, %c0_32, %c0_33] : memref<8x2x2x10x30xf32, #tpu.memory_space<vmem>>, vector<8x1x1x8x30xf32>
    %19 = vector.shape_cast %18 : vector<8x1x1x8x30xf32> to vector<8x8x30xf32>
    %20 = vector.shape_cast %19 : vector<8x8x30xf32> to vector<64x30xf32>
    %21 = arith.truncf %20 : vector<64x30xf32> to vector<64x30xbf16>
    %c0_34 = arith.constant 0 : index
    %c1_35 = arith.constant 1 : index
    %c0_36 = arith.constant 0 : index
    %c0_37 = arith.constant 0 : index
    %22 = vector.load %arg2[%c0_34, %c1_35, %c0_36, %c0_37] : memref<3x2x30x128xbf16, #tpu.memory_space<vmem>>, vector<1x1x30x128xbf16>
    %23 = vector.shape_cast %22 : vector<1x1x30x128xbf16> to vector<30x128xbf16>
    %cst_38 = arith.constant dense<0.000000e+00> : vector<64x128xf32>
    %24 = tpu.matmul %21, %23, %cst_38 {dimension_numbers = #tpu.dot_dimension_numbers<[1], [0], [0], [1], [0, 0, 1, 1], [], []>} : vector<64x30xbf16>, vector<30x128xbf16>, vector<64x128xf32> -> vector<64x128xf32>
    %25 = arith.addf %17, %24 : vector<64x128xf32>
    %c0_39 = arith.constant 0 : index
    %c0_40 = arith.constant 0 : index
    %c0_41 = arith.constant 0 : index
    %c1_42 = arith.constant 1 : index
    %c0_43 = arith.constant 0 : index
    %26 = vector.load %arg1[%c0_39, %c0_40, %c0_41, %c1_42, %c0_43] : memref<8x2x2x10x30xf32, #tpu.memory_space<vmem>>, vector<8x1x1x8x30xf32>
    %27 = vector.shape_cast %26 : vector<8x1x1x8x30xf32> to vector<8x8x30xf32>
    %28 = vector.shape_cast %27 : vector<8x8x30xf32> to vector<64x30xf32>
    %29 = arith.truncf %28 : vector<64x30xf32> to vector<64x30xbf16>
    %c1_44 = arith.constant 1 : index
    %c0_45 = arith.constant 0 : index
    %c0_46 = arith.constant 0 : index
    %c0_47 = arith.constant 0 : index
    %30 = vector.load %arg2[%c1_44, %c0_45, %c0_46, %c0_47] : memref<3x2x30x128xbf16, #tpu.memory_space<vmem>>, vector<1x1x30x128xbf16>
    %31 = vector.shape_cast %30 : vector<1x1x30x128xbf16> to vector<30x128xbf16>
    %cst_48 = arith.constant dense<0.000000e+00> : vector<64x128xf32>
    %32 = tpu.matmul %29, %31, %cst_48 {dimension_numbers = #tpu.dot_dimension_numbers<[1], [0], [0], [1], [0, 0, 1, 1], [], []>} : vector<64x30xbf16>, vector<30x128xbf16>, vector<64x128xf32> -> vector<64x128xf32>
    %33 = arith.addf %25, %32 : vector<64x128xf32>
    %c0_49 = arith.constant 0 : index
    %c0_50 = arith.constant 0 : index
    %c1_51 = arith.constant 1 : index
    %c1_52 = arith.constant 1 : index
    %c0_53 = arith.constant 0 : index
    %34 = vector.load %arg1[%c0_49, %c0_50, %c1_51, %c1_52, %c0_53] : memref<8x2x2x10x30xf32, #tpu.memory_space<vmem>>, vector<8x1x1x8x30xf32>
    %35 = vector.shape_cast %34 : vector<8x1x1x8x30xf32> to vector<8x8x30xf32>
    %36 = vector.shape_cast %35 : vector<8x8x30xf32> to vector<64x30xf32>
    %37 = arith.truncf %36 : vector<64x30xf32> to vector<64x30xbf16>
    %c1_54 = arith.constant 1 : index
    %c1_55 = arith.constant 1 : index
    %c0_56 = arith.constant 0 : index
    %c0_57 = arith.constant 0 : index
    %38 = vector.load %arg2[%c1_54, %c1_55, %c0_56, %c0_57] : memref<3x2x30x128xbf16, #tpu.memory_space<vmem>>, vector<1x1x30x128xbf16>
    %39 = vector.shape_cast %38 : vector<1x1x30x128xbf16> to vector<30x128xbf16>
    %cst_58 = arith.constant dense<0.000000e+00> : vector<64x128xf32>
    %40 = tpu.matmul %37, %39, %cst_58 {dimension_numbers = #tpu.dot_dimension_numbers<[1], [0], [0], [1], [0, 0, 1, 1], [], []>} : vector<64x30xbf16>, vector<30x128xbf16>, vector<64x128xf32> -> vector<64x128xf32>
    %41 = arith.addf %33, %40 : vector<64x128xf32>
    %c0_59 = arith.constant 0 : index
    %c1_60 = arith.constant 1 : index
    %c0_61 = arith.constant 0 : index
    %c1_62 = arith.constant 1 : index
    %c0_63 = arith.constant 0 : index
    %42 = vector.load %arg1[%c0_59, %c1_60, %c0_61, %c1_62, %c0_63] : memref<8x2x2x10x30xf32, #tpu.memory_space<vmem>>, vector<8x1x1x8x30xf32>
    %43 = vector.shape_cast %42 : vector<8x1x1x8x30xf32> to vector<8x8x30xf32>
    %44 = vector.shape_cast %43 : vector<8x8x30xf32> to vector<64x30xf32>
    %45 = arith.truncf %44 : vector<64x30xf32> to vector<64x30xbf16>
    %c2 = arith.constant 2 : index
    %c0_64 = arith.constant 0 : index
    %c0_65 = arith.constant 0 : index
    %c0_66 = arith.constant 0 : index
    %46 = vector.load %arg2[%c2, %c0_64, %c0_65, %c0_66] : memref<3x2x30x128xbf16, #tpu.memory_space<vmem>>, vector<1x1x30x128xbf16>
    %47 = vector.shape_cast %46 : vector<1x1x30x128xbf16> to vector<30x128xbf16>
    %cst_67 = arith.constant dense<0.000000e+00> : vector<64x128xf32>
    %48 = tpu.matmul %45, %47, %cst_67 {dimension_numbers = #tpu.dot_dimension_numbers<[1], [0], [0], [1], [0, 0, 1, 1], [], []>} : vector<64x30xbf16>, vector<30x128xbf16>, vector<64x128xf32> -> vector<64x128xf32>
    %49 = arith.addf %41, %48 : vector<64x128xf32>
    %c0_68 = arith.constant 0 : index
    %c1_69 = arith.constant 1 : index
    %c1_70 = arith.constant 1 : index
    %c1_71 = arith.constant 1 : index
    %c0_72 = arith.constant 0 : index
    %50 = vector.load %arg1[%c0_68, %c1_69, %c1_70, %c1_71, %c0_72] : memref<8x2x2x10x30xf32, #tpu.memory_space<vmem>>, vector<8x1x1x8x30xf32>
    %51 = vector.shape_cast %50 : vector<8x1x1x8x30xf32> to vector<8x8x30xf32>
    %52 = vector.shape_cast %51 : vector<8x8x30xf32> to vector<64x30xf32>
    %53 = arith.truncf %52 : vector<64x30xf32> to vector<64x30xbf16>
    %c2_73 = arith.constant 2 : index
    %c1_74 = arith.constant 1 : index
    %c0_75 = arith.constant 0 : index
    %c0_76 = arith.constant 0 : index
    %54 = vector.load %arg2[%c2_73, %c1_74, %c0_75, %c0_76] : memref<3x2x30x128xbf16, #tpu.memory_space<vmem>>, vector<1x1x30x128xbf16>
    %55 = vector.shape_cast %54 : vector<1x1x30x128xbf16> to vector<30x128xbf16>
    %cst_77 = arith.constant dense<0.000000e+00> : vector<64x128xf32>
    %56 = tpu.matmul %53, %55, %cst_77 {dimension_numbers = #tpu.dot_dimension_numbers<[1], [0], [0], [1], [0, 0, 1, 1], [], []>} : vector<64x30xbf16>, vector<30x128xbf16>, vector<64x128xf32> -> vector<64x128xf32>
    %57 = arith.addf %49, %56 : vector<64x128xf32>
    %58 = vector.broadcast %10 : vector<1x128xf32> to vector<64x128xf32>
    %59 = arith.addf %57, %58 : vector<64x128xf32>
    %c0_78 = arith.constant 0 : index
    %c0_79 = arith.constant 0 : index
    %c0_80 = arith.constant 0 : index
    %c0_81 = arith.constant 0 : index
    %60 = vector.load %arg2[%c0_78, %c0_79, %c0_80, %c0_81] : memref<3x2x30x128xbf16, #tpu.memory_space<vmem>>, vector<1x1x30x128xbf16>
    %61 = vector.shape_cast %60 : vector<1x1x30x128xbf16> to vector<30x128xbf16>
    %cst_82 = arith.constant dense<0.000000e+00> : vector<64x128xf32>
    %62 = tpu.matmul %29, %61, %cst_82 {dimension_numbers = #tpu.dot_dimension_numbers<[1], [0], [0], [1], [0, 0, 1, 1], [], []>} : vector<64x30xbf16>, vector<30x128xbf16>, vector<64x128xf32> -> vector<64x128xf32>
    %c0_83 = arith.constant 0 : index
    %c1_84 = arith.constant 1 : index
    %c0_85 = arith.constant 0 : index
    %c0_86 = arith.constant 0 : index
    %63 = vector.load %arg2[%c0_83, %c1_84, %c0_85, %c0_86] : memref<3x2x30x128xbf16, #tpu.memory_space<vmem>>, vector<1x1x30x128xbf16>
    %64 = vector.shape_cast %63 : vector<1x1x30x128xbf16> to vector<30x128xbf16>
    %cst_87 = arith.constant dense<0.000000e+00> : vector<64x128xf32>
    %65 = tpu.matmul %37, %64, %cst_87 {dimension_numbers = #tpu.dot_dimension_numbers<[1], [0], [0], [1], [0, 0, 1, 1], [], []>} : vector<64x30xbf16>, vector<30x128xbf16>, vector<64x128xf32> -> vector<64x128xf32>
    %66 = arith.addf %62, %65 : vector<64x128xf32>
    %c1_88 = arith.constant 1 : index
    %c0_89 = arith.constant 0 : index
    %c0_90 = arith.constant 0 : index
    %c0_91 = arith.constant 0 : index
    %67 = vector.load %arg2[%c1_88, %c0_89, %c0_90, %c0_91] : memref<3x2x30x128xbf16, #tpu.memory_space<vmem>>, vector<1x1x30x128xbf16>
    %68 = vector.shape_cast %67 : vector<1x1x30x128xbf16> to vector<30x128xbf16>
    %cst_92 = arith.constant dense<0.000000e+00> : vector<64x128xf32>
    %69 = tpu.matmul %45, %68, %cst_92 {dimension_numbers = #tpu.dot_dimension_numbers<[1], [0], [0], [1], [0, 0, 1, 1], [], []>} : vector<64x30xbf16>, vector<30x128xbf16>, vector<64x128xf32> -> vector<64x128xf32>
    %70 = arith.addf %66, %69 : vector<64x128xf32>
    %c1_93 = arith.constant 1 : index
    %c1_94 = arith.constant 1 : index
    %c0_95 = arith.constant 0 : index
    %c0_96 = arith.constant 0 : index
    %71 = vector.load %arg2[%c1_93, %c1_94, %c0_95, %c0_96] : memref<3x2x30x128xbf16, #tpu.memory_space<vmem>>, vector<1x1x30x128xbf16>
    %72 = vector.shape_cast %71 : vector<1x1x30x128xbf16> to vector<30x128xbf16>
    %cst_97 = arith.constant dense<0.000000e+00> : vector<64x128xf32>
    %73 = tpu.matmul %53, %72, %cst_97 {dimension_numbers = #tpu.dot_dimension_numbers<[1], [0], [0], [1], [0, 0, 1, 1], [], []>} : vector<64x30xbf16>, vector<30x128xbf16>, vector<64x128xf32> -> vector<64x128xf32>
    %74 = arith.addf %70, %73 : vector<64x128xf32>
    %c0_98 = arith.constant 0 : index
    %c0_99 = arith.constant 0 : index
    %c0_100 = arith.constant 0 : index
    %c2_101 = arith.constant 2 : index
    %c0_102 = arith.constant 0 : index
    %75 = vector.load %arg1[%c0_98, %c0_99, %c0_100, %c2_101, %c0_102] : memref<8x2x2x10x30xf32, #tpu.memory_space<vmem>>, vector<8x1x1x8x30xf32>
    %76 = vector.shape_cast %75 : vector<8x1x1x8x30xf32> to vector<8x8x30xf32>
    %77 = vector.shape_cast %76 : vector<8x8x30xf32> to vector<64x30xf32>
    %78 = arith.truncf %77 : vector<64x30xf32> to vector<64x30xbf16>
    %c2_103 = arith.constant 2 : index
    %c0_104 = arith.constant 0 : index
    %c0_105 = arith.constant 0 : index
    %c0_106 = arith.constant 0 : index
    %79 = vector.load %arg2[%c2_103, %c0_104, %c0_105, %c0_106] : memref<3x2x30x128xbf16, #tpu.memory_space<vmem>>, vector<1x1x30x128xbf16>
    %80 = vector.shape_cast %79 : vector<1x1x30x128xbf16> to vector<30x128xbf16>
    %cst_107 = arith.constant dense<0.000000e+00> : vector<64x128xf32>
    %81 = tpu.matmul %78, %80, %cst_107 {dimension_numbers = #tpu.dot_dimension_numbers<[1], [0], [0], [1], [0, 0, 1, 1], [], []>} : vector<64x30xbf16>, vector<30x128xbf16>, vector<64x128xf32> -> vector<64x128xf32>
    %82 = arith.addf %74, %81 : vector<64x128xf32>
    %c0_108 = arith.constant 0 : index
    %c0_109 = arith.constant 0 : index
    %c1_110 = arith.constant 1 : index
    %c2_111 = arith.constant 2 : index
    %c0_112 = arith.constant 0 : index
    %83 = vector.load %arg1[%c0_108, %c0_109, %c1_110, %c2_111, %c0_112] : memref<8x2x2x10x30xf32, #tpu.memory_space<vmem>>, vector<8x1x1x8x30xf32>
    %84 = vector.shape_cast %83 : vector<8x1x1x8x30xf32> to vector<8x8x30xf32>
    %85 = vector.shape_cast %84 : vector<8x8x30xf32> to vector<64x30xf32>
    %86 = arith.truncf %85 : vector<64x30xf32> to vector<64x30xbf16>
    %c2_113 = arith.constant 2 : index
    %c1_114 = arith.constant 1 : index
    %c0_115 = arith.constant 0 : index
    %c0_116 = arith.constant 0 : index
    %87 = vector.load %arg2[%c2_113, %c1_114, %c0_115, %c0_116] : memref<3x2x30x128xbf16, #tpu.memory_space<vmem>>, vector<1x1x30x128xbf16>
    %88 = vector.shape_cast %87 : vector<1x1x30x128xbf16> to vector<30x128xbf16>
    %cst_117 = arith.constant dense<0.000000e+00> : vector<64x128xf32>
    %89 = tpu.matmul %86, %88, %cst_117 {dimension_numbers = #tpu.dot_dimension_numbers<[1], [0], [0], [1], [0, 0, 1, 1], [], []>} : vector<64x30xbf16>, vector<30x128xbf16>, vector<64x128xf32> -> vector<64x128xf32>
    %90 = arith.addf %82, %89 : vector<64x128xf32>
    %91 = vector.broadcast %10 : vector<1x128xf32> to vector<64x128xf32>
    %92 = arith.addf %90, %91 : vector<64x128xf32>
    %c0_118 = arith.constant 0 : index
    %c0_119 = arith.constant 0 : index
    %93 = vector.load %arg11[%c0_118, %c0_119] : memref<1x128xf32, #tpu.memory_space<vmem>>, vector<1x128xf32>
    %94 = vector.extract_strided_slice %59 {offsets = [0, 0], sizes = [64, 64], strides = [1, 1]} : vector<64x128xf32> to vector<64x64xf32>
    %95 = arith.truncf %94 : vector<64x64xf32> to vector<64x64xbf16>
    %c0_120 = arith.constant 0 : index
    %c0_121 = arith.constant 0 : index
    %c0_122 = arith.constant 0 : index
    %96 = vector.load %arg10[%c0_120, %c0_121, %c0_122] : memref<4x64x128xbf16, #tpu.memory_space<vmem>>, vector<1x64x128xbf16>
    %97 = vector.shape_cast %96 : vector<1x64x128xbf16> to vector<64x128xbf16>
    %cst_123 = arith.constant dense<0.000000e+00> : vector<64x128xf32>
    %98 = tpu.matmul %95, %97, %cst_123 {dimension_numbers = #tpu.dot_dimension_numbers<[1], [0], [0], [1], [0, 0, 1, 1], [], []>} : vector<64x64xbf16>, vector<64x128xbf16>, vector<64x128xf32> -> vector<64x128xf32>
    %99 = vector.broadcast %93 : vector<1x128xf32> to vector<64x128xf32>
    %100 = arith.addf %99, %98 : vector<64x128xf32>
    %101 = vector.extract_strided_slice %59 {offsets = [0, 64], sizes = [64, 64], strides = [1, 1]} : vector<64x128xf32> to vector<64x64xf32>
    %102 = arith.truncf %101 : vector<64x64xf32> to vector<64x64xbf16>
    %c1_124 = arith.constant 1 : index
    %c0_125 = arith.constant 0 : index
    %c0_126 = arith.constant 0 : index
    %103 = vector.load %arg10[%c1_124, %c0_125, %c0_126] : memref<4x64x128xbf16, #tpu.memory_space<vmem>>, vector<1x64x128xbf16>
    %104 = vector.shape_cast %103 : vector<1x64x128xbf16> to vector<64x128xbf16>
    %cst_127 = arith.constant dense<0.000000e+00> : vector<64x128xf32>
    %105 = tpu.matmul %102, %104, %cst_127 {dimension_numbers = #tpu.dot_dimension_numbers<[1], [0], [0], [1], [0, 0, 1, 1], [], []>} : vector<64x64xbf16>, vector<64x128xbf16>, vector<64x128xf32> -> vector<64x128xf32>
    %106 = arith.addf %100, %105 : vector<64x128xf32>
    %107 = vector.extract_strided_slice %92 {offsets = [0, 0], sizes = [64, 64], strides = [1, 1]} : vector<64x128xf32> to vector<64x64xf32>
    %108 = arith.truncf %107 : vector<64x64xf32> to vector<64x64xbf16>
    %c2_128 = arith.constant 2 : index
    %c0_129 = arith.constant 0 : index
    %c0_130 = arith.constant 0 : index
    %109 = vector.load %arg10[%c2_128, %c0_129, %c0_130] : memref<4x64x128xbf16, #tpu.memory_space<vmem>>, vector<1x64x128xbf16>
    %110 = vector.shape_cast %109 : vector<1x64x128xbf16> to vector<64x128xbf16>
    %cst_131 = arith.constant dense<0.000000e+00> : vector<64x128xf32>
    %111 = tpu.matmul %108, %110, %cst_131 {dimension_numbers = #tpu.dot_dimension_numbers<[1], [0], [0], [1], [0, 0, 1, 1], [], []>} : vector<64x64xbf16>, vector<64x128xbf16>, vector<64x128xf32> -> vector<64x128xf32>
    %112 = arith.addf %106, %111 : vector<64x128xf32>
    %113 = vector.extract_strided_slice %92 {offsets = [0, 64], sizes = [64, 64], strides = [1, 1]} : vector<64x128xf32> to vector<64x64xf32>
    %114 = arith.truncf %113 : vector<64x64xf32> to vector<64x64xbf16>
    %c3 = arith.constant 3 : index
    %c0_132 = arith.constant 0 : index
    %c0_133 = arith.constant 0 : index
    %115 = vector.load %arg10[%c3, %c0_132, %c0_133] : memref<4x64x128xbf16, #tpu.memory_space<vmem>>, vector<1x64x128xbf16>
    %116 = vector.shape_cast %115 : vector<1x64x128xbf16> to vector<64x128xbf16>
    %cst_134 = arith.constant dense<0.000000e+00> : vector<64x128xf32>
    %117 = tpu.matmul %114, %116, %cst_134 {dimension_numbers = #tpu.dot_dimension_numbers<[1], [0], [0], [1], [0, 0, 1, 1], [], []>} : vector<64x64xbf16>, vector<64x128xbf16>, vector<64x128xf32> -> vector<64x128xf32>
    %118 = arith.addf %112, %117 : vector<64x128xf32>
    %119 = vector.extract_strided_slice %59 {offsets = [0, 0], sizes = [64, 64], strides = [1, 1]} : vector<64x128xf32> to vector<64x64xf32>
    %120 = vector.shape_cast %119 : vector<64x64xf32> to vector<8x8x64xf32>
    %c0_135 = arith.constant 0 : index
    %c0_136 = arith.constant 0 : index
    %c0_137 = arith.constant 0 : index
    %c1_138 = arith.constant 1 : index
    %c8 = arith.constant 8 : index
    %121 = vector.load %arg15[%c0_135, %c0_136, %c0_137, %c1_138, %c8] : memref<2x2x8x10x80xf32, #tpu.memory_space<vmem>>, vector<1x1x8x8x64xf32>
    %122 = vector.shape_cast %121 : vector<1x1x8x8x64xf32> to vector<8x8x64xf32>
    %123 = vector.shape_cast %120 : vector<8x8x64xf32> to vector<1x1x8x8x64xf32>
    tpu.vector_store %arg15[%c0_135, %c0_136, %c0_137, %c1_138, %c8], %123 {strides = array<i32>} : memref<2x2x8x10x80xf32, #tpu.memory_space<vmem>>, vector<1x1x8x8x64xf32>,
    %124 = vector.extract_strided_slice %59 {offsets = [0, 64], sizes = [64, 64], strides = [1, 1]} : vector<64x128xf32> to vector<64x64xf32>
    %125 = vector.shape_cast %124 : vector<64x64xf32> to vector<8x8x64xf32>
    %c0_139 = arith.constant 0 : index
    %c1_140 = arith.constant 1 : index
    %c0_141 = arith.constant 0 : index
    %c1_142 = arith.constant 1 : index
    %c8_143 = arith.constant 8 : index
    %126 = vector.load %arg15[%c0_139, %c1_140, %c0_141, %c1_142, %c8_143] : memref<2x2x8x10x80xf32, #tpu.memory_space<vmem>>, vector<1x1x8x8x64xf32>
    %127 = vector.shape_cast %126 : vector<1x1x8x8x64xf32> to vector<8x8x64xf32>
    %128 = vector.shape_cast %125 : vector<8x8x64xf32> to vector<1x1x8x8x64xf32>
    tpu.vector_store %arg15[%c0_139, %c1_140, %c0_141, %c1_142, %c8_143], %128 {strides = array<i32>} : memref<2x2x8x10x80xf32, #tpu.memory_space<vmem>>, vector<1x1x8x8x64xf32>,
    %129 = vector.extract_strided_slice %92 {offsets = [0, 0], sizes = [64, 64], strides = [1, 1]} : vector<64x128xf32> to vector<64x64xf32>
    %130 = vector.shape_cast %129 : vector<64x64xf32> to vector<8x8x64xf32>
    %c1_144 = arith.constant 1 : index
    %c0_145 = arith.constant 0 : index
    %c0_146 = arith.constant 0 : index
    %c1_147 = arith.constant 1 : index
    %c8_148 = arith.constant 8 : index
    %131 = vector.load %arg15[%c1_144, %c0_145, %c0_146, %c1_147, %c8_148] : memref<2x2x8x10x80xf32, #tpu.memory_space<vmem>>, vector<1x1x8x8x64xf32>
    %132 = vector.shape_cast %131 : vector<1x1x8x8x64xf32> to vector<8x8x64xf32>
    %133 = vector.shape_cast %130 : vector<8x8x64xf32> to vector<1x1x8x8x64xf32>
    tpu.vector_store %arg15[%c1_144, %c0_145, %c0_146, %c1_147, %c8_148], %133 {strides = array<i32>} : memref<2x2x8x10x80xf32, #tpu.memory_space<vmem>>, vector<1x1x8x8x64xf32>,
    %134 = vector.extract_strided_slice %92 {offsets = [0, 64], sizes = [64, 64], strides = [1, 1]} : vector<64x128xf32> to vector<64x64xf32>
    %135 = vector.shape_cast %134 : vector<64x64xf32> to vector<8x8x64xf32>
    %c1_149 = arith.constant 1 : index
    %c1_150 = arith.constant 1 : index
    %c0_151 = arith.constant 0 : index
    %c1_152 = arith.constant 1 : index
    %c8_153 = arith.constant 8 : index
    %136 = vector.load %arg15[%c1_149, %c1_150, %c0_151, %c1_152, %c8_153] : memref<2x2x8x10x80xf32, #tpu.memory_space<vmem>>, vector<1x1x8x8x64xf32>
    %137 = vector.shape_cast %136 : vector<1x1x8x8x64xf32> to vector<8x8x64xf32>
    %138 = vector.shape_cast %135 : vector<8x8x64xf32> to vector<1x1x8x8x64xf32>
    tpu.vector_store %arg15[%c1_149, %c1_150, %c0_151, %c1_152, %c8_153], %138 {strides = array<i32>} : memref<2x2x8x10x80xf32, #tpu.memory_space<vmem>>, vector<1x1x8x8x64xf32>,
    %c0_154 = arith.constant 0 : index
    %c0_155 = arith.constant 0 : index
    %139 = vector.load %arg5[%c0_154, %c0_155] : memref<1x128xf32, #tpu.memory_space<vmem>>, vector<1x128xf32>
    %c1_156 = arith.constant 1 : index
    %c0_157 = arith.constant 0 : index
    %c0_158 = arith.constant 0 : index
    %c0_159 = arith.constant 0 : index
    %c0_160 = arith.constant 0 : index
    %140 = vector.load %arg15[%c1_156, %c0_157, %c0_158, %c0_159, %c0_160] : memref<2x2x8x10x80xf32, #tpu.memory_space<vmem>>, vector<1x1x8x8x80xf32>
    %141 = vector.shape_cast %140 : vector<1x1x8x8x80xf32> to vector<8x8x80xf32>
    %142 = vector.shape_cast %141 : vector<8x8x80xf32> to vector<64x80xf32>
    %143 = arith.truncf %142 : vector<64x80xf32> to vector<64x80xbf16>
    %c0_161 = arith.constant 0 : index
    %c0_162 = arith.constant 0 : index
    %c0_163 = arith.constant 0 : index
    %c0_164 = arith.constant 0 : index
    %144 = vector.load %arg4[%c0_161, %c0_162, %c0_163, %c0_164] : memref<3x2x80x128xbf16, #tpu.memory_space<vmem>>, vector<1x1x80x128xbf16>
    %145 = vector.shape_cast %144 : vector<1x1x80x128xbf16> to vector<80x128xbf16>
    %cst_165 = arith.constant dense<0.000000e+00> : vector<64x128xf32>
    %146 = tpu.matmul %143, %145, %cst_165 {dimension_numbers = #tpu.dot_dimension_numbers<[1], [0], [0], [1], [0, 0, 1, 1], [], []>} : vector<64x80xbf16>, vector<80x128xbf16>, vector<64x128xf32> -> vector<64x128xf32>
    %c1_166 = arith.constant 1 : index
    %c1_167 = arith.constant 1 : index
    %c0_168 = arith.constant 0 : index
    %c0_169 = arith.constant 0 : index
    %c0_170 = arith.constant 0 : index
    %147 = vector.load %arg15[%c1_166, %c1_167, %c0_168, %c0_169, %c0_170] : memref<2x2x8x10x80xf32, #tpu.memory_space<vmem>>, vector<1x1x8x8x80xf32>
    %148 = vector.shape_cast %147 : vector<1x1x8x8x80xf32> to vector<8x8x80xf32>
    %149 = vector.shape_cast %148 : vector<8x8x80xf32> to vector<64x80xf32>
    %150 = arith.truncf %149 : vector<64x80xf32> to vector<64x80xbf16>
    %c0_171 = arith.constant 0 : index
    %c1_172 = arith.constant 1 : index
    %c0_173 = arith.constant 0 : index
    %c0_174 = arith.constant 0 : index
    %151 = vector.load %arg4[%c0_171, %c1_172, %c0_173, %c0_174] : memref<3x2x80x128xbf16, #tpu.memory_space<vmem>>, vector<1x1x80x128xbf16>
    %152 = vector.shape_cast %151 : vector<1x1x80x128xbf16> to vector<80x128xbf16>
    %cst_175 = arith.constant dense<0.000000e+00> : vector<64x128xf32>
    %153 = tpu.matmul %150, %152, %cst_175 {dimension_numbers = #tpu.dot_dimension_numbers<[1], [0], [0], [1], [0, 0, 1, 1], [], []>} : vector<64x80xbf16>, vector<80x128xbf16>, vector<64x128xf32> -> vector<64x128xf32>
    %154 = arith.addf %146, %153 : vector<64x128xf32>
    %c0_176 = arith.constant 0 : index
    %c0_177 = arith.constant 0 : index
    %c0_178 = arith.constant 0 : index
    %c1_179 = arith.constant 1 : index
    %c0_180 = arith.constant 0 : index
    %155 = vector.load %arg15[%c0_176, %c0_177, %c0_178, %c1_179, %c0_180] : memref<2x2x8x10x80xf32, #tpu.memory_space<vmem>>, vector<1x1x8x8x80xf32>
    %156 = vector.shape_cast %155 : vector<1x1x8x8x80xf32> to vector<8x8x80xf32>
    %157 = vector.shape_cast %156 : vector<8x8x80xf32> to vector<64x80xf32>
    %158 = arith.truncf %157 : vector<64x80xf32> to vector<64x80xbf16>
    %c1_181 = arith.constant 1 : index
    %c0_182 = arith.constant 0 : index
    %c0_183 = arith.constant 0 : index
    %c0_184 = arith.constant 0 : index
    %159 = vector.load %arg4[%c1_181, %c0_182, %c0_183, %c0_184] : memref<3x2x80x128xbf16, #tpu.memory_space<vmem>>, vector<1x1x80x128xbf16>
    %160 = vector.shape_cast %159 : vector<1x1x80x128xbf16> to vector<80x128xbf16>
    %cst_185 = arith.constant dense<0.000000e+00> : vector<64x128xf32>
    %161 = tpu.matmul %158, %160, %cst_185 {dimension_numbers = #tpu.dot_dimension_numbers<[1], [0], [0], [1], [0, 0, 1, 1], [], []>} : vector<64x80xbf16>, vector<80x128xbf16>, vector<64x128xf32> -> vector<64x128xf32>
    %162 = arith.addf %154, %161 : vector<64x128xf32>
    %c0_186 = arith.constant 0 : index
    %c1_187 = arith.constant 1 : index
    %c0_188 = arith.constant 0 : index
    %c1_189 = arith.constant 1 : index
    %c0_190 = arith.constant 0 : index
    %163 = vector.load %arg15[%c0_186, %c1_187, %c0_188, %c1_189, %c0_190] : memref<2x2x8x10x80xf32, #tpu.memory_space<vmem>>, vector<1x1x8x8x80xf32>
    %164 = vector.shape_cast %163 : vector<1x1x8x8x80xf32> to vector<8x8x80xf32>
    %165 = vector.shape_cast %164 : vector<8x8x80xf32> to vector<64x80xf32>
    %166 = arith.truncf %165 : vector<64x80xf32> to vector<64x80xbf16>
    %c1_191 = arith.constant 1 : index
    %c1_192 = arith.constant 1 : index
    %c0_193 = arith.constant 0 : index
    %c0_194 = arith.constant 0 : index
    %167 = vector.load %arg4[%c1_191, %c1_192, %c0_193, %c0_194] : memref<3x2x80x128xbf16, #tpu.memory_space<vmem>>, vector<1x1x80x128xbf16>
    %168 = vector.shape_cast %167 : vector<1x1x80x128xbf16> to vector<80x128xbf16>
    %cst_195 = arith.constant dense<0.000000e+00> : vector<64x128xf32>
    %169 = tpu.matmul %166, %168, %cst_195 {dimension_numbers = #tpu.dot_dimension_numbers<[1], [0], [0], [1], [0, 0, 1, 1], [], []>} : vector<64x80xbf16>, vector<80x128xbf16>, vector<64x128xf32> -> vector<64x128xf32>
    %170 = arith.addf %162, %169 : vector<64x128xf32>
    %c1_196 = arith.constant 1 : index
    %c0_197 = arith.constant 0 : index
    %c0_198 = arith.constant 0 : index
    %c1_199 = arith.constant 1 : index
    %c0_200 = arith.constant 0 : index
    %171 = vector.load %arg15[%c1_196, %c0_197, %c0_198, %c1_199, %c0_200] : memref<2x2x8x10x80xf32, #tpu.memory_space<vmem>>, vector<1x1x8x8x80xf32>
    %172 = vector.shape_cast %171 : vector<1x1x8x8x80xf32> to vector<8x8x80xf32>
    %173 = vector.shape_cast %172 : vector<8x8x80xf32> to vector<64x80xf32>
    %174 = arith.truncf %173 : vector<64x80xf32> to vector<64x80xbf16>
    %c2_201 = arith.constant 2 : index
    %c0_202 = arith.constant 0 : index
    %c0_203 = arith.constant 0 : index
    %c0_204 = arith.constant 0 : index
    %175 = vector.load %arg4[%c2_201, %c0_202, %c0_203, %c0_204] : memref<3x2x80x128xbf16, #tpu.memory_space<vmem>>, vector<1x1x80x128xbf16>
    %176 = vector.shape_cast %175 : vector<1x1x80x128xbf16> to vector<80x128xbf16>
    %cst_205 = arith.constant dense<0.000000e+00> : vector<64x128xf32>
    %177 = tpu.matmul %174, %176, %cst_205 {dimension_numbers = #tpu.dot_dimension_numbers<[1], [0], [0], [1], [0, 0, 1, 1], [], []>} : vector<64x80xbf16>, vector<80x128xbf16>, vector<64x128xf32> -> vector<64x128xf32>
    %178 = arith.addf %170, %177 : vector<64x128xf32>
    %c1_206 = arith.constant 1 : index
    %c1_207 = arith.constant 1 : index
    %c0_208 = arith.constant 0 : index
    %c1_209 = arith.constant 1 : index
    %c0_210 = arith.constant 0 : index
    %179 = vector.load %arg15[%c1_206, %c1_207, %c0_208, %c1_209, %c0_210] : memref<2x2x8x10x80xf32, #tpu.memory_space<vmem>>, vector<1x1x8x8x80xf32>
    %180 = vector.shape_cast %179 : vector<1x1x8x8x80xf32> to vector<8x8x80xf32>
    %181 = vector.shape_cast %180 : vector<8x8x80xf32> to vector<64x80xf32>
    %182 = arith.truncf %181 : vector<64x80xf32> to vector<64x80xbf16>
    %c2_211 = arith.constant 2 : index
    %c1_212 = arith.constant 1 : index
    %c0_213 = arith.constant 0 : index
    %c0_214 = arith.constant 0 : index
    %183 = vector.load %arg4[%c2_211, %c1_212, %c0_213, %c0_214] : memref<3x2x80x128xbf16, #tpu.memory_space<vmem>>, vector<1x1x80x128xbf16>
    %184 = vector.shape_cast %183 : vector<1x1x80x128xbf16> to vector<80x128xbf16>
    %cst_215 = arith.constant dense<0.000000e+00> : vector<64x128xf32>
    %185 = tpu.matmul %182, %184, %cst_215 {dimension_numbers = #tpu.dot_dimension_numbers<[1], [0], [0], [1], [0, 0, 1, 1], [], []>} : vector<64x80xbf16>, vector<80x128xbf16>, vector<64x128xf32> -> vector<64x128xf32>
    %186 = arith.addf %178, %185 : vector<64x128xf32>
    %187 = vector.broadcast %139 : vector<1x128xf32> to vector<64x128xf32>
    %188 = arith.addf %186, %187 : vector<64x128xf32>
    %cst_216 = arith.constant 0.000000e+00 : f32
    %189 = vector.broadcast %cst_216 : f32 to vector<64x128xf32>
    %190 = arith.maximumf %188, %189 : vector<64x128xf32>
    %c0_217 = arith.constant 0 : index
    %c0_218 = arith.constant 0 : index
    %c0_219 = arith.constant 0 : index
    %c0_220 = arith.constant 0 : index
    %191 = vector.load %arg4[%c0_217, %c0_218, %c0_219, %c0_220] : memref<3x2x80x128xbf16, #tpu.memory_space<vmem>>, vector<1x1x80x128xbf16>
    %192 = vector.shape_cast %191 : vector<1x1x80x128xbf16> to vector<80x128xbf16>
    %cst_221 = arith.constant dense<0.000000e+00> : vector<64x128xf32>
    %193 = tpu.matmul %158, %192, %cst_221 {dimension_numbers = #tpu.dot_dimension_numbers<[1], [0], [0], [1], [0, 0, 1, 1], [], []>} : vector<64x80xbf16>, vector<80x128xbf16>, vector<64x128xf32> -> vector<64x128xf32>
    %c0_222 = arith.constant 0 : index
    %c1_223 = arith.constant 1 : index
    %c0_224 = arith.constant 0 : index
    %c0_225 = arith.constant 0 : index
    %194 = vector.load %arg4[%c0_222, %c1_223, %c0_224, %c0_225] : memref<3x2x80x128xbf16, #tpu.memory_space<vmem>>, vector<1x1x80x128xbf16>
    %195 = vector.shape_cast %194 : vector<1x1x80x128xbf16> to vector<80x128xbf16>
    %cst_226 = arith.constant dense<0.000000e+00> : vector<64x128xf32>
    %196 = tpu.matmul %166, %195, %cst_226 {dimension_numbers = #tpu.dot_dimension_numbers<[1], [0], [0], [1], [0, 0, 1, 1], [], []>} : vector<64x80xbf16>, vector<80x128xbf16>, vector<64x128xf32> -> vector<64x128xf32>
    %197 = arith.addf %193, %196 : vector<64x128xf32>
    %c1_227 = arith.constant 1 : index
    %c0_228 = arith.constant 0 : index
    %c0_229 = arith.constant 0 : index
    %c0_230 = arith.constant 0 : index
    %198 = vector.load %arg4[%c1_227, %c0_228, %c0_229, %c0_230] : memref<3x2x80x128xbf16, #tpu.memory_space<vmem>>, vector<1x1x80x128xbf16>
    %199 = vector.shape_cast %198 : vector<1x1x80x128xbf16> to vector<80x128xbf16>
    %cst_231 = arith.constant dense<0.000000e+00> : vector<64x128xf32>
    %200 = tpu.matmul %174, %199, %cst_231 {dimension_numbers = #tpu.dot_dimension_numbers<[1], [0], [0], [1], [0, 0, 1, 1], [], []>} : vector<64x80xbf16>, vector<80x128xbf16>, vector<64x128xf32> -> vector<64x128xf32>
    %201 = arith.addf %197, %200 : vector<64x128xf32>
    %c1_232 = arith.constant 1 : index
    %c1_233 = arith.constant 1 : index
    %c0_234 = arith.constant 0 : index
    %c0_235 = arith.constant 0 : index
    %202 = vector.load %arg4[%c1_232, %c1_233, %c0_234, %c0_235] : memref<3x2x80x128xbf16, #tpu.memory_space<vmem>>, vector<1x1x80x128xbf16>
    %203 = vector.shape_cast %202 : vector<1x1x80x128xbf16> to vector<80x128xbf16>
    %cst_236 = arith.constant dense<0.000000e+00> : vector<64x128xf32>
    %204 = tpu.matmul %182, %203, %cst_236 {dimension_numbers = #tpu.dot_dimension_numbers<[1], [0], [0], [1], [0, 0, 1, 1], [], []>} : vector<64x80xbf16>, vector<80x128xbf16>, vector<64x128xf32> -> vector<64x128xf32>
    %205 = arith.addf %201, %204 : vector<64x128xf32>
    %c0_237 = arith.constant 0 : index
    %c0_238 = arith.constant 0 : index
    %c0_239 = arith.constant 0 : index
    %c2_240 = arith.constant 2 : index
    %c0_241 = arith.constant 0 : index
    %206 = vector.load %arg15[%c0_237, %c0_238, %c0_239, %c2_240, %c0_241] : memref<2x2x8x10x80xf32, #tpu.memory_space<vmem>>, vector<1x1x8x8x80xf32>
    %207 = vector.shape_cast %206 : vector<1x1x8x8x80xf32> to vector<8x8x80xf32>
    %208 = vector.shape_cast %207 : vector<8x8x80xf32> to vector<64x80xf32>
    %209 = arith.truncf %208 : vector<64x80xf32> to vector<64x80xbf16>
    %c2_242 = arith.constant 2 : index
    %c0_243 = arith.constant 0 : index
    %c0_244 = arith.constant 0 : index
    %c0_245 = arith.constant 0 : index
    %210 = vector.load %arg4[%c2_242, %c0_243, %c0_244, %c0_245] : memref<3x2x80x128xbf16, #tpu.memory_space<vmem>>, vector<1x1x80x128xbf16>
    %211 = vector.shape_cast %210 : vector<1x1x80x128xbf16> to vector<80x128xbf16>
    %cst_246 = arith.constant dense<0.000000e+00> : vector<64x128xf32>
    %212 = tpu.matmul %209, %211, %cst_246 {dimension_numbers = #tpu.dot_dimension_numbers<[1], [0], [0], [1], [0, 0, 1, 1], [], []>} : vector<64x80xbf16>, vector<80x128xbf16>, vector<64x128xf32> -> vector<64x128xf32>
    %213 = arith.addf %205, %212 : vector<64x128xf32>
    %c0_247 = arith.constant 0 : index
    %c1_248 = arith.constant 1 : index
    %c0_249 = arith.constant 0 : index
    %c2_250 = arith.constant 2 : index
    %c0_251 = arith.constant 0 : index
    %214 = vector.load %arg15[%c0_247, %c1_248, %c0_249, %c2_250, %c0_251] : memref<2x2x8x10x80xf32, #tpu.memory_space<vmem>>, vector<1x1x8x8x80xf32>
    %215 = vector.shape_cast %214 : vector<1x1x8x8x80xf32> to vector<8x8x80xf32>
    %216 = vector.shape_cast %215 : vector<8x8x80xf32> to vector<64x80xf32>
    %217 = arith.truncf %216 : vector<64x80xf32> to vector<64x80xbf16>
    %c2_252 = arith.constant 2 : index
    %c1_253 = arith.constant 1 : index
    %c0_254 = arith.constant 0 : index
    %c0_255 = arith.constant 0 : index
    %218 = vector.load %arg4[%c2_252, %c1_253, %c0_254, %c0_255] : memref<3x2x80x128xbf16, #tpu.memory_space<vmem>>, vector<1x1x80x128xbf16>
    %219 = vector.shape_cast %218 : vector<1x1x80x128xbf16> to vector<80x128xbf16>
    %cst_256 = arith.constant dense<0.000000e+00> : vector<64x128xf32>
    %220 = tpu.matmul %217, %219, %cst_256 {dimension_numbers = #tpu.dot_dimension_numbers<[1], [0], [0], [1], [0, 0, 1, 1], [], []>} : vector<64x80xbf16>, vector<80x128xbf16>, vector<64x128xf32> -> vector<64x128xf32>
    %221 = arith.addf %213, %220 : vector<64x128xf32>
    %222 = vector.broadcast %139 : vector<1x128xf32> to vector<64x128xf32>
    %223 = arith.addf %221, %222 : vector<64x128xf32>
    %cst_257 = arith.constant 0.000000e+00 : f32
    %224 = vector.broadcast %cst_257 : f32 to vector<64x128xf32>
    %225 = arith.maximumf %223, %224 : vector<64x128xf32>
    %226 = vector.extract_strided_slice %190 {offsets = [0, 0], sizes = [64, 64], strides = [1, 1]} : vector<64x128xf32> to vector<64x64xf32>
    %227 = vector.shape_cast %226 : vector<64x64xf32> to vector<8x8x64xf32>
    %c0_258 = arith.constant 0 : index
    %c0_259 = arith.constant 0 : index
    %c0_260 = arith.constant 0 : index
    %c1_261 = arith.constant 1 : index
    %c8_262 = arith.constant 8 : index
    %228 = vector.load %arg15[%c0_258, %c0_259, %c0_260, %c1_261, %c8_262] : memref<2x2x8x10x80xf32, #tpu.memory_space<vmem>>, vector<1x1x8x8x64xf32>
    %229 = vector.shape_cast %228 : vector<1x1x8x8x64xf32> to vector<8x8x64xf32>
    %230 = vector.shape_cast %227 : vector<8x8x64xf32> to vector<1x1x8x8x64xf32>
    tpu.vector_store %arg15[%c0_258, %c0_259, %c0_260, %c1_261, %c8_262], %230 {strides = array<i32>} : memref<2x2x8x10x80xf32, #tpu.memory_space<vmem>>, vector<1x1x8x8x64xf32>,
    %231 = vector.extract_strided_slice %190 {offsets = [0, 64], sizes = [64, 64], strides = [1, 1]} : vector<64x128xf32> to vector<64x64xf32>
    %232 = vector.shape_cast %231 : vector<64x64xf32> to vector<8x8x64xf32>
    %c0_263 = arith.constant 0 : index
    %c1_264 = arith.constant 1 : index
    %c0_265 = arith.constant 0 : index
    %c1_266 = arith.constant 1 : index
    %c8_267 = arith.constant 8 : index
    %233 = vector.load %arg15[%c0_263, %c1_264, %c0_265, %c1_266, %c8_267] : memref<2x2x8x10x80xf32, #tpu.memory_space<vmem>>, vector<1x1x8x8x64xf32>
    %234 = vector.shape_cast %233 : vector<1x1x8x8x64xf32> to vector<8x8x64xf32>
    %235 = vector.shape_cast %232 : vector<8x8x64xf32> to vector<1x1x8x8x64xf32>
    tpu.vector_store %arg15[%c0_263, %c1_264, %c0_265, %c1_266, %c8_267], %235 {strides = array<i32>} : memref<2x2x8x10x80xf32, #tpu.memory_space<vmem>>, vector<1x1x8x8x64xf32>,
    %236 = vector.extract_strided_slice %225 {offsets = [0, 0], sizes = [64, 64], strides = [1, 1]} : vector<64x128xf32> to vector<64x64xf32>
    %237 = vector.shape_cast %236 : vector<64x64xf32> to vector<8x8x64xf32>
    %c1_268 = arith.constant 1 : index
    %c0_269 = arith.constant 0 : index
    %c0_270 = arith.constant 0 : index
    %c1_271 = arith.constant 1 : index
    %c8_272 = arith.constant 8 : index
    %238 = vector.load %arg15[%c1_268, %c0_269, %c0_270, %c1_271, %c8_272] : memref<2x2x8x10x80xf32, #tpu.memory_space<vmem>>, vector<1x1x8x8x64xf32>
    %239 = vector.shape_cast %238 : vector<1x1x8x8x64xf32> to vector<8x8x64xf32>
    %240 = vector.shape_cast %237 : vector<8x8x64xf32> to vector<1x1x8x8x64xf32>
    tpu.vector_store %arg15[%c1_268, %c0_269, %c0_270, %c1_271, %c8_272], %240 {strides = array<i32>} : memref<2x2x8x10x80xf32, #tpu.memory_space<vmem>>, vector<1x1x8x8x64xf32>,
    %241 = vector.extract_strided_slice %225 {offsets = [0, 64], sizes = [64, 64], strides = [1, 1]} : vector<64x128xf32> to vector<64x64xf32>
    %242 = vector.shape_cast %241 : vector<64x64xf32> to vector<8x8x64xf32>
    %c1_273 = arith.constant 1 : index
    %c1_274 = arith.constant 1 : index
    %c0_275 = arith.constant 0 : index
    %c1_276 = arith.constant 1 : index
    %c8_277 = arith.constant 8 : index
    %243 = vector.load %arg15[%c1_273, %c1_274, %c0_275, %c1_276, %c8_277] : memref<2x2x8x10x80xf32, #tpu.memory_space<vmem>>, vector<1x1x8x8x64xf32>
    %244 = vector.shape_cast %243 : vector<1x1x8x8x64xf32> to vector<8x8x64xf32>
    %245 = vector.shape_cast %242 : vector<8x8x64xf32> to vector<1x1x8x8x64xf32>
    tpu.vector_store %arg15[%c1_273, %c1_274, %c0_275, %c1_276, %c8_277], %245 {strides = array<i32>} : memref<2x2x8x10x80xf32, #tpu.memory_space<vmem>>, vector<1x1x8x8x64xf32>,
    %c0_278 = arith.constant 0 : index
    %c0_279 = arith.constant 0 : index
    %246 = vector.load %arg7[%c0_278, %c0_279] : memref<1x128xf32, #tpu.memory_space<vmem>>, vector<1x128xf32>
    %c1_280 = arith.constant 1 : index
    %c0_281 = arith.constant 0 : index
    %c0_282 = arith.constant 0 : index
    %c0_283 = arith.constant 0 : index
    %c0_284 = arith.constant 0 : index
    %247 = vector.load %arg15[%c1_280, %c0_281, %c0_282, %c0_283, %c0_284] : memref<2x2x8x10x80xf32, #tpu.memory_space<vmem>>, vector<1x1x8x8x80xf32>
    %248 = vector.shape_cast %247 : vector<1x1x8x8x80xf32> to vector<8x8x80xf32>
    %249 = vector.shape_cast %248 : vector<8x8x80xf32> to vector<64x80xf32>
    %250 = arith.truncf %249 : vector<64x80xf32> to vector<64x80xbf16>
    %c0_285 = arith.constant 0 : index
    %c0_286 = arith.constant 0 : index
    %c0_287 = arith.constant 0 : index
    %c0_288 = arith.constant 0 : index
    %251 = vector.load %arg6[%c0_285, %c0_286, %c0_287, %c0_288] : memref<3x2x80x128xbf16, #tpu.memory_space<vmem>>, vector<1x1x80x128xbf16>
    %252 = vector.shape_cast %251 : vector<1x1x80x128xbf16> to vector<80x128xbf16>
    %cst_289 = arith.constant dense<0.000000e+00> : vector<64x128xf32>
    %253 = tpu.matmul %250, %252, %cst_289 {dimension_numbers = #tpu.dot_dimension_numbers<[1], [0], [0], [1], [0, 0, 1, 1], [], []>} : vector<64x80xbf16>, vector<80x128xbf16>, vector<64x128xf32> -> vector<64x128xf32>
    %c1_290 = arith.constant 1 : index
    %c1_291 = arith.constant 1 : index
    %c0_292 = arith.constant 0 : index
    %c0_293 = arith.constant 0 : index
    %c0_294 = arith.constant 0 : index
    %254 = vector.load %arg15[%c1_290, %c1_291, %c0_292, %c0_293, %c0_294] : memref<2x2x8x10x80xf32, #tpu.memory_space<vmem>>, vector<1x1x8x8x80xf32>
    %255 = vector.shape_cast %254 : vector<1x1x8x8x80xf32> to vector<8x8x80xf32>
    %256 = vector.shape_cast %255 : vector<8x8x80xf32> to vector<64x80xf32>
    %257 = arith.truncf %256 : vector<64x80xf32> to vector<64x80xbf16>
    %c0_295 = arith.constant 0 : index
    %c1_296 = arith.constant 1 : index
    %c0_297 = arith.constant 0 : index
    %c0_298 = arith.constant 0 : index
    %258 = vector.load %arg6[%c0_295, %c1_296, %c0_297, %c0_298] : memref<3x2x80x128xbf16, #tpu.memory_space<vmem>>, vector<1x1x80x128xbf16>
    %259 = vector.shape_cast %258 : vector<1x1x80x128xbf16> to vector<80x128xbf16>
    %cst_299 = arith.constant dense<0.000000e+00> : vector<64x128xf32>
    %260 = tpu.matmul %257, %259, %cst_299 {dimension_numbers = #tpu.dot_dimension_numbers<[1], [0], [0], [1], [0, 0, 1, 1], [], []>} : vector<64x80xbf16>, vector<80x128xbf16>, vector<64x128xf32> -> vector<64x128xf32>
    %261 = arith.addf %253, %260 : vector<64x128xf32>
    %c0_300 = arith.constant 0 : index
    %c0_301 = arith.constant 0 : index
    %c0_302 = arith.constant 0 : index
    %c1_303 = arith.constant 1 : index
    %c0_304 = arith.constant 0 : index
    %262 = vector.load %arg15[%c0_300, %c0_301, %c0_302, %c1_303, %c0_304] : memref<2x2x8x10x80xf32, #tpu.memory_space<vmem>>, vector<1x1x8x8x80xf32>
    %263 = vector.shape_cast %262 : vector<1x1x8x8x80xf32> to vector<8x8x80xf32>
    %264 = vector.shape_cast %263 : vector<8x8x80xf32> to vector<64x80xf32>
    %265 = arith.truncf %264 : vector<64x80xf32> to vector<64x80xbf16>
    %c1_305 = arith.constant 1 : index
    %c0_306 = arith.constant 0 : index
    %c0_307 = arith.constant 0 : index
    %c0_308 = arith.constant 0 : index
    %266 = vector.load %arg6[%c1_305, %c0_306, %c0_307, %c0_308] : memref<3x2x80x128xbf16, #tpu.memory_space<vmem>>, vector<1x1x80x128xbf16>
    %267 = vector.shape_cast %266 : vector<1x1x80x128xbf16> to vector<80x128xbf16>
    %cst_309 = arith.constant dense<0.000000e+00> : vector<64x128xf32>
    %268 = tpu.matmul %265, %267, %cst_309 {dimension_numbers = #tpu.dot_dimension_numbers<[1], [0], [0], [1], [0, 0, 1, 1], [], []>} : vector<64x80xbf16>, vector<80x128xbf16>, vector<64x128xf32> -> vector<64x128xf32>
    %269 = arith.addf %261, %268 : vector<64x128xf32>
    %c0_310 = arith.constant 0 : index
    %c1_311 = arith.constant 1 : index
    %c0_312 = arith.constant 0 : index
    %c1_313 = arith.constant 1 : index
    %c0_314 = arith.constant 0 : index
    %270 = vector.load %arg15[%c0_310, %c1_311, %c0_312, %c1_313, %c0_314] : memref<2x2x8x10x80xf32, #tpu.memory_space<vmem>>, vector<1x1x8x8x80xf32>
    %271 = vector.shape_cast %270 : vector<1x1x8x8x80xf32> to vector<8x8x80xf32>
    %272 = vector.shape_cast %271 : vector<8x8x80xf32> to vector<64x80xf32>
    %273 = arith.truncf %272 : vector<64x80xf32> to vector<64x80xbf16>
    %c1_315 = arith.constant 1 : index
    %c1_316 = arith.constant 1 : index
    %c0_317 = arith.constant 0 : index
    %c0_318 = arith.constant 0 : index
    %274 = vector.load %arg6[%c1_315, %c1_316, %c0_317, %c0_318] : memref<3x2x80x128xbf16, #tpu.memory_space<vmem>>, vector<1x1x80x128xbf16>
    %275 = vector.shape_cast %274 : vector<1x1x80x128xbf16> to vector<80x128xbf16>
    %cst_319 = arith.constant dense<0.000000e+00> : vector<64x128xf32>
    %276 = tpu.matmul %273, %275, %cst_319 {dimension_numbers = #tpu.dot_dimension_numbers<[1], [0], [0], [1], [0, 0, 1, 1], [], []>} : vector<64x80xbf16>, vector<80x128xbf16>, vector<64x128xf32> -> vector<64x128xf32>
    %277 = arith.addf %269, %276 : vector<64x128xf32>
    %c1_320 = arith.constant 1 : index
    %c0_321 = arith.constant 0 : index
    %c0_322 = arith.constant 0 : index
    %c1_323 = arith.constant 1 : index
    %c0_324 = arith.constant 0 : index
    %278 = vector.load %arg15[%c1_320, %c0_321, %c0_322, %c1_323, %c0_324] : memref<2x2x8x10x80xf32, #tpu.memory_space<vmem>>, vector<1x1x8x8x80xf32>
    %279 = vector.shape_cast %278 : vector<1x1x8x8x80xf32> to vector<8x8x80xf32>
    %280 = vector.shape_cast %279 : vector<8x8x80xf32> to vector<64x80xf32>
    %281 = arith.truncf %280 : vector<64x80xf32> to vector<64x80xbf16>
    %c2_325 = arith.constant 2 : index
    %c0_326 = arith.constant 0 : index
    %c0_327 = arith.constant 0 : index
    %c0_328 = arith.constant 0 : index
    %282 = vector.load %arg6[%c2_325, %c0_326, %c0_327, %c0_328] : memref<3x2x80x128xbf16, #tpu.memory_space<vmem>>, vector<1x1x80x128xbf16>
    %283 = vector.shape_cast %282 : vector<1x1x80x128xbf16> to vector<80x128xbf16>
    %cst_329 = arith.constant dense<0.000000e+00> : vector<64x128xf32>
    %284 = tpu.matmul %281, %283, %cst_329 {dimension_numbers = #tpu.dot_dimension_numbers<[1], [0], [0], [1], [0, 0, 1, 1], [], []>} : vector<64x80xbf16>, vector<80x128xbf16>, vector<64x128xf32> -> vector<64x128xf32>
    %285 = arith.addf %277, %284 : vector<64x128xf32>
    %c1_330 = arith.constant 1 : index
    %c1_331 = arith.constant 1 : index
    %c0_332 = arith.constant 0 : index
    %c1_333 = arith.constant 1 : index
    %c0_334 = arith.constant 0 : index
    %286 = vector.load %arg15[%c1_330, %c1_331, %c0_332, %c1_333, %c0_334] : memref<2x2x8x10x80xf32, #tpu.memory_space<vmem>>, vector<1x1x8x8x80xf32>
    %287 = vector.shape_cast %286 : vector<1x1x8x8x80xf32> to vector<8x8x80xf32>
    %288 = vector.shape_cast %287 : vector<8x8x80xf32> to vector<64x80xf32>
    %289 = arith.truncf %288 : vector<64x80xf32> to vector<64x80xbf16>
    %c2_335 = arith.constant 2 : index
    %c1_336 = arith.constant 1 : index
    %c0_337 = arith.constant 0 : index
    %c0_338 = arith.constant 0 : index
    %290 = vector.load %arg6[%c2_335, %c1_336, %c0_337, %c0_338] : memref<3x2x80x128xbf16, #tpu.memory_space<vmem>>, vector<1x1x80x128xbf16>
    %291 = vector.shape_cast %290 : vector<1x1x80x128xbf16> to vector<80x128xbf16>
    %cst_339 = arith.constant dense<0.000000e+00> : vector<64x128xf32>
    %292 = tpu.matmul %289, %291, %cst_339 {dimension_numbers = #tpu.dot_dimension_numbers<[1], [0], [0], [1], [0, 0, 1, 1], [], []>} : vector<64x80xbf16>, vector<80x128xbf16>, vector<64x128xf32> -> vector<64x128xf32>
    %293 = arith.addf %285, %292 : vector<64x128xf32>
    %294 = vector.broadcast %246 : vector<1x128xf32> to vector<64x128xf32>
    %295 = arith.addf %293, %294 : vector<64x128xf32>
    %cst_340 = arith.constant 0.000000e+00 : f32
    %296 = vector.broadcast %cst_340 : f32 to vector<64x128xf32>
    %297 = arith.maximumf %295, %296 : vector<64x128xf32>
    %c0_341 = arith.constant 0 : index
    %c0_342 = arith.constant 0 : index
    %c0_343 = arith.constant 0 : index
    %c0_344 = arith.constant 0 : index
    %298 = vector.load %arg6[%c0_341, %c0_342, %c0_343, %c0_344] : memref<3x2x80x128xbf16, #tpu.memory_space<vmem>>, vector<1x1x80x128xbf16>
    %299 = vector.shape_cast %298 : vector<1x1x80x128xbf16> to vector<80x128xbf16>
    %cst_345 = arith.constant dense<0.000000e+00> : vector<64x128xf32>
    %300 = tpu.matmul %265, %299, %cst_345 {dimension_numbers = #tpu.dot_dimension_numbers<[1], [0], [0], [1], [0, 0, 1, 1], [], []>} : vector<64x80xbf16>, vector<80x128xbf16>, vector<64x128xf32> -> vector<64x128xf32>
    %c0_346 = arith.constant 0 : index
    %c1_347 = arith.constant 1 : index
    %c0_348 = arith.constant 0 : index
    %c0_349 = arith.constant 0 : index
    %301 = vector.load %arg6[%c0_346, %c1_347, %c0_348, %c0_349] : memref<3x2x80x128xbf16, #tpu.memory_space<vmem>>, vector<1x1x80x128xbf16>
    %302 = vector.shape_cast %301 : vector<1x1x80x128xbf16> to vector<80x128xbf16>
    %cst_350 = arith.constant dense<0.000000e+00> : vector<64x128xf32>
    %303 = tpu.matmul %273, %302, %cst_350 {dimension_numbers = #tpu.dot_dimension_numbers<[1], [0], [0], [1], [0, 0, 1, 1], [], []>} : vector<64x80xbf16>, vector<80x128xbf16>, vector<64x128xf32> -> vector<64x128xf32>
    %304 = arith.addf %300, %303 : vector<64x128xf32>
    %c1_351 = arith.constant 1 : index
    %c0_352 = arith.constant 0 : index
    %c0_353 = arith.constant 0 : index
    %c0_354 = arith.constant 0 : index
    %305 = vector.load %arg6[%c1_351, %c0_352, %c0_353, %c0_354] : memref<3x2x80x128xbf16, #tpu.memory_space<vmem>>, vector<1x1x80x128xbf16>
    %306 = vector.shape_cast %305 : vector<1x1x80x128xbf16> to vector<80x128xbf16>
    %cst_355 = arith.constant dense<0.000000e+00> : vector<64x128xf32>
    %307 = tpu.matmul %281, %306, %cst_355 {dimension_numbers = #tpu.dot_dimension_numbers<[1], [0], [0], [1], [0, 0, 1, 1], [], []>} : vector<64x80xbf16>, vector<80x128xbf16>, vector<64x128xf32> -> vector<64x128xf32>
    %308 = arith.addf %304, %307 : vector<64x128xf32>
    %c1_356 = arith.constant 1 : index
    %c1_357 = arith.constant 1 : index
    %c0_358 = arith.constant 0 : index
    %c0_359 = arith.constant 0 : index
    %309 = vector.load %arg6[%c1_356, %c1_357, %c0_358, %c0_359] : memref<3x2x80x128xbf16, #tpu.memory_space<vmem>>, vector<1x1x80x128xbf16>
    %310 = vector.shape_cast %309 : vector<1x1x80x128xbf16> to vector<80x128xbf16>
    %cst_360 = arith.constant dense<0.000000e+00> : vector<64x128xf32>
    %311 = tpu.matmul %289, %310, %cst_360 {dimension_numbers = #tpu.dot_dimension_numbers<[1], [0], [0], [1], [0, 0, 1, 1], [], []>} : vector<64x80xbf16>, vector<80x128xbf16>, vector<64x128xf32> -> vector<64x128xf32>
    %312 = arith.addf %308, %311 : vector<64x128xf32>
    %c0_361 = arith.constant 0 : index
    %c0_362 = arith.constant 0 : index
    %c0_363 = arith.constant 0 : index
    %c2_364 = arith.constant 2 : index
    %c0_365 = arith.constant 0 : index
    %313 = vector.load %arg15[%c0_361, %c0_362, %c0_363, %c2_364, %c0_365] : memref<2x2x8x10x80xf32, #tpu.memory_space<vmem>>, vector<1x1x8x8x80xf32>
    %314 = vector.shape_cast %313 : vector<1x1x8x8x80xf32> to vector<8x8x80xf32>
    %315 = vector.shape_cast %314 : vector<8x8x80xf32> to vector<64x80xf32>
    %316 = arith.truncf %315 : vector<64x80xf32> to vector<64x80xbf16>
    %c2_366 = arith.constant 2 : index
    %c0_367 = arith.constant 0 : index
    %c0_368 = arith.constant 0 : index
    %c0_369 = arith.constant 0 : index
    %317 = vector.load %arg6[%c2_366, %c0_367, %c0_368, %c0_369] : memref<3x2x80x128xbf16, #tpu.memory_space<vmem>>, vector<1x1x80x128xbf16>
    %318 = vector.shape_cast %317 : vector<1x1x80x128xbf16> to vector<80x128xbf16>
    %cst_370 = arith.constant dense<0.000000e+00> : vector<64x128xf32>
    %319 = tpu.matmul %316, %318, %cst_370 {dimension_numbers = #tpu.dot_dimension_numbers<[1], [0], [0], [1], [0, 0, 1, 1], [], []>} : vector<64x80xbf16>, vector<80x128xbf16>, vector<64x128xf32> -> vector<64x128xf32>
    %320 = arith.addf %312, %319 : vector<64x128xf32>
    %c0_371 = arith.constant 0 : index
    %c1_372 = arith.constant 1 : index
    %c0_373 = arith.constant 0 : index
    %c2_374 = arith.constant 2 : index
    %c0_375 = arith.constant 0 : index
    %321 = vector.load %arg15[%c0_371, %c1_372, %c0_373, %c2_374, %c0_375] : memref<2x2x8x10x80xf32, #tpu.memory_space<vmem>>, vector<1x1x8x8x80xf32>
    %322 = vector.shape_cast %321 : vector<1x1x8x8x80xf32> to vector<8x8x80xf32>
    %323 = vector.shape_cast %322 : vector<8x8x80xf32> to vector<64x80xf32>
    %324 = arith.truncf %323 : vector<64x80xf32> to vector<64x80xbf16>
    %c2_376 = arith.constant 2 : index
    %c1_377 = arith.constant 1 : index
    %c0_378 = arith.constant 0 : index
    %c0_379 = arith.constant 0 : index
    %325 = vector.load %arg6[%c2_376, %c1_377, %c0_378, %c0_379] : memref<3x2x80x128xbf16, #tpu.memory_space<vmem>>, vector<1x1x80x128xbf16>
    %326 = vector.shape_cast %325 : vector<1x1x80x128xbf16> to vector<80x128xbf16>
    %cst_380 = arith.constant dense<0.000000e+00> : vector<64x128xf32>
    %327 = tpu.matmul %324, %326, %cst_380 {dimension_numbers = #tpu.dot_dimension_numbers<[1], [0], [0], [1], [0, 0, 1, 1], [], []>} : vector<64x80xbf16>, vector<80x128xbf16>, vector<64x128xf32> -> vector<64x128xf32>
    %328 = arith.addf %320, %327 : vector<64x128xf32>
    %329 = vector.broadcast %246 : vector<1x128xf32> to vector<64x128xf32>
    %330 = arith.addf %328, %329 : vector<64x128xf32>
    %cst_381 = arith.constant 0.000000e+00 : f32
    %331 = vector.broadcast %cst_381 : f32 to vector<64x128xf32>
    %332 = arith.maximumf %330, %331 : vector<64x128xf32>
    %333 = vector.extract_strided_slice %297 {offsets = [0, 0], sizes = [64, 64], strides = [1, 1]} : vector<64x128xf32> to vector<64x64xf32>
    %334 = vector.shape_cast %333 : vector<64x64xf32> to vector<8x8x64xf32>
    %c0_382 = arith.constant 0 : index
    %c0_383 = arith.constant 0 : index
    %c0_384 = arith.constant 0 : index
    %c1_385 = arith.constant 1 : index
    %c8_386 = arith.constant 8 : index
    %335 = vector.load %arg15[%c0_382, %c0_383, %c0_384, %c1_385, %c8_386] : memref<2x2x8x10x80xf32, #tpu.memory_space<vmem>>, vector<1x1x8x8x64xf32>
    %336 = vector.shape_cast %335 : vector<1x1x8x8x64xf32> to vector<8x8x64xf32>
    %337 = vector.shape_cast %334 : vector<8x8x64xf32> to vector<1x1x8x8x64xf32>
    tpu.vector_store %arg15[%c0_382, %c0_383, %c0_384, %c1_385, %c8_386], %337 {strides = array<i32>} : memref<2x2x8x10x80xf32, #tpu.memory_space<vmem>>, vector<1x1x8x8x64xf32>,
    %338 = vector.extract_strided_slice %297 {offsets = [0, 64], sizes = [64, 64], strides = [1, 1]} : vector<64x128xf32> to vector<64x64xf32>
    %339 = vector.shape_cast %338 : vector<64x64xf32> to vector<8x8x64xf32>
    %c0_387 = arith.constant 0 : index
    %c1_388 = arith.constant 1 : index
    %c0_389 = arith.constant 0 : index
    %c1_390 = arith.constant 1 : index
    %c8_391 = arith.constant 8 : index
    %340 = vector.load %arg15[%c0_387, %c1_388, %c0_389, %c1_390, %c8_391] : memref<2x2x8x10x80xf32, #tpu.memory_space<vmem>>, vector<1x1x8x8x64xf32>
    %341 = vector.shape_cast %340 : vector<1x1x8x8x64xf32> to vector<8x8x64xf32>
    %342 = vector.shape_cast %339 : vector<8x8x64xf32> to vector<1x1x8x8x64xf32>
    tpu.vector_store %arg15[%c0_387, %c1_388, %c0_389, %c1_390, %c8_391], %342 {strides = array<i32>} : memref<2x2x8x10x80xf32, #tpu.memory_space<vmem>>, vector<1x1x8x8x64xf32>,
    %343 = vector.extract_strided_slice %332 {offsets = [0, 0], sizes = [64, 64], strides = [1, 1]} : vector<64x128xf32> to vector<64x64xf32>
    %344 = vector.shape_cast %343 : vector<64x64xf32> to vector<8x8x64xf32>
    %c1_392 = arith.constant 1 : index
    %c0_393 = arith.constant 0 : index
    %c0_394 = arith.constant 0 : index
    %c1_395 = arith.constant 1 : index
    %c8_396 = arith.constant 8 : index
    %345 = vector.load %arg15[%c1_392, %c0_393, %c0_394, %c1_395, %c8_396] : memref<2x2x8x10x80xf32, #tpu.memory_space<vmem>>, vector<1x1x8x8x64xf32>
    %346 = vector.shape_cast %345 : vector<1x1x8x8x64xf32> to vector<8x8x64xf32>
    %347 = vector.shape_cast %344 : vector<8x8x64xf32> to vector<1x1x8x8x64xf32>
    tpu.vector_store %arg15[%c1_392, %c0_393, %c0_394, %c1_395, %c8_396], %347 {strides = array<i32>} : memref<2x2x8x10x80xf32, #tpu.memory_space<vmem>>, vector<1x1x8x8x64xf32>,
    %348 = vector.extract_strided_slice %332 {offsets = [0, 64], sizes = [64, 64], strides = [1, 1]} : vector<64x128xf32> to vector<64x64xf32>
    %349 = vector.shape_cast %348 : vector<64x64xf32> to vector<8x8x64xf32>
    %c1_397 = arith.constant 1 : index
    %c1_398 = arith.constant 1 : index
    %c0_399 = arith.constant 0 : index
    %c1_400 = arith.constant 1 : index
    %c8_401 = arith.constant 8 : index
    %350 = vector.load %arg15[%c1_397, %c1_398, %c0_399, %c1_400, %c8_401] : memref<2x2x8x10x80xf32, #tpu.memory_space<vmem>>, vector<1x1x8x8x64xf32>
    %351 = vector.shape_cast %350 : vector<1x1x8x8x64xf32> to vector<8x8x64xf32>
    %352 = vector.shape_cast %349 : vector<8x8x64xf32> to vector<1x1x8x8x64xf32>
    tpu.vector_store %arg15[%c1_397, %c1_398, %c0_399, %c1_400, %c8_401], %352 {strides = array<i32>} : memref<2x2x8x10x80xf32, #tpu.memory_space<vmem>>, vector<1x1x8x8x64xf32>,
    %c0_402 = arith.constant 0 : index
    %c0_403 = arith.constant 0 : index
    %353 = vector.load %arg9[%c0_402, %c0_403] : memref<1x256xf32, #tpu.memory_space<vmem>>, vector<1x256xf32>
    %c1_404 = arith.constant 1 : index
    %c0_405 = arith.constant 0 : index
    %c0_406 = arith.constant 0 : index
    %c0_407 = arith.constant 0 : index
    %c0_408 = arith.constant 0 : index
    %354 = vector.load %arg15[%c1_404, %c0_405, %c0_406, %c0_407, %c0_408] : memref<2x2x8x10x80xf32, #tpu.memory_space<vmem>>, vector<1x1x8x8x80xf32>
    %355 = vector.shape_cast %354 : vector<1x1x8x8x80xf32> to vector<8x8x80xf32>
    %356 = vector.shape_cast %355 : vector<8x8x80xf32> to vector<64x80xf32>
    %357 = arith.truncf %356 : vector<64x80xf32> to vector<64x80xbf16>
    %c0_409 = arith.constant 0 : index
    %c0_410 = arith.constant 0 : index
    %c0_411 = arith.constant 0 : index
    %c0_412 = arith.constant 0 : index
    %358 = vector.load %arg8[%c0_409, %c0_410, %c0_411, %c0_412] : memref<3x2x80x256xbf16, #tpu.memory_space<vmem>>, vector<1x1x80x256xbf16>
    %359 = vector.shape_cast %358 : vector<1x1x80x256xbf16> to vector<80x256xbf16>
    %cst_413 = arith.constant dense<0.000000e+00> : vector<64x256xf32>
    %360 = tpu.matmul %357, %359, %cst_413 {dimension_numbers = #tpu.dot_dimension_numbers<[1], [0], [0], [1], [0, 0, 1, 1], [], []>} : vector<64x80xbf16>, vector<80x256xbf16>, vector<64x256xf32> -> vector<64x256xf32>
    %c1_414 = arith.constant 1 : index
    %c1_415 = arith.constant 1 : index
    %c0_416 = arith.constant 0 : index
    %c0_417 = arith.constant 0 : index
    %c0_418 = arith.constant 0 : index
    %361 = vector.load %arg15[%c1_414, %c1_415, %c0_416, %c0_417, %c0_418] : memref<2x2x8x10x80xf32, #tpu.memory_space<vmem>>, vector<1x1x8x8x80xf32>
    %362 = vector.shape_cast %361 : vector<1x1x8x8x80xf32> to vector<8x8x80xf32>
    %363 = vector.shape_cast %362 : vector<8x8x80xf32> to vector<64x80xf32>
    %364 = arith.truncf %363 : vector<64x80xf32> to vector<64x80xbf16>
    %c0_419 = arith.constant 0 : index
    %c1_420 = arith.constant 1 : index
    %c0_421 = arith.constant 0 : index
    %c0_422 = arith.constant 0 : index
    %365 = vector.load %arg8[%c0_419, %c1_420, %c0_421, %c0_422] : memref<3x2x80x256xbf16, #tpu.memory_space<vmem>>, vector<1x1x80x256xbf16>
    %366 = vector.shape_cast %365 : vector<1x1x80x256xbf16> to vector<80x256xbf16>
    %cst_423 = arith.constant dense<0.000000e+00> : vector<64x256xf32>
    %367 = tpu.matmul %364, %366, %cst_423 {dimension_numbers = #tpu.dot_dimension_numbers<[1], [0], [0], [1], [0, 0, 1, 1], [], []>} : vector<64x80xbf16>, vector<80x256xbf16>, vector<64x256xf32> -> vector<64x256xf32>
    %368 = arith.addf %360, %367 : vector<64x256xf32>
    %c0_424 = arith.constant 0 : index
    %c0_425 = arith.constant 0 : index
    %c0_426 = arith.constant 0 : index
    %c1_427 = arith.constant 1 : index
    %c0_428 = arith.constant 0 : index
    %369 = vector.load %arg15[%c0_424, %c0_425, %c0_426, %c1_427, %c0_428] : memref<2x2x8x10x80xf32, #tpu.memory_space<vmem>>, vector<1x1x8x8x80xf32>
    %370 = vector.shape_cast %369 : vector<1x1x8x8x80xf32> to vector<8x8x80xf32>
    %371 = vector.shape_cast %370 : vector<8x8x80xf32> to vector<64x80xf32>
    %372 = arith.truncf %371 : vector<64x80xf32> to vector<64x80xbf16>
    %c1_429 = arith.constant 1 : index
    %c0_430 = arith.constant 0 : index
    %c0_431 = arith.constant 0 : index
    %c0_432 = arith.constant 0 : index
    %373 = vector.load %arg8[%c1_429, %c0_430, %c0_431, %c0_432] : memref<3x2x80x256xbf16, #tpu.memory_space<vmem>>, vector<1x1x80x256xbf16>
    %374 = vector.shape_cast %373 : vector<1x1x80x256xbf16> to vector<80x256xbf16>
    %cst_433 = arith.constant dense<0.000000e+00> : vector<64x256xf32>
    %375 = tpu.matmul %372, %374, %cst_433 {dimension_numbers = #tpu.dot_dimension_numbers<[1], [0], [0], [1], [0, 0, 1, 1], [], []>} : vector<64x80xbf16>, vector<80x256xbf16>, vector<64x256xf32> -> vector<64x256xf32>
    %376 = arith.addf %368, %375 : vector<64x256xf32>
    %c0_434 = arith.constant 0 : index
    %c1_435 = arith.constant 1 : index
    %c0_436 = arith.constant 0 : index
    %c1_437 = arith.constant 1 : index
    %c0_438 = arith.constant 0 : index
    %377 = vector.load %arg15[%c0_434, %c1_435, %c0_436, %c1_437, %c0_438] : memref<2x2x8x10x80xf32, #tpu.memory_space<vmem>>, vector<1x1x8x8x80xf32>
    %378 = vector.shape_cast %377 : vector<1x1x8x8x80xf32> to vector<8x8x80xf32>
    %379 = vector.shape_cast %378 : vector<8x8x80xf32> to vector<64x80xf32>
    %380 = arith.truncf %379 : vector<64x80xf32> to vector<64x80xbf16>
    %c1_439 = arith.constant 1 : index
    %c1_440 = arith.constant 1 : index
    %c0_441 = arith.constant 0 : index
    %c0_442 = arith.constant 0 : index
    %381 = vector.load %arg8[%c1_439, %c1_440, %c0_441, %c0_442] : memref<3x2x80x256xbf16, #tpu.memory_space<vmem>>, vector<1x1x80x256xbf16>
    %382 = vector.shape_cast %381 : vector<1x1x80x256xbf16> to vector<80x256xbf16>
    %cst_443 = arith.constant dense<0.000000e+00> : vector<64x256xf32>
    %383 = tpu.matmul %380, %382, %cst_443 {dimension_numbers = #tpu.dot_dimension_numbers<[1], [0], [0], [1], [0, 0, 1, 1], [], []>} : vector<64x80xbf16>, vector<80x256xbf16>, vector<64x256xf32> -> vector<64x256xf32>
    %384 = arith.addf %376, %383 : vector<64x256xf32>
    %c1_444 = arith.constant 1 : index
    %c0_445 = arith.constant 0 : index
    %c0_446 = arith.constant 0 : index
    %c1_447 = arith.constant 1 : index
    %c0_448 = arith.constant 0 : index
    %385 = vector.load %arg15[%c1_444, %c0_445, %c0_446, %c1_447, %c0_448] : memref<2x2x8x10x80xf32, #tpu.memory_space<vmem>>, vector<1x1x8x8x80xf32>
    %386 = vector.shape_cast %385 : vector<1x1x8x8x80xf32> to vector<8x8x80xf32>
    %387 = vector.shape_cast %386 : vector<8x8x80xf32> to vector<64x80xf32>
    %388 = arith.truncf %387 : vector<64x80xf32> to vector<64x80xbf16>
    %c2_449 = arith.constant 2 : index
    %c0_450 = arith.constant 0 : index
    %c0_451 = arith.constant 0 : index
    %c0_452 = arith.constant 0 : index
    %389 = vector.load %arg8[%c2_449, %c0_450, %c0_451, %c0_452] : memref<3x2x80x256xbf16, #tpu.memory_space<vmem>>, vector<1x1x80x256xbf16>
    %390 = vector.shape_cast %389 : vector<1x1x80x256xbf16> to vector<80x256xbf16>
    %cst_453 = arith.constant dense<0.000000e+00> : vector<64x256xf32>
    %391 = tpu.matmul %388, %390, %cst_453 {dimension_numbers = #tpu.dot_dimension_numbers<[1], [0], [0], [1], [0, 0, 1, 1], [], []>} : vector<64x80xbf16>, vector<80x256xbf16>, vector<64x256xf32> -> vector<64x256xf32>
    %392 = arith.addf %384, %391 : vector<64x256xf32>
    %c1_454 = arith.constant 1 : index
    %c1_455 = arith.constant 1 : index
    %c0_456 = arith.constant 0 : index
    %c1_457 = arith.constant 1 : index
    %c0_458 = arith.constant 0 : index
    %393 = vector.load %arg15[%c1_454, %c1_455, %c0_456, %c1_457, %c0_458] : memref<2x2x8x10x80xf32, #tpu.memory_space<vmem>>, vector<1x1x8x8x80xf32>
    %394 = vector.shape_cast %393 : vector<1x1x8x8x80xf32> to vector<8x8x80xf32>
    %395 = vector.shape_cast %394 : vector<8x8x80xf32> to vector<64x80xf32>
    %396 = arith.truncf %395 : vector<64x80xf32> to vector<64x80xbf16>
    %c2_459 = arith.constant 2 : index
    %c1_460 = arith.constant 1 : index
    %c0_461 = arith.constant 0 : index
    %c0_462 = arith.constant 0 : index
    %397 = vector.load %arg8[%c2_459, %c1_460, %c0_461, %c0_462] : memref<3x2x80x256xbf16, #tpu.memory_space<vmem>>, vector<1x1x80x256xbf16>
    %398 = vector.shape_cast %397 : vector<1x1x80x256xbf16> to vector<80x256xbf16>
    %cst_463 = arith.constant dense<0.000000e+00> : vector<64x256xf32>
    %399 = tpu.matmul %396, %398, %cst_463 {dimension_numbers = #tpu.dot_dimension_numbers<[1], [0], [0], [1], [0, 0, 1, 1], [], []>} : vector<64x80xbf16>, vector<80x256xbf16>, vector<64x256xf32> -> vector<64x256xf32>
    %400 = arith.addf %392, %399 : vector<64x256xf32>
    %401 = vector.broadcast %353 : vector<1x256xf32> to vector<64x256xf32>
    %402 = arith.addf %400, %401 : vector<64x256xf32>
    %cst_464 = arith.constant 0.000000e+00 : f32
    %403 = vector.broadcast %cst_464 : f32 to vector<64x256xf32>
    %404 = arith.maximumf %402, %403 : vector<64x256xf32>
    %c0_465 = arith.constant 0 : index
    %c0_466 = arith.constant 0 : index
    %c0_467 = arith.constant 0 : index
    %c0_468 = arith.constant 0 : index
    %405 = vector.load %arg8[%c0_465, %c0_466, %c0_467, %c0_468] : memref<3x2x80x256xbf16, #tpu.memory_space<vmem>>, vector<1x1x80x256xbf16>
    %406 = vector.shape_cast %405 : vector<1x1x80x256xbf16> to vector<80x256xbf16>
    %cst_469 = arith.constant dense<0.000000e+00> : vector<64x256xf32>
    %407 = tpu.matmul %372, %406, %cst_469 {dimension_numbers = #tpu.dot_dimension_numbers<[1], [0], [0], [1], [0, 0, 1, 1], [], []>} : vector<64x80xbf16>, vector<80x256xbf16>, vector<64x256xf32> -> vector<64x256xf32>
    %c0_470 = arith.constant 0 : index
    %c1_471 = arith.constant 1 : index
    %c0_472 = arith.constant 0 : index
    %c0_473 = arith.constant 0 : index
    %408 = vector.load %arg8[%c0_470, %c1_471, %c0_472, %c0_473] : memref<3x2x80x256xbf16, #tpu.memory_space<vmem>>, vector<1x1x80x256xbf16>
    %409 = vector.shape_cast %408 : vector<1x1x80x256xbf16> to vector<80x256xbf16>
    %cst_474 = arith.constant dense<0.000000e+00> : vector<64x256xf32>
    %410 = tpu.matmul %380, %409, %cst_474 {dimension_numbers = #tpu.dot_dimension_numbers<[1], [0], [0], [1], [0, 0, 1, 1], [], []>} : vector<64x80xbf16>, vector<80x256xbf16>, vector<64x256xf32> -> vector<64x256xf32>
    %411 = arith.addf %407, %410 : vector<64x256xf32>
    %c1_475 = arith.constant 1 : index
    %c0_476 = arith.constant 0 : index
    %c0_477 = arith.constant 0 : index
    %c0_478 = arith.constant 0 : index
    %412 = vector.load %arg8[%c1_475, %c0_476, %c0_477, %c0_478] : memref<3x2x80x256xbf16, #tpu.memory_space<vmem>>, vector<1x1x80x256xbf16>
    %413 = vector.shape_cast %412 : vector<1x1x80x256xbf16> to vector<80x256xbf16>
    %cst_479 = arith.constant dense<0.000000e+00> : vector<64x256xf32>
    %414 = tpu.matmul %388, %413, %cst_479 {dimension_numbers = #tpu.dot_dimension_numbers<[1], [0], [0], [1], [0, 0, 1, 1], [], []>} : vector<64x80xbf16>, vector<80x256xbf16>, vector<64x256xf32> -> vector<64x256xf32>
    %415 = arith.addf %411, %414 : vector<64x256xf32>
    %c1_480 = arith.constant 1 : index
    %c1_481 = arith.constant 1 : index
    %c0_482 = arith.constant 0 : index
    %c0_483 = arith.constant 0 : index
    %416 = vector.load %arg8[%c1_480, %c1_481, %c0_482, %c0_483] : memref<3x2x80x256xbf16, #tpu.memory_space<vmem>>, vector<1x1x80x256xbf16>
    %417 = vector.shape_cast %416 : vector<1x1x80x256xbf16> to vector<80x256xbf16>
    %cst_484 = arith.constant dense<0.000000e+00> : vector<64x256xf32>
    %418 = tpu.matmul %396, %417, %cst_484 {dimension_numbers = #tpu.dot_dimension_numbers<[1], [0], [0], [1], [0, 0, 1, 1], [], []>} : vector<64x80xbf16>, vector<80x256xbf16>, vector<64x256xf32> -> vector<64x256xf32>
    %419 = arith.addf %415, %418 : vector<64x256xf32>
    %c0_485 = arith.constant 0 : index
    %c0_486 = arith.constant 0 : index
    %c0_487 = arith.constant 0 : index
    %c2_488 = arith.constant 2 : index
    %c0_489 = arith.constant 0 : index
    %420 = vector.load %arg15[%c0_485, %c0_486, %c0_487, %c2_488, %c0_489] : memref<2x2x8x10x80xf32, #tpu.memory_space<vmem>>, vector<1x1x8x8x80xf32>
    %421 = vector.shape_cast %420 : vector<1x1x8x8x80xf32> to vector<8x8x80xf32>
    %422 = vector.shape_cast %421 : vector<8x8x80xf32> to vector<64x80xf32>
    %423 = arith.truncf %422 : vector<64x80xf32> to vector<64x80xbf16>
    %c2_490 = arith.constant 2 : index
    %c0_491 = arith.constant 0 : index
    %c0_492 = arith.constant 0 : index
    %c0_493 = arith.constant 0 : index
    %424 = vector.load %arg8[%c2_490, %c0_491, %c0_492, %c0_493] : memref<3x2x80x256xbf16, #tpu.memory_space<vmem>>, vector<1x1x80x256xbf16>
    %425 = vector.shape_cast %424 : vector<1x1x80x256xbf16> to vector<80x256xbf16>
    %cst_494 = arith.constant dense<0.000000e+00> : vector<64x256xf32>
    %426 = tpu.matmul %423, %425, %cst_494 {dimension_numbers = #tpu.dot_dimension_numbers<[1], [0], [0], [1], [0, 0, 1, 1], [], []>} : vector<64x80xbf16>, vector<80x256xbf16>, vector<64x256xf32> -> vector<64x256xf32>
    %427 = arith.addf %419, %426 : vector<64x256xf32>
    %c0_495 = arith.constant 0 : index
    %c1_496 = arith.constant 1 : index
    %c0_497 = arith.constant 0 : index
    %c2_498 = arith.constant 2 : index
    %c0_499 = arith.constant 0 : index
    %428 = vector.load %arg15[%c0_495, %c1_496, %c0_497, %c2_498, %c0_499] : memref<2x2x8x10x80xf32, #tpu.memory_space<vmem>>, vector<1x1x8x8x80xf32>
    %429 = vector.shape_cast %428 : vector<1x1x8x8x80xf32> to vector<8x8x80xf32>
    %430 = vector.shape_cast %429 : vector<8x8x80xf32> to vector<64x80xf32>
    %431 = arith.truncf %430 : vector<64x80xf32> to vector<64x80xbf16>
    %c2_500 = arith.constant 2 : index
    %c1_501 = arith.constant 1 : index
    %c0_502 = arith.constant 0 : index
    %c0_503 = arith.constant 0 : index
    %432 = vector.load %arg8[%c2_500, %c1_501, %c0_502, %c0_503] : memref<3x2x80x256xbf16, #tpu.memory_space<vmem>>, vector<1x1x80x256xbf16>
    %433 = vector.shape_cast %432 : vector<1x1x80x256xbf16> to vector<80x256xbf16>
    %cst_504 = arith.constant dense<0.000000e+00> : vector<64x256xf32>
    %434 = tpu.matmul %431, %433, %cst_504 {dimension_numbers = #tpu.dot_dimension_numbers<[1], [0], [0], [1], [0, 0, 1, 1], [], []>} : vector<64x80xbf16>, vector<80x256xbf16>, vector<64x256xf32> -> vector<64x256xf32>
    %435 = arith.addf %427, %434 : vector<64x256xf32>
    %436 = vector.broadcast %353 : vector<1x256xf32> to vector<64x256xf32>
    %437 = arith.addf %435, %436 : vector<64x256xf32>
    %cst_505 = arith.constant 0.000000e+00 : f32
    %438 = vector.broadcast %cst_505 : f32 to vector<64x256xf32>
    %439 = arith.maximumf %437, %438 : vector<64x256xf32>
    %440 = vector.extract_strided_slice %404 {offsets = [0, 0], sizes = [64, 128], strides = [1, 1]} : vector<64x256xf32> to vector<64x128xf32>
    %441 = vector.extract_strided_slice %404 {offsets = [0, 128], sizes = [64, 128], strides = [1, 1]} : vector<64x256xf32> to vector<64x128xf32>
    %442 = arith.maximumf %440, %441 : vector<64x128xf32>
    %443 = vector.extract_strided_slice %439 {offsets = [0, 0], sizes = [64, 128], strides = [1, 1]} : vector<64x256xf32> to vector<64x128xf32>
    %444 = vector.extract_strided_slice %439 {offsets = [0, 128], sizes = [64, 128], strides = [1, 1]} : vector<64x256xf32> to vector<64x128xf32>
    %445 = arith.maximumf %443, %444 : vector<64x128xf32>
    %446 = arith.maximumf %442, %445 : vector<64x128xf32>
    %447 = arith.addf %446, %118 : vector<64x128xf32>
    %c0_506 = arith.constant 0 : index
    %c0_507 = arith.constant 0 : index
    %448 = vector.load %arg12[%c0_506, %c0_507] : memref<1x128xf32, #tpu.memory_space<vmem>>, vector<1x128xf32>
    %449 = vector.broadcast %448 : vector<1x128xf32> to vector<64x128xf32>
    %450 = arith.mulf %447, %449 : vector<64x128xf32>
    %c0_508 = arith.constant 0 : index
    %c0_509 = arith.constant 0 : index
    %451 = vector.load %arg13[%c0_508, %c0_509] : memref<1x128xf32, #tpu.memory_space<vmem>>, vector<1x128xf32>
    %452 = vector.broadcast %451 : vector<1x128xf32> to vector<64x128xf32>
    %453 = arith.addf %450, %452 : vector<64x128xf32>
    %454 = vector.shape_cast %453 : vector<64x128xf32> to vector<8x8x128xf32>
    %c0_510 = arith.constant 0 : index
    %c0_511 = arith.constant 0 : index
    %c0_512 = arith.constant 0 : index
    %455 = vector.load %arg14[%c0_510, %c0_511, %c0_512] : memref<8x8x128xf32, #tpu.memory_space<vmem>>, vector<8x8x128xf32>
    tpu.vector_store %arg14[%c0_510, %c0_511, %c0_512], %454 {strides = array<i32>} : memref<8x8x128xf32, #tpu.memory_space<vmem>>, vector<8x8x128xf32>,
    return
  }
  func.func @transform_0(%arg0: i32) -> (i32, i32, i32, i32, i32) {
    %c0_i32 = arith.constant 0 : i32
    %c0_i32_0 = arith.constant 0 : i32
    %c0_i32_1 = arith.constant 0 : i32
    %c0_i32_2 = arith.constant 0 : i32
    %c0_i32_3 = arith.constant 0 : i32
    return %arg0, %c0_i32, %c0_i32_0, %c0_i32_1, %c0_i32_2 : i32, i32, i32, i32, i32
  }
  func.func @transform_1(%arg0: i32) -> (i32, i32, i32, i32) {
    %c0_i32 = arith.constant 0 : i32
    %c0_i32_0 = arith.constant 0 : i32
    %c0_i32_1 = arith.constant 0 : i32
    %c0_i32_2 = arith.constant 0 : i32
    %c0_i32_3 = arith.constant 0 : i32
    return %c0_i32, %c0_i32_0, %c0_i32_1, %c0_i32_2 : i32, i32, i32, i32
  }
  func.func @transform_2(%arg0: i32) -> (i32, i32) {
    %c0_i32 = arith.constant 0 : i32
    %c0_i32_0 = arith.constant 0 : i32
    %c0_i32_1 = arith.constant 0 : i32
    return %c0_i32, %c0_i32_0 : i32, i32
  }
  func.func @transform_3(%arg0: i32) -> (i32, i32, i32, i32) {
    %c0_i32 = arith.constant 0 : i32
    %c0_i32_0 = arith.constant 0 : i32
    %c0_i32_1 = arith.constant 0 : i32
    %c0_i32_2 = arith.constant 0 : i32
    %c0_i32_3 = arith.constant 0 : i32
    return %c0_i32, %c0_i32_0, %c0_i32_1, %c0_i32_2 : i32, i32, i32, i32
  }
  func.func @transform_4(%arg0: i32) -> (i32, i32) {
    %c0_i32 = arith.constant 0 : i32
    %c0_i32_0 = arith.constant 0 : i32
    %c0_i32_1 = arith.constant 0 : i32
    return %c0_i32, %c0_i32_0 : i32, i32
  }
  func.func @transform_5(%arg0: i32) -> (i32, i32, i32, i32) {
    %c0_i32 = arith.constant 0 : i32
    %c0_i32_0 = arith.constant 0 : i32
    %c0_i32_1 = arith.constant 0 : i32
    %c0_i32_2 = arith.constant 0 : i32
    %c0_i32_3 = arith.constant 0 : i32
    return %c0_i32, %c0_i32_0, %c0_i32_1, %c0_i32_2 : i32, i32, i32, i32
  }
  func.func @transform_6(%arg0: i32) -> (i32, i32) {
    %c0_i32 = arith.constant 0 : i32
    %c0_i32_0 = arith.constant 0 : i32
    %c0_i32_1 = arith.constant 0 : i32
    return %c0_i32, %c0_i32_0 : i32, i32
  }
  func.func @transform_7(%arg0: i32) -> (i32, i32, i32, i32) {
    %c0_i32 = arith.constant 0 : i32
    %c0_i32_0 = arith.constant 0 : i32
    %c0_i32_1 = arith.constant 0 : i32
    %c0_i32_2 = arith.constant 0 : i32
    %c0_i32_3 = arith.constant 0 : i32
    return %c0_i32, %c0_i32_0, %c0_i32_1, %c0_i32_2 : i32, i32, i32, i32
  }
  func.func @transform_8(%arg0: i32) -> (i32, i32) {
    %c0_i32 = arith.constant 0 : i32
    %c0_i32_0 = arith.constant 0 : i32
    %c0_i32_1 = arith.constant 0 : i32
    return %c0_i32, %c0_i32_0 : i32, i32
  }
  func.func @transform_9(%arg0: i32) -> (i32, i32, i32) {
    %c0_i32 = arith.constant 0 : i32
    %c0_i32_0 = arith.constant 0 : i32
    %c0_i32_1 = arith.constant 0 : i32
    %c0_i32_2 = arith.constant 0 : i32
    return %c0_i32, %c0_i32_0, %c0_i32_1 : i32, i32, i32
  }
  func.func @transform_10(%arg0: i32) -> (i32, i32) {
    %c0_i32 = arith.constant 0 : i32
    %c0_i32_0 = arith.constant 0 : i32
    %c0_i32_1 = arith.constant 0 : i32
    return %c0_i32, %c0_i32_0 : i32, i32
  }
  func.func @transform_11(%arg0: i32) -> (i32, i32) {
    %c0_i32 = arith.constant 0 : i32
    %c0_i32_0 = arith.constant 0 : i32
    %c0_i32_1 = arith.constant 0 : i32
    return %c0_i32, %c0_i32_0 : i32, i32
  }
  func.func @transform_12(%arg0: i32) -> (i32, i32) {
    %c0_i32 = arith.constant 0 : i32
    %c0_i32_0 = arith.constant 0 : i32
    %c0_i32_1 = arith.constant 0 : i32
    return %c0_i32, %c0_i32_0 : i32, i32
  }
  func.func @transform_13(%arg0: i32) -> (i32, i32, i32) {
    %c0_i32 = arith.constant 0 : i32
    %c0_i32_0 = arith.constant 0 : i32
    %c0_i32_1 = arith.constant 0 : i32
    return %arg0, %c0_i32, %c0_i32_0 : i32, i32, i32
  }
}

</mosaic_0001>

<llo_original>
// kernel: tpu_custom_call.1
$region0: #{tpu_custom_call.1}
  #allocation0 [shape = 'u32[]', space=smem, size = 0x4, offset = 0x4, fixed_abs, tag = 'smem constant byte address 0x4 - core index']
  #allocation1 [shape = 'u32[144,128]{1,0:T(1,128)}', space=vmem, size = 0x12000, scoped, tag = 'internal scratch']
  #allocation2 [shape = 'f32[2,2,8,10,80]{4,3,2,1,0:T(8,128)}', space=vmem, size = 0x40000, scoped, tag = 'scratch operand']
  %s0 = inlined_call_operand.vmem [shape: f32[8,2,2,10,30], index: 0, kind: input, shape index: {}]
  %s1 = inlined_call_operand.vmem [shape: bf16[3,2,30,128], index: 1, kind: input, shape index: {}]
  %s2 = inlined_call_operand.vmem [shape: f32[1,128], index: 2, kind: input, shape index: {}]
  %s3 = inlined_call_operand.vmem [shape: bf16[3,2,80,128], index: 3, kind: input, shape index: {}]
  %s4 = inlined_call_operand.vmem [shape: f32[1,128], index: 4, kind: input, shape index: {}]
  %s5 = inlined_call_operand.vmem [shape: bf16[3,2,80,128], index: 5, kind: input, shape index: {}]
  %s6 = inlined_call_operand.vmem [shape: f32[1,128], index: 6, kind: input, shape index: {}]
  %s7 = inlined_call_operand.vmem [shape: bf16[3,2,80,256], index: 7, kind: input, shape index: {}]
  %s8 = inlined_call_operand.vmem [shape: f32[1,256], index: 8, kind: input, shape index: {}]
  %s9 = inlined_call_operand.hbm [shape: bf16[4,64,128], index: 9, kind: input, shape index: {}]
  %s10 = inlined_call_operand.vmem [shape: f32[1,128], index: 10, kind: input, shape index: {}]
  %s11 = inlined_call_operand.vmem [shape: f32[1,128], index: 11, kind: input, shape index: {}]
  %s12 = inlined_call_operand.vmem [shape: f32[1,128], index: 12, kind: input, shape index: {}]
  %s13 = inlined_call_operand.hbm [shape: f32[8,8,128], index: 13, kind: output, shape index: {}]
  %s14 = sld [smem:[#allocation0]]
  $region66: #{tpu_custom_call.1} parent=0
    _
  %s16 = ssub.s32 1, %s14
  %s17 = scalar_select 0, %s16, %s14
  $region1: #{tpu_custom_call.1} parent=0
    #allocation3 [shape = 'u8[65536]{0}', space=vmem, size = 0x10000, scoped, tag = 'input window, operand 9, single buffered']
    #allocation4 [shape = 's32[1]{0}', space=sflag, size = 0x4, scoped, tag = 'scoped memory for tpu_custom_call.1']
    #allocation5 [shape = 's32[1]{0}', space=sflag, size = 0x4, scoped, tag = 'scoped memory for tpu_custom_call.1']
    #allocation6 [shape = 'u8[32768]{0}', space=vmem, size = 0x8000, scoped, tag = 'output window, operand 0, single buffered']
    %18 = vsyncpa [#allocation4], 0
    %19 = vsyncpa [#allocation5], 0
    // Predicated region
    $region2: #{tpu_custom_call.1} parent=1 // pred_check
      _
    $region3: #{tpu_custom_call.1} parent=1 // pred_check_branch
      %21 = sbr.rel (0) target = $region5
    $region4: #{tpu_custom_call.1} parent=1 // pred_region
      _
    $region5: #{tpu_custom_call.1} parent=1 // pred_fallthru
      _
    // Predicated region
    $region6: #{tpu_custom_call.1} parent=1 // pred_check
      _
    $region7: #{tpu_custom_call.1} parent=1 // pred_check_branch
      %23 = sbr.rel (0) target = $region9
    $region8: #{tpu_custom_call.1} parent=1 // pred_region
      _
    $region9: #{tpu_custom_call.1} parent=1 // pred_fallthru
      _
    // Predicated region
    $region10: #{tpu_custom_call.1} parent=1 // pred_check
      _
    $region11: #{tpu_custom_call.1} parent=1 // pred_check_branch
      %25 = sbr.rel (0) target = $region13
    $region12: #{tpu_custom_call.1} parent=1 // pred_region
      _
    $region13: #{tpu_custom_call.1} parent=1 // pred_fallthru
      _
    // Predicated region
    $region14: #{tpu_custom_call.1} parent=1 // pred_check
      _
    $region15: #{tpu_custom_call.1} parent=1 // pred_check_branch
      %27 = sbr.rel (0) target = $region17
    $region16: #{tpu_custom_call.1} parent=1 // pred_region
      _
    $region17: #{tpu_custom_call.1} parent=1 // pred_fallthru
      _
    // Predicated region
    $region18: #{tpu_custom_call.1} parent=1 // pred_check
      _
    $region19: #{tpu_custom_call.1} parent=1 // pred_check_branch
      %29 = sbr.rel (0) target = $region21
    $region20: #{tpu_custom_call.1} parent=1 // pred_region
      _
    $region21: #{tpu_custom_call.1} parent=1 // pred_fallthru
      _
    // Predicated region
    $region22: #{tpu_custom_call.1} parent=1 // pred_check
      _
    $region23: #{tpu_custom_call.1} parent=1 // pred_check_branch
      %31 = sbr.rel (0) target = $region25
    $region24: #{tpu_custom_call.1} parent=1 // pred_region
      _
    $region25: #{tpu_custom_call.1} parent=1 // pred_fallthru
      _
    // Predicated region
    $region26: #{tpu_custom_call.1} parent=1 // pred_check
      _
    $region27: #{tpu_custom_call.1} parent=1 // pred_check_branch
      %33 = sbr.rel (0) target = $region29
    $region28: #{tpu_custom_call.1} parent=1 // pred_region
      _
    $region29: #{tpu_custom_call.1} parent=1 // pred_fallthru
      _
    // Predicated region
    $region30: #{tpu_custom_call.1} parent=1 // pred_check
      _
    $region31: #{tpu_custom_call.1} parent=1 // pred_check_branch
      %35 = sbr.rel (0) target = $region33
    $region32: #{tpu_custom_call.1} parent=1 // pred_region
      _
    $region33: #{tpu_custom_call.1} parent=1 // pred_fallthru
      _
    // Predicated region
    $region34: #{tpu_custom_call.1} parent=1 // pred_check
      _
    $region35: #{tpu_custom_call.1} parent=1 // pred_check_branch
      %37 = sbr.rel (0) target = $region37
    $region36: #{tpu_custom_call.1} parent=1 // pred_region
      _
    $region37: #{tpu_custom_call.1} parent=1 // pred_fallthru
      _
    // Predicated region
    $region38: #{tpu_custom_call.1} parent=1 // pred_check
      _
    $region39: #{tpu_custom_call.1} parent=1 // pred_check_branch
      %39 = sbr.rel (0) target = $region41
    $region40: #{tpu_custom_call.1} parent=1 // pred_region
      %s41 = ssub.s32 2048, 2048
      %42 = vsyncadd [#allocation4], %s41
      %s43 = sshll.u32 [#allocation3], 4
      %s44 = int_to_ptr.vmem [resolvable:$true] %s43
      %49 = dma.hbm_to_vmem [thread:$0]  %s9, 2048, %s44, [#allocation4], 64, 64, 4
    $region41: #{tpu_custom_call.1} parent=1 // pred_fallthru
      _
    // Predicated region
    $region42: #{tpu_custom_call.1} parent=1 // pred_check
      _
    $region43: #{tpu_custom_call.1} parent=1 // pred_check_branch
      %51 = sbr.rel (0) target = $region45
    $region44: #{tpu_custom_call.1} parent=1 // pred_region
      _
    $region45: #{tpu_custom_call.1} parent=1 // pred_fallthru
      _
    // Predicated region
    $region46: #{tpu_custom_call.1} parent=1 // pred_check
      _
    $region47: #{tpu_custom_call.1} parent=1 // pred_check_branch
      %53 = sbr.rel (0) target = $region49
    $region48: #{tpu_custom_call.1} parent=1 // pred_region
      _
    $region49: #{tpu_custom_call.1} parent=1 // pred_fallthru
      _
    // Predicated region
    $region50: #{tpu_custom_call.1} parent=1 // pred_check
      _
    $region51: #{tpu_custom_call.1} parent=1 // pred_check_branch
      %55 = sbr.rel (0) target = $region53
    $region52: #{tpu_custom_call.1} parent=1 // pred_region
      _
    $region53: #{tpu_custom_call.1} parent=1 // pred_fallthru
      _
    // Predicated region
    $region54: #{tpu_custom_call.1} parent=1 // pred_check
      _
    $region55: #{tpu_custom_call.1} parent=1 // pred_check_branch
      %57 = sbr.rel (0) target = $region57
    $region56: #{tpu_custom_call.1} parent=1 // pred_region
      %58 = dma.done [#allocation4], 2048
    $region57: #{tpu_custom_call.1} parent=1 // pred_fallthru
      _
    %vm60 = vcmask 647168
    %61 = vst.msk [vmem:[#allocation2] sm:$0x1] %vm60, 0.0
    %62 = vst.msk [vmem:[#allocation2 + $0x10] sm:$0x1] %vm60, 0.0
    %63 = vst.msk [vmem:[#allocation2 + $0x20] sm:$0x1] %vm60, 0.0
    %64 = vst.msk [vmem:[#allocation2 + $0x30] sm:$0x1] %vm60, 0.0
    %65 = vst.msk [vmem:[#allocation2 + $0x40] sm:$0x1] %vm60, 0.0
    %66 = vst.msk [vmem:[#allocation2 + $0x50] sm:$0x1] %vm60, 0.0
    %67 = vst.msk [vmem:[#allocation2 + $0x60] sm:$0x1] %vm60, 0.0
    %68 = vst.msk [vmem:[#allocation2 + $0x70] sm:$0x1] %vm60, 0.0
    %69 = vst.msk [vmem:[#allocation2 + $0x80] sm:$0x1] %vm60, 0.0
    %70 = vst.msk [vmem:[#allocation2 + $0x90] sm:$0x1] %vm60, 0.0
    %71 = vst.msk [vmem:[#allocation2 + $0xa0] sm:$0x1] %vm60, 0.0
    %72 = vst.msk [vmem:[#allocation2 + $0xb0] sm:$0x1] %vm60, 0.0
    %73 = vst.msk [vmem:[#allocation2 + $0xc0] sm:$0x1] %vm60, 0.0
    %74 = vst.msk [vmem:[#allocation2 + $0xd0] sm:$0x1] %vm60, 0.0
    %75 = vst.msk [vmem:[#allocation2 + $0xe0] sm:$0x1] %vm60, 0.0
    %76 = vst.msk [vmem:[#allocation2 + $0xf0] sm:$0x1] %vm60, 0.0
    %77 = vst.msk [vmem:[#allocation2 + $0x100] sm:$0x1] %vm60, 0.0
    %78 = vst.msk [vmem:[#allocation2 + $0x110] sm:$0x1] %vm60, 0.0
    %79 = vst.msk [vmem:[#allocation2 + $0x120] sm:$0x1] %vm60, 0.0
    %80 = vst.msk [vmem:[#allocation2 + $0x130] sm:$0x1] %vm60, 0.0
    %81 = vst.msk [vmem:[#allocation2 + $0x140] sm:$0x1] %vm60, 0.0
    %82 = vst.msk [vmem:[#allocation2 + $0x150] sm:$0x1] %vm60, 0.0
    %83 = vst.msk [vmem:[#allocation2 + $0x160] sm:$0x1] %vm60, 0.0
    %84 = vst.msk [vmem:[#allocation2 + $0x170] sm:$0x1] %vm60, 0.0
    %85 = vst.msk [vmem:[#allocation2 + $0x180] sm:$0x1] %vm60, 0.0
    %86 = vst.msk [vmem:[#allocation2 + $0x190] sm:$0x1] %vm60, 0.0
    %87 = vst.msk [vmem:[#allocation2 + $0x1a0] sm:$0x1] %vm60, 0.0
    %88 = vst.msk [vmem:[#allocation2 + $0x1b0] sm:$0x1] %vm60, 0.0
    %89 = vst.msk [vmem:[#allocation2 + $0x1c0] sm:$0x1] %vm60, 0.0
    %90 = vst.msk [vmem:[#allocation2 + $0x1d0] sm:$0x1] %vm60, 0.0
    %91 = vst.msk [vmem:[#allocation2 + $0x1e0] sm:$0x1] %vm60, 0.0
    %92 = vst.msk [vmem:[#allocation2 + $0x1f0] sm:$0x1] %vm60, 0.0
    %93 = vst.msk [vmem:[#allocation2 + $0x9] sm:$0x1] %vm60, 0.0
    %94 = vst.msk [vmem:[#allocation2 + $0x19] sm:$0x1] %vm60, 0.0
    %95 = vst.msk [vmem:[#allocation2 + $0x29] sm:$0x1] %vm60, 0.0
    %96 = vst.msk [vmem:[#allocation2 + $0x39] sm:$0x1] %vm60, 0.0
    %97 = vst.msk [vmem:[#allocation2 + $0x49] sm:$0x1] %vm60, 0.0
    %98 = vst.msk [vmem:[#allocation2 + $0x59] sm:$0x1] %vm60, 0.0
    %99 = vst.msk [vmem:[#allocation2 + $0x69] sm:$0x1] %vm60, 0.0
    %100 = vst.msk [vmem:[#allocation2 + $0x79] sm:$0x1] %vm60, 0.0
    %101 = vst.msk [vmem:[#allocation2 + $0x89] sm:$0x1] %vm60, 0.0
    %102 = vst.msk [vmem:[#allocation2 + $0x99] sm:$0x1] %vm60, 0.0
    %103 = vst.msk [vmem:[#allocation2 + $0xa9] sm:$0x1] %vm60, 0.0
    %104 = vst.msk [vmem:[#allocation2 + $0xb9] sm:$0x1] %vm60, 0.0
    %105 = vst.msk [vmem:[#allocation2 + $0xc9] sm:$0x1] %vm60, 0.0
    %106 = vst.msk [vmem:[#allocation2 + $0xd9] sm:$0x1] %vm60, 0.0
    %107 = vst.msk [vmem:[#allocation2 + $0xe9] sm:$0x1] %vm60, 0.0
    %108 = vst.msk [vmem:[#allocation2 + $0xf9] sm:$0x1] %vm60, 0.0
    %109 = vst.msk [vmem:[#allocation2 + $0x109] sm:$0x1] %vm60, 0.0
    %110 = vst.msk [vmem:[#allocation2 + $0x119] sm:$0x1] %vm60, 0.0
    %111 = vst.msk [vmem:[#allocation2 + $0x129] sm:$0x1] %vm60, 0.0
    %112 = vst.msk [vmem:[#allocation2 + $0x139] sm:$0x1] %vm60, 0.0
    %113 = vst.msk [vmem:[#allocation2 + $0x149] sm:$0x1] %vm60, 0.0
    %114 = vst.msk [vmem:[#allocation2 + $0x159] sm:$0x1] %vm60, 0.0
    %115 = vst.msk [vmem:[#allocation2 + $0x169] sm:$0x1] %vm60, 0.0
    %116 = vst.msk [vmem:[#allocation2 + $0x179] sm:$0x1] %vm60, 0.0
    %117 = vst.msk [vmem:[#allocation2 + $0x189] sm:$0x1] %vm60, 0.0
    %118 = vst.msk [vmem:[#allocation2 + $0x199] sm:$0x1] %vm60, 0.0
    %119 = vst.msk [vmem:[#allocation2 + $0x1a9] sm:$0x1] %vm60, 0.0
    %120 = vst.msk [vmem:[#allocation2 + $0x1b9] sm:$0x1] %vm60, 0.0
    %121 = vst.msk [vmem:[#allocation2 + $0x1c9] sm:$0x1] %vm60, 0.0
    %122 = vst.msk [vmem:[#allocation2 + $0x1d9] sm:$0x1] %vm60, 0.0
    %123 = vst.msk [vmem:[#allocation2 + $0x1e9] sm:$0x1] %vm60, 0.0
    %124 = vst.msk [vmem:[#allocation2 + $0x1f9] sm:$0x1] %vm60, 0.0
    %vm125 = vcmask 64512
    %126 = vst.msk [vmem:[#allocation2 + $0x1] sm:$0xff] %vm125, 0.0
    %127 = vst.msk [vmem:[#allocation2 + $0x11] sm:$0xff] %vm125, 0.0
    %128 = vst.msk [vmem:[#allocation2 + $0x21] sm:$0xff] %vm125, 0.0
    %129 = vst.msk [vmem:[#allocation2 + $0x31] sm:$0xff] %vm125, 0.0
    %130 = vst.msk [vmem:[#allocation2 + $0x41] sm:$0xff] %vm125, 0.0
    %131 = vst.msk [vmem:[#allocation2 + $0x51] sm:$0xff] %vm125, 0.0
    %132 = vst.msk [vmem:[#allocation2 + $0x61] sm:$0xff] %vm125, 0.0
    %133 = vst.msk [vmem:[#allocation2 + $0x71] sm:$0xff] %vm125, 0.0
    %134 = vst.msk [vmem:[#allocation2 + $0x81] sm:$0xff] %vm125, 0.0
    %135 = vst.msk [vmem:[#allocation2 + $0x91] sm:$0xff] %vm125, 0.0
    %136 = vst.msk [vmem:[#allocation2 + $0xa1] sm:$0xff] %vm125, 0.0
    %137 = vst.msk [vmem:[#allocation2 + $0xb1] sm:$0xff] %vm125, 0.0
    %138 = vst.msk [vmem:[#allocation2 + $0xc1] sm:$0xff] %vm125, 0.0
    %139 = vst.msk [vmem:[#allocation2 + $0xd1] sm:$0xff] %vm125, 0.0
    %140 = vst.msk [vmem:[#allocation2 + $0xe1] sm:$0xff] %vm125, 0.0
    %141 = vst.msk [vmem:[#allocation2 + $0xf1] sm:$0xff] %vm125, 0.0
    %142 = vst.msk [vmem:[#allocation2 + $0x101] sm:$0xff] %vm125, 0.0
    %143 = vst.msk [vmem:[#allocation2 + $0x111] sm:$0xff] %vm125, 0.0
    %144 = vst.msk [vmem:[#allocation2 + $0x121] sm:$0xff] %vm125, 0.0
    %145 = vst.msk [vmem:[#allocation2 + $0x131] sm:$0xff] %vm125, 0.0
    %146 = vst.msk [vmem:[#allocation2 + $0x141] sm:$0xff] %vm125, 0.0
    %147 = vst.msk [vmem:[#allocation2 + $0x151] sm:$0xff] %vm125, 0.0
    %148 = vst.msk [vmem:[#allocation2 + $0x161] sm:$0xff] %vm125, 0.0
    %149 = vst.msk [vmem:[#allocation2 + $0x171] sm:$0xff] %vm125, 0.0
    %150 = vst.msk [vmem:[#allocation2 + $0x181] sm:$0xff] %vm125, 0.0
    %151 = vst.msk [vmem:[#allocation2 + $0x191] sm:$0xff] %vm125, 0.0
    %152 = vst.msk [vmem:[#allocation2 + $0x1a1] sm:$0xff] %vm125, 0.0
    %153 = vst.msk [vmem:[#allocation2 + $0x1b1] sm:$0xff] %vm125, 0.0
    %154 = vst.msk [vmem:[#allocation2 + $0x1c1] sm:$0xff] %vm125, 0.0
    %155 = vst.msk [vmem:[#allocation2 + $0x1d1] sm:$0xff] %vm125, 0.0
    %156 = vst.msk [vmem:[#allocation2 + $0x1e1] sm:$0xff] %vm125, 0.0
    %157 = vst.msk [vmem:[#allocation2 + $0x1f1] sm:$0xff] %vm125, 0.0
    %vm158 = vcmask 654912
    %159 = vst.msk [vmem:[#allocation2 + $0x1] sm:$0xff] %vm158, 0.0
    %160 = vst.msk [vmem:[#allocation2 + $0x11] sm:$0xff] %vm158, 0.0
    %161 = vst.msk [vmem:[#allocation2 + $0x21] sm:$0xff] %vm158, 0.0
    %162 = vst.msk [vmem:[#allocation2 + $0x31] sm:$0xff] %vm158, 0.0
    %163 = vst.msk [vmem:[#allocation2 + $0x41] sm:$0xff] %vm158, 0.0
    %164 = vst.msk [vmem:[#allocation2 + $0x51] sm:$0xff] %vm158, 0.0
    %165 = vst.msk [vmem:[#allocation2 + $0x61] sm:$0xff] %vm158, 0.0
    %166 = vst.msk [vmem:[#allocation2 + $0x71] sm:$0xff] %vm158, 0.0
    %167 = vst.msk [vmem:[#allocation2 + $0x81] sm:$0xff] %vm158, 0.0
    %168 = vst.msk [vmem:[#allocation2 + $0x91] sm:$0xff] %vm158, 0.0
    %169 = vst.msk [vmem:[#allocation2 + $0xa1] sm:$0xff] %vm158, 0.0
    %170 = vst.msk [vmem:[#allocation2 + $0xb1] sm:$0xff] %vm158, 0.0
    %171 = vst.msk [vmem:[#allocation2 + $0xc1] sm:$0xff] %vm158, 0.0
    %172 = vst.msk [vmem:[#allocation2 + $0xd1] sm:$0xff] %vm158, 0.0
    %173 = vst.msk [vmem:[#allocation2 + $0xe1] sm:$0xff] %vm158, 0.0
    %174 = vst.msk [vmem:[#allocation2 + $0xf1] sm:$0xff] %vm158, 0.0
    %175 = vst.msk [vmem:[#allocation2 + $0x101] sm:$0xff] %vm158, 0.0
    %176 = vst.msk [vmem:[#allocation2 + $0x111] sm:$0xff] %vm158, 0.0
    %177 = vst.msk [vmem:[#allocation2 + $0x121] sm:$0xff] %vm158, 0.0
    %178 = vst.msk [vmem:[#allocation2 + $0x131] sm:$0xff] %vm158, 0.0
    %179 = vst.msk [vmem:[#allocation2 + $0x141] sm:$0xff] %vm158, 0.0
    %180 = vst.msk [vmem:[#allocation2 + $0x151] sm:$0xff] %vm158, 0.0
    %181 = vst.msk [vmem:[#allocation2 + $0x161] sm:$0xff] %vm158, 0.0
    %182 = vst.msk [vmem:[#allocation2 + $0x171] sm:$0xff] %vm158, 0.0
    %183 = vst.msk [vmem:[#allocation2 + $0x181] sm:$0xff] %vm158, 0.0
    %184 = vst.msk [vmem:[#allocation2 + $0x191] sm:$0xff] %vm158, 0.0
    %185 = vst.msk [vmem:[#allocation2 + $0x1a1] sm:$0xff] %vm158, 0.0
    %186 = vst.msk [vmem:[#allocation2 + $0x1b1] sm:$0xff] %vm158, 0.0
    %187 = vst.msk [vmem:[#allocation2 + $0x1c1] sm:$0xff] %vm158, 0.0
    %188 = vst.msk [vmem:[#allocation2 + $0x1d1] sm:$0xff] %vm158, 0.0
    %189 = vst.msk [vmem:[#allocation2 + $0x1e1] sm:$0xff] %vm158, 0.0
    %190 = vst.msk [vmem:[#allocation2 + $0x1f1] sm:$0xff] %vm158, 0.0
    %v191 = vld [vmem:[%s2] sm:$0x1]
    %s192 = scalar_lea.vmem %s0, 32
    %v193 = vld [vmem:[%s192] sm:$0xff]
    %v194 = vld [vmem:[%s192 + $0x40] sm:$0xff]
    %v195 = vld [vmem:[%s192 + $0x80] sm:$0xff]
    %v196 = vld [vmem:[%s192 + $0xc0] sm:$0xff]
    %v197 = vld [vmem:[%s192 + $0x100] sm:$0xff]
    %v198 = vld [vmem:[%s192 + $0x140] sm:$0xff]
    %v199 = vld [vmem:[%s192 + $0x180] sm:$0xff]
    %v200 = vld [vmem:[%s192 + $0x1c0] sm:$0xff]
    %v201 = vpack.c.bf16 %v194, %v193
    %v202 = vpack.c.bf16 %v196, %v195
    %v203 = vpack.c.bf16 %v198, %v197
    %v204 = vpack.c.bf16 %v200, %v199
    %v205 = vld [vmem:[%s1] sm:$0xf]
    %v206 = vld [vmem:[%s1 + $0x4] sm:$0xf]
    %v207 = vld [vmem:[%s1 + $0x8] sm:$0xf]
    %v208 = vld [vmem:[%s1 + $0xc] sm:$0x7]
    %s209 = scalar_lea.vmem %s0, 48
    %v210 = vld [vmem:[%s209] sm:$0xff]
    %v211 = vld [vmem:[%s209 + $0x40] sm:$0xff]
    %v212 = vld [vmem:[%s209 + $0x80] sm:$0xff]
    %v213 = vld [vmem:[%s209 + $0xc0] sm:$0xff]
    %v214 = vld [vmem:[%s209 + $0x100] sm:$0xff]
    %v215 = vld [vmem:[%s209 + $0x140] sm:$0xff]
    %v216 = vld [vmem:[%s209 + $0x180] sm:$0xff]
    %v217 = vld [vmem:[%s209 + $0x1c0] sm:$0xff]
    %v218 = vpack.c.bf16 %v211, %v210
    %v219 = vpack.c.bf16 %v213, %v212
    %v220 = vpack.c.bf16 %v215, %v214
    %v221 = vpack.c.bf16 %v217, %v216
    %s222 = scalar_lea.vmem %s1, 16
    %v223 = vld [vmem:[%s222] sm:$0xf]
    %v224 = vld [vmem:[%s222 + $0x4] sm:$0xf]
    %v225 = vld [vmem:[%s222 + $0x8] sm:$0xf]
    %v226 = vld [vmem:[%s222 + $0xc] sm:$0x7]
    %v231 = vunpack.c.l.b16 %v223
    %v232 = vunpack.c.l.b16 %v224
    %v233 = vunpack.c.l.b16 %v225
    %v234 = vunpack.c.l.b16 %v226
    %v235 = vpack.c.b16 %v232, %v231
    %v236 = vpack.c.b16 %v234, %v233
    %vm238 = vcmask 244736
    %v240 = vsel %vm238, %v218, 0
    %v243 = vsel %vm238, %v219, 0
    %v246 = vsel %vm238, %v220, 0
    %v249 = vsel %vm238, %v221, 0
    %vm251 = vcmask 1046528
    %v253 = vsel %vm251, %v236, 0
    %255 = vmatprep.subr.bf16.mxu0 0
    %256 = vmatpush1.bf16.msra.mxu0 0
    %257 = vmatprep.subr.bf16.mxu0 0
    %258 = vmatpush1.bf16.msra.mxu0 0
    %259 = vmatprep.subr.bf16.mxu0 0
    %260 = vmatpush1.bf16.msra.mxu0 0
    %261 = vmatprep.subr.bf16.mxu0 0
    %262 = vmatpush1.bf16.msra.mxu0 0
    %263 = vmatprep.subr.bf16.mxu0 0
    %264 = vmatpush1.bf16.msra.mxu0 0
    %265 = vmatprep.subr.bf16.mxu0 0
    %266 = vmatpush1.bf16.msra.mxu0 0
    %267 = vmatprep.subr.bf16.mxu0 0
    %268 = vmatpush1.bf16.msra.mxu0 %v253
    %269 = vmatprep.subr.bf16.mxu0 0
    %270 = vmatpush1.bf16.msra.mxu0 %v235
    %271 = vmatprep.subr.bf16.mxu0 0
    %272 = vmatpush2.bf16.msra.mxu0 0
    %273 = vmatprep.subr.bf16.mxu0 0
    %274 = vmatpush2.bf16.msra.mxu0 0
    %275 = vmatprep.subr.bf16.mxu0 0
    %276 = vmatpush2.bf16.msra.mxu0 0
    %277 = vmatprep.subr.bf16.mxu0 0
    %278 = vmatpush2.bf16.msra.mxu0 0
    %279 = vmatprep.subr.bf16.mxu0 0
    %280 = vmatpush2.bf16.msra.mxu0 0
    %281 = vmatprep.subr.bf16.mxu0 0
    %282 = vmatpush2.bf16.msra.mxu0 0
    %283 = vmatprep.subr.bf16.mxu0 0
    %284 = vmatpush2.bf16.msra.mxu0 0
    %285 = vmatprep.subr.bf16.mxu0 0
    %286 = vmatpush2.bf16.msra.mxu0 0
    %287 = vmatprep.mubr.bf16.mxu0 0
    %288 = vmatmul.mubr.bf16.gmra.mxu0 %v240
    %v289 = vpop.f32.mrf.mxu0
    %v290 = vadd.f32 0.0, %v289
    %v291 = vpop.f32.mrf.mxu0
    %v292 = vpop.f32.mrf.mxu0
    %v293 = vadd.f32 0.0, %v292
    %v294 = vpop.f32.mrf.mxu0
    %295 = vmatprep.mubr.bf16.mxu0 0
    %296 = vmatmul.mubr.bf16.gmra.mxu0 %v243
    %v297 = vpop.f32.mrf.mxu0
    %v298 = vadd.f32 0.0, %v297
    %v299 = vpop.f32.mrf.mxu0
    %v300 = vpop.f32.mrf.mxu0
    %v301 = vadd.f32 0.0, %v300
    %v302 = vpop.f32.mrf.mxu0
    %303 = vmatprep.mubr.bf16.mxu0 0
    %304 = vmatmul.mubr.bf16.gmra.mxu0 %v246
    %v305 = vpop.f32.mrf.mxu0
    %v306 = vadd.f32 0.0, %v305
    %v307 = vpop.f32.mrf.mxu0
    %v308 = vpop.f32.mrf.mxu0
    %v309 = vadd.f32 0.0, %v308
    %v310 = vpop.f32.mrf.mxu0
    %311 = vmatprep.mubr.bf16.mxu0 0
    %312 = vmatmul.mubr.bf16.gmra.mxu0 %v249
    %v313 = vpop.f32.mrf.mxu0
    %v314 = vadd.f32 0.0, %v313
    %v315 = vpop.f32.mrf.mxu0
    %v316 = vpop.f32.mrf.mxu0
    %v317 = vadd.f32 0.0, %v316
    %v318 = vpop.f32.mrf.mxu0
    %319 = vdwg.mxu0
    %v324 = vunpack.c.l.b16 %v205
    %v325 = vunpack.c.l.b16 %v206
    %v326 = vunpack.c.l.b16 %v207
    %v327 = vunpack.c.l.b16 %v208
    %v328 = vpack.c.b16 %v325, %v324
    %v329 = vpack.c.b16 %v327, %v326
    %v332 = vsel %vm238, %v201, 0
    %v335 = vsel %vm238, %v202, 0
    %v338 = vsel %vm238, %v203, 0
    %v341 = vsel %vm238, %v204, 0
    %v344 = vsel %vm251, %v329, 0
    %346 = vmatprep.subr.bf16.mxu0 0
    %347 = vmatpush1.bf16.msra.mxu0 0
    %348 = vmatprep.subr.bf16.mxu0 0
    %349 = vmatpush1.bf16.msra.mxu0 0
    %350 = vmatprep.subr.bf16.mxu0 0
    %351 = vmatpush1.bf16.msra.mxu0 0
    %352 = vmatprep.subr.bf16.mxu0 0
    %353 = vmatpush1.bf16.msra.mxu0 0
    %354 = vmatprep.subr.bf16.mxu0 0
    %355 = vmatpush1.bf16.msra.mxu0 0
    %356 = vmatprep.subr.bf16.mxu0 0
    %357 = vmatpush1.bf16.msra.mxu0 0
    %358 = vmatprep.subr.bf16.mxu0 0
    %359 = vmatpush1.bf16.msra.mxu0 %v344
    %360 = vmatprep.subr.bf16.mxu0 0
    %361 = vmatpush1.bf16.msra.mxu0 %v328
    %362 = vmatprep.subr.bf16.mxu0 0
    %363 = vmatpush2.bf16.msra.mxu0 0
    %364 = vmatprep.subr.bf16.mxu0 0
    %365 = vmatpush2.bf16.msra.mxu0 0
    %366 = vmatprep.subr.bf16.mxu0 0
    %367 = vmatpush2.bf16.msra.mxu0 0
    %368 = vmatprep.subr.bf16.mxu0 0
    %369 = vmatpush2.bf16.msra.mxu0 0
    %370 = vmatprep.subr.bf16.mxu0 0
    %371 = vmatpush2.bf16.msra.mxu0 0
    %372 = vmatprep.subr.bf16.mxu0 0
    %373 = vmatpush2.bf16.msra.mxu0 0
    %374 = vmatprep.subr.bf16.mxu0 0
    %375 = vmatpush2.bf16.msra.mxu0 0
    %376 = vmatprep.subr.bf16.mxu0 0
    %377 = vmatpush2.bf16.msra.mxu0 0
    %378 = vmatprep.mubr.bf16.mxu0 0
    %379 = vmatmul.mubr.bf16.gmra.mxu0 %v332
    %v380 = vpop.f32.mrf.mxu0
    %v381 = vadd.f32 %v290, %v380
    %v382 = vpop.f32.mrf.mxu0
    %v383 = vpop.f32.mrf.mxu0
    %v384 = vadd.f32 %v293, %v383
    %v385 = vpop.f32.mrf.mxu0
    %386 = vmatprep.mubr.bf16.mxu0 0
    %387 = vmatmul.mubr.bf16.gmra.mxu0 %v335
    %v388 = vpop.f32.mrf.mxu0
    %v389 = vadd.f32 %v298, %v388
    %v390 = vpop.f32.mrf.mxu0
    %v391 = vpop.f32.mrf.mxu0
    %v392 = vadd.f32 %v301, %v391
    %v393 = vpop.f32.mrf.mxu0
    %394 = vmatprep.mubr.bf16.mxu0 0
    %395 = vmatmul.mubr.bf16.gmra.mxu0 %v338
    %v396 = vpop.f32.mrf.mxu0
    %v397 = vadd.f32 %v306, %v396
    %v398 = vpop.f32.mrf.mxu0
    %v399 = vpop.f32.mrf.mxu0
    %v400 = vadd.f32 %v309, %v399
    %v401 = vpop.f32.mrf.mxu0
    %402 = vmatprep.mubr.bf16.mxu0 0
    %403 = vmatmul.mubr.bf16.gmra.mxu0 %v341
    %v404 = vpop.f32.mrf.mxu0
    %v405 = vadd.f32 %v314, %v404
    %v406 = vpop.f32.mrf.mxu0
    %v407 = vpop.f32.mrf.mxu0
    %v408 = vadd.f32 %v317, %v407
    %v409 = vpop.f32.mrf.mxu0
    %410 = vdwg.mxu0
    %v411 = vld [vmem:[%s0 + $0x1] sm:$0xff]
    %v412 = vld [vmem:[%s0 + $0x41] sm:$0xff]
    %v413 = vld [vmem:[%s0 + $0x81] sm:$0xff]
    %v414 = vld [vmem:[%s0 + $0xc1] sm:$0xff]
    %v415 = vld [vmem:[%s0 + $0x101] sm:$0xff]
    %v416 = vld [vmem:[%s0 + $0x141] sm:$0xff]
    %v417 = vld [vmem:[%s0 + $0x181] sm:$0xff]
    %v418 = vld [vmem:[%s0 + $0x1c1] sm:$0xff]
    %v419 = vpack.c.bf16 %v412, %v411
    %v420 = vpack.c.bf16 %v414, %v413
    %v421 = vpack.c.bf16 %v416, %v415
    %v422 = vpack.c.bf16 %v418, %v417
    %s423 = scalar_lea.vmem %s1, 32
    %v424 = vld [vmem:[%s423] sm:$0xf]
    %v425 = vld [vmem:[%s423 + $0x4] sm:$0xf]
    %v426 = vld [vmem:[%s423 + $0x8] sm:$0xf]
    %v427 = vld [vmem:[%s423 + $0xc] sm:$0x7]
    %v432 = vunpack.c.l.b16 %v424
    %v433 = vunpack.c.l.b16 %v425
    %v434 = vunpack.c.l.b16 %v426
    %v435 = vunpack.c.l.b16 %v427
    %v436 = vpack.c.b16 %v433, %v432
    %v437 = vpack.c.b16 %v435, %v434
    %v440 = vsel %vm238, %v419, 0
    %v443 = vsel %vm238, %v420, 0
    %v446 = vsel %vm238, %v421, 0
    %v449 = vsel %vm238, %v422, 0
    %v452 = vsel %vm251, %v437, 0
    %454 = vmatprep.subr.bf16.mxu0 0
    %455 = vmatpush1.bf16.msra.mxu0 0
    %456 = vmatprep.subr.bf16.mxu0 0
    %457 = vmatpush1.bf16.msra.mxu0 0
    %458 = vmatprep.subr.bf16.mxu0 0
    %459 = vmatpush1.bf16.msra.mxu0 0
    %460 = vmatprep.subr.bf16.mxu0 0
    %461 = vmatpush1.bf16.msra.mxu0 0
    %462 = vmatprep.subr.bf16.mxu0 0
    %463 = vmatpush1.bf16.msra.mxu0 0
    %464 = vmatprep.subr.bf16.mxu0 0
    %465 = vmatpush1.bf16.msra.mxu0 0
    %466 = vmatprep.subr.bf16.mxu0 0
    %467 = vmatpush1.bf16.msra.mxu0 %v452
    %468 = vmatprep.subr.bf16.mxu0 0
    %469 = vmatpush1.bf16.msra.mxu0 %v436
    %470 = vmatprep.subr.bf16.mxu0 0
    %471 = vmatpush2.bf16.msra.mxu0 0
    %472 = vmatprep.subr.bf16.mxu0 0
    %473 = vmatpush2.bf16.msra.mxu0 0
    %474 = vmatprep.subr.bf16.mxu0 0
    %475 = vmatpush2.bf16.msra.mxu0 0
    %476 = vmatprep.subr.bf16.mxu0 0
    %477 = vmatpush2.bf16.msra.mxu0 0
    %478 = vmatprep.subr.bf16.mxu0 0
    %479 = vmatpush2.bf16.msra.mxu0 0
    %480 = vmatprep.subr.bf16.mxu0 0
    %481 = vmatpush2.bf16.msra.mxu0 0
    %482 = vmatprep.subr.bf16.mxu0 0
    %483 = vmatpush2.bf16.msra.mxu0 0
    %484 = vmatprep.subr.bf16.mxu0 0
    %485 = vmatpush2.bf16.msra.mxu0 0
    %486 = vmatprep.mubr.bf16.mxu0 0
    %487 = vmatmul.mubr.bf16.gmra.mxu0 %v440
    %v488 = vpop.f32.mrf.mxu0
    %v489 = vadd.f32 0.0, %v488
    %v490 = vpop.f32.mrf.mxu0
    %v491 = vpop.f32.mrf.mxu0
    %v492 = vadd.f32 0.0, %v491
    %v493 = vpop.f32.mrf.mxu0
    %494 = vmatprep.mubr.bf16.mxu0 0
    %495 = vmatmul.mubr.bf16.gmra.mxu0 %v443
    %v496 = vpop.f32.mrf.mxu0
    %v497 = vadd.f32 0.0, %v496
    %v498 = vpop.f32.mrf.mxu0
    %v499 = vpop.f32.mrf.mxu0
    %v500 = vadd.f32 0.0, %v499
    %v501 = vpop.f32.mrf.mxu0
    %502 = vmatprep.mubr.bf16.mxu0 0
    %503 = vmatmul.mubr.bf16.gmra.mxu0 %v446
    %v504 = vpop.f32.mrf.mxu0
    %v505 = vadd.f32 0.0, %v504
    %v506 = vpop.f32.mrf.mxu0
    %v507 = vpop.f32.mrf.mxu0
    %v508 = vadd.f32 0.0, %v507
    %v509 = vpop.f32.mrf.mxu0
    %510 = vmatprep.mubr.bf16.mxu0 0
    %511 = vmatmul.mubr.bf16.gmra.mxu0 %v449
    %v512 = vpop.f32.mrf.mxu0
    %v513 = vadd.f32 0.0, %v512
    %v514 = vpop.f32.mrf.mxu0
    %v515 = vpop.f32.mrf.mxu0
    %v516 = vadd.f32 0.0, %v515
    %v517 = vpop.f32.mrf.mxu0
    %518 = vdwg.mxu0
    %v519 = vadd.f32 %v381, %v489
    %v520 = vadd.f32 %v384, %v492
    %v521 = vadd.f32 %v389, %v497
    %v522 = vadd.f32 %v392, %v500
    %v523 = vadd.f32 %v397, %v505
    %v524 = vadd.f32 %v400, %v508
    %v525 = vadd.f32 %v405, %v513
    %v526 = vadd.f32 %v408, %v516
    %s527 = scalar_lea.vmem %s0, 16
    %v528 = vld [vmem:[%s527 + $0x1] sm:$0xff]
    %v529 = vld [vmem:[%s527 + $0x41] sm:$0xff]
    %v530 = vld [vmem:[%s527 + $0x81] sm:$0xff]
    %v531 = vld [vmem:[%s527 + $0xc1] sm:$0xff]
    %v532 = vld [vmem:[%s527 + $0x101] sm:$0xff]
    %v533 = vld [vmem:[%s527 + $0x141] sm:$0xff]
    %v534 = vld [vmem:[%s527 + $0x181] sm:$0xff]
    %v535 = vld [vmem:[%s527 + $0x1c1] sm:$0xff]
    %v536 = vpack.c.bf16 %v529, %v528
    %v537 = vpack.c.bf16 %v531, %v530
    %v538 = vpack.c.bf16 %v533, %v532
    %v539 = vpack.c.bf16 %v535, %v534
    %s540 = scalar_lea.vmem %s1, 48
    %v541 = vld [vmem:[%s540] sm:$0xf]
    %v542 = vld [vmem:[%s540 + $0x4] sm:$0xf]
    %v543 = vld [vmem:[%s540 + $0x8] sm:$0xf]
    %v544 = vld [vmem:[%s540 + $0xc] sm:$0x7]
    %v549 = vunpack.c.l.b16 %v541
    %v550 = vunpack.c.l.b16 %v542
    %v551 = vunpack.c.l.b16 %v543
    %v552 = vunpack.c.l.b16 %v544
    %v553 = vpack.c.b16 %v550, %v549
    %v554 = vpack.c.b16 %v552, %v551
    %v557 = vsel %vm238, %v536, 0
    %v560 = vsel %vm238, %v537, 0
    %v563 = vsel %vm238, %v538, 0
    %v566 = vsel %vm238, %v539, 0
    %v569 = vsel %vm251, %v554, 0
    %571 = vmatprep.subr.bf16.mxu0 0
    %572 = vmatpush1.bf16.msra.mxu0 0
    %573 = vmatprep.subr.bf16.mxu0 0
    %574 = vmatpush1.bf16.msra.mxu0 0
    %575 = vmatprep.subr.bf16.mxu0 0
    %576 = vmatpush1.bf16.msra.mxu0 0
    %577 = vmatprep.subr.bf16.mxu0 0
    %578 = vmatpush1.bf16.msra.mxu0 0
    %579 = vmatprep.subr.bf16.mxu0 0
    %580 = vmatpush1.bf16.msra.mxu0 0
    %581 = vmatprep.subr.bf16.mxu0 0
    %582 = vmatpush1.bf16.msra.mxu0 0
    %583 = vmatprep.subr.bf16.mxu0 0
    %584 = vmatpush1.bf16.msra.mxu0 %v569
    %585 = vmatprep.subr.bf16.mxu0 0
    %586 = vmatpush1.bf16.msra.mxu0 %v553
    %587 = vmatprep.subr.bf16.mxu0 0
    %588 = vmatpush2.bf16.msra.mxu0 0
    %589 = vmatprep.subr.bf16.mxu0 0
    %590 = vmatpush2.bf16.msra.mxu0 0
    %591 = vmatprep.subr.bf16.mxu0 0
    %592 = vmatpush2.bf16.msra.mxu0 0
    %593 = vmatprep.subr.bf16.mxu0 0
    %594 = vmatpush2.bf16.msra.mxu0 0
    %595 = vmatprep.subr.bf16.mxu0 0
    %596 = vmatpush2.bf16.msra.mxu0 0
    %597 = vmatprep.subr.bf16.mxu0 0
    %598 = vmatpush2.bf16.msra.mxu0 0
    %599 = vmatprep.subr.bf16.mxu0 0
    %600 = vmatpush2.bf16.msra.mxu0 0
    %601 = vmatprep.subr.bf16.mxu0 0
    %602 = vmatpush2.bf16.msra.mxu0 0
    %603 = vmatprep.mubr.bf16.mxu0 0
    %604 = vmatmul.mubr.bf16.gmra.mxu0 %v557
    %v605 = vpop.f32.mrf.mxu0
    %v606 = vadd.f32 0.0, %v605
    %v607 = vpop.f32.mrf.mxu0
    %v608 = vpop.f32.mrf.mxu0
    %v609 = vadd.f32 0.0, %v608
    %v610 = vpop.f32.mrf.mxu0
    %611 = vmatprep.mubr.bf16.mxu0 0
    %612 = vmatmul.mubr.bf16.gmra.mxu0 %v560
    %v613 = vpop.f32.mrf.mxu0
    %v614 = vadd.f32 0.0, %v613
    %v615 = vpop.f32.mrf.mxu0
    %v616 = vpop.f32.mrf.mxu0
    %v617 = vadd.f32 0.0, %v616
    %v618 = vpop.f32.mrf.mxu0
    %619 = vmatprep.mubr.bf16.mxu0 0
    %620 = vmatmul.mubr.bf16.gmra.mxu0 %v563
    %v621 = vpop.f32.mrf.mxu0
    %v622 = vadd.f32 0.0, %v621
    %v623 = vpop.f32.mrf.mxu0
    %v624 = vpop.f32.mrf.mxu0
    %v625 = vadd.f32 0.0, %v624
    %v626 = vpop.f32.mrf.mxu0
    %627 = vmatprep.mubr.bf16.mxu0 0
    %628 = vmatmul.mubr.bf16.gmra.mxu0 %v566
    %v629 = vpop.f32.mrf.mxu0
    %v630 = vadd.f32 0.0, %v629
    %v631 = vpop.f32.mrf.mxu0
    %v632 = vpop.f32.mrf.mxu0
    %v633 = vadd.f32 0.0, %v632
    %v634 = vpop.f32.mrf.mxu0
    %635 = vdwg.mxu0
    %v636 = vadd.f32 %v519, %v606
    %v637 = vadd.f32 %v520, %v609
    %v638 = vadd.f32 %v521, %v614
    %v639 = vadd.f32 %v522, %v617
    %v640 = vadd.f32 %v523, %v622
    %v641 = vadd.f32 %v524, %v625
    %v642 = vadd.f32 %v525, %v630
    %v643 = vadd.f32 %v526, %v633
    %v644 = vld [vmem:[%s192 + $0x1] sm:$0xff]
    %v645 = vld [vmem:[%s192 + $0x41] sm:$0xff]
    %v646 = vld [vmem:[%s192 + $0x81] sm:$0xff]
    %v647 = vld [vmem:[%s192 + $0xc1] sm:$0xff]
    %v648 = vld [vmem:[%s192 + $0x101] sm:$0xff]
    %v649 = vld [vmem:[%s192 + $0x141] sm:$0xff]
    %v650 = vld [vmem:[%s192 + $0x181] sm:$0xff]
    %v651 = vld [vmem:[%s192 + $0x1c1] sm:$0xff]
    %v652 = vpack.c.bf16 %v645, %v644
    %v653 = vpack.c.bf16 %v647, %v646
    %v654 = vpack.c.bf16 %v649, %v648
    %v655 = vpack.c.bf16 %v651, %v650
    %s656 = scalar_lea.vmem %s1, 64
    %v657 = vld [vmem:[%s656] sm:$0xf]
    %v658 = vld [vmem:[%s656 + $0x4] sm:$0xf]
    %v659 = vld [vmem:[%s656 + $0x8] sm:$0xf]
    %v660 = vld [vmem:[%s656 + $0xc] sm:$0x7]
    %v665 = vunpack.c.l.b16 %v657
    %v666 = vunpack.c.l.b16 %v658
    %v667 = vunpack.c.l.b16 %v659
    %v668 = vunpack.c.l.b16 %v660
    %v669 = vpack.c.b16 %v666, %v665
    %v670 = vpack.c.b16 %v668, %v667
    %v673 = vsel %vm238, %v652, 0
    %v676 = vsel %vm238, %v653, 0
    %v679 = vsel %vm238, %v654, 0
    %v682 = vsel %vm238, %v655, 0
    %v685 = vsel %vm251, %v670, 0
    %687 = vmatprep.subr.bf16.mxu0 0
    %688 = vmatpush1.bf16.msra.mxu0 0
    %689 = vmatprep.subr.bf16.mxu0 0
    %690 = vmatpush1.bf16.msra.mxu0 0
    %691 = vmatprep.subr.bf16.mxu0 0
    %692 = vmatpush1.bf16.msra.mxu0 0
    %693 = vmatprep.subr.bf16.mxu0 0
    %694 = vmatpush1.bf16.msra.mxu0 0
    %695 = vmatprep.subr.bf16.mxu0 0
    %696 = vmatpush1.bf16.msra.mxu0 0
    %697 = vmatprep.subr.bf16.mxu0 0
    %698 = vmatpush1.bf16.msra.mxu0 0
    %699 = vmatprep.subr.bf16.mxu0 0
    %700 = vmatpush1.bf16.msra.mxu0 %v685
    %701 = vmatprep.subr.bf16.mxu0 0
    %702 = vmatpush1.bf16.msra.mxu0 %v669
    %703 = vmatprep.subr.bf16.mxu0 0
    %704 = vmatpush2.bf16.msra.mxu0 0
    %705 = vmatprep.subr.bf16.mxu0 0
    %706 = vmatpush2.bf16.msra.mxu0 0
    %707 = vmatprep.subr.bf16.mxu0 0
    %708 = vmatpush2.bf16.msra.mxu0 0
    %709 = vmatprep.subr.bf16.mxu0 0
    %710 = vmatpush2.bf16.msra.mxu0 0
    %711 = vmatprep.subr.bf16.mxu0 0
    %712 = vmatpush2.bf16.msra.mxu0 0
    %713 = vmatprep.subr.bf16.mxu0 0
    %714 = vmatpush2.bf16.msra.mxu0 0
    %715 = vmatprep.subr.bf16.mxu0 0
    %716 = vmatpush2.bf16.msra.mxu0 0
    %717 = vmatprep.subr.bf16.mxu0 0
    %718 = vmatpush2.bf16.msra.mxu0 0
    %719 = vmatprep.mubr.bf16.mxu0 0
    %720 = vmatmul.mubr.bf16.gmra.mxu0 %v673
    %v721 = vpop.f32.mrf.mxu0
    %v722 = vadd.f32 0.0, %v721
    %v723 = vpop.f32.mrf.mxu0
    %v724 = vpop.f32.mrf.mxu0
    %v725 = vadd.f32 0.0, %v724
    %v726 = vpop.f32.mrf.mxu0
    %727 = vmatprep.mubr.bf16.mxu0 0
    %728 = vmatmul.mubr.bf16.gmra.mxu0 %v676
    %v729 = vpop.f32.mrf.mxu0
    %v730 = vadd.f32 0.0, %v729
    %v731 = vpop.f32.mrf.mxu0
    %v732 = vpop.f32.mrf.mxu0
    %v733 = vadd.f32 0.0, %v732
    %v734 = vpop.f32.mrf.mxu0
    %735 = vmatprep.mubr.bf16.mxu0 0
    %736 = vmatmul.mubr.bf16.gmra.mxu0 %v679
    %v737 = vpop.f32.mrf.mxu0
    %v738 = vadd.f32 0.0, %v737
    %v739 = vpop.f32.mrf.mxu0
    %v740 = vpop.f32.mrf.mxu0
    %v741 = vadd.f32 0.0, %v740
    %v742 = vpop.f32.mrf.mxu0
    %743 = vmatprep.mubr.bf16.mxu0 0
    %744 = vmatmul.mubr.bf16.gmra.mxu0 %v682
    %v745 = vpop.f32.mrf.mxu0
    %v746 = vadd.f32 0.0, %v745
    %v747 = vpop.f32.mrf.mxu0
    %v748 = vpop.f32.mrf.mxu0
    %v749 = vadd.f32 0.0, %v748
    %v750 = vpop.f32.mrf.mxu0
    %751 = vdwg.mxu0
    %v752 = vadd.f32 %v636, %v722
    %v753 = vadd.f32 %v637, %v725
    %v754 = vadd.f32 %v638, %v730
    %v755 = vadd.f32 %v639, %v733
    %v756 = vadd.f32 %v640, %v738
    %v757 = vadd.f32 %v641, %v741
    %v758 = vadd.f32 %v642, %v746
    %v759 = vadd.f32 %v643, %v749
    %v760 = vld [vmem:[%s209 + $0x1] sm:$0xff]
    %v761 = vld [vmem:[%s209 + $0x41] sm:$0xff]
    %v762 = vld [vmem:[%s209 + $0x81] sm:$0xff]
    %v763 = vld [vmem:[%s209 + $0xc1] sm:$0xff]
    %v764 = vld [vmem:[%s209 + $0x101] sm:$0xff]
    %v765 = vld [vmem:[%s209 + $0x141] sm:$0xff]
    %v766 = vld [vmem:[%s209 + $0x181] sm:$0xff]
    %v767 = vld [vmem:[%s209 + $0x1c1] sm:$0xff]
    %v768 = vpack.c.bf16 %v761, %v760
    %v769 = vpack.c.bf16 %v763, %v762
    %v770 = vpack.c.bf16 %v765, %v764
    %v771 = vpack.c.bf16 %v767, %v766
    %s772 = scalar_lea.vmem %s1, 80
    %v773 = vld [vmem:[%s772] sm:$0xf]
    %v774 = vld [vmem:[%s772 + $0x4] sm:$0xf]
    %v775 = vld [vmem:[%s772 + $0x8] sm:$0xf]
    %v776 = vld [vmem:[%s772 + $0xc] sm:$0x7]
    %v781 = vunpack.c.l.b16 %v773
    %v782 = vunpack.c.l.b16 %v774
    %v783 = vunpack.c.l.b16 %v775
    %v784 = vunpack.c.l.b16 %v776
    %v785 = vpack.c.b16 %v782, %v781
    %v786 = vpack.c.b16 %v784, %v783
    %v789 = vsel %vm238, %v768, 0
    %v792 = vsel %vm238, %v769, 0
    %v795 = vsel %vm238, %v770, 0
    %v798 = vsel %vm238, %v771, 0
    %v801 = vsel %vm251, %v786, 0
    %803 = vmatprep.subr.bf16.mxu0 0
    %804 = vmatpush1.bf16.msra.mxu0 0
    %805 = vmatprep.subr.bf16.mxu0 0
    %806 = vmatpush1.bf16.msra.mxu0 0
    %807 = vmatprep.subr.bf16.mxu0 0
    %808 = vmatpush1.bf16.msra.mxu0 0
    %809 = vmatprep.subr.bf16.mxu0 0
    %810 = vmatpush1.bf16.msra.mxu0 0
    %811 = vmatprep.subr.bf16.mxu0 0
    %812 = vmatpush1.bf16.msra.mxu0 0
    %813 = vmatprep.subr.bf16.mxu0 0
    %814 = vmatpush1.bf16.msra.mxu0 0
    %815 = vmatprep.subr.bf16.mxu0 0
    %816 = vmatpush1.bf16.msra.mxu0 %v801
    %817 = vmatprep.subr.bf16.mxu0 0
    %818 = vmatpush1.bf16.msra.mxu0 %v785
    %819 = vmatprep.subr.bf16.mxu0 0
    %820 = vmatpush2.bf16.msra.mxu0 0
    %821 = vmatprep.subr.bf16.mxu0 0
    %822 = vmatpush2.bf16.msra.mxu0 0
    %823 = vmatprep.subr.bf16.mxu0 0
    %824 = vmatpush2.bf16.msra.mxu0 0
    %825 = vmatprep.subr.bf16.mxu0 0
    %826 = vmatpush2.bf16.msra.mxu0 0
    %827 = vmatprep.subr.bf16.mxu0 0
    %828 = vmatpush2.bf16.msra.mxu0 0
    %829 = vmatprep.subr.bf16.mxu0 0
    %830 = vmatpush2.bf16.msra.mxu0 0
    %831 = vmatprep.subr.bf16.mxu0 0
    %832 = vmatpush2.bf16.msra.mxu0 0
    %833 = vmatprep.subr.bf16.mxu0 0
    %834 = vmatpush2.bf16.msra.mxu0 0
    %835 = vmatprep.mubr.bf16.mxu0 0
    %836 = vmatmul.mubr.bf16.gmra.mxu0 %v789
    %v837 = vpop.f32.mrf.mxu0
    %v838 = vadd.f32 0.0, %v837
    %v839 = vpop.f32.mrf.mxu0
    %v840 = vpop.f32.mrf.mxu0
    %v841 = vadd.f32 0.0, %v840
    %v842 = vpop.f32.mrf.mxu0
    %843 = vmatprep.mubr.bf16.mxu0 0
    %844 = vmatmul.mubr.bf16.gmra.mxu0 %v792
    %v845 = vpop.f32.mrf.mxu0
    %v846 = vadd.f32 0.0, %v845
    %v847 = vpop.f32.mrf.mxu0
    %v848 = vpop.f32.mrf.mxu0
    %v849 = vadd.f32 0.0, %v848
    %v850 = vpop.f32.mrf.mxu0
    %851 = vmatprep.mubr.bf16.mxu0 0
    %852 = vmatmul.mubr.bf16.gmra.mxu0 %v795
    %v853 = vpop.f32.mrf.mxu0
    %v854 = vadd.f32 0.0, %v853
    %v855 = vpop.f32.mrf.mxu0
    %v856 = vpop.f32.mrf.mxu0
    %v857 = vadd.f32 0.0, %v856
    %v858 = vpop.f32.mrf.mxu0
    %859 = vmatprep.mubr.bf16.mxu0 0
    %860 = vmatmul.mubr.bf16.gmra.mxu0 %v798
    %v861 = vpop.f32.mrf.mxu0
    %v862 = vadd.f32 0.0, %v861
    %v863 = vpop.f32.mrf.mxu0
    %v864 = vpop.f32.mrf.mxu0
    %v865 = vadd.f32 0.0, %v864
    %v866 = vpop.f32.mrf.mxu0
    %867 = vdwg.mxu0
    %v868 = vadd.f32 %v752, %v838
    %v869 = vadd.f32 %v753, %v841
    %v870 = vadd.f32 %v754, %v846
    %v871 = vadd.f32 %v755, %v849
    %v872 = vadd.f32 %v756, %v854
    %v873 = vadd.f32 %v757, %v857
    %v874 = vadd.f32 %v758, %v862
    %v875 = vadd.f32 %v759, %v865
    %v877 = vlaneseq
    %v878 = vshrl.u32 %v877, 7
    %v879 = vsub.s32 0, %v878
    %v880 = vrot.slane %v191, %v879
    %v882 = vadd.f32 %v868, %v880
    %v883 = vadd.f32 %v869, %v880
    %v884 = vadd.f32 %v870, %v880
    %v885 = vadd.f32 %v871, %v880
    %v886 = vadd.f32 %v872, %v880
    %v887 = vadd.f32 %v873, %v880
    %v888 = vadd.f32 %v874, %v880
    %v889 = vadd.f32 %v875, %v880
    %890 = vmatprep.subr.bf16.mxu0 0
    %891 = vmatpush1.bf16.msra.mxu0 0
    %892 = vmatprep.subr.bf16.mxu0 0
    %893 = vmatpush1.bf16.msra.mxu0 0
    %894 = vmatprep.subr.bf16.mxu0 0
    %895 = vmatpush1.bf16.msra.mxu0 0
    %896 = vmatprep.subr.bf16.mxu0 0
    %897 = vmatpush1.bf16.msra.mxu0 0
    %898 = vmatprep.subr.bf16.mxu0 0
    %899 = vmatpush1.bf16.msra.mxu0 0
    %900 = vmatprep.subr.bf16.mxu0 0
    %901 = vmatpush1.bf16.msra.mxu0 0
    %902 = vmatprep.subr.bf16.mxu0 0
    %903 = vmatpush1.bf16.msra.mxu0 %v253
    %904 = vmatprep.subr.bf16.mxu0 0
    %905 = vmatpush1.bf16.msra.mxu0 %v235
    %906 = vmatprep.subr.bf16.mxu0 0
    %907 = vmatpush2.bf16.msra.mxu0 0
    %908 = vmatprep.subr.bf16.mxu0 0
    %909 = vmatpush2.bf16.msra.mxu0 0
    %910 = vmatprep.subr.bf16.mxu0 0
    %911 = vmatpush2.bf16.msra.mxu0 0
    %912 = vmatprep.subr.bf16.mxu0 0
    %913 = vmatpush2.bf16.msra.mxu0 0
    %914 = vmatprep.subr.bf16.mxu0 0
    %915 = vmatpush2.bf16.msra.mxu0 0
    %916 = vmatprep.subr.bf16.mxu0 0
    %917 = vmatpush2.bf16.msra.mxu0 0
    %918 = vmatprep.subr.bf16.mxu0 0
    %919 = vmatpush2.bf16.msra.mxu0 0
    %920 = vmatprep.subr.bf16.mxu0 0
    %921 = vmatpush2.bf16.msra.mxu0 0
    %922 = vmatprep.mubr.bf16.mxu0 0
    %923 = vmatmul.mubr.bf16.gmra.mxu0 %v557
    %v924 = vpop.f32.mrf.mxu0
    %v925 = vadd.f32 0.0, %v924
    %v926 = vpop.f32.mrf.mxu0
    %v927 = vpop.f32.mrf.mxu0
    %v928 = vadd.f32 0.0, %v927
    %v929 = vpop.f32.mrf.mxu0
    %930 = vmatprep.mubr.bf16.mxu0 0
    %931 = vmatmul.mubr.bf16.gmra.mxu0 %v560
    %v932 = vpop.f32.mrf.mxu0
    %v933 = vadd.f32 0.0, %v932
    %v934 = vpop.f32.mrf.mxu0
    %v935 = vpop.f32.mrf.mxu0
    %v936 = vadd.f32 0.0, %v935
    %v937 = vpop.f32.mrf.mxu0
    %938 = vmatprep.mubr.bf16.mxu0 0
    %939 = vmatmul.mubr.bf16.gmra.mxu0 %v563
    %v940 = vpop.f32.mrf.mxu0
    %v941 = vadd.f32 0.0, %v940
    %v942 = vpop.f32.mrf.mxu0
    %v943 = vpop.f32.mrf.mxu0
    %v944 = vadd.f32 0.0, %v943
    %v945 = vpop.f32.mrf.mxu0
    %946 = vmatprep.mubr.bf16.mxu0 0
    %947 = vmatmul.mubr.bf16.gmra.mxu0 %v566
    %v948 = vpop.f32.mrf.mxu0
    %v949 = vadd.f32 0.0, %v948
    %v950 = vpop.f32.mrf.mxu0
    %v951 = vpop.f32.mrf.mxu0
    %v952 = vadd.f32 0.0, %v951
    %v953 = vpop.f32.mrf.mxu0
    %954 = vdwg.mxu0
    %955 = vmatprep.subr.bf16.mxu0 0
    %956 = vmatpush1.bf16.msra.mxu0 0
    %957 = vmatprep.subr.bf16.mxu0 0
    %958 = vmatpush1.bf16.msra.mxu0 0
    %959 = vmatprep.subr.bf16.mxu0 0
    %960 = vmatpush1.bf16.msra.mxu0 0
    %961 = vmatprep.subr.bf16.mxu0 0
    %962 = vmatpush1.bf16.msra.mxu0 0
    %963 = vmatprep.subr.bf16.mxu0 0
    %964 = vmatpush1.bf16.msra.mxu0 0
    %965 = vmatprep.subr.bf16.mxu0 0
    %966 = vmatpush1.bf16.msra.mxu0 0
    %967 = vmatprep.subr.bf16.mxu0 0
    %968 = vmatpush1.bf16.msra.mxu0 %v344
    %969 = vmatprep.subr.bf16.mxu0 0
    %970 = vmatpush1.bf16.msra.mxu0 %v328
    %971 = vmatprep.subr.bf16.mxu0 0
    %972 = vmatpush2.bf16.msra.mxu0 0
    %973 = vmatprep.subr.bf16.mxu0 0
    %974 = vmatpush2.bf16.msra.mxu0 0
    %975 = vmatprep.subr.bf16.mxu0 0
    %976 = vmatpush2.bf16.msra.mxu0 0
    %977 = vmatprep.subr.bf16.mxu0 0
    %978 = vmatpush2.bf16.msra.mxu0 0
    %979 = vmatprep.subr.bf16.mxu0 0
    %980 = vmatpush2.bf16.msra.mxu0 0
    %981 = vmatprep.subr.bf16.mxu0 0
    %982 = vmatpush2.bf16.msra.mxu0 0
    %983 = vmatprep.subr.bf16.mxu0 0
    %984 = vmatpush2.bf16.msra.mxu0 0
    %985 = vmatprep.subr.bf16.mxu0 0
    %986 = vmatpush2.bf16.msra.mxu0 0
    %987 = vmatprep.mubr.bf16.mxu0 0
    %988 = vmatmul.mubr.bf16.gmra.mxu0 %v440
    %v989 = vpop.f32.mrf.mxu0
    %v990 = vadd.f32 %v925, %v989
    %v991 = vpop.f32.mrf.mxu0
    %v992 = vpop.f32.mrf.mxu0
    %v993 = vadd.f32 %v928, %v992
    %v994 = vpop.f32.mrf.mxu0
    %995 = vmatprep.mubr.bf16.mxu0 0
    %996 = vmatmul.mubr.bf16.gmra.mxu0 %v443
    %v997 = vpop.f32.mrf.mxu0
    %v998 = vadd.f32 %v933, %v997
    %v999 = vpop.f32.mrf.mxu0
    %v1000 = vpop.f32.mrf.mxu0
    %v1001 = vadd.f32 %v936, %v1000
    %v1002 = vpop.f32.mrf.mxu0
    %1003 = vmatprep.mubr.bf16.mxu0 0
    %1004 = vmatmul.mubr.bf16.gmra.mxu0 %v446
    %v1005 = vpop.f32.mrf.mxu0
    %v1006 = vadd.f32 %v941, %v1005
    %v1007 = vpop.f32.mrf.mxu0
    %v1008 = vpop.f32.mrf.mxu0
    %v1009 = vadd.f32 %v944, %v1008
    %v1010 = vpop.f32.mrf.mxu0
    %1011 = vmatprep.mubr.bf16.mxu0 0
    %1012 = vmatmul.mubr.bf16.gmra.mxu0 %v449
    %v1013 = vpop.f32.mrf.mxu0
    %v1014 = vadd.f32 %v949, %v1013
    %v1015 = vpop.f32.mrf.mxu0
    %v1016 = vpop.f32.mrf.mxu0
    %v1017 = vadd.f32 %v952, %v1016
    %v1018 = vpop.f32.mrf.mxu0
    %1019 = vdwg.mxu0
    %1020 = vmatprep.subr.bf16.mxu0 0
    %1021 = vmatpush1.bf16.msra.mxu0 0
    %1022 = vmatprep.subr.bf16.mxu0 0
    %1023 = vmatpush1.bf16.msra.mxu0 0
    %1024 = vmatprep.subr.bf16.mxu0 0
    %1025 = vmatpush1.bf16.msra.mxu0 0
    %1026 = vmatprep.subr.bf16.mxu0 0
    %1027 = vmatpush1.bf16.msra.mxu0 0
    %1028 = vmatprep.subr.bf16.mxu0 0
    %1029 = vmatpush1.bf16.msra.mxu0 0
    %1030 = vmatprep.subr.bf16.mxu0 0
    %1031 = vmatpush1.bf16.msra.mxu0 0
    %1032 = vmatprep.subr.bf16.mxu0 0
    %1033 = vmatpush1.bf16.msra.mxu0 %v452
    %1034 = vmatprep.subr.bf16.mxu0 0
    %1035 = vmatpush1.bf16.msra.mxu0 %v436
    %1036 = vmatprep.subr.bf16.mxu0 0
    %1037 = vmatpush2.bf16.msra.mxu0 0
    %1038 = vmatprep.subr.bf16.mxu0 0
    %1039 = vmatpush2.bf16.msra.mxu0 0
    %1040 = vmatprep.subr.bf16.mxu0 0
    %1041 = vmatpush2.bf16.msra.mxu0 0
    %1042 = vmatprep.subr.bf16.mxu0 0
    %1043 = vmatpush2.bf16.msra.mxu0 0
    %1044 = vmatprep.subr.bf16.mxu0 0
    %1045 = vmatpush2.bf16.msra.mxu0 0
    %1046 = vmatprep.subr.bf16.mxu0 0
    %1047 = vmatpush2.bf16.msra.mxu0 0
    %1048 = vmatprep.subr.bf16.mxu0 0
    %1049 = vmatpush2.bf16.msra.mxu0 0
    %1050 = vmatprep.subr.bf16.mxu0 0
    %1051 = vmatpush2.bf16.msra.mxu0 0
    %1052 = vmatprep.mubr.bf16.mxu0 0
    %1053 = vmatmul.mubr.bf16.gmra.mxu0 %v673
    %v1054 = vpop.f32.mrf.mxu0
    %v1055 = vadd.f32 0.0, %v1054
    %v1056 = vpop.f32.mrf.mxu0
    %v1057 = vpop.f32.mrf.mxu0
    %v1058 = vadd.f32 0.0, %v1057
    %v1059 = vpop.f32.mrf.mxu0
    %1060 = vmatprep.mubr.bf16.mxu0 0
    %1061 = vmatmul.mubr.bf16.gmra.mxu0 %v676
    %v1062 = vpop.f32.mrf.mxu0
    %v1063 = vadd.f32 0.0, %v1062
    %v1064 = vpop.f32.mrf.mxu0
    %v1065 = vpop.f32.mrf.mxu0
    %v1066 = vadd.f32 0.0, %v1065
    %v1067 = vpop.f32.mrf.mxu0
    %1068 = vmatprep.mubr.bf16.mxu0 0
    %1069 = vmatmul.mubr.bf16.gmra.mxu0 %v679
    %v1070 = vpop.f32.mrf.mxu0
    %v1071 = vadd.f32 0.0, %v1070
    %v1072 = vpop.f32.mrf.mxu0
    %v1073 = vpop.f32.mrf.mxu0
    %v1074 = vadd.f32 0.0, %v1073
    %v1075 = vpop.f32.mrf.mxu0
    %1076 = vmatprep.mubr.bf16.mxu0 0
    %1077 = vmatmul.mubr.bf16.gmra.mxu0 %v682
    %v1078 = vpop.f32.mrf.mxu0
    %v1079 = vadd.f32 0.0, %v1078
    %v1080 = vpop.f32.mrf.mxu0
    %v1081 = vpop.f32.mrf.mxu0
    %v1082 = vadd.f32 0.0, %v1081
    %v1083 = vpop.f32.mrf.mxu0
    %1084 = vdwg.mxu0
    %v1085 = vadd.f32 %v990, %v1055
    %v1086 = vadd.f32 %v993, %v1058
    %v1087 = vadd.f32 %v998, %v1063
    %v1088 = vadd.f32 %v1001, %v1066
    %v1089 = vadd.f32 %v1006, %v1071
    %v1090 = vadd.f32 %v1009, %v1074
    %v1091 = vadd.f32 %v1014, %v1079
    %v1092 = vadd.f32 %v1017, %v1082
    %1093 = vmatprep.subr.bf16.mxu0 0
    %1094 = vmatpush1.bf16.msra.mxu0 0
    %1095 = vmatprep.subr.bf16.mxu0 0
    %1096 = vmatpush1.bf16.msra.mxu0 0
    %1097 = vmatprep.subr.bf16.mxu0 0
    %1098 = vmatpush1.bf16.msra.mxu0 0
    %1099 = vmatprep.subr.bf16.mxu0 0
    %1100 = vmatpush1.bf16.msra.mxu0 0
    %1101 = vmatprep.subr.bf16.mxu0 0
    %1102 = vmatpush1.bf16.msra.mxu0 0
    %1103 = vmatprep.subr.bf16.mxu0 0
    %1104 = vmatpush1.bf16.msra.mxu0 0
    %1105 = vmatprep.subr.bf16.mxu0 0
    %1106 = vmatpush1.bf16.msra.mxu0 %v569
    %1107 = vmatprep.subr.bf16.mxu0 0
    %1108 = vmatpush1.bf16.msra.mxu0 %v553
    %1109 = vmatprep.subr.bf16.mxu0 0
    %1110 = vmatpush2.bf16.msra.mxu0 0
    %1111 = vmatprep.subr.bf16.mxu0 0
    %1112 = vmatpush2.bf16.msra.mxu0 0
    %1113 = vmatprep.subr.bf16.mxu0 0
    %1114 = vmatpush2.bf16.msra.mxu0 0
    %1115 = vmatprep.subr.bf16.mxu0 0
    %1116 = vmatpush2.bf16.msra.mxu0 0
    %1117 = vmatprep.subr.bf16.mxu0 0
    %1118 = vmatpush2.bf16.msra.mxu0 0
    %1119 = vmatprep.subr.bf16.mxu0 0
    %1120 = vmatpush2.bf16.msra.mxu0 0
    %1121 = vmatprep.subr.bf16.mxu0 0
    %1122 = vmatpush2.bf16.msra.mxu0 0
    %1123 = vmatprep.subr.bf16.mxu0 0
    %1124 = vmatpush2.bf16.msra.mxu0 0
    %1125 = vmatprep.mubr.bf16.mxu0 0
    %1126 = vmatmul.mubr.bf16.gmra.mxu0 %v789
    %v1127 = vpop.f32.mrf.mxu0
    %v1128 = vadd.f32 0.0, %v1127
    %v1129 = vpop.f32.mrf.mxu0
    %v1130 = vpop.f32.mrf.mxu0
    %v1131 = vadd.f32 0.0, %v1130
    %v1132 = vpop.f32.mrf.mxu0
    %1133 = vmatprep.mubr.bf16.mxu0 0
    %1134 = vmatmul.mubr.bf16.gmra.mxu0 %v792
    %v1135 = vpop.f32.mrf.mxu0
    %v1136 = vadd.f32 0.0, %v1135
    %v1137 = vpop.f32.mrf.mxu0
    %v1138 = vpop.f32.mrf.mxu0
    %v1139 = vadd.f32 0.0, %v1138
    %v1140 = vpop.f32.mrf.mxu0
    %1141 = vmatprep.mubr.bf16.mxu0 0
    %1142 = vmatmul.mubr.bf16.gmra.mxu0 %v795
    %v1143 = vpop.f32.mrf.mxu0
    %v1144 = vadd.f32 0.0, %v1143
    %v1145 = vpop.f32.mrf.mxu0
    %v1146 = vpop.f32.mrf.mxu0
    %v1147 = vadd.f32 0.0, %v1146
    %v1148 = vpop.f32.mrf.mxu0
    %1149 = vmatprep.mubr.bf16.mxu0 0
    %1150 = vmatmul.mubr.bf16.gmra.mxu0 %v798
    %v1151 = vpop.f32.mrf.mxu0
    %v1152 = vadd.f32 0.0, %v1151
    %v1153 = vpop.f32.mrf.mxu0
    %v1154 = vpop.f32.mrf.mxu0
    %v1155 = vadd.f32 0.0, %v1154
    %v1156 = vpop.f32.mrf.mxu0
    %1157 = vdwg.mxu0
    %v1158 = vadd.f32 %v1085, %v1128
    %v1159 = vadd.f32 %v1086, %v1131
    %v1160 = vadd.f32 %v1087, %v1136
    %v1161 = vadd.f32 %v1088, %v1139
    %v1162 = vadd.f32 %v1089, %v1144
    %v1163 = vadd.f32 %v1090, %v1147
    %v1164 = vadd.f32 %v1091, %v1152
    %v1165 = vadd.f32 %v1092, %v1155
    %v1166 = vld [vmem:[%s0 + $0x2] sm:$0xff]
    %v1167 = vld [vmem:[%s0 + $0x42] sm:$0xff]
    %v1168 = vld [vmem:[%s0 + $0x82] sm:$0xff]
    %v1169 = vld [vmem:[%s0 + $0xc2] sm:$0xff]
    %v1170 = vld [vmem:[%s0 + $0x102] sm:$0xff]
    %v1171 = vld [vmem:[%s0 + $0x142] sm:$0xff]
    %v1172 = vld [vmem:[%s0 + $0x182] sm:$0xff]
    %v1173 = vld [vmem:[%s0 + $0x1c2] sm:$0xff]
    %v1174 = vpack.c.bf16 %v1167, %v1166
    %v1175 = vpack.c.bf16 %v1169, %v1168
    %v1176 = vpack.c.bf16 %v1171, %v1170
    %v1177 = vpack.c.bf16 %v1173, %v1172
    %v1179 = vsel %vm238, %v1174, 0
    %v1182 = vsel %vm238, %v1175, 0
    %v1185 = vsel %vm238, %v1176, 0
    %v1188 = vsel %vm238, %v1177, 0
    %1190 = vmatprep.subr.bf16.mxu0 0
    %1191 = vmatpush1.bf16.msra.mxu0 0
    %1192 = vmatprep.subr.bf16.mxu0 0
    %1193 = vmatpush1.bf16.msra.mxu0 0
    %1194 = vmatprep.subr.bf16.mxu0 0
    %1195 = vmatpush1.bf16.msra.mxu0 0
    %1196 = vmatprep.subr.bf16.mxu0 0
    %1197 = vmatpush1.bf16.msra.mxu0 0
    %1198 = vmatprep.subr.bf16.mxu0 0
    %1199 = vmatpush1.bf16.msra.mxu0 0
    %1200 = vmatprep.subr.bf16.mxu0 0
    %1201 = vmatpush1.bf16.msra.mxu0 0
    %1202 = vmatprep.subr.bf16.mxu0 0
    %1203 = vmatpush1.bf16.msra.mxu0 %v685
    %1204 = vmatprep.subr.bf16.mxu0 0
    %1205 = vmatpush1.bf16.msra.mxu0 %v669
    %1206 = vmatprep.subr.bf16.mxu0 0
    %1207 = vmatpush2.bf16.msra.mxu0 0
    %1208 = vmatprep.subr.bf16.mxu0 0
    %1209 = vmatpush2.bf16.msra.mxu0 0
    %1210 = vmatprep.subr.bf16.mxu0 0
    %1211 = vmatpush2.bf16.msra.mxu0 0
    %1212 = vmatprep.subr.bf16.mxu0 0
    %1213 = vmatpush2.bf16.msra.mxu0 0
    %1214 = vmatprep.subr.bf16.mxu0 0
    %1215 = vmatpush2.bf16.msra.mxu0 0
    %1216 = vmatprep.subr.bf16.mxu0 0
    %1217 = vmatpush2.bf16.msra.mxu0 0
    %1218 = vmatprep.subr.bf16.mxu0 0
    %1219 = vmatpush2.bf16.msra.mxu0 0
    %1220 = vmatprep.subr.bf16.mxu0 0
    %1221 = vmatpush2.bf16.msra.mxu0 0
    %1222 = vmatprep.mubr.bf16.mxu0 0
    %1223 = vmatmul.mubr.bf16.gmra.mxu0 %v1179
    %v1224 = vpop.f32.mrf.mxu0
    %v1225 = vadd.f32 0.0, %v1224
    %v1226 = vpop.f32.mrf.mxu0
    %v1227 = vpop.f32.mrf.mxu0
    %v1228 = vadd.f32 0.0, %v1227
    %v1229 = vpop.f32.mrf.mxu0
    %1230 = vmatprep.mubr.bf16.mxu0 0
    %1231 = vmatmul.mubr.bf16.gmra.mxu0 %v1182
    %v1232 = vpop.f32.mrf.mxu0
    %v1233 = vadd.f32 0.0, %v1232
    %v1234 = vpop.f32.mrf.mxu0
    %v1235 = vpop.f32.mrf.mxu0
    %v1236 = vadd.f32 0.0, %v1235
    %v1237 = vpop.f32.mrf.mxu0
    %1238 = vmatprep.mubr.bf16.mxu0 0
    %1239 = vmatmul.mubr.bf16.gmra.mxu0 %v1185
    %v1240 = vpop.f32.mrf.mxu0
    %v1241 = vadd.f32 0.0, %v1240
    %v1242 = vpop.f32.mrf.mxu0
    %v1243 = vpop.f32.mrf.mxu0
    %v1244 = vadd.f32 0.0, %v1243
    %v1245 = vpop.f32.mrf.mxu0
    %1246 = vmatprep.mubr.bf16.mxu0 0
    %1247 = vmatmul.mubr.bf16.gmra.mxu0 %v1188
    %v1248 = vpop.f32.mrf.mxu0
    %v1249 = vadd.f32 0.0, %v1248
    %v1250 = vpop.f32.mrf.mxu0
    %v1251 = vpop.f32.mrf.mxu0
    %v1252 = vadd.f32 0.0, %v1251
    %v1253 = vpop.f32.mrf.mxu0
    %1254 = vdwg.mxu0
    %v1255 = vadd.f32 %v1158, %v1225
    %v1256 = vadd.f32 %v1159, %v1228
    %v1257 = vadd.f32 %v1160, %v1233
    %v1258 = vadd.f32 %v1161, %v1236
    %v1259 = vadd.f32 %v1162, %v1241
    %v1260 = vadd.f32 %v1163, %v1244
    %v1261 = vadd.f32 %v1164, %v1249
    %v1262 = vadd.f32 %v1165, %v1252
    %v1263 = vld [vmem:[%s527 + $0x2] sm:$0xff]
    %v1264 = vld [vmem:[%s527 + $0x42] sm:$0xff]
    %v1265 = vld [vmem:[%s527 + $0x82] sm:$0xff]
    %v1266 = vld [vmem:[%s527 + $0xc2] sm:$0xff]
    %v1267 = vld [vmem:[%s527 + $0x102] sm:$0xff]
    %v1268 = vld [vmem:[%s527 + $0x142] sm:$0xff]
    %v1269 = vld [vmem:[%s527 + $0x182] sm:$0xff]
    %v1270 = vld [vmem:[%s527 + $0x1c2] sm:$0xff]
    %v1271 = vpack.c.bf16 %v1264, %v1263
    %v1272 = vpack.c.bf16 %v1266, %v1265
    %v1273 = vpack.c.bf16 %v1268, %v1267
    %v1274 = vpack.c.bf16 %v1270, %v1269
    %v1276 = vsel %vm238, %v1271, 0
    %v1279 = vsel %vm238, %v1272, 0
    %v1282 = vsel %vm238, %v1273, 0
    %v1285 = vsel %vm238, %v1274, 0
    %1287 = vmatprep.subr.bf16.mxu0 0
    %1288 = vmatpush1.bf16.msra.mxu0 0
    %1289 = vmatprep.subr.bf16.mxu0 0
    %1290 = vmatpush1.bf16.msra.mxu0 0
    %1291 = vmatprep.subr.bf16.mxu0 0
    %1292 = vmatpush1.bf16.msra.mxu0 0
    %1293 = vmatprep.subr.bf16.mxu0 0
    %1294 = vmatpush1.bf16.msra.mxu0 0
    %1295 = vmatprep.subr.bf16.mxu0 0
    %1296 = vmatpush1.bf16.msra.mxu0 0
    %1297 = vmatprep.subr.bf16.mxu0 0
    %1298 = vmatpush1.bf16.msra.mxu0 0
    %1299 = vmatprep.subr.bf16.mxu0 0
    %1300 = vmatpush1.bf16.msra.mxu0 %v801
    %1301 = vmatprep.subr.bf16.mxu0 0
    %1302 = vmatpush1.bf16.msra.mxu0 %v785
    %1303 = vmatprep.subr.bf16.mxu0 0
    %1304 = vmatpush2.bf16.msra.mxu0 0
    %1305 = vmatprep.subr.bf16.mxu0 0
    %1306 = vmatpush2.bf16.msra.mxu0 0
    %1307 = vmatprep.subr.bf16.mxu0 0
    %1308 = vmatpush2.bf16.msra.mxu0 0
    %1309 = vmatprep.subr.bf16.mxu0 0
    %1310 = vmatpush2.bf16.msra.mxu0 0
    %1311 = vmatprep.subr.bf16.mxu0 0
    %1312 = vmatpush2.bf16.msra.mxu0 0
    %1313 = vmatprep.subr.bf16.mxu0 0
    %1314 = vmatpush2.bf16.msra.mxu0 0
    %1315 = vmatprep.subr.bf16.mxu0 0
    %1316 = vmatpush2.bf16.msra.mxu0 0
    %1317 = vmatprep.subr.bf16.mxu0 0
    %1318 = vmatpush2.bf16.msra.mxu0 0
    %1319 = vmatprep.mubr.bf16.mxu0 0
    %1320 = vmatmul.mubr.bf16.gmra.mxu0 %v1276
    %v1321 = vpop.f32.mrf.mxu0
    %v1322 = vadd.f32 0.0, %v1321
    %v1323 = vpop.f32.mrf.mxu0
    %v1324 = vpop.f32.mrf.mxu0
    %v1325 = vadd.f32 0.0, %v1324
    %v1326 = vpop.f32.mrf.mxu0
    %1327 = vmatprep.mubr.bf16.mxu0 0
    %1328 = vmatmul.mubr.bf16.gmra.mxu0 %v1279
    %v1329 = vpop.f32.mrf.mxu0
    %v1330 = vadd.f32 0.0, %v1329
    %v1331 = vpop.f32.mrf.mxu0
    %v1332 = vpop.f32.mrf.mxu0
    %v1333 = vadd.f32 0.0, %v1332
    %v1334 = vpop.f32.mrf.mxu0
    %1335 = vmatprep.mubr.bf16.mxu0 0
    %1336 = vmatmul.mubr.bf16.gmra.mxu0 %v1282
    %v1337 = vpop.f32.mrf.mxu0
    %v1338 = vadd.f32 0.0, %v1337
    %v1339 = vpop.f32.mrf.mxu0
    %v1340 = vpop.f32.mrf.mxu0
    %v1341 = vadd.f32 0.0, %v1340
    %v1342 = vpop.f32.mrf.mxu0
    %1343 = vmatprep.mubr.bf16.mxu0 0
    %1344 = vmatmul.mubr.bf16.gmra.mxu0 %v1285
    %v1345 = vpop.f32.mrf.mxu0
    %v1346 = vadd.f32 0.0, %v1345
    %v1347 = vpop.f32.mrf.mxu0
    %v1348 = vpop.f32.mrf.mxu0
    %v1349 = vadd.f32 0.0, %v1348
    %v1350 = vpop.f32.mrf.mxu0
    %1351 = vdwg.mxu0
    %v1352 = vadd.f32 %v1255, %v1322
    %v1353 = vadd.f32 %v1256, %v1325
    %v1354 = vadd.f32 %v1257, %v1330
    %v1355 = vadd.f32 %v1258, %v1333
    %v1356 = vadd.f32 %v1259, %v1338
    %v1357 = vadd.f32 %v1260, %v1341
    %v1358 = vadd.f32 %v1261, %v1346
    %v1359 = vadd.f32 %v1262, %v1349
    %v1360 = vadd.f32 %v1352, %v880
    %v1361 = vadd.f32 %v1353, %v880
    %v1362 = vadd.f32 %v1354, %v880
    %v1363 = vadd.f32 %v1355, %v880
    %v1364 = vadd.f32 %v1356, %v880
    %v1365 = vadd.f32 %v1357, %v880
    %v1366 = vadd.f32 %v1358, %v880
    %v1367 = vadd.f32 %v1359, %v880
    %v1368 = vld [vmem:[%s10] sm:$0x1]
    %v1369 = vpack.c.bf16 %v883, %v882
    %v1370 = vpack.c.bf16 %v885, %v884
    %v1371 = vpack.c.bf16 %v887, %v886
    %v1372 = vpack.c.bf16 %v889, %v888
    %v1373 = vld [vmem:[#allocation3] sm:$0xf]
    %v1374 = vld [vmem:[#allocation3 + $0x4] sm:$0xf]
    %v1375 = vld [vmem:[#allocation3 + $0x8] sm:$0xf]
    %v1376 = vld [vmem:[#allocation3 + $0xc] sm:$0xf]
    %v1377 = vld [vmem:[#allocation3 + $0x10] sm:$0xf]
    %v1378 = vld [vmem:[#allocation3 + $0x14] sm:$0xf]
    %v1379 = vld [vmem:[#allocation3 + $0x18] sm:$0xf]
    %v1380 = vld [vmem:[#allocation3 + $0x1c] sm:$0xf]
    %v1389 = vunpack.c.l.b16 %v1373
    %v1390 = vunpack.c.l.b16 %v1374
    %v1391 = vunpack.c.l.b16 %v1375
    %v1392 = vunpack.c.l.b16 %v1376
    %v1393 = vunpack.c.l.b16 %v1377
    %v1394 = vunpack.c.l.b16 %v1378
    %v1395 = vunpack.c.l.b16 %v1379
    %v1396 = vunpack.c.l.b16 %v1380
    %v1397 = vpack.c.b16 %v1390, %v1389
    %v1398 = vpack.c.b16 %v1392, %v1391
    %v1399 = vpack.c.b16 %v1394, %v1393
    %v1400 = vpack.c.b16 %v1396, %v1395
    %vm1405 = vcmask 523264
    %v1407 = vsel %vm1405, %v1369, 0
    %v1410 = vsel %vm1405, %v1370, 0
    %v1413 = vsel %vm1405, %v1371, 0
    %v1416 = vsel %vm1405, %v1372, 0
    %1418 = vmatprep.subr.bf16.mxu0 0
    %1419 = vmatpush1.bf16.msra.mxu0 0
    %1420 = vmatprep.subr.bf16.mxu0 0
    %1421 = vmatpush1.bf16.msra.mxu0 0
    %1422 = vmatprep.subr.bf16.mxu0 0
    %1423 = vmatpush1.bf16.msra.mxu0 0
    %1424 = vmatprep.subr.bf16.mxu0 0
    %1425 = vmatpush1.bf16.msra.mxu0 0
    %1426 = vmatprep.subr.bf16.mxu0 0
    %1427 = vmatpush1.bf16.msra.mxu0 %v1400
    %1428 = vmatprep.subr.bf16.mxu0 0
    %1429 = vmatpush1.bf16.msra.mxu0 %v1399
    %1430 = vmatprep.subr.bf16.mxu0 0
    %1431 = vmatpush1.bf16.msra.mxu0 %v1398
    %1432 = vmatprep.subr.bf16.mxu0 0
    %1433 = vmatpush1.bf16.msra.mxu0 %v1397
    %1434 = vmatprep.subr.bf16.mxu0 0
    %1435 = vmatpush2.bf16.msra.mxu0 0
    %1436 = vmatprep.subr.bf16.mxu0 0
    %1437 = vmatpush2.bf16.msra.mxu0 0
    %1438 = vmatprep.subr.bf16.mxu0 0
    %1439 = vmatpush2.bf16.msra.mxu0 0
    %1440 = vmatprep.subr.bf16.mxu0 0
    %1441 = vmatpush2.bf16.msra.mxu0 0
    %1442 = vmatprep.subr.bf16.mxu0 0
    %1443 = vmatpush2.bf16.msra.mxu0 0
    %1444 = vmatprep.subr.bf16.mxu0 0
    %1445 = vmatpush2.bf16.msra.mxu0 0
    %1446 = vmatprep.subr.bf16.mxu0 0
    %1447 = vmatpush2.bf16.msra.mxu0 0
    %1448 = vmatprep.subr.bf16.mxu0 0
    %1449 = vmatpush2.bf16.msra.mxu0 0
    %1450 = vmatprep.mubr.bf16.mxu0 0
    %1451 = vmatmul.mubr.bf16.gmra.mxu0 %v1407
    %v1452 = vpop.f32.mrf.mxu0
    %v1453 = vadd.f32 0.0, %v1452
    %v1454 = vpop.f32.mrf.mxu0
    %v1455 = vpop.f32.mrf.mxu0
    %v1456 = vadd.f32 0.0, %v1455
    %v1457 = vpop.f32.mrf.mxu0
    %1458 = vmatprep.mubr.bf16.mxu0 0
    %1459 = vmatmul.mubr.bf16.gmra.mxu0 %v1410
    %v1460 = vpop.f32.mrf.mxu0
    %v1461 = vadd.f32 0.0, %v1460
    %v1462 = vpop.f32.mrf.mxu0
    %v1463 = vpop.f32.mrf.mxu0
    %v1464 = vadd.f32 0.0, %v1463
    %v1465 = vpop.f32.mrf.mxu0
    %1466 = vmatprep.mubr.bf16.mxu0 0
    %1467 = vmatmul.mubr.bf16.gmra.mxu0 %v1413
    %v1468 = vpop.f32.mrf.mxu0
    %v1469 = vadd.f32 0.0, %v1468
    %v1470 = vpop.f32.mrf.mxu0
    %v1471 = vpop.f32.mrf.mxu0
    %v1472 = vadd.f32 0.0, %v1471
    %v1473 = vpop.f32.mrf.mxu0
    %1474 = vmatprep.mubr.bf16.mxu0 0
    %1475 = vmatmul.mubr.bf16.gmra.mxu0 %v1416
    %v1476 = vpop.f32.mrf.mxu0
    %v1477 = vadd.f32 0.0, %v1476
    %v1478 = vpop.f32.mrf.mxu0
    %v1479 = vpop.f32.mrf.mxu0
    %v1480 = vadd.f32 0.0, %v1479
    %v1481 = vpop.f32.mrf.mxu0
    %1482 = vdwg.mxu0
    %v1484 = vlaneseq
    %v1485 = vshrl.u32 %v1484, 7
    %v1486 = vsub.s32 0, %v1485
    %v1487 = vrot.slane %v1368, %v1486
    %v1489 = vadd.f32 %v1487, %v1453
    %v1490 = vadd.f32 %v1487, %v1456
    %v1491 = vadd.f32 %v1487, %v1461
    %v1492 = vadd.f32 %v1487, %v1464
    %v1493 = vadd.f32 %v1487, %v1469
    %v1494 = vadd.f32 %v1487, %v1472
    %v1495 = vadd.f32 %v1487, %v1477
    %v1496 = vadd.f32 %v1487, %v1480
    %s1497 = scalar_lea.vmem [#allocation3], 32
    %v1498 = vld [vmem:[%s1497] sm:$0xf]
    %v1499 = vld [vmem:[%s1497 + $0x4] sm:$0xf]
    %v1500 = vld [vmem:[%s1497 + $0x8] sm:$0xf]
    %v1501 = vld [vmem:[%s1497 + $0xc] sm:$0xf]
    %v1502 = vld [vmem:[%s1497 + $0x10] sm:$0xf]
    %v1503 = vld [vmem:[%s1497 + $0x14] sm:$0xf]
    %v1504 = vld [vmem:[%s1497 + $0x18] sm:$0xf]
    %v1505 = vld [vmem:[%s1497 + $0x1c] sm:$0xf]
    %1510 = vrot.lane.b32.xlu0 %v1369, 64
    %v1511 = vpop.permute.xlu0 %1510
    %1512 = vrot.lane.b32.xlu0 %v1370, 64
    %v1513 = vpop.permute.xlu0 %1512
    %1514 = vrot.lane.b32.xlu0 %v1371, 64
    %v1515 = vpop.permute.xlu0 %1514
    %1516 = vrot.lane.b32.xlu0 %v1372, 64
    %v1517 = vpop.permute.xlu0 %1516
    %v1526 = vunpack.c.l.b16 %v1498
    %v1527 = vunpack.c.l.b16 %v1499
    %v1528 = vunpack.c.l.b16 %v1500
    %v1529 = vunpack.c.l.b16 %v1501
    %v1530 = vunpack.c.l.b16 %v1502
    %v1531 = vunpack.c.l.b16 %v1503
    %v1532 = vunpack.c.l.b16 %v1504
    %v1533 = vunpack.c.l.b16 %v1505
    %v1534 = vpack.c.b16 %v1527, %v1526
    %v1535 = vpack.c.b16 %v1529, %v1528
    %v1536 = vpack.c.b16 %v1531, %v1530
    %v1537 = vpack.c.b16 %v1533, %v1532
    %v1543 = vsel %vm1405, %v1511, 0
    %v1546 = vsel %vm1405, %v1513, 0
    %v1549 = vsel %vm1405, %v1515, 0
    %v1552 = vsel %vm1405, %v1517, 0
    %1554 = vmatprep.subr.bf16.mxu0 0
    %1555 = vmatpush1.bf16.msra.mxu0 0
    %1556 = vmatprep.subr.bf16.mxu0 0
    %1557 = vmatpush1.bf16.msra.mxu0 0
    %1558 = vmatprep.subr.bf16.mxu0 0
    %1559 = vmatpush1.bf16.msra.mxu0 0
    %1560 = vmatprep.subr.bf16.mxu0 0
    %1561 = vmatpush1.bf16.msra.mxu0 0
    %1562 = vmatprep.subr.bf16.mxu0 0
    %1563 = vmatpush1.bf16.msra.mxu0 %v1537
    %1564 = vmatprep.subr.bf16.mxu0 0
    %1565 = vmatpush1.bf16.msra.mxu0 %v1536
    %1566 = vmatprep.subr.bf16.mxu0 0
    %1567 = vmatpush1.bf16.msra.mxu0 %v1535
    %1568 = vmatprep.subr.bf16.mxu0 0
    %1569 = vmatpush1.bf16.msra.mxu0 %v1534
    %1570 = vmatprep.subr.bf16.mxu0 0
    %1571 = vmatpush2.bf16.msra.mxu0 0
    %1572 = vmatprep.subr.bf16.mxu0 0
    %1573 = vmatpush2.bf16.msra.mxu0 0
    %1574 = vmatprep.subr.bf16.mxu0 0
    %1575 = vmatpush2.bf16.msra.mxu0 0
    %1576 = vmatprep.subr.bf16.mxu0 0
    %1577 = vmatpush2.bf16.msra.mxu0 0
    %1578 = vmatprep.subr.bf16.mxu0 0
    %1579 = vmatpush2.bf16.msra.mxu0 0
    %1580 = vmatprep.subr.bf16.mxu0 0
    %1581 = vmatpush2.bf16.msra.mxu0 0
    %1582 = vmatprep.subr.bf16.mxu0 0
    %1583 = vmatpush2.bf16.msra.mxu0 0
    %1584 = vmatprep.subr.bf16.mxu0 0
    %1585 = vmatpush2.bf16.msra.mxu0 0
    %1586 = vmatprep.mubr.bf16.mxu0 0
    %1587 = vmatmul.mubr.bf16.gmra.mxu0 %v1543
    %v1588 = vpop.f32.mrf.mxu0
    %v1589 = vadd.f32 0.0, %v1588
    %v1590 = vpop.f32.mrf.mxu0
    %v1591 = vpop.f32.mrf.mxu0
    %v1592 = vadd.f32 0.0, %v1591
    %v1593 = vpop.f32.mrf.mxu0
    %1594 = vmatprep.mubr.bf16.mxu0 0
    %1595 = vmatmul.mubr.bf16.gmra.mxu0 %v1546
    %v1596 = vpop.f32.mrf.mxu0
    %v1597 = vadd.f32 0.0, %v1596
    %v1598 = vpop.f32.mrf.mxu0
    %v1599 = vpop.f32.mrf.mxu0
    %v1600 = vadd.f32 0.0, %v1599
    %v1601 = vpop.f32.mrf.mxu0
    %1602 = vmatprep.mubr.bf16.mxu0 0
    %1603 = vmatmul.mubr.bf16.gmra.mxu0 %v1549
    %v1604 = vpop.f32.mrf.mxu0
    %v1605 = vadd.f32 0.0, %v1604
    %v1606 = vpop.f32.mrf.mxu0
    %v1607 = vpop.f32.mrf.mxu0
    %v1608 = vadd.f32 0.0, %v1607
    %v1609 = vpop.f32.mrf.mxu0
    %1610 = vmatprep.mubr.bf16.mxu0 0
    %1611 = vmatmul.mubr.bf16.gmra.mxu0 %v1552
    %v1612 = vpop.f32.mrf.mxu0
    %v1613 = vadd.f32 0.0, %v1612
    %v1614 = vpop.f32.mrf.mxu0
    %v1615 = vpop.f32.mrf.mxu0
    %v1616 = vadd.f32 0.0, %v1615
    %v1617 = vpop.f32.mrf.mxu0
    %1618 = vdwg.mxu0
    %v1619 = vadd.f32 %v1489, %v1589
    %v1620 = vadd.f32 %v1490, %v1592
    %v1621 = vadd.f32 %v1491, %v1597
    %v1622 = vadd.f32 %v1492, %v1600
    %v1623 = vadd.f32 %v1493, %v1605
    %v1624 = vadd.f32 %v1494, %v1608
    %v1625 = vadd.f32 %v1495, %v1613
    %v1626 = vadd.f32 %v1496, %v1616
    %v1627 = vpack.c.bf16 %v1361, %v1360
    %v1628 = vpack.c.bf16 %v1363, %v1362
    %v1629 = vpack.c.bf16 %v1365, %v1364
    %v1630 = vpack.c.bf16 %v1367, %v1366
    %s1631 = scalar_lea.vmem [#allocation3], 64
    %v1632 = vld [vmem:[%s1631] sm:$0xf]
    %v1633 = vld [vmem:[%s1631 + $0x4] sm:$0xf]
    %v1634 = vld [vmem:[%s1631 + $0x8] sm:$0xf]
    %v1635 = vld [vmem:[%s1631 + $0xc] sm:$0xf]
    %v1636 = vld [vmem:[%s1631 + $0x10] sm:$0xf]
    %v1637 = vld [vmem:[%s1631 + $0x14] sm:$0xf]
    %v1638 = vld [vmem:[%s1631 + $0x18] sm:$0xf]
    %v1639 = vld [vmem:[%s1631 + $0x1c] sm:$0xf]
    %v1648 = vunpack.c.l.b16 %v1632
    %v1649 = vunpack.c.l.b16 %v1633
    %v1650 = vunpack.c.l.b16 %v1634
    %v1651 = vunpack.c.l.b16 %v1635
    %v1652 = vunpack.c.l.b16 %v1636
    %v1653 = vunpack.c.l.b16 %v1637
    %v1654 = vunpack.c.l.b16 %v1638
    %v1655 = vunpack.c.l.b16 %v1639
    %v1656 = vpack.c.b16 %v1649, %v1648
    %v1657 = vpack.c.b16 %v1651, %v1650
    %v1658 = vpack.c.b16 %v1653, %v1652
    %v1659 = vpack.c.b16 %v1655, %v1654
    %v1665 = vsel %vm1405, %v1627, 0
    %v1668 = vsel %vm1405, %v1628, 0
    %v1671 = vsel %vm1405, %v1629, 0
    %v1674 = vsel %vm1405, %v1630, 0
    %1676 = vmatprep.subr.bf16.mxu0 0
    %1677 = vmatpush1.bf16.msra.mxu0 0
    %1678 = vmatprep.subr.bf16.mxu0 0
    %1679 = vmatpush1.bf16.msra.mxu0 0
    %1680 = vmatprep.subr.bf16.mxu0 0
    %1681 = vmatpush1.bf16.msra.mxu0 0
    %1682 = vmatprep.subr.bf16.mxu0 0
    %1683 = vmatpush1.bf16.msra.mxu0 0
    %1684 = vmatprep.subr.bf16.mxu0 0
    %1685 = vmatpush1.bf16.msra.mxu0 %v1659
    %1686 = vmatprep.subr.bf16.mxu0 0
    %1687 = vmatpush1.bf16.msra.mxu0 %v1658
    %1688 = vmatprep.subr.bf16.mxu0 0
    %1689 = vmatpush1.bf16.msra.mxu0 %v1657
    %1690 = vmatprep.subr.bf16.mxu0 0
    %1691 = vmatpush1.bf16.msra.mxu0 %v1656
    %1692 = vmatprep.subr.bf16.mxu0 0
    %1693 = vmatpush2.bf16.msra.mxu0 0
    %1694 = vmatprep.subr.bf16.mxu0 0
    %1695 = vmatpush2.bf16.msra.mxu0 0
    %1696 = vmatprep.subr.bf16.mxu0 0
    %1697 = vmatpush2.bf16.msra.mxu0 0
    %1698 = vmatprep.subr.bf16.mxu0 0
    %1699 = vmatpush2.bf16.msra.mxu0 0
    %1700 = vmatprep.subr.bf16.mxu0 0
    %1701 = vmatpush2.bf16.msra.mxu0 0
    %1702 = vmatprep.subr.bf16.mxu0 0
    %1703 = vmatpush2.bf16.msra.mxu0 0
    %1704 = vmatprep.subr.bf16.mxu0 0
    %1705 = vmatpush2.bf16.msra.mxu0 0
    %1706 = vmatprep.subr.bf16.mxu0 0
    %1707 = vmatpush2.bf16.msra.mxu0 0
    %1708 = vmatprep.mubr.bf16.mxu0 0
    %1709 = vmatmul.mubr.bf16.gmra.mxu0 %v1665
    %v1710 = vpop.f32.mrf.mxu0
    %v1711 = vadd.f32 0.0, %v1710
    %v1712 = vpop.f32.mrf.mxu0
    %v1713 = vpop.f32.mrf.mxu0
    %v1714 = vadd.f32 0.0, %v1713
    %v1715 = vpop.f32.mrf.mxu0
    %1716 = vmatprep.mubr.bf16.mxu0 0
    %1717 = vmatmul.mubr.bf16.gmra.mxu0 %v1668
    %v1718 = vpop.f32.mrf.mxu0
    %v1719 = vadd.f32 0.0, %v1718
    %v1720 = vpop.f32.mrf.mxu0
    %v1721 = vpop.f32.mrf.mxu0
    %v1722 = vadd.f32 0.0, %v1721
    %v1723 = vpop.f32.mrf.mxu0
    %1724 = vmatprep.mubr.bf16.mxu0 0
    %1725 = vmatmul.mubr.bf16.gmra.mxu0 %v1671
    %v1726 = vpop.f32.mrf.mxu0
    %v1727 = vadd.f32 0.0, %v1726
    %v1728 = vpop.f32.mrf.mxu0
    %v1729 = vpop.f32.mrf.mxu0
    %v1730 = vadd.f32 0.0, %v1729
    %v1731 = vpop.f32.mrf.mxu0
    %1732 = vmatprep.mubr.bf16.mxu0 0
    %1733 = vmatmul.mubr.bf16.gmra.mxu0 %v1674
    %v1734 = vpop.f32.mrf.mxu0
    %v1735 = vadd.f32 0.0, %v1734
    %v1736 = vpop.f32.mrf.mxu0
    %v1737 = vpop.f32.mrf.mxu0
    %v1738 = vadd.f32 0.0, %v1737
    %v1739 = vpop.f32.mrf.mxu0
    %1740 = vdwg.mxu0
    %v1741 = vadd.f32 %v1619, %v1711
    %v1742 = vadd.f32 %v1620, %v1714
    %v1743 = vadd.f32 %v1621, %v1719
    %v1744 = vadd.f32 %v1622, %v1722
    %v1745 = vadd.f32 %v1623, %v1727
    %v1746 = vadd.f32 %v1624, %v1730
    %v1747 = vadd.f32 %v1625, %v1735
    %v1748 = vadd.f32 %v1626, %v1738
    %s1749 = scalar_lea.vmem [#allocation3], 96
    %v1750 = vld [vmem:[%s1749] sm:$0xf]
    %v1751 = vld [vmem:[%s1749 + $0x4] sm:$0xf]
    %v1752 = vld [vmem:[%s1749 + $0x8] sm:$0xf]
    %v1753 = vld [vmem:[%s1749 + $0xc] sm:$0xf]
    %v1754 = vld [vmem:[%s1749 + $0x10] sm:$0xf]
    %v1755 = vld [vmem:[%s1749 + $0x14] sm:$0xf]
    %v1756 = vld [vmem:[%s1749 + $0x18] sm:$0xf]
    %v1757 = vld [vmem:[%s1749 + $0x1c] sm:$0xf]
    %1762 = vrot.lane.b32.xlu0 %v1627, 64
    %v1763 = vpop.permute.xlu0 %1762
    %1764 = vrot.lane.b32.xlu0 %v1628, 64
    %v1765 = vpop.permute.xlu0 %1764
    %1766 = vrot.lane.b32.xlu0 %v1629, 64
    %v1767 = vpop.permute.xlu0 %1766
    %1768 = vrot.lane.b32.xlu0 %v1630, 64
    %v1769 = vpop.permute.xlu0 %1768
    %v1778 = vunpack.c.l.b16 %v1750
    %v1779 = vunpack.c.l.b16 %v1751
    %v1780 = vunpack.c.l.b16 %v1752
    %v1781 = vunpack.c.l.b16 %v1753
    %v1782 = vunpack.c.l.b16 %v1754
    %v1783 = vunpack.c.l.b16 %v1755
    %v1784 = vunpack.c.l.b16 %v1756
    %v1785 = vunpack.c.l.b16 %v1757
    %v1786 = vpack.c.b16 %v1779, %v1778
    %v1787 = vpack.c.b16 %v1781, %v1780
    %v1788 = vpack.c.b16 %v1783, %v1782
    %v1789 = vpack.c.b16 %v1785, %v1784
    %v1795 = vsel %vm1405, %v1763, 0
    %v1798 = vsel %vm1405, %v1765, 0
    %v1801 = vsel %vm1405, %v1767, 0
    %v1804 = vsel %vm1405, %v1769, 0
    %1806 = vmatprep.subr.bf16.mxu0 0
    %1807 = vmatpush1.bf16.msra.mxu0 0
    %1808 = vmatprep.subr.bf16.mxu0 0
    %1809 = vmatpush1.bf16.msra.mxu0 0
    %1810 = vmatprep.subr.bf16.mxu0 0
    %1811 = vmatpush1.bf16.msra.mxu0 0
    %1812 = vmatprep.subr.bf16.mxu0 0
    %1813 = vmatpush1.bf16.msra.mxu0 0
    %1814 = vmatprep.subr.bf16.mxu0 0
    %1815 = vmatpush1.bf16.msra.mxu0 %v1789
    %1816 = vmatprep.subr.bf16.mxu0 0
    %1817 = vmatpush1.bf16.msra.mxu0 %v1788
    %1818 = vmatprep.subr.bf16.mxu0 0
    %1819 = vmatpush1.bf16.msra.mxu0 %v1787
    %1820 = vmatprep.subr.bf16.mxu0 0
    %1821 = vmatpush1.bf16.msra.mxu0 %v1786
    %1822 = vmatprep.subr.bf16.mxu0 0
    %1823 = vmatpush2.bf16.msra.mxu0 0
    %1824 = vmatprep.subr.bf16.mxu0 0
    %1825 = vmatpush2.bf16.msra.mxu0 0
    %1826 = vmatprep.subr.bf16.mxu0 0
    %1827 = vmatpush2.bf16.msra.mxu0 0
    %1828 = vmatprep.subr.bf16.mxu0 0
    %1829 = vmatpush2.bf16.msra.mxu0 0
    %1830 = vmatprep.subr.bf16.mxu0 0
    %1831 = vmatpush2.bf16.msra.mxu0 0
    %1832 = vmatprep.subr.bf16.mxu0 0
    %1833 = vmatpush2.bf16.msra.mxu0 0
    %1834 = vmatprep.subr.bf16.mxu0 0
    %1835 = vmatpush2.bf16.msra.mxu0 0
    %1836 = vmatprep.subr.bf16.mxu0 0
    %1837 = vmatpush2.bf16.msra.mxu0 0
    %1838 = vmatprep.mubr.bf16.mxu0 0
    %1839 = vmatmul.mubr.bf16.gmra.mxu0 %v1795
    %v1840 = vpop.f32.mrf.mxu0
    %v1841 = vadd.f32 0.0, %v1840
    %v1842 = vpop.f32.mrf.mxu0
    %v1843 = vpop.f32.mrf.mxu0
    %v1844 = vadd.f32 0.0, %v1843
    %v1845 = vpop.f32.mrf.mxu0
    %1846 = vmatprep.mubr.bf16.mxu0 0
    %1847 = vmatmul.mubr.bf16.gmra.mxu0 %v1798
    %v1848 = vpop.f32.mrf.mxu0
    %v1849 = vadd.f32 0.0, %v1848
    %v1850 = vpop.f32.mrf.mxu0
    %v1851 = vpop.f32.mrf.mxu0
    %v1852 = vadd.f32 0.0, %v1851
    %v1853 = vpop.f32.mrf.mxu0
    %1854 = vmatprep.mubr.bf16.mxu0 0
    %1855 = vmatmul.mubr.bf16.gmra.mxu0 %v1801
    %v1856 = vpop.f32.mrf.mxu0
    %v1857 = vadd.f32 0.0, %v1856
    %v1858 = vpop.f32.mrf.mxu0
    %v1859 = vpop.f32.mrf.mxu0
    %v1860 = vadd.f32 0.0, %v1859
    %v1861 = vpop.f32.mrf.mxu0
    %1862 = vmatprep.mubr.bf16.mxu0 0
    %1863 = vmatmul.mubr.bf16.gmra.mxu0 %v1804
    %v1864 = vpop.f32.mrf.mxu0
    %v1865 = vadd.f32 0.0, %v1864
    %v1866 = vpop.f32.mrf.mxu0
    %v1867 = vpop.f32.mrf.mxu0
    %v1868 = vadd.f32 0.0, %v1867
    %v1869 = vpop.f32.mrf.mxu0
    %1870 = vdwg.mxu0
    %v1871 = vadd.f32 %v1741, %v1841
    %v1872 = vadd.f32 %v1742, %v1844
    %v1873 = vadd.f32 %v1743, %v1849
    %v1874 = vadd.f32 %v1744, %v1852
    %v1875 = vadd.f32 %v1745, %v1857
    %v1876 = vadd.f32 %v1746, %v1860
    %v1877 = vadd.f32 %v1747, %v1865
    %v1878 = vadd.f32 %v1748, %v1868
    %1887 = vrot.lane.b32.xlu0 %v882, 8
    %v1888 = vpop.permute.xlu0 %1887
    %1889 = vrot.lane.b32.xlu0 %v883, 8
    %v1890 = vpop.permute.xlu0 %1889
    %1891 = vrot.lane.b32.xlu0 %v884, 8
    %v1892 = vpop.permute.xlu0 %1891
    %1893 = vrot.lane.b32.xlu0 %v885, 8
    %v1894 = vpop.permute.xlu0 %1893
    %1895 = vrot.lane.b32.xlu0 %v886, 8
    %v1896 = vpop.permute.xlu0 %1895
    %1897 = vrot.lane.b32.xlu0 %v887, 8
    %v1898 = vpop.permute.xlu0 %1897
    %1899 = vrot.lane.b32.xlu0 %v888, 8
    %v1900 = vpop.permute.xlu0 %1899
    %1901 = vrot.lane.b32.xlu0 %v889, 8
    %v1902 = vpop.permute.xlu0 %1901
    %vm1911 = vcmask 588864
    %1912 = vst.msk [vmem:[#allocation2 + $0x1] sm:$0xff] %vm1911, %v1888
    %1913 = vst.msk [vmem:[#allocation2 + $0x11] sm:$0xff] %vm1911, %v1890
    %1914 = vst.msk [vmem:[#allocation2 + $0x21] sm:$0xff] %vm1911, %v1892
    %1915 = vst.msk [vmem:[#allocation2 + $0x31] sm:$0xff] %vm1911, %v1894
    %1916 = vst.msk [vmem:[#allocation2 + $0x41] sm:$0xff] %vm1911, %v1896
    %1917 = vst.msk [vmem:[#allocation2 + $0x51] sm:$0xff] %vm1911, %v1898
    %1918 = vst.msk [vmem:[#allocation2 + $0x61] sm:$0xff] %vm1911, %v1900
    %1919 = vst.msk [vmem:[#allocation2 + $0x71] sm:$0xff] %vm1911, %v1902
    %1920 = vrot.lane.b32.xlu0 %v882, 72
    %v1921 = vpop.permute.xlu0 %1920
    %1922 = vrot.lane.b32.xlu0 %v883, 72
    %v1923 = vpop.permute.xlu0 %1922
    %1924 = vrot.lane.b32.xlu0 %v884, 72
    %v1925 = vpop.permute.xlu0 %1924
    %1926 = vrot.lane.b32.xlu0 %v885, 72
    %v1927 = vpop.permute.xlu0 %1926
    %1928 = vrot.lane.b32.xlu0 %v886, 72
    %v1929 = vpop.permute.xlu0 %1928
    %1930 = vrot.lane.b32.xlu0 %v887, 72
    %v1931 = vpop.permute.xlu0 %1930
    %1932 = vrot.lane.b32.xlu0 %v888, 72
    %v1933 = vpop.permute.xlu0 %1932
    %1934 = vrot.lane.b32.xlu0 %v889, 72
    %v1935 = vpop.permute.xlu0 %1934
    %s1944 = scalar_lea.vmem [#allocation2], 128
    %1945 = vst.msk [vmem:[%s1944 + $0x1] sm:$0xff] %vm1911, %v1921
    %1946 = vst.msk [vmem:[%s1944 + $0x11] sm:$0xff] %vm1911, %v1923
    %1947 = vst.msk [vmem:[%s1944 + $0x21] sm:$0xff] %vm1911, %v1925
    %1948 = vst.msk [vmem:[%s1944 + $0x31] sm:$0xff] %vm1911, %v1927
    %1949 = vst.msk [vmem:[%s1944 + $0x41] sm:$0xff] %vm1911, %v1929
    %1950 = vst.msk [vmem:[%s1944 + $0x51] sm:$0xff] %vm1911, %v1931
    %1951 = vst.msk [vmem:[%s1944 + $0x61] sm:$0xff] %vm1911, %v1933
    %1952 = vst.msk [vmem:[%s1944 + $0x71] sm:$0xff] %vm1911, %v1935
    %1961 = vrot.lane.b32.xlu0 %v1360, 8
    %v1962 = vpop.permute.xlu0 %1961
    %1963 = vrot.lane.b32.xlu0 %v1361, 8
    %v1964 = vpop.permute.xlu0 %1963
    %1965 = vrot.lane.b32.xlu0 %v1362, 8
    %v1966 = vpop.permute.xlu0 %1965
    %1967 = vrot.lane.b32.xlu0 %v1363, 8
    %v1968 = vpop.permute.xlu0 %1967
    %1969 = vrot.lane.b32.xlu0 %v1364, 8
    %v1970 = vpop.permute.xlu0 %1969
    %1971 = vrot.lane.b32.xlu0 %v1365, 8
    %v1972 = vpop.permute.xlu0 %1971
    %1973 = vrot.lane.b32.xlu0 %v1366, 8
    %v1974 = vpop.permute.xlu0 %1973
    %1975 = vrot.lane.b32.xlu0 %v1367, 8
    %v1976 = vpop.permute.xlu0 %1975
    %s1985 = scalar_lea.vmem [#allocation2], 256
    %1986 = vst.msk [vmem:[%s1985 + $0x1] sm:$0xff] %vm1911, %v1962
    %1987 = vst.msk [vmem:[%s1985 + $0x11] sm:$0xff] %vm1911, %v1964
    %1988 = vst.msk [vmem:[%s1985 + $0x21] sm:$0xff] %vm1911, %v1966
    %1989 = vst.msk [vmem:[%s1985 + $0x31] sm:$0xff] %vm1911, %v1968
    %1990 = vst.msk [vmem:[%s1985 + $0x41] sm:$0xff] %vm1911, %v1970
    %1991 = vst.msk [vmem:[%s1985 + $0x51] sm:$0xff] %vm1911, %v1972
    %1992 = vst.msk [vmem:[%s1985 + $0x61] sm:$0xff] %vm1911, %v1974
    %1993 = vst.msk [vmem:[%s1985 + $0x71] sm:$0xff] %vm1911, %v1976
    %1994 = vrot.lane.b32.xlu0 %v1360, 72
    %v1995 = vpop.permute.xlu0 %1994
    %1996 = vrot.lane.b32.xlu0 %v1361, 72
    %v1997 = vpop.permute.xlu0 %1996
    %1998 = vrot.lane.b32.xlu0 %v1362, 72
    %v1999 = vpop.permute.xlu0 %1998
    %2000 = vrot.lane.b32.xlu0 %v1363, 72
    %v2001 = vpop.permute.xlu0 %2000
    %2002 = vrot.lane.b32.xlu0 %v1364, 72
    %v2003 = vpop.permute.xlu0 %2002
    %2004 = vrot.lane.b32.xlu0 %v1365, 72
    %v2005 = vpop.permute.xlu0 %2004
    %2006 = vrot.lane.b32.xlu0 %v1366, 72
    %v2007 = vpop.permute.xlu0 %2006
    %2008 = vrot.lane.b32.xlu0 %v1367, 72
    %v2009 = vpop.permute.xlu0 %2008
    %s2018 = scalar_lea.vmem [#allocation2], 384
    %2019 = vst.msk [vmem:[%s2018 + $0x1] sm:$0xff] %vm1911, %v1995
    %2020 = vst.msk [vmem:[%s2018 + $0x11] sm:$0xff] %vm1911, %v1997
    %2021 = vst.msk [vmem:[%s2018 + $0x21] sm:$0xff] %vm1911, %v1999
    %2022 = vst.msk [vmem:[%s2018 + $0x31] sm:$0xff] %vm1911, %v2001
    %2023 = vst.msk [vmem:[%s2018 + $0x41] sm:$0xff] %vm1911, %v2003
    %2024 = vst.msk [vmem:[%s2018 + $0x51] sm:$0xff] %vm1911, %v2005
    %2025 = vst.msk [vmem:[%s2018 + $0x61] sm:$0xff] %vm1911, %v2007
    %2026 = vst.msk [vmem:[%s2018 + $0x71] sm:$0xff] %vm1911, %v2009
    %v2027 = vld [vmem:[%s4] sm:$0x1]
    %v2028 = vld [vmem:[%s1985] sm:$0xff]
    %v2029 = vld [vmem:[%s1985 + $0x10] sm:$0xff]
    %v2030 = vld [vmem:[%s1985 + $0x20] sm:$0xff]
    %v2031 = vld [vmem:[%s1985 + $0x30] sm:$0xff]
    %v2032 = vld [vmem:[%s1985 + $0x40] sm:$0xff]
    %v2033 = vld [vmem:[%s1985 + $0x50] sm:$0xff]
    %v2034 = vld [vmem:[%s1985 + $0x60] sm:$0xff]
    %v2035 = vld [vmem:[%s1985 + $0x70] sm:$0xff]
    %v2036 = vpack.c.bf16 %v2029, %v2028
    %v2037 = vpack.c.bf16 %v2031, %v2030
    %v2038 = vpack.c.bf16 %v2033, %v2032
    %v2039 = vpack.c.bf16 %v2035, %v2034
    %v2040 = vld [vmem:[%s3] sm:$0xf]
    %v2041 = vld [vmem:[%s3 + $0x4] sm:$0xf]
    %v2042 = vld [vmem:[%s3 + $0x8] sm:$0xf]
    %v2043 = vld [vmem:[%s3 + $0xc] sm:$0xf]
    %v2044 = vld [vmem:[%s3 + $0x10] sm:$0xf]
    %v2045 = vld [vmem:[%s3 + $0x14] sm:$0xf]
    %v2046 = vld [vmem:[%s3 + $0x18] sm:$0xf]
    %v2047 = vld [vmem:[%s3 + $0x1c] sm:$0xf]
    %v2048 = vld [vmem:[%s3 + $0x20] sm:$0xf]
    %v2049 = vld [vmem:[%s3 + $0x24] sm:$0xf]
    %v2050 = vld [vmem:[%s2018] sm:$0xff]
    %v2051 = vld [vmem:[%s2018 + $0x10] sm:$0xff]
    %v2052 = vld [vmem:[%s2018 + $0x20] sm:$0xff]
    %v2053 = vld [vmem:[%s2018 + $0x30] sm:$0xff]
    %v2054 = vld [vmem:[%s2018 + $0x40] sm:$0xff]
    %v2055 = vld [vmem:[%s2018 + $0x50] sm:$0xff]
    %v2056 = vld [vmem:[%s2018 + $0x60] sm:$0xff]
    %v2057 = vld [vmem:[%s2018 + $0x70] sm:$0xff]
    %v2058 = vpack.c.bf16 %v2051, %v2050
    %v2059 = vpack.c.bf16 %v2053, %v2052
    %v2060 = vpack.c.bf16 %v2055, %v2054
    %v2061 = vpack.c.bf16 %v2057, %v2056
    %s2062 = scalar_lea.vmem %s3, 40
    %v2063 = vld [vmem:[%s2062] sm:$0xf]
    %v2064 = vld [vmem:[%s2062 + $0x4] sm:$0xf]
    %v2065 = vld [vmem:[%s2062 + $0x8] sm:$0xf]
    %v2066 = vld [vmem:[%s2062 + $0xc] sm:$0xf]
    %v2067 = vld [vmem:[%s2062 + $0x10] sm:$0xf]
    %v2068 = vld [vmem:[%s2062 + $0x14] sm:$0xf]
    %v2069 = vld [vmem:[%s2062 + $0x18] sm:$0xf]
    %v2070 = vld [vmem:[%s2062 + $0x1c] sm:$0xf]
    %v2071 = vld [vmem:[%s2062 + $0x20] sm:$0xf]
    %v2072 = vld [vmem:[%s2062 + $0x24] sm:$0xf]
    %v2083 = vunpack.c.l.b16 %v2063
    %v2084 = vunpack.c.l.b16 %v2064
    %v2085 = vunpack.c.l.b16 %v2065
    %v2086 = vunpack.c.l.b16 %v2066
    %v2087 = vunpack.c.l.b16 %v2067
    %v2088 = vunpack.c.l.b16 %v2068
    %v2089 = vunpack.c.l.b16 %v2069
    %v2090 = vunpack.c.l.b16 %v2070
    %v2091 = vunpack.c.l.b16 %v2071
    %v2092 = vunpack.c.l.b16 %v2072
    %v2093 = vpack.c.b16 %v2084, %v2083
    %v2094 = vpack.c.b16 %v2086, %v2085
    %v2095 = vpack.c.b16 %v2088, %v2087
    %v2096 = vpack.c.b16 %v2090, %v2089
    %v2097 = vpack.c.b16 %v2092, %v2091
    %vm2103 = vcmask 654336
    %v2105 = vsel %vm2103, %v2058, 0
    %v2108 = vsel %vm2103, %v2059, 0
    %v2111 = vsel %vm2103, %v2060, 0
    %v2114 = vsel %vm2103, %v2061, 0
    %2116 = vmatprep.subr.bf16.mxu0 0
    %2117 = vmatpush1.bf16.msra.mxu0 0
    %2118 = vmatprep.subr.bf16.mxu0 0
    %2119 = vmatpush1.bf16.msra.mxu0 0
    %2120 = vmatprep.subr.bf16.mxu0 0
    %2121 = vmatpush1.bf16.msra.mxu0 0
    %2122 = vmatprep.subr.bf16.mxu0 0
    %2123 = vmatpush1.bf16.msra.mxu0 %v2097
    %2124 = vmatprep.subr.bf16.mxu0 0
    %2125 = vmatpush1.bf16.msra.mxu0 %v2096
    %2126 = vmatprep.subr.bf16.mxu0 0
    %2127 = vmatpush1.bf16.msra.mxu0 %v2095
    %2128 = vmatprep.subr.bf16.mxu0 0
    %2129 = vmatpush1.bf16.msra.mxu0 %v2094
    %2130 = vmatprep.subr.bf16.mxu0 0
    %2131 = vmatpush1.bf16.msra.mxu0 %v2093
    %2132 = vmatprep.subr.bf16.mxu0 0
    %2133 = vmatpush2.bf16.msra.mxu0 0
    %2134 = vmatprep.subr.bf16.mxu0 0
    %2135 = vmatpush2.bf16.msra.mxu0 0
    %2136 = vmatprep.subr.bf16.mxu0 0
    %2137 = vmatpush2.bf16.msra.mxu0 0
    %2138 = vmatprep.subr.bf16.mxu0 0
    %2139 = vmatpush2.bf16.msra.mxu0 0
    %2140 = vmatprep.subr.bf16.mxu0 0
    %2141 = vmatpush2.bf16.msra.mxu0 0
    %2142 = vmatprep.subr.bf16.mxu0 0
    %2143 = vmatpush2.bf16.msra.mxu0 0
    %2144 = vmatprep.subr.bf16.mxu0 0
    %2145 = vmatpush2.bf16.msra.mxu0 0
    %2146 = vmatprep.subr.bf16.mxu0 0
    %2147 = vmatpush2.bf16.msra.mxu0 0
    %2148 = vmatprep.mubr.bf16.mxu0 0
    %2149 = vmatmul.mubr.bf16.gmra.mxu0 %v2105
    %v2150 = vpop.f32.mrf.mxu0
    %v2151 = vadd.f32 0.0, %v2150
    %v2152 = vpop.f32.mrf.mxu0
    %v2153 = vpop.f32.mrf.mxu0
    %v2154 = vadd.f32 0.0, %v2153
    %v2155 = vpop.f32.mrf.mxu0
    %2156 = vmatprep.mubr.bf16.mxu0 0
    %2157 = vmatmul.mubr.bf16.gmra.mxu0 %v2108
    %v2158 = vpop.f32.mrf.mxu0
    %v2159 = vadd.f32 0.0, %v2158
    %v2160 = vpop.f32.mrf.mxu0
    %v2161 = vpop.f32.mrf.mxu0
    %v2162 = vadd.f32 0.0, %v2161
    %v2163 = vpop.f32.mrf.mxu0
    %2164 = vmatprep.mubr.bf16.mxu0 0
    %2165 = vmatmul.mubr.bf16.gmra.mxu0 %v2111
    %v2166 = vpop.f32.mrf.mxu0
    %v2167 = vadd.f32 0.0, %v2166
    %v2168 = vpop.f32.mrf.mxu0
    %v2169 = vpop.f32.mrf.mxu0
    %v2170 = vadd.f32 0.0, %v2169
    %v2171 = vpop.f32.mrf.mxu0
    %2172 = vmatprep.mubr.bf16.mxu0 0
    %2173 = vmatmul.mubr.bf16.gmra.mxu0 %v2114
    %v2174 = vpop.f32.mrf.mxu0
    %v2175 = vadd.f32 0.0, %v2174
    %v2176 = vpop.f32.mrf.mxu0
    %v2177 = vpop.f32.mrf.mxu0
    %v2178 = vadd.f32 0.0, %v2177
    %v2179 = vpop.f32.mrf.mxu0
    %2180 = vdwg.mxu0
    %v2191 = vunpack.c.l.b16 %v2040
    %v2192 = vunpack.c.l.b16 %v2041
    %v2193 = vunpack.c.l.b16 %v2042
    %v2194 = vunpack.c.l.b16 %v2043
    %v2195 = vunpack.c.l.b16 %v2044
    %v2196 = vunpack.c.l.b16 %v2045
    %v2197 = vunpack.c.l.b16 %v2046
    %v2198 = vunpack.c.l.b16 %v2047
    %v2199 = vunpack.c.l.b16 %v2048
    %v2200 = vunpack.c.l.b16 %v2049
    %v2201 = vpack.c.b16 %v2192, %v2191
    %v2202 = vpack.c.b16 %v2194, %v2193
    %v2203 = vpack.c.b16 %v2196, %v2195
    %v2204 = vpack.c.b16 %v2198, %v2197
    %v2205 = vpack.c.b16 %v2200, %v2199
    %v2212 = vsel %vm2103, %v2036, 0
    %v2215 = vsel %vm2103, %v2037, 0
    %v2218 = vsel %vm2103, %v2038, 0
    %v2221 = vsel %vm2103, %v2039, 0
    %2223 = vmatprep.subr.bf16.mxu0 0
    %2224 = vmatpush1.bf16.msra.mxu0 0
    %2225 = vmatprep.subr.bf16.mxu0 0
    %2226 = vmatpush1.bf16.msra.mxu0 0
    %2227 = vmatprep.subr.bf16.mxu0 0
    %2228 = vmatpush1.bf16.msra.mxu0 0
    %2229 = vmatprep.subr.bf16.mxu0 0
    %2230 = vmatpush1.bf16.msra.mxu0 %v2205
    %2231 = vmatprep.subr.bf16.mxu0 0
    %2232 = vmatpush1.bf16.msra.mxu0 %v2204
    %2233 = vmatprep.subr.bf16.mxu0 0
    %2234 = vmatpush1.bf16.msra.mxu0 %v2203
    %2235 = vmatprep.subr.bf16.mxu0 0
    %2236 = vmatpush1.bf16.msra.mxu0 %v2202
    %2237 = vmatprep.subr.bf16.mxu0 0
    %2238 = vmatpush1.bf16.msra.mxu0 %v2201
    %2239 = vmatprep.subr.bf16.mxu0 0
    %2240 = vmatpush2.bf16.msra.mxu0 0
    %2241 = vmatprep.subr.bf16.mxu0 0
    %2242 = vmatpush2.bf16.msra.mxu0 0
    %2243 = vmatprep.subr.bf16.mxu0 0
    %2244 = vmatpush2.bf16.msra.mxu0 0
    %2245 = vmatprep.subr.bf16.mxu0 0
    %2246 = vmatpush2.bf16.msra.mxu0 0
    %2247 = vmatprep.subr.bf16.mxu0 0
    %2248 = vmatpush2.bf16.msra.mxu0 0
    %2249 = vmatprep.subr.bf16.mxu0 0
    %2250 = vmatpush2.bf16.msra.mxu0 0
    %2251 = vmatprep.subr.bf16.mxu0 0
    %2252 = vmatpush2.bf16.msra.mxu0 0
    %2253 = vmatprep.subr.bf16.mxu0 0
    %2254 = vmatpush2.bf16.msra.mxu0 0
    %2255 = vmatprep.mubr.bf16.mxu0 0
    %2256 = vmatmul.mubr.bf16.gmra.mxu0 %v2212
    %v2257 = vpop.f32.mrf.mxu0
    %v2258 = vadd.f32 %v2151, %v2257
    %v2259 = vpop.f32.mrf.mxu0
    %v2260 = vpop.f32.mrf.mxu0
    %v2261 = vadd.f32 %v2154, %v2260
    %v2262 = vpop.f32.mrf.mxu0
    %2263 = vmatprep.mubr.bf16.mxu0 0
    %2264 = vmatmul.mubr.bf16.gmra.mxu0 %v2215
    %v2265 = vpop.f32.mrf.mxu0
    %v2266 = vadd.f32 %v2159, %v2265
    %v2267 = vpop.f32.mrf.mxu0
    %v2268 = vpop.f32.mrf.mxu0
    %v2269 = vadd.f32 %v2162, %v2268
    %v2270 = vpop.f32.mrf.mxu0
    %2271 = vmatprep.mubr.bf16.mxu0 0
    %2272 = vmatmul.mubr.bf16.gmra.mxu0 %v2218
    %v2273 = vpop.f32.mrf.mxu0
    %v2274 = vadd.f32 %v2167, %v2273
    %v2275 = vpop.f32.mrf.mxu0
    %v2276 = vpop.f32.mrf.mxu0
    %v2277 = vadd.f32 %v2170, %v2276
    %v2278 = vpop.f32.mrf.mxu0
    %2279 = vmatprep.mubr.bf16.mxu0 0
    %2280 = vmatmul.mubr.bf16.gmra.mxu0 %v2221
    %v2281 = vpop.f32.mrf.mxu0
    %v2282 = vadd.f32 %v2175, %v2281
    %v2283 = vpop.f32.mrf.mxu0
    %v2284 = vpop.f32.mrf.mxu0
    %v2285 = vadd.f32 %v2178, %v2284
    %v2286 = vpop.f32.mrf.mxu0
    %2287 = vdwg.mxu0
    %v2288 = vld [vmem:[#allocation2 + $0x1] sm:$0xff]
    %v2289 = vld [vmem:[#allocation2 + $0x11] sm:$0xff]
    %v2290 = vld [vmem:[#allocation2 + $0x21] sm:$0xff]
    %v2291 = vld [vmem:[#allocation2 + $0x31] sm:$0xff]
    %v2292 = vld [vmem:[#allocation2 + $0x41] sm:$0xff]
    %v2293 = vld [vmem:[#allocation2 + $0x51] sm:$0xff]
    %v2294 = vld [vmem:[#allocation2 + $0x61] sm:$0xff]
    %v2295 = vld [vmem:[#allocation2 + $0x71] sm:$0xff]
    %v2296 = vpack.c.bf16 %v2289, %v2288
    %v2297 = vpack.c.bf16 %v2291, %v2290
    %v2298 = vpack.c.bf16 %v2293, %v2292
    %v2299 = vpack.c.bf16 %v2295, %v2294
    %s2300 = scalar_lea.vmem %s3, 80
    %v2301 = vld [vmem:[%s2300] sm:$0xf]
    %v2302 = vld [vmem:[%s2300 + $0x4] sm:$0xf]
    %v2303 = vld [vmem:[%s2300 + $0x8] sm:$0xf]
    %v2304 = vld [vmem:[%s2300 + $0xc] sm:$0xf]
    %v2305 = vld [vmem:[%s2300 + $0x10] sm:$0xf]
    %v2306 = vld [vmem:[%s2300 + $0x14] sm:$0xf]
    %v2307 = vld [vmem:[%s2300 + $0x18] sm:$0xf]
    %v2308 = vld [vmem:[%s2300 + $0x1c] sm:$0xf]
    %v2309 = vld [vmem:[%s2300 + $0x20] sm:$0xf]
    %v2310 = vld [vmem:[%s2300 + $0x24] sm:$0xf]
    %v2321 = vunpack.c.l.b16 %v2301
    %v2322 = vunpack.c.l.b16 %v2302
    %v2323 = vunpack.c.l.b16 %v2303
    %v2324 = vunpack.c.l.b16 %v2304
    %v2325 = vunpack.c.l.b16 %v2305
    %v2326 = vunpack.c.l.b16 %v2306
    %v2327 = vunpack.c.l.b16 %v2307
    %v2328 = vunpack.c.l.b16 %v2308
    %v2329 = vunpack.c.l.b16 %v2309
    %v2330 = vunpack.c.l.b16 %v2310
    %v2331 = vpack.c.b16 %v2322, %v2321
    %v2332 = vpack.c.b16 %v2324, %v2323
    %v2333 = vpack.c.b16 %v2326, %v2325
    %v2334 = vpack.c.b16 %v2328, %v2327
    %v2335 = vpack.c.b16 %v2330, %v2329
    %v2342 = vsel %vm2103, %v2296, 0
    %v2345 = vsel %vm2103, %v2297, 0
    %v2348 = vsel %vm2103, %v2298, 0
    %v2351 = vsel %vm2103, %v2299, 0
    %2353 = vmatprep.subr.bf16.mxu0 0
    %2354 = vmatpush1.bf16.msra.mxu0 0
    %2355 = vmatprep.subr.bf16.mxu0 0
    %2356 = vmatpush1.bf16.msra.mxu0 0
    %2357 = vmatprep.subr.bf16.mxu0 0
    %2358 = vmatpush1.bf16.msra.mxu0 0
    %2359 = vmatprep.subr.bf16.mxu0 0
    %2360 = vmatpush1.bf16.msra.mxu0 %v2335
    %2361 = vmatprep.subr.bf16.mxu0 0
    %2362 = vmatpush1.bf16.msra.mxu0 %v2334
    %2363 = vmatprep.subr.bf16.mxu0 0
    %2364 = vmatpush1.bf16.msra.mxu0 %v2333
    %2365 = vmatprep.subr.bf16.mxu0 0
    %2366 = vmatpush1.bf16.msra.mxu0 %v2332
    %2367 = vmatprep.subr.bf16.mxu0 0
    %2368 = vmatpush1.bf16.msra.mxu0 %v2331
    %2369 = vmatprep.subr.bf16.mxu0 0
    %2370 = vmatpush2.bf16.msra.mxu0 0
    %2371 = vmatprep.subr.bf16.mxu0 0
    %2372 = vmatpush2.bf16.msra.mxu0 0
    %2373 = vmatprep.subr.bf16.mxu0 0
    %2374 = vmatpush2.bf16.msra.mxu0 0
    %2375 = vmatprep.subr.bf16.mxu0 0
    %2376 = vmatpush2.bf16.msra.mxu0 0
    %2377 = vmatprep.subr.bf16.mxu0 0
    %2378 = vmatpush2.bf16.msra.mxu0 0
    %2379 = vmatprep.subr.bf16.mxu0 0
    %2380 = vmatpush2.bf16.msra.mxu0 0
    %2381 = vmatprep.subr.bf16.mxu0 0
    %2382 = vmatpush2.bf16.msra.mxu0 0
    %2383 = vmatprep.subr.bf16.mxu0 0
    %2384 = vmatpush2.bf16.msra.mxu0 0
    %2385 = vmatprep.mubr.bf16.mxu0 0
    %2386 = vmatmul.mubr.bf16.gmra.mxu0 %v2342
    %v2387 = vpop.f32.mrf.mxu0
    %v2388 = vadd.f32 0.0, %v2387
    %v2389 = vpop.f32.mrf.mxu0
    %v2390 = vpop.f32.mrf.mxu0
    %v2391 = vadd.f32 0.0, %v2390
    %v2392 = vpop.f32.mrf.mxu0
    %2393 = vmatprep.mubr.bf16.mxu0 0
    %2394 = vmatmul.mubr.bf16.gmra.mxu0 %v2345
    %v2395 = vpop.f32.mrf.mxu0
    %v2396 = vadd.f32 0.0, %v2395
    %v2397 = vpop.f32.mrf.mxu0
    %v2398 = vpop.f32.mrf.mxu0
    %v2399 = vadd.f32 0.0, %v2398
    %v2400 = vpop.f32.mrf.mxu0
    %2401 = vmatprep.mubr.bf16.mxu0 0
    %2402 = vmatmul.mubr.bf16.gmra.mxu0 %v2348
    %v2403 = vpop.f32.mrf.mxu0
    %v2404 = vadd.f32 0.0, %v2403
    %v2405 = vpop.f32.mrf.mxu0
    %v2406 = vpop.f32.mrf.mxu0
    %v2407 = vadd.f32 0.0, %v2406
    %v2408 = vpop.f32.mrf.mxu0
    %2409 = vmatprep.mubr.bf16.mxu0 0
    %2410 = vmatmul.mubr.bf16.gmra.mxu0 %v2351
    %v2411 = vpop.f32.mrf.mxu0
    %v2412 = vadd.f32 0.0, %v2411
    %v2413 = vpop.f32.mrf.mxu0
    %v2414 = vpop.f32.mrf.mxu0
    %v2415 = vadd.f32 0.0, %v2414
    %v2416 = vpop.f32.mrf.mxu0
    %2417 = vdwg.mxu0
    %v2418 = vadd.f32 %v2258, %v2388
    %v2419 = vadd.f32 %v2261, %v2391
    %v2420 = vadd.f32 %v2266, %v2396
    %v2421 = vadd.f32 %v2269, %v2399
    %v2422 = vadd.f32 %v2274, %v2404
    %v2423 = vadd.f32 %v2277, %v2407
    %v2424 = vadd.f32 %v2282, %v2412
    %v2425 = vadd.f32 %v2285, %v2415
    %v2426 = vld [vmem:[%s1944 + $0x1] sm:$0xff]
    %v2427 = vld [vmem:[%s1944 + $0x11] sm:$0xff]
    %v2428 = vld [vmem:[%s1944 + $0x21] sm:$0xff]
    %v2429 = vld [vmem:[%s1944 + $0x31] sm:$0xff]
    %v2430 = vld [vmem:[%s1944 + $0x41] sm:$0xff]
    %v2431 = vld [vmem:[%s1944 + $0x51] sm:$0xff]
    %v2432 = vld [vmem:[%s1944 + $0x61] sm:$0xff]
    %v2433 = vld [vmem:[%s1944 + $0x71] sm:$0xff]
    %v2434 = vpack.c.bf16 %v2427, %v2426
    %v2435 = vpack.c.bf16 %v2429, %v2428
    %v2436 = vpack.c.bf16 %v2431, %v2430
    %v2437 = vpack.c.bf16 %v2433, %v2432
    %s2438 = scalar_lea.vmem %s3, 120
    %v2439 = vld [vmem:[%s2438] sm:$0xf]
    %v2440 = vld [vmem:[%s2438 + $0x4] sm:$0xf]
    %v2441 = vld [vmem:[%s2438 + $0x8] sm:$0xf]
    %v2442 = vld [vmem:[%s2438 + $0xc] sm:$0xf]
    %v2443 = vld [vmem:[%s2438 + $0x10] sm:$0xf]
    %v2444 = vld [vmem:[%s2438 + $0x14] sm:$0xf]
    %v2445 = vld [vmem:[%s2438 + $0x18] sm:$0xf]
    %v2446 = vld [vmem:[%s2438 + $0x1c] sm:$0xf]
    %v2447 = vld [vmem:[%s2438 + $0x20] sm:$0xf]
    %v2448 = vld [vmem:[%s2438 + $0x24] sm:$0xf]
    %v2459 = vunpack.c.l.b16 %v2439
    %v2460 = vunpack.c.l.b16 %v2440
    %v2461 = vunpack.c.l.b16 %v2441
    %v2462 = vunpack.c.l.b16 %v2442
    %v2463 = vunpack.c.l.b16 %v2443
    %v2464 = vunpack.c.l.b16 %v2444
    %v2465 = vunpack.c.l.b16 %v2445
    %v2466 = vunpack.c.l.b16 %v2446
    %v2467 = vunpack.c.l.b16 %v2447
    %v2468 = vunpack.c.l.b16 %v2448
    %v2469 = vpack.c.b16 %v2460, %v2459
    %v2470 = vpack.c.b16 %v2462, %v2461
    %v2471 = vpack.c.b16 %v2464, %v2463
    %v2472 = vpack.c.b16 %v2466, %v2465
    %v2473 = vpack.c.b16 %v2468, %v2467
    %v2480 = vsel %vm2103, %v2434, 0
    %v2483 = vsel %vm2103, %v2435, 0
    %v2486 = vsel %vm2103, %v2436, 0
    %v2489 = vsel %vm2103, %v2437, 0
    %2491 = vmatprep.subr.bf16.mxu0 0
    %2492 = vmatpush1.bf16.msra.mxu0 0
    %2493 = vmatprep.subr.bf16.mxu0 0
    %2494 = vmatpush1.bf16.msra.mxu0 0
    %2495 = vmatprep.subr.bf16.mxu0 0
    %2496 = vmatpush1.bf16.msra.mxu0 0
    %2497 = vmatprep.subr.bf16.mxu0 0
    %2498 = vmatpush1.bf16.msra.mxu0 %v2473
    %2499 = vmatprep.subr.bf16.mxu0 0
    %2500 = vmatpush1.bf16.msra.mxu0 %v2472
    %2501 = vmatprep.subr.bf16.mxu0 0
    %2502 = vmatpush1.bf16.msra.mxu0 %v2471
    %2503 = vmatprep.subr.bf16.mxu0 0
    %2504 = vmatpush1.bf16.msra.mxu0 %v2470
    %2505 = vmatprep.subr.bf16.mxu0 0
    %2506 = vmatpush1.bf16.msra.mxu0 %v2469
    %2507 = vmatprep.subr.bf16.mxu0 0
    %2508 = vmatpush2.bf16.msra.mxu0 0
    %2509 = vmatprep.subr.bf16.mxu0 0
    %2510 = vmatpush2.bf16.msra.mxu0 0
    %2511 = vmatprep.subr.bf16.mxu0 0
    %2512 = vmatpush2.bf16.msra.mxu0 0
    %2513 = vmatprep.subr.bf16.mxu0 0
    %2514 = vmatpush2.bf16.msra.mxu0 0
    %2515 = vmatprep.subr.bf16.mxu0 0
    %2516 = vmatpush2.bf16.msra.mxu0 0
    %2517 = vmatprep.subr.bf16.mxu0 0
    %2518 = vmatpush2.bf16.msra.mxu0 0
    %2519 = vmatprep.subr.bf16.mxu0 0
    %2520 = vmatpush2.bf16.msra.mxu0 0
    %2521 = vmatprep.subr.bf16.mxu0 0
    %2522 = vmatpush2.bf16.msra.mxu0 0
    %2523 = vmatprep.mubr.bf16.mxu0 0
    %2524 = vmatmul.mubr.bf16.gmra.mxu0 %v2480
    %v2525 = vpop.f32.mrf.mxu0
    %v2526 = vadd.f32 0.0, %v2525
    %v2527 = vpop.f32.mrf.mxu0
    %v2528 = vpop.f32.mrf.mxu0
    %v2529 = vadd.f32 0.0, %v2528
    %v2530 = vpop.f32.mrf.mxu0
    %2531 = vmatprep.mubr.bf16.mxu0 0
    %2532 = vmatmul.mubr.bf16.gmra.mxu0 %v2483
    %v2533 = vpop.f32.mrf.mxu0
    %v2534 = vadd.f32 0.0, %v2533
    %v2535 = vpop.f32.mrf.mxu0
    %v2536 = vpop.f32.mrf.mxu0
    %v2537 = vadd.f32 0.0, %v2536
    %v2538 = vpop.f32.mrf.mxu0
    %2539 = vmatprep.mubr.bf16.mxu0 0
    %2540 = vmatmul.mubr.bf16.gmra.mxu0 %v2486
    %v2541 = vpop.f32.mrf.mxu0
    %v2542 = vadd.f32 0.0, %v2541
    %v2543 = vpop.f32.mrf.mxu0
    %v2544 = vpop.f32.mrf.mxu0
    %v2545 = vadd.f32 0.0, %v2544
    %v2546 = vpop.f32.mrf.mxu0
    %2547 = vmatprep.mubr.bf16.mxu0 0
    %2548 = vmatmul.mubr.bf16.gmra.mxu0 %v2489
    %v2549 = vpop.f32.mrf.mxu0
    %v2550 = vadd.f32 0.0, %v2549
    %v2551 = vpop.f32.mrf.mxu0
    %v2552 = vpop.f32.mrf.mxu0
    %v2553 = vadd.f32 0.0, %v2552
    %v2554 = vpop.f32.mrf.mxu0
    %2555 = vdwg.mxu0
    %v2556 = vadd.f32 %v2418, %v2526
    %v2557 = vadd.f32 %v2419, %v2529
    %v2558 = vadd.f32 %v2420, %v2534
    %v2559 = vadd.f32 %v2421, %v2537
    %v2560 = vadd.f32 %v2422, %v2542
    %v2561 = vadd.f32 %v2423, %v2545
    %v2562 = vadd.f32 %v2424, %v2550
    %v2563 = vadd.f32 %v2425, %v2553
    %v2564 = vld [vmem:[%s1985 + $0x1] sm:$0xff]
    %v2565 = vld [vmem:[%s1985 + $0x11] sm:$0xff]
    %v2566 = vld [vmem:[%s1985 + $0x21] sm:$0xff]
    %v2567 = vld [vmem:[%s1985 + $0x31] sm:$0xff]
    %v2568 = vld [vmem:[%s1985 + $0x41] sm:$0xff]
    %v2569 = vld [vmem:[%s1985 + $0x51] sm:$0xff]
    %v2570 = vld [vmem:[%s1985 + $0x61] sm:$0xff]
    %v2571 = vld [vmem:[%s1985 + $0x71] sm:$0xff]
    %v2572 = vpack.c.bf16 %v2565, %v2564
    %v2573 = vpack.c.bf16 %v2567, %v2566
    %v2574 = vpack.c.bf16 %v2569, %v2568
    %v2575 = vpack.c.bf16 %v2571, %v2570
    %s2576 = scalar_lea.vmem %s3, 160
    %v2577 = vld [vmem:[%s2576] sm:$0xf]
    %v2578 = vld [vmem:[%s2576 + $0x4] sm:$0xf]
    %v2579 = vld [vmem:[%s2576 + $0x8] sm:$0xf]
    %v2580 = vld [vmem:[%s2576 + $0xc] sm:$0xf]
    %v2581 = vld [vmem:[%s2576 + $0x10] sm:$0xf]
    %v2582 = vld [vmem:[%s2576 + $0x14] sm:$0xf]
    %v2583 = vld [vmem:[%s2576 + $0x18] sm:$0xf]
    %v2584 = vld [vmem:[%s2576 + $0x1c] sm:$0xf]
    %v2585 = vld [vmem:[%s2576 + $0x20] sm:$0xf]
    %v2586 = vld [vmem:[%s2576 + $0x24] sm:$0xf]
    %v2597 = vunpack.c.l.b16 %v2577
    %v2598 = vunpack.c.l.b16 %v2578
    %v2599 = vunpack.c.l.b16 %v2579
    %v2600 = vunpack.c.l.b16 %v2580
    %v2601 = vunpack.c.l.b16 %v2581
    %v2602 = vunpack.c.l.b16 %v2582
    %v2603 = vunpack.c.l.b16 %v2583
    %v2604 = vunpack.c.l.b16 %v2584
    %v2605 = vunpack.c.l.b16 %v2585
    %v2606 = vunpack.c.l.b16 %v2586
    %v2607 = vpack.c.b16 %v2598, %v2597
    %v2608 = vpack.c.b16 %v2600, %v2599
    %v2609 = vpack.c.b16 %v2602, %v2601
    %v2610 = vpack.c.b16 %v2604, %v2603
    %v2611 = vpack.c.b16 %v2606, %v2605
    %v2618 = vsel %vm2103, %v2572, 0
    %v2621 = vsel %vm2103, %v2573, 0
    %v2624 = vsel %vm2103, %v2574, 0
    %v2627 = vsel %vm2103, %v2575, 0
    %2629 = vmatprep.subr.bf16.mxu0 0
    %2630 = vmatpush1.bf16.msra.mxu0 0
    %2631 = vmatprep.subr.bf16.mxu0 0
    %2632 = vmatpush1.bf16.msra.mxu0 0
    %2633 = vmatprep.subr.bf16.mxu0 0
    %2634 = vmatpush1.bf16.msra.mxu0 0
    %2635 = vmatprep.subr.bf16.mxu0 0
    %2636 = vmatpush1.bf16.msra.mxu0 %v2611
    %2637 = vmatprep.subr.bf16.mxu0 0
    %2638 = vmatpush1.bf16.msra.mxu0 %v2610
    %2639 = vmatprep.subr.bf16.mxu0 0
    %2640 = vmatpush1.bf16.msra.mxu0 %v2609
    %2641 = vmatprep.subr.bf16.mxu0 0
    %2642 = vmatpush1.bf16.msra.mxu0 %v2608
    %2643 = vmatprep.subr.bf16.mxu0 0
    %2644 = vmatpush1.bf16.msra.mxu0 %v2607
    %2645 = vmatprep.subr.bf16.mxu0 0
    %2646 = vmatpush2.bf16.msra.mxu0 0
    %2647 = vmatprep.subr.bf16.mxu0 0
    %2648 = vmatpush2.bf16.msra.mxu0 0
    %2649 = vmatprep.subr.bf16.mxu0 0
    %2650 = vmatpush2.bf16.msra.mxu0 0
    %2651 = vmatprep.subr.bf16.mxu0 0
    %2652 = vmatpush2.bf16.msra.mxu0 0
    %2653 = vmatprep.subr.bf16.mxu0 0
    %2654 = vmatpush2.bf16.msra.mxu0 0
    %2655 = vmatprep.subr.bf16.mxu0 0
    %2656 = vmatpush2.bf16.msra.mxu0 0
    %2657 = vmatprep.subr.bf16.mxu0 0
    %2658 = vmatpush2.bf16.msra.mxu0 0
    %2659 = vmatprep.subr.bf16.mxu0 0
    %2660 = vmatpush2.bf16.msra.mxu0 0
    %2661 = vmatprep.mubr.bf16.mxu0 0
    %2662 = vmatmul.mubr.bf16.gmra.mxu0 %v2618
    %v2663 = vpop.f32.mrf.mxu0
    %v2664 = vadd.f32 0.0, %v2663
    %v2665 = vpop.f32.mrf.mxu0
    %v2666 = vpop.f32.mrf.mxu0
    %v2667 = vadd.f32 0.0, %v2666
    %v2668 = vpop.f32.mrf.mxu0
    %2669 = vmatprep.mubr.bf16.mxu0 0
    %2670 = vmatmul.mubr.bf16.gmra.mxu0 %v2621
    %v2671 = vpop.f32.mrf.mxu0
    %v2672 = vadd.f32 0.0, %v2671
    %v2673 = vpop.f32.mrf.mxu0
    %v2674 = vpop.f32.mrf.mxu0
    %v2675 = vadd.f32 0.0, %v2674
    %v2676 = vpop.f32.mrf.mxu0
    %2677 = vmatprep.mubr.bf16.mxu0 0
    %2678 = vmatmul.mubr.bf16.gmra.mxu0 %v2624
    %v2679 = vpop.f32.mrf.mxu0
    %v2680 = vadd.f32 0.0, %v2679
    %v2681 = vpop.f32.mrf.mxu0
    %v2682 = vpop.f32.mrf.mxu0
    %v2683 = vadd.f32 0.0, %v2682
    %v2684 = vpop.f32.mrf.mxu0
    %2685 = vmatprep.mubr.bf16.mxu0 0
    %2686 = vmatmul.mubr.bf16.gmra.mxu0 %v2627
    %v2687 = vpop.f32.mrf.mxu0
    %v2688 = vadd.f32 0.0, %v2687
    %v2689 = vpop.f32.mrf.mxu0
    %v2690 = vpop.f32.mrf.mxu0
    %v2691 = vadd.f32 0.0, %v2690
    %v2692 = vpop.f32.mrf.mxu0
    %2693 = vdwg.mxu0
    %v2694 = vadd.f32 %v2556, %v2664
    %v2695 = vadd.f32 %v2557, %v2667
    %v2696 = vadd.f32 %v2558, %v2672
    %v2697 = vadd.f32 %v2559, %v2675
    %v2698 = vadd.f32 %v2560, %v2680
    %v2699 = vadd.f32 %v2561, %v2683
    %v2700 = vadd.f32 %v2562, %v2688
    %v2701 = vadd.f32 %v2563, %v2691
    %v2702 = vld [vmem:[%s2018 + $0x1] sm:$0xff]
    %v2703 = vld [vmem:[%s2018 + $0x11] sm:$0xff]
    %v2704 = vld [vmem:[%s2018 + $0x21] sm:$0xff]
    %v2705 = vld [vmem:[%s2018 + $0x31] sm:$0xff]
    %v2706 = vld [vmem:[%s2018 + $0x41] sm:$0xff]
    %v2707 = vld [vmem:[%s2018 + $0x51] sm:$0xff]
    %v2708 = vld [vmem:[%s2018 + $0x61] sm:$0xff]
    %v2709 = vld [vmem:[%s2018 + $0x71] sm:$0xff]
    %v2710 = vpack.c.bf16 %v2703, %v2702
    %v2711 = vpack.c.bf16 %v2705, %v2704
    %v2712 = vpack.c.bf16 %v2707, %v2706
    %v2713 = vpack.c.bf16 %v2709, %v2708
    %s2714 = scalar_lea.vmem %s3, 200
    %v2715 = vld [vmem:[%s2714] sm:$0xf]
    %v2716 = vld [vmem:[%s2714 + $0x4] sm:$0xf]
    %v2717 = vld [vmem:[%s2714 + $0x8] sm:$0xf]
    %v2718 = vld [vmem:[%s2714 + $0xc] sm:$0xf]
    %v2719 = vld [vmem:[%s2714 + $0x10] sm:$0xf]
    %v2720 = vld [vmem:[%s2714 + $0x14] sm:$0xf]
    %v2721 = vld [vmem:[%s2714 + $0x18] sm:$0xf]
    %v2722 = vld [vmem:[%s2714 + $0x1c] sm:$0xf]
    %v2723 = vld [vmem:[%s2714 + $0x20] sm:$0xf]
    %v2724 = vld [vmem:[%s2714 + $0x24] sm:$0xf]
    %v2735 = vunpack.c.l.b16 %v2715
    %v2736 = vunpack.c.l.b16 %v2716
    %v2737 = vunpack.c.l.b16 %v2717
    %v2738 = vunpack.c.l.b16 %v2718
    %v2739 = vunpack.c.l.b16 %v2719
    %v2740 = vunpack.c.l.b16 %v2720
    %v2741 = vunpack.c.l.b16 %v2721
    %v2742 = vunpack.c.l.b16 %v2722
    %v2743 = vunpack.c.l.b16 %v2723
    %v2744 = vunpack.c.l.b16 %v2724
    %v2745 = vpack.c.b16 %v2736, %v2735
    %v2746 = vpack.c.b16 %v2738, %v2737
    %v2747 = vpack.c.b16 %v2740, %v2739
    %v2748 = vpack.c.b16 %v2742, %v2741
    %v2749 = vpack.c.b16 %v2744, %v2743
    %v2756 = vsel %vm2103, %v2710, 0
    %v2759 = vsel %vm2103, %v2711, 0
    %v2762 = vsel %vm2103, %v2712, 0
    %v2765 = vsel %vm2103, %v2713, 0
    %2767 = vmatprep.subr.bf16.mxu0 0
    %2768 = vmatpush1.bf16.msra.mxu0 0
    %2769 = vmatprep.subr.bf16.mxu0 0
    %2770 = vmatpush1.bf16.msra.mxu0 0
    %2771 = vmatprep.subr.bf16.mxu0 0
    %2772 = vmatpush1.bf16.msra.mxu0 0
    %2773 = vmatprep.subr.bf16.mxu0 0
    %2774 = vmatpush1.bf16.msra.mxu0 %v2749
    %2775 = vmatprep.subr.bf16.mxu0 0
    %2776 = vmatpush1.bf16.msra.mxu0 %v2748
    %2777 = vmatprep.subr.bf16.mxu0 0
    %2778 = vmatpush1.bf16.msra.mxu0 %v2747
    %2779 = vmatprep.subr.bf16.mxu0 0
    %2780 = vmatpush1.bf16.msra.mxu0 %v2746
    %2781 = vmatprep.subr.bf16.mxu0 0
    %2782 = vmatpush1.bf16.msra.mxu0 %v2745
    %2783 = vmatprep.subr.bf16.mxu0 0
    %2784 = vmatpush2.bf16.msra.mxu0 0
    %2785 = vmatprep.subr.bf16.mxu0 0
    %2786 = vmatpush2.bf16.msra.mxu0 0
    %2787 = vmatprep.subr.bf16.mxu0 0
    %2788 = vmatpush2.bf16.msra.mxu0 0
    %2789 = vmatprep.subr.bf16.mxu0 0
    %2790 = vmatpush2.bf16.msra.mxu0 0
    %2791 = vmatprep.subr.bf16.mxu0 0
    %2792 = vmatpush2.bf16.msra.mxu0 0
    %2793 = vmatprep.subr.bf16.mxu0 0
    %2794 = vmatpush2.bf16.msra.mxu0 0
    %2795 = vmatprep.subr.bf16.mxu0 0
    %2796 = vmatpush2.bf16.msra.mxu0 0
    %2797 = vmatprep.subr.bf16.mxu0 0
    %2798 = vmatpush2.bf16.msra.mxu0 0
    %2799 = vmatprep.mubr.bf16.mxu0 0
    %2800 = vmatmul.mubr.bf16.gmra.mxu0 %v2756
    %v2801 = vpop.f32.mrf.mxu0
    %v2802 = vadd.f32 0.0, %v2801
    %v2803 = vpop.f32.mrf.mxu0
    %v2804 = vpop.f32.mrf.mxu0
    %v2805 = vadd.f32 0.0, %v2804
    %v2806 = vpop.f32.mrf.mxu0
    %2807 = vmatprep.mubr.bf16.mxu0 0
    %2808 = vmatmul.mubr.bf16.gmra.mxu0 %v2759
    %v2809 = vpop.f32.mrf.mxu0
    %v2810 = vadd.f32 0.0, %v2809
    %v2811 = vpop.f32.mrf.mxu0
    %v2812 = vpop.f32.mrf.mxu0
    %v2813 = vadd.f32 0.0, %v2812
    %v2814 = vpop.f32.mrf.mxu0
    %2815 = vmatprep.mubr.bf16.mxu0 0
    %2816 = vmatmul.mubr.bf16.gmra.mxu0 %v2762
    %v2817 = vpop.f32.mrf.mxu0
    %v2818 = vadd.f32 0.0, %v2817
    %v2819 = vpop.f32.mrf.mxu0
    %v2820 = vpop.f32.mrf.mxu0
    %v2821 = vadd.f32 0.0, %v2820
    %v2822 = vpop.f32.mrf.mxu0
    %2823 = vmatprep.mubr.bf16.mxu0 0
    %2824 = vmatmul.mubr.bf16.gmra.mxu0 %v2765
    %v2825 = vpop.f32.mrf.mxu0
    %v2826 = vadd.f32 0.0, %v2825
    %v2827 = vpop.f32.mrf.mxu0
    %v2828 = vpop.f32.mrf.mxu0
    %v2829 = vadd.f32 0.0, %v2828
    %v2830 = vpop.f32.mrf.mxu0
    %2831 = vdwg.mxu0
    %v2832 = vadd.f32 %v2694, %v2802
    %v2833 = vadd.f32 %v2695, %v2805
    %v2834 = vadd.f32 %v2696, %v2810
    %v2835 = vadd.f32 %v2697, %v2813
    %v2836 = vadd.f32 %v2698, %v2818
    %v2837 = vadd.f32 %v2699, %v2821
    %v2838 = vadd.f32 %v2700, %v2826
    %v2839 = vadd.f32 %v2701, %v2829
    %v2841 = vlaneseq
    %v2842 = vshrl.u32 %v2841, 7
    %v2843 = vsub.s32 0, %v2842
    %v2844 = vrot.slane %v2027, %v2843
    %v2846 = vadd.f32 %v2832, %v2844
    %v2847 = vadd.f32 %v2833, %v2844
    %v2848 = vadd.f32 %v2834, %v2844
    %v2849 = vadd.f32 %v2835, %v2844
    %v2850 = vadd.f32 %v2836, %v2844
    %v2851 = vadd.f32 %v2837, %v2844
    %v2852 = vadd.f32 %v2838, %v2844
    %v2853 = vadd.f32 %v2839, %v2844
    %v2854 = vmax.f32 %v2846, 0.0
    %v2855 = vmax.f32 %v2847, 0.0
    %v2856 = vmax.f32 %v2848, 0.0
    %v2857 = vmax.f32 %v2849, 0.0
    %v2858 = vmax.f32 %v2850, 0.0
    %v2859 = vmax.f32 %v2851, 0.0
    %v2860 = vmax.f32 %v2852, 0.0
    %v2861 = vmax.f32 %v2853, 0.0
    %2862 = vmatprep.subr.bf16.mxu0 0
    %2863 = vmatpush1.bf16.msra.mxu0 0
    %2864 = vmatprep.subr.bf16.mxu0 0
    %2865 = vmatpush1.bf16.msra.mxu0 0
    %2866 = vmatprep.subr.bf16.mxu0 0
    %2867 = vmatpush1.bf16.msra.mxu0 0
    %2868 = vmatprep.subr.bf16.mxu0 0
    %2869 = vmatpush1.bf16.msra.mxu0 %v2097
    %2870 = vmatprep.subr.bf16.mxu0 0
    %2871 = vmatpush1.bf16.msra.mxu0 %v2096
    %2872 = vmatprep.subr.bf16.mxu0 0
    %2873 = vmatpush1.bf16.msra.mxu0 %v2095
    %2874 = vmatprep.subr.bf16.mxu0 0
    %2875 = vmatpush1.bf16.msra.mxu0 %v2094
    %2876 = vmatprep.subr.bf16.mxu0 0
    %2877 = vmatpush1.bf16.msra.mxu0 %v2093
    %2878 = vmatprep.subr.bf16.mxu0 0
    %2879 = vmatpush2.bf16.msra.mxu0 0
    %2880 = vmatprep.subr.bf16.mxu0 0
    %2881 = vmatpush2.bf16.msra.mxu0 0
    %2882 = vmatprep.subr.bf16.mxu0 0
    %2883 = vmatpush2.bf16.msra.mxu0 0
    %2884 = vmatprep.subr.bf16.mxu0 0
    %2885 = vmatpush2.bf16.msra.mxu0 0
    %2886 = vmatprep.subr.bf16.mxu0 0
    %2887 = vmatpush2.bf16.msra.mxu0 0
    %2888 = vmatprep.subr.bf16.mxu0 0
    %2889 = vmatpush2.bf16.msra.mxu0 0
    %2890 = vmatprep.subr.bf16.mxu0 0
    %2891 = vmatpush2.bf16.msra.mxu0 0
    %2892 = vmatprep.subr.bf16.mxu0 0
    %2893 = vmatpush2.bf16.msra.mxu0 0
    %2894 = vmatprep.mubr.bf16.mxu0 0
    %2895 = vmatmul.mubr.bf16.gmra.mxu0 %v2480
    %v2896 = vpop.f32.mrf.mxu0
    %v2897 = vadd.f32 0.0, %v2896
    %v2898 = vpop.f32.mrf.mxu0
    %v2899 = vpop.f32.mrf.mxu0
    %v2900 = vadd.f32 0.0, %v2899
    %v2901 = vpop.f32.mrf.mxu0
    %2902 = vmatprep.mubr.bf16.mxu0 0
    %2903 = vmatmul.mubr.bf16.gmra.mxu0 %v2483
    %v2904 = vpop.f32.mrf.mxu0
    %v2905 = vadd.f32 0.0, %v2904
    %v2906 = vpop.f32.mrf.mxu0
    %v2907 = vpop.f32.mrf.mxu0
    %v2908 = vadd.f32 0.0, %v2907
    %v2909 = vpop.f32.mrf.mxu0
    %2910 = vmatprep.mubr.bf16.mxu0 0
    %2911 = vmatmul.mubr.bf16.gmra.mxu0 %v2486
    %v2912 = vpop.f32.mrf.mxu0
    %v2913 = vadd.f32 0.0, %v2912
    %v2914 = vpop.f32.mrf.mxu0
    %v2915 = vpop.f32.mrf.mxu0
    %v2916 = vadd.f32 0.0, %v2915
    %v2917 = vpop.f32.mrf.mxu0
    %2918 = vmatprep.mubr.bf16.mxu0 0
    %2919 = vmatmul.mubr.bf16.gmra.mxu0 %v2489
    %v2920 = vpop.f32.mrf.mxu0
    %v2921 = vadd.f32 0.0, %v2920
    %v2922 = vpop.f32.mrf.mxu0
    %v2923 = vpop.f32.mrf.mxu0
    %v2924 = vadd.f32 0.0, %v2923
    %v2925 = vpop.f32.mrf.mxu0
    %2926 = vdwg.mxu0
    %2927 = vmatprep.subr.bf16.mxu0 0
    %2928 = vmatpush1.bf16.msra.mxu0 0
    %2929 = vmatprep.subr.bf16.mxu0 0
    %2930 = vmatpush1.bf16.msra.mxu0 0
    %2931 = vmatprep.subr.bf16.mxu0 0
    %2932 = vmatpush1.bf16.msra.mxu0 0
    %2933 = vmatprep.subr.bf16.mxu0 0
    %2934 = vmatpush1.bf16.msra.mxu0 %v2205
    %2935 = vmatprep.subr.bf16.mxu0 0
    %2936 = vmatpush1.bf16.msra.mxu0 %v2204
    %2937 = vmatprep.subr.bf16.mxu0 0
    %2938 = vmatpush1.bf16.msra.mxu0 %v2203
    %2939 = vmatprep.subr.bf16.mxu0 0
    %2940 = vmatpush1.bf16.msra.mxu0 %v2202
    %2941 = vmatprep.subr.bf16.mxu0 0
    %2942 = vmatpush1.bf16.msra.mxu0 %v2201
    %2943 = vmatprep.subr.bf16.mxu0 0
    %2944 = vmatpush2.bf16.msra.mxu0 0
    %2945 = vmatprep.subr.bf16.mxu0 0
    %2946 = vmatpush2.bf16.msra.mxu0 0
    %2947 = vmatprep.subr.bf16.mxu0 0
    %2948 = vmatpush2.bf16.msra.mxu0 0
    %2949 = vmatprep.subr.bf16.mxu0 0
    %2950 = vmatpush2.bf16.msra.mxu0 0
    %2951 = vmatprep.subr.bf16.mxu0 0
    %2952 = vmatpush2.bf16.msra.mxu0 0
    %2953 = vmatprep.subr.bf16.mxu0 0
    %2954 = vmatpush2.bf16.msra.mxu0 0
    %2955 = vmatprep.subr.bf16.mxu0 0
    %2956 = vmatpush2.bf16.msra.mxu0 0
    %2957 = vmatprep.subr.bf16.mxu0 0
    %2958 = vmatpush2.bf16.msra.mxu0 0
    %2959 = vmatprep.mubr.bf16.mxu0 0
    %2960 = vmatmul.mubr.bf16.gmra.mxu0 %v2342
    %v2961 = vpop.f32.mrf.mxu0
    %v2962 = vadd.f32 %v2897, %v2961
    %v2963 = vpop.f32.mrf.mxu0
    %v2964 = vpop.f32.mrf.mxu0
    %v2965 = vadd.f32 %v2900, %v2964
    %v2966 = vpop.f32.mrf.mxu0
    %2967 = vmatprep.mubr.bf16.mxu0 0
    %2968 = vmatmul.mubr.bf16.gmra.mxu0 %v2345
    %v2969 = vpop.f32.mrf.mxu0
    %v2970 = vadd.f32 %v2905, %v2969
    %v2971 = vpop.f32.mrf.mxu0
    %v2972 = vpop.f32.mrf.mxu0
    %v2973 = vadd.f32 %v2908, %v2972
    %v2974 = vpop.f32.mrf.mxu0
    %2975 = vmatprep.mubr.bf16.mxu0 0
    %2976 = vmatmul.mubr.bf16.gmra.mxu0 %v2348
    %v2977 = vpop.f32.mrf.mxu0
    %v2978 = vadd.f32 %v2913, %v2977
    %v2979 = vpop.f32.mrf.mxu0
    %v2980 = vpop.f32.mrf.mxu0
    %v2981 = vadd.f32 %v2916, %v2980
    %v2982 = vpop.f32.mrf.mxu0
    %2983 = vmatprep.mubr.bf16.mxu0 0
    %2984 = vmatmul.mubr.bf16.gmra.mxu0 %v2351
    %v2985 = vpop.f32.mrf.mxu0
    %v2986 = vadd.f32 %v2921, %v2985
    %v2987 = vpop.f32.mrf.mxu0
    %v2988 = vpop.f32.mrf.mxu0
    %v2989 = vadd.f32 %v2924, %v2988
    %v2990 = vpop.f32.mrf.mxu0
    %2991 = vdwg.mxu0
    %2992 = vmatprep.subr.bf16.mxu0 0
    %2993 = vmatpush1.bf16.msra.mxu0 0
    %2994 = vmatprep.subr.bf16.mxu0 0
    %2995 = vmatpush1.bf16.msra.mxu0 0
    %2996 = vmatprep.subr.bf16.mxu0 0
    %2997 = vmatpush1.bf16.msra.mxu0 0
    %2998 = vmatprep.subr.bf16.mxu0 0
    %2999 = vmatpush1.bf16.msra.mxu0 %v2335
    %3000 = vmatprep.subr.bf16.mxu0 0
    %3001 = vmatpush1.bf16.msra.mxu0 %v2334
    %3002 = vmatprep.subr.bf16.mxu0 0
    %3003 = vmatpush1.bf16.msra.mxu0 %v2333
    %3004 = vmatprep.subr.bf16.mxu0 0
    %3005 = vmatpush1.bf16.msra.mxu0 %v2332
    %3006 = vmatprep.subr.bf16.mxu0 0
    %3007 = vmatpush1.bf16.msra.mxu0 %v2331
    %3008 = vmatprep.subr.bf16.mxu0 0
    %3009 = vmatpush2.bf16.msra.mxu0 0
    %3010 = vmatprep.subr.bf16.mxu0 0
    %3011 = vmatpush2.bf16.msra.mxu0 0
    %3012 = vmatprep.subr.bf16.mxu0 0
    %3013 = vmatpush2.bf16.msra.mxu0 0
    %3014 = vmatprep.subr.bf16.mxu0 0
    %3015 = vmatpush2.bf16.msra.mxu0 0
    %3016 = vmatprep.subr.bf16.mxu0 0
    %3017 = vmatpush2.bf16.msra.mxu0 0
    %3018 = vmatprep.subr.bf16.mxu0 0
    %3019 = vmatpush2.bf16.msra.mxu0 0
    %3020 = vmatprep.subr.bf16.mxu0 0
    %3021 = vmatpush2.bf16.msra.mxu0 0
    %3022 = vmatprep.subr.bf16.mxu0 0
    %3023 = vmatpush2.bf16.msra.mxu0 0
    %3024 = vmatprep.mubr.bf16.mxu0 0
    %3025 = vmatmul.mubr.bf16.gmra.mxu0 %v2618
    %v3026 = vpop.f32.mrf.mxu0
    %v3027 = vadd.f32 0.0, %v3026
    %v3028 = vpop.f32.mrf.mxu0
    %v3029 = vpop.f32.mrf.mxu0
    %v3030 = vadd.f32 0.0, %v3029
    %v3031 = vpop.f32.mrf.mxu0
    %3032 = vmatprep.mubr.bf16.mxu0 0
    %3033 = vmatmul.mubr.bf16.gmra.mxu0 %v2621
    %v3034 = vpop.f32.mrf.mxu0
    %v3035 = vadd.f32 0.0, %v3034
    %v3036 = vpop.f32.mrf.mxu0
    %v3037 = vpop.f32.mrf.mxu0
    %v3038 = vadd.f32 0.0, %v3037
    %v3039 = vpop.f32.mrf.mxu0
    %3040 = vmatprep.mubr.bf16.mxu0 0
    %3041 = vmatmul.mubr.bf16.gmra.mxu0 %v2624
    %v3042 = vpop.f32.mrf.mxu0
    %v3043 = vadd.f32 0.0, %v3042
    %v3044 = vpop.f32.mrf.mxu0
    %v3045 = vpop.f32.mrf.mxu0
    %v3046 = vadd.f32 0.0, %v3045
    %v3047 = vpop.f32.mrf.mxu0
    %3048 = vmatprep.mubr.bf16.mxu0 0
    %3049 = vmatmul.mubr.bf16.gmra.mxu0 %v2627
    %v3050 = vpop.f32.mrf.mxu0
    %v3051 = vadd.f32 0.0, %v3050
    %v3052 = vpop.f32.mrf.mxu0
    %v3053 = vpop.f32.mrf.mxu0
    %v3054 = vadd.f32 0.0, %v3053
    %v3055 = vpop.f32.mrf.mxu0
    %3056 = vdwg.mxu0
    %v3057 = vadd.f32 %v2962, %v3027
    %v3058 = vadd.f32 %v2965, %v3030
    %v3059 = vadd.f32 %v2970, %v3035
    %v3060 = vadd.f32 %v2973, %v3038
    %v3061 = vadd.f32 %v2978, %v3043
    %v3062 = vadd.f32 %v2981, %v3046
    %v3063 = vadd.f32 %v2986, %v3051
    %v3064 = vadd.f32 %v2989, %v3054
    %3065 = vmatprep.subr.bf16.mxu0 0
    %3066 = vmatpush1.bf16.msra.mxu0 0
    %3067 = vmatprep.subr.bf16.mxu0 0
    %3068 = vmatpush1.bf16.msra.mxu0 0
    %3069 = vmatprep.subr.bf16.mxu0 0
    %3070 = vmatpush1.bf16.msra.mxu0 0
    %3071 = vmatprep.subr.bf16.mxu0 0
    %3072 = vmatpush1.bf16.msra.mxu0 %v2473
    %3073 = vmatprep.subr.bf16.mxu0 0
    %3074 = vmatpush1.bf16.msra.mxu0 %v2472
    %3075 = vmatprep.subr.bf16.mxu0 0
    %3076 = vmatpush1.bf16.msra.mxu0 %v2471
    %3077 = vmatprep.subr.bf16.mxu0 0
    %3078 = vmatpush1.bf16.msra.mxu0 %v2470
    %3079 = vmatprep.subr.bf16.mxu0 0
    %3080 = vmatpush1.bf16.msra.mxu0 %v2469
    %3081 = vmatprep.subr.bf16.mxu0 0
    %3082 = vmatpush2.bf16.msra.mxu0 0
    %3083 = vmatprep.subr.bf16.mxu0 0
    %3084 = vmatpush2.bf16.msra.mxu0 0
    %3085 = vmatprep.subr.bf16.mxu0 0
    %3086 = vmatpush2.bf16.msra.mxu0 0
    %3087 = vmatprep.subr.bf16.mxu0 0
    %3088 = vmatpush2.bf16.msra.mxu0 0
    %3089 = vmatprep.subr.bf16.mxu0 0
    %3090 = vmatpush2.bf16.msra.mxu0 0
    %3091 = vmatprep.subr.bf16.mxu0 0
    %3092 = vmatpush2.bf16.msra.mxu0 0
    %3093 = vmatprep.subr.bf16.mxu0 0
    %3094 = vmatpush2.bf16.msra.mxu0 0
    %3095 = vmatprep.subr.bf16.mxu0 0
    %3096 = vmatpush2.bf16.msra.mxu0 0
    %3097 = vmatprep.mubr.bf16.mxu0 0
    %3098 = vmatmul.mubr.bf16.gmra.mxu0 %v2756
    %v3099 = vpop.f32.mrf.mxu0
    %v3100 = vadd.f32 0.0, %v3099
    %v3101 = vpop.f32.mrf.mxu0
    %v3102 = vpop.f32.mrf.mxu0
    %v3103 = vadd.f32 0.0, %v3102
    %v3104 = vpop.f32.mrf.mxu0
    %3105 = vmatprep.mubr.bf16.mxu0 0
    %3106 = vmatmul.mubr.bf16.gmra.mxu0 %v2759
    %v3107 = vpop.f32.mrf.mxu0
    %v3108 = vadd.f32 0.0, %v3107
    %v3109 = vpop.f32.mrf.mxu0
    %v3110 = vpop.f32.mrf.mxu0
    %v3111 = vadd.f32 0.0, %v3110
    %v3112 = vpop.f32.mrf.mxu0
    %3113 = vmatprep.mubr.bf16.mxu0 0
    %3114 = vmatmul.mubr.bf16.gmra.mxu0 %v2762
    %v3115 = vpop.f32.mrf.mxu0
    %v3116 = vadd.f32 0.0, %v3115
    %v3117 = vpop.f32.mrf.mxu0
    %v3118 = vpop.f32.mrf.mxu0
    %v3119 = vadd.f32 0.0, %v3118
    %v3120 = vpop.f32.mrf.mxu0
    %3121 = vmatprep.mubr.bf16.mxu0 0
    %3122 = vmatmul.mubr.bf16.gmra.mxu0 %v2765
    %v3123 = vpop.f32.mrf.mxu0
    %v3124 = vadd.f32 0.0, %v3123
    %v3125 = vpop.f32.mrf.mxu0
    %v3126 = vpop.f32.mrf.mxu0
    %v3127 = vadd.f32 0.0, %v3126
    %v3128 = vpop.f32.mrf.mxu0
    %3129 = vdwg.mxu0
    %v3130 = vadd.f32 %v3057, %v3100
    %v3131 = vadd.f32 %v3058, %v3103
    %v3132 = vadd.f32 %v3059, %v3108
    %v3133 = vadd.f32 %v3060, %v3111
    %v3134 = vadd.f32 %v3061, %v3116
    %v3135 = vadd.f32 %v3062, %v3119
    %v3136 = vadd.f32 %v3063, %v3124
    %v3137 = vadd.f32 %v3064, %v3127
    %v3138 = vld [vmem:[#allocation2 + $0x2] sm:$0xff]
    %v3139 = vld [vmem:[#allocation2 + $0x12] sm:$0xff]
    %v3140 = vld [vmem:[#allocation2 + $0x22] sm:$0xff]
    %v3141 = vld [vmem:[#allocation2 + $0x32] sm:$0xff]
    %v3142 = vld [vmem:[#allocation2 + $0x42] sm:$0xff]
    %v3143 = vld [vmem:[#allocation2 + $0x52] sm:$0xff]
    %v3144 = vld [vmem:[#allocation2 + $0x62] sm:$0xff]
    %v3145 = vld [vmem:[#allocation2 + $0x72] sm:$0xff]
    %v3146 = vpack.c.bf16 %v3139, %v3138
    %v3147 = vpack.c.bf16 %v3141, %v3140
    %v3148 = vpack.c.bf16 %v3143, %v3142
    %v3149 = vpack.c.bf16 %v3145, %v3144
    %v3151 = vsel %vm2103, %v3146, 0
    %v3154 = vsel %vm2103, %v3147, 0
    %v3157 = vsel %vm2103, %v3148, 0
    %v3160 = vsel %vm2103, %v3149, 0
    %3162 = vmatprep.subr.bf16.mxu0 0
    %3163 = vmatpush1.bf16.msra.mxu0 0
    %3164 = vmatprep.subr.bf16.mxu0 0
    %3165 = vmatpush1.bf16.msra.mxu0 0
    %3166 = vmatprep.subr.bf16.mxu0 0
    %3167 = vmatpush1.bf16.msra.mxu0 0
    %3168 = vmatprep.subr.bf16.mxu0 0
    %3169 = vmatpush1.bf16.msra.mxu0 %v2611
    %3170 = vmatprep.subr.bf16.mxu0 0
    %3171 = vmatpush1.bf16.msra.mxu0 %v2610
    %3172 = vmatprep.subr.bf16.mxu0 0
    %3173 = vmatpush1.bf16.msra.mxu0 %v2609
    %3174 = vmatprep.subr.bf16.mxu0 0
    %3175 = vmatpush1.bf16.msra.mxu0 %v2608
    %3176 = vmatprep.subr.bf16.mxu0 0
    %3177 = vmatpush1.bf16.msra.mxu0 %v2607
    %3178 = vmatprep.subr.bf16.mxu0 0
    %3179 = vmatpush2.bf16.msra.mxu0 0
    %3180 = vmatprep.subr.bf16.mxu0 0
    %3181 = vmatpush2.bf16.msra.mxu0 0
    %3182 = vmatprep.subr.bf16.mxu0 0
    %3183 = vmatpush2.bf16.msra.mxu0 0
    %3184 = vmatprep.subr.bf16.mxu0 0
    %3185 = vmatpush2.bf16.msra.mxu0 0
    %3186 = vmatprep.subr.bf16.mxu0 0
    %3187 = vmatpush2.bf16.msra.mxu0 0
    %3188 = vmatprep.subr.bf16.mxu0 0
    %3189 = vmatpush2.bf16.msra.mxu0 0
    %3190 = vmatprep.subr.bf16.mxu0 0
    %3191 = vmatpush2.bf16.msra.mxu0 0
    %3192 = vmatprep.subr.bf16.mxu0 0
    %3193 = vmatpush2.bf16.msra.mxu0 0
    %3194 = vmatprep.mubr.bf16.mxu0 0
    %3195 = vmatmul.mubr.bf16.gmra.mxu0 %v3151
    %v3196 = vpop.f32.mrf.mxu0
    %v3197 = vadd.f32 0.0, %v3196
    %v3198 = vpop.f32.mrf.mxu0
    %v3199 = vpop.f32.mrf.mxu0
    %v3200 = vadd.f32 0.0, %v3199
    %v3201 = vpop.f32.mrf.mxu0
    %3202 = vmatprep.mubr.bf16.mxu0 0
    %3203 = vmatmul.mubr.bf16.gmra.mxu0 %v3154
    %v3204 = vpop.f32.mrf.mxu0
    %v3205 = vadd.f32 0.0, %v3204
    %v3206 = vpop.f32.mrf.mxu0
    %v3207 = vpop.f32.mrf.mxu0
    %v3208 = vadd.f32 0.0, %v3207
    %v3209 = vpop.f32.mrf.mxu0
    %3210 = vmatprep.mubr.bf16.mxu0 0
    %3211 = vmatmul.mubr.bf16.gmra.mxu0 %v3157
    %v3212 = vpop.f32.mrf.mxu0
    %v3213 = vadd.f32 0.0, %v3212
    %v3214 = vpop.f32.mrf.mxu0
    %v3215 = vpop.f32.mrf.mxu0
    %v3216 = vadd.f32 0.0, %v3215
    %v3217 = vpop.f32.mrf.mxu0
    %3218 = vmatprep.mubr.bf16.mxu0 0
    %3219 = vmatmul.mubr.bf16.gmra.mxu0 %v3160
    %v3220 = vpop.f32.mrf.mxu0
    %v3221 = vadd.f32 0.0, %v3220
    %v3222 = vpop.f32.mrf.mxu0
    %v3223 = vpop.f32.mrf.mxu0
    %v3224 = vadd.f32 0.0, %v3223
    %v3225 = vpop.f32.mrf.mxu0
    %3226 = vdwg.mxu0
    %v3227 = vadd.f32 %v3130, %v3197
    %v3228 = vadd.f32 %v3131, %v3200
    %v3229 = vadd.f32 %v3132, %v3205
    %v3230 = vadd.f32 %v3133, %v3208
    %v3231 = vadd.f32 %v3134, %v3213
    %v3232 = vadd.f32 %v3135, %v3216
    %v3233 = vadd.f32 %v3136, %v3221
    %v3234 = vadd.f32 %v3137, %v3224
    %v3235 = vld [vmem:[%s1944 + $0x2] sm:$0xff]
    %v3236 = vld [vmem:[%s1944 + $0x12] sm:$0xff]
    %v3237 = vld [vmem:[%s1944 + $0x22] sm:$0xff]
    %v3238 = vld [vmem:[%s1944 + $0x32] sm:$0xff]
    %v3239 = vld [vmem:[%s1944 + $0x42] sm:$0xff]
    %v3240 = vld [vmem:[%s1944 + $0x52] sm:$0xff]
    %v3241 = vld [vmem:[%s1944 + $0x62] sm:$0xff]
    %v3242 = vld [vmem:[%s1944 + $0x72] sm:$0xff]
    %v3243 = vpack.c.bf16 %v3236, %v3235
    %v3244 = vpack.c.bf16 %v3238, %v3237
    %v3245 = vpack.c.bf16 %v3240, %v3239
    %v3246 = vpack.c.bf16 %v3242, %v3241
    %v3248 = vsel %vm2103, %v3243, 0
    %v3251 = vsel %vm2103, %v3244, 0
    %v3254 = vsel %vm2103, %v3245, 0
    %v3257 = vsel %vm2103, %v3246, 0
    %3259 = vmatprep.subr.bf16.mxu0 0
    %3260 = vmatpush1.bf16.msra.mxu0 0
    %3261 = vmatprep.subr.bf16.mxu0 0
    %3262 = vmatpush1.bf16.msra.mxu0 0
    %3263 = vmatprep.subr.bf16.mxu0 0
    %3264 = vmatpush1.bf16.msra.mxu0 0
    %3265 = vmatprep.subr.bf16.mxu0 0
    %3266 = vmatpush1.bf16.msra.mxu0 %v2749
    %3267 = vmatprep.subr.bf16.mxu0 0
    %3268 = vmatpush1.bf16.msra.mxu0 %v2748
    %3269 = vmatprep.subr.bf16.mxu0 0
    %3270 = vmatpush1.bf16.msra.mxu0 %v2747
    %3271 = vmatprep.subr.bf16.mxu0 0
    %3272 = vmatpush1.bf16.msra.mxu0 %v2746
    %3273 = vmatprep.subr.bf16.mxu0 0
    %3274 = vmatpush1.bf16.msra.mxu0 %v2745
    %3275 = vmatprep.subr.bf16.mxu0 0
    %3276 = vmatpush2.bf16.msra.mxu0 0
    %3277 = vmatprep.subr.bf16.mxu0 0
    %3278 = vmatpush2.bf16.msra.mxu0 0
    %3279 = vmatprep.subr.bf16.mxu0 0
    %3280 = vmatpush2.bf16.msra.mxu0 0
    %3281 = vmatprep.subr.bf16.mxu0 0
    %3282 = vmatpush2.bf16.msra.mxu0 0
    %3283 = vmatprep.subr.bf16.mxu0 0
    %3284 = vmatpush2.bf16.msra.mxu0 0
    %3285 = vmatprep.subr.bf16.mxu0 0
    %3286 = vmatpush2.bf16.msra.mxu0 0
    %3287 = vmatprep.subr.bf16.mxu0 0
    %3288 = vmatpush2.bf16.msra.mxu0 0
    %3289 = vmatprep.subr.bf16.mxu0 0
    %3290 = vmatpush2.bf16.msra.mxu0 0
    %3291 = vmatprep.mubr.bf16.mxu0 0
    %3292 = vmatmul.mubr.bf16.gmra.mxu0 %v3248
    %v3293 = vpop.f32.mrf.mxu0
    %v3294 = vadd.f32 0.0, %v3293
    %v3295 = vpop.f32.mrf.mxu0
    %v3296 = vpop.f32.mrf.mxu0
    %v3297 = vadd.f32 0.0, %v3296
    %v3298 = vpop.f32.mrf.mxu0
    %3299 = vmatprep.mubr.bf16.mxu0 0
    %3300 = vmatmul.mubr.bf16.gmra.mxu0 %v3251
    %v3301 = vpop.f32.mrf.mxu0
    %v3302 = vadd.f32 0.0, %v3301
    %v3303 = vpop.f32.mrf.mxu0
    %v3304 = vpop.f32.mrf.mxu0
    %v3305 = vadd.f32 0.0, %v3304
    %v3306 = vpop.f32.mrf.mxu0
    %3307 = vmatprep.mubr.bf16.mxu0 0
    %3308 = vmatmul.mubr.bf16.gmra.mxu0 %v3254
    %v3309 = vpop.f32.mrf.mxu0
    %v3310 = vadd.f32 0.0, %v3309
    %v3311 = vpop.f32.mrf.mxu0
    %v3312 = vpop.f32.mrf.mxu0
    %v3313 = vadd.f32 0.0, %v3312
    %v3314 = vpop.f32.mrf.mxu0
    %3315 = vmatprep.mubr.bf16.mxu0 0
    %3316 = vmatmul.mubr.bf16.gmra.mxu0 %v3257
    %v3317 = vpop.f32.mrf.mxu0
    %v3318 = vadd.f32 0.0, %v3317
    %v3319 = vpop.f32.mrf.mxu0
    %v3320 = vpop.f32.mrf.mxu0
    %v3321 = vadd.f32 0.0, %v3320
    %v3322 = vpop.f32.mrf.mxu0
    %3323 = vdwg.mxu0
    %v3324 = vadd.f32 %v3227, %v3294
    %v3325 = vadd.f32 %v3228, %v3297
    %v3326 = vadd.f32 %v3229, %v3302
    %v3327 = vadd.f32 %v3230, %v3305
    %v3328 = vadd.f32 %v3231, %v3310
    %v3329 = vadd.f32 %v3232, %v3313
    %v3330 = vadd.f32 %v3233, %v3318
    %v3331 = vadd.f32 %v3234, %v3321
    %v3332 = vadd.f32 %v3324, %v2844
    %v3333 = vadd.f32 %v3325, %v2844
    %v3334 = vadd.f32 %v3326, %v2844
    %v3335 = vadd.f32 %v3327, %v2844
    %v3336 = vadd.f32 %v3328, %v2844
    %v3337 = vadd.f32 %v3329, %v2844
    %v3338 = vadd.f32 %v3330, %v2844
    %v3339 = vadd.f32 %v3331, %v2844
    %v3340 = vmax.f32 %v3332, 0.0
    %v3341 = vmax.f32 %v3333, 0.0
    %v3342 = vmax.f32 %v3334, 0.0
    %v3343 = vmax.f32 %v3335, 0.0
    %v3344 = vmax.f32 %v3336, 0.0
    %v3345 = vmax.f32 %v3337, 0.0
    %v3346 = vmax.f32 %v3338, 0.0
    %v3347 = vmax.f32 %v3339, 0.0
    %3356 = vrot.lane.b32.xlu0 %v2854, 8
    %v3357 = vpop.permute.xlu0 %3356
    %3358 = vrot.lane.b32.xlu0 %v2855, 8
    %v3359 = vpop.permute.xlu0 %3358
    %3360 = vrot.lane.b32.xlu0 %v2856, 8
    %v3361 = vpop.permute.xlu0 %3360
    %3362 = vrot.lane.b32.xlu0 %v2857, 8
    %v3363 = vpop.permute.xlu0 %3362
    %3364 = vrot.lane.b32.xlu0 %v2858, 8
    %v3365 = vpop.permute.xlu0 %3364
    %3366 = vrot.lane.b32.xlu0 %v2859, 8
    %v3367 = vpop.permute.xlu0 %3366
    %3368 = vrot.lane.b32.xlu0 %v2860, 8
    %v3369 = vpop.permute.xlu0 %3368
    %3370 = vrot.lane.b32.xlu0 %v2861, 8
    %v3371 = vpop.permute.xlu0 %3370
    %3380 = vst.msk [vmem:[#allocation2 + $0x1] sm:$0xff] %vm1911, %v3357
    %3381 = vst.msk [vmem:[#allocation2 + $0x11] sm:$0xff] %vm1911, %v3359
    %3382 = vst.msk [vmem:[#allocation2 + $0x21] sm:$0xff] %vm1911, %v3361
    %3383 = vst.msk [vmem:[#allocation2 + $0x31] sm:$0xff] %vm1911, %v3363
    %3384 = vst.msk [vmem:[#allocation2 + $0x41] sm:$0xff] %vm1911, %v3365
    %3385 = vst.msk [vmem:[#allocation2 + $0x51] sm:$0xff] %vm1911, %v3367
    %3386 = vst.msk [vmem:[#allocation2 + $0x61] sm:$0xff] %vm1911, %v3369
    %3387 = vst.msk [vmem:[#allocation2 + $0x71] sm:$0xff] %vm1911, %v3371
    %3388 = vrot.lane.b32.xlu0 %v2854, 72
    %v3389 = vpop.permute.xlu0 %3388
    %3390 = vrot.lane.b32.xlu0 %v2855, 72
    %v3391 = vpop.permute.xlu0 %3390
    %3392 = vrot.lane.b32.xlu0 %v2856, 72
    %v3393 = vpop.permute.xlu0 %3392
    %3394 = vrot.lane.b32.xlu0 %v2857, 72
    %v3395 = vpop.permute.xlu0 %3394
    %3396 = vrot.lane.b32.xlu0 %v2858, 72
    %v3397 = vpop.permute.xlu0 %3396
    %3398 = vrot.lane.b32.xlu0 %v2859, 72
    %v3399 = vpop.permute.xlu0 %3398
    %3400 = vrot.lane.b32.xlu0 %v2860, 72
    %v3401 = vpop.permute.xlu0 %3400
    %3402 = vrot.lane.b32.xlu0 %v2861, 72
    %v3403 = vpop.permute.xlu0 %3402
    %3412 = vst.msk [vmem:[%s1944 + $0x1] sm:$0xff] %vm1911, %v3389
    %3413 = vst.msk [vmem:[%s1944 + $0x11] sm:$0xff] %vm1911, %v3391
    %3414 = vst.msk [vmem:[%s1944 + $0x21] sm:$0xff] %vm1911, %v3393
    %3415 = vst.msk [vmem:[%s1944 + $0x31] sm:$0xff] %vm1911, %v3395
    %3416 = vst.msk [vmem:[%s1944 + $0x41] sm:$0xff] %vm1911, %v3397
    %3417 = vst.msk [vmem:[%s1944 + $0x51] sm:$0xff] %vm1911, %v3399
    %3418 = vst.msk [vmem:[%s1944 + $0x61] sm:$0xff] %vm1911, %v3401
    %3419 = vst.msk [vmem:[%s1944 + $0x71] sm:$0xff] %vm1911, %v3403
    %3428 = vrot.lane.b32.xlu0 %v3340, 8
    %v3429 = vpop.permute.xlu0 %3428
    %3430 = vrot.lane.b32.xlu0 %v3341, 8
    %v3431 = vpop.permute.xlu0 %3430
    %3432 = vrot.lane.b32.xlu0 %v3342, 8
    %v3433 = vpop.permute.xlu0 %3432
    %3434 = vrot.lane.b32.xlu0 %v3343, 8
    %v3435 = vpop.permute.xlu0 %3434
    %3436 = vrot.lane.b32.xlu0 %v3344, 8
    %v3437 = vpop.permute.xlu0 %3436
    %3438 = vrot.lane.b32.xlu0 %v3345, 8
    %v3439 = vpop.permute.xlu0 %3438
    %3440 = vrot.lane.b32.xlu0 %v3346, 8
    %v3441 = vpop.permute.xlu0 %3440
    %3442 = vrot.lane.b32.xlu0 %v3347, 8
    %v3443 = vpop.permute.xlu0 %3442
    %3452 = vst.msk [vmem:[%s1985 + $0x1] sm:$0xff] %vm1911, %v3429
    %3453 = vst.msk [vmem:[%s1985 + $0x11] sm:$0xff] %vm1911, %v3431
    %3454 = vst.msk [vmem:[%s1985 + $0x21] sm:$0xff] %vm1911, %v3433
    %3455 = vst.msk [vmem:[%s1985 + $0x31] sm:$0xff] %vm1911, %v3435
    %3456 = vst.msk [vmem:[%s1985 + $0x41] sm:$0xff] %vm1911, %v3437
    %3457 = vst.msk [vmem:[%s1985 + $0x51] sm:$0xff] %vm1911, %v3439
    %3458 = vst.msk [vmem:[%s1985 + $0x61] sm:$0xff] %vm1911, %v3441
    %3459 = vst.msk [vmem:[%s1985 + $0x71] sm:$0xff] %vm1911, %v3443
    %3460 = vrot.lane.b32.xlu0 %v3340, 72
    %v3461 = vpop.permute.xlu0 %3460
    %3462 = vrot.lane.b32.xlu0 %v3341, 72
    %v3463 = vpop.permute.xlu0 %3462
    %3464 = vrot.lane.b32.xlu0 %v3342, 72
    %v3465 = vpop.permute.xlu0 %3464
    %3466 = vrot.lane.b32.xlu0 %v3343, 72
    %v3467 = vpop.permute.xlu0 %3466
    %3468 = vrot.lane.b32.xlu0 %v3344, 72
    %v3469 = vpop.permute.xlu0 %3468
    %3470 = vrot.lane.b32.xlu0 %v3345, 72
    %v3471 = vpop.permute.xlu0 %3470
    %3472 = vrot.lane.b32.xlu0 %v3346, 72
    %v3473 = vpop.permute.xlu0 %3472
    %3474 = vrot.lane.b32.xlu0 %v3347, 72
    %v3475 = vpop.permute.xlu0 %3474
    %3484 = vst.msk [vmem:[%s2018 + $0x1] sm:$0xff] %vm1911, %v3461
    %3485 = vst.msk [vmem:[%s2018 + $0x11] sm:$0xff] %vm1911, %v3463
    %3486 = vst.msk [vmem:[%s2018 + $0x21] sm:$0xff] %vm1911, %v3465
    %3487 = vst.msk [vmem:[%s2018 + $0x31] sm:$0xff] %vm1911, %v3467
    %3488 = vst.msk [vmem:[%s2018 + $0x41] sm:$0xff] %vm1911, %v3469
    %3489 = vst.msk [vmem:[%s2018 + $0x51] sm:$0xff] %vm1911, %v3471
    %3490 = vst.msk [vmem:[%s2018 + $0x61] sm:$0xff] %vm1911, %v3473
    %3491 = vst.msk [vmem:[%s2018 + $0x71] sm:$0xff] %vm1911, %v3475
    %v3492 = vld [vmem:[%s6] sm:$0x1]
    %v3493 = vld [vmem:[%s1985] sm:$0xff]
    %v3494 = vld [vmem:[%s1985 + $0x10] sm:$0xff]
    %v3495 = vld [vmem:[%s1985 + $0x20] sm:$0xff]
    %v3496 = vld [vmem:[%s1985 + $0x30] sm:$0xff]
    %v3497 = vld [vmem:[%s1985 + $0x40] sm:$0xff]
    %v3498 = vld [vmem:[%s1985 + $0x50] sm:$0xff]
    %v3499 = vld [vmem:[%s1985 + $0x60] sm:$0xff]
    %v3500 = vld [vmem:[%s1985 + $0x70] sm:$0xff]
    %v3501 = vpack.c.bf16 %v3494, %v3493
    %v3502 = vpack.c.bf16 %v3496, %v3495
    %v3503 = vpack.c.bf16 %v3498, %v3497
    %v3504 = vpack.c.bf16 %v3500, %v3499
    %v3505 = vld [vmem:[%s5] sm:$0xf]
    %v3506 = vld [vmem:[%s5 + $0x4] sm:$0xf]
    %v3507 = vld [vmem:[%s5 + $0x8] sm:$0xf]
    %v3508 = vld [vmem:[%s5 + $0xc] sm:$0xf]
    %v3509 = vld [vmem:[%s5 + $0x10] sm:$0xf]
    %v3510 = vld [vmem:[%s5 + $0x14] sm:$0xf]
    %v3511 = vld [vmem:[%s5 + $0x18] sm:$0xf]
    %v3512 = vld [vmem:[%s5 + $0x1c] sm:$0xf]
    %v3513 = vld [vmem:[%s5 + $0x20] sm:$0xf]
    %v3514 = vld [vmem:[%s5 + $0x24] sm:$0xf]
    %v3515 = vld [vmem:[%s2018] sm:$0xff]
    %v3516 = vld [vmem:[%s2018 + $0x10] sm:$0xff]
    %v3517 = vld [vmem:[%s2018 + $0x20] sm:$0xff]
    %v3518 = vld [vmem:[%s2018 + $0x30] sm:$0xff]
    %v3519 = vld [vmem:[%s2018 + $0x40] sm:$0xff]
    %v3520 = vld [vmem:[%s2018 + $0x50] sm:$0xff]
    %v3521 = vld [vmem:[%s2018 + $0x60] sm:$0xff]
    %v3522 = vld [vmem:[%s2018 + $0x70] sm:$0xff]
    %v3523 = vpack.c.bf16 %v3516, %v3515
    %v3524 = vpack.c.bf16 %v3518, %v3517
    %v3525 = vpack.c.bf16 %v3520, %v3519
    %v3526 = vpack.c.bf16 %v3522, %v3521
    %s3527 = scalar_lea.vmem %s5, 40
    %v3528 = vld [vmem:[%s3527] sm:$0xf]
    %v3529 = vld [vmem:[%s3527 + $0x4] sm:$0xf]
    %v3530 = vld [vmem:[%s3527 + $0x8] sm:$0xf]
    %v3531 = vld [vmem:[%s3527 + $0xc] sm:$0xf]
    %v3532 = vld [vmem:[%s3527 + $0x10] sm:$0xf]
    %v3533 = vld [vmem:[%s3527 + $0x14] sm:$0xf]
    %v3534 = vld [vmem:[%s3527 + $0x18] sm:$0xf]
    %v3535 = vld [vmem:[%s3527 + $0x1c] sm:$0xf]
    %v3536 = vld [vmem:[%s3527 + $0x20] sm:$0xf]
    %v3537 = vld [vmem:[%s3527 + $0x24] sm:$0xf]
    %v3548 = vunpack.c.l.b16 %v3528
    %v3549 = vunpack.c.l.b16 %v3529
    %v3550 = vunpack.c.l.b16 %v3530
    %v3551 = vunpack.c.l.b16 %v3531
    %v3552 = vunpack.c.l.b16 %v3532
    %v3553 = vunpack.c.l.b16 %v3533
    %v3554 = vunpack.c.l.b16 %v3534
    %v3555 = vunpack.c.l.b16 %v3535
    %v3556 = vunpack.c.l.b16 %v3536
    %v3557 = vunpack.c.l.b16 %v3537
    %v3558 = vpack.c.b16 %v3549, %v3548
    %v3559 = vpack.c.b16 %v3551, %v3550
    %v3560 = vpack.c.b16 %v3553, %v3552
    %v3561 = vpack.c.b16 %v3555, %v3554
    %v3562 = vpack.c.b16 %v3557, %v3556
    %v3569 = vsel %vm2103, %v3523, 0
    %v3572 = vsel %vm2103, %v3524, 0
    %v3575 = vsel %vm2103, %v3525, 0
    %v3578 = vsel %vm2103, %v3526, 0
    %3580 = vmatprep.subr.bf16.mxu0 0
    %3581 = vmatpush1.bf16.msra.mxu0 0
    %3582 = vmatprep.subr.bf16.mxu0 0
    %3583 = vmatpush1.bf16.msra.mxu0 0
    %3584 = vmatprep.subr.bf16.mxu0 0
    %3585 = vmatpush1.bf16.msra.mxu0 0
    %3586 = vmatprep.subr.bf16.mxu0 0
    %3587 = vmatpush1.bf16.msra.mxu0 %v3562
    %3588 = vmatprep.subr.bf16.mxu0 0
    %3589 = vmatpush1.bf16.msra.mxu0 %v3561
    %3590 = vmatprep.subr.bf16.mxu0 0
    %3591 = vmatpush1.bf16.msra.mxu0 %v3560
    %3592 = vmatprep.subr.bf16.mxu0 0
    %3593 = vmatpush1.bf16.msra.mxu0 %v3559
    %3594 = vmatprep.subr.bf16.mxu0 0
    %3595 = vmatpush1.bf16.msra.mxu0 %v3558
    %3596 = vmatprep.subr.bf16.mxu0 0
    %3597 = vmatpush2.bf16.msra.mxu0 0
    %3598 = vmatprep.subr.bf16.mxu0 0
    %3599 = vmatpush2.bf16.msra.mxu0 0
    %3600 = vmatprep.subr.bf16.mxu0 0
    %3601 = vmatpush2.bf16.msra.mxu0 0
    %3602 = vmatprep.subr.bf16.mxu0 0
    %3603 = vmatpush2.bf16.msra.mxu0 0
    %3604 = vmatprep.subr.bf16.mxu0 0
    %3605 = vmatpush2.bf16.msra.mxu0 0
    %3606 = vmatprep.subr.bf16.mxu0 0
    %3607 = vmatpush2.bf16.msra.mxu0 0
    %3608 = vmatprep.subr.bf16.mxu0 0
    %3609 = vmatpush2.bf16.msra.mxu0 0
    %3610 = vmatprep.subr.bf16.mxu0 0
    %3611 = vmatpush2.bf16.msra.mxu0 0
    %3612 = vmatprep.mubr.bf16.mxu0 0
    %3613 = vmatmul.mubr.bf16.gmra.mxu0 %v3569
    %v3614 = vpop.f32.mrf.mxu0
    %v3615 = vadd.f32 0.0, %v3614
    %v3616 = vpop.f32.mrf.mxu0
    %v3617 = vpop.f32.mrf.mxu0
    %v3618 = vadd.f32 0.0, %v3617
    %v3619 = vpop.f32.mrf.mxu0
    %3620 = vmatprep.mubr.bf16.mxu0 0
    %3621 = vmatmul.mubr.bf16.gmra.mxu0 %v3572
    %v3622 = vpop.f32.mrf.mxu0
    %v3623 = vadd.f32 0.0, %v3622
    %v3624 = vpop.f32.mrf.mxu0
    %v3625 = vpop.f32.mrf.mxu0
    %v3626 = vadd.f32 0.0, %v3625
    %v3627 = vpop.f32.mrf.mxu0
    %3628 = vmatprep.mubr.bf16.mxu0 0
    %3629 = vmatmul.mubr.bf16.gmra.mxu0 %v3575
    %v3630 = vpop.f32.mrf.mxu0
    %v3631 = vadd.f32 0.0, %v3630
    %v3632 = vpop.f32.mrf.mxu0
    %v3633 = vpop.f32.mrf.mxu0
    %v3634 = vadd.f32 0.0, %v3633
    %v3635 = vpop.f32.mrf.mxu0
    %3636 = vmatprep.mubr.bf16.mxu0 0
    %3637 = vmatmul.mubr.bf16.gmra.mxu0 %v3578
    %v3638 = vpop.f32.mrf.mxu0
    %v3639 = vadd.f32 0.0, %v3638
    %v3640 = vpop.f32.mrf.mxu0
    %v3641 = vpop.f32.mrf.mxu0
    %v3642 = vadd.f32 0.0, %v3641
    %v3643 = vpop.f32.mrf.mxu0
    %3644 = vdwg.mxu0
    %v3655 = vunpack.c.l.b16 %v3505
    %v3656 = vunpack.c.l.b16 %v3506
    %v3657 = vunpack.c.l.b16 %v3507
    %v3658 = vunpack.c.l.b16 %v3508
    %v3659 = vunpack.c.l.b16 %v3509
    %v3660 = vunpack.c.l.b16 %v3510
    %v3661 = vunpack.c.l.b16 %v3511
    %v3662 = vunpack.c.l.b16 %v3512
    %v3663 = vunpack.c.l.b16 %v3513
    %v3664 = vunpack.c.l.b16 %v3514
    %v3665 = vpack.c.b16 %v3656, %v3655
    %v3666 = vpack.c.b16 %v3658, %v3657
    %v3667 = vpack.c.b16 %v3660, %v3659
    %v3668 = vpack.c.b16 %v3662, %v3661
    %v3669 = vpack.c.b16 %v3664, %v3663
    %v3676 = vsel %vm2103, %v3501, 0
    %v3679 = vsel %vm2103, %v3502, 0
    %v3682 = vsel %vm2103, %v3503, 0
    %v3685 = vsel %vm2103, %v3504, 0
    %3687 = vmatprep.subr.bf16.mxu0 0
    %3688 = vmatpush1.bf16.msra.mxu0 0
    %3689 = vmatprep.subr.bf16.mxu0 0
    %3690 = vmatpush1.bf16.msra.mxu0 0
    %3691 = vmatprep.subr.bf16.mxu0 0
    %3692 = vmatpush1.bf16.msra.mxu0 0
    %3693 = vmatprep.subr.bf16.mxu0 0
    %3694 = vmatpush1.bf16.msra.mxu0 %v3669
    %3695 = vmatprep.subr.bf16.mxu0 0
    %3696 = vmatpush1.bf16.msra.mxu0 %v3668
    %3697 = vmatprep.subr.bf16.mxu0 0
    %3698 = vmatpush1.bf16.msra.mxu0 %v3667
    %3699 = vmatprep.subr.bf16.mxu0 0
    %3700 = vmatpush1.bf16.msra.mxu0 %v3666
    %3701 = vmatprep.subr.bf16.mxu0 0
    %3702 = vmatpush1.bf16.msra.mxu0 %v3665
    %3703 = vmatprep.subr.bf16.mxu0 0
    %3704 = vmatpush2.bf16.msra.mxu0 0
    %3705 = vmatprep.subr.bf16.mxu0 0
    %3706 = vmatpush2.bf16.msra.mxu0 0
    %3707 = vmatprep.subr.bf16.mxu0 0
    %3708 = vmatpush2.bf16.msra.mxu0 0
    %3709 = vmatprep.subr.bf16.mxu0 0
    %3710 = vmatpush2.bf16.msra.mxu0 0
    %3711 = vmatprep.subr.bf16.mxu0 0
    %3712 = vmatpush2.bf16.msra.mxu0 0
    %3713 = vmatprep.subr.bf16.mxu0 0
    %3714 = vmatpush2.bf16.msra.mxu0 0
    %3715 = vmatprep.subr.bf16.mxu0 0
    %3716 = vmatpush2.bf16.msra.mxu0 0
    %3717 = vmatprep.subr.bf16.mxu0 0
    %3718 = vmatpush2.bf16.msra.mxu0 0
    %3719 = vmatprep.mubr.bf16.mxu0 0
    %3720 = vmatmul.mubr.bf16.gmra.mxu0 %v3676
    %v3721 = vpop.f32.mrf.mxu0
    %v3722 = vadd.f32 %v3615, %v3721
    %v3723 = vpop.f32.mrf.mxu0
    %v3724 = vpop.f32.mrf.mxu0
    %v3725 = vadd.f32 %v3618, %v3724
    %v3726 = vpop.f32.mrf.mxu0
    %3727 = vmatprep.mubr.bf16.mxu0 0
    %3728 = vmatmul.mubr.bf16.gmra.mxu0 %v3679
    %v3729 = vpop.f32.mrf.mxu0
    %v3730 = vadd.f32 %v3623, %v3729
    %v3731 = vpop.f32.mrf.mxu0
    %v3732 = vpop.f32.mrf.mxu0
    %v3733 = vadd.f32 %v3626, %v3732
    %v3734 = vpop.f32.mrf.mxu0
    %3735 = vmatprep.mubr.bf16.mxu0 0
    %3736 = vmatmul.mubr.bf16.gmra.mxu0 %v3682
    %v3737 = vpop.f32.mrf.mxu0
    %v3738 = vadd.f32 %v3631, %v3737
    %v3739 = vpop.f32.mrf.mxu0
    %v3740 = vpop.f32.mrf.mxu0
    %v3741 = vadd.f32 %v3634, %v3740
    %v3742 = vpop.f32.mrf.mxu0
    %3743 = vmatprep.mubr.bf16.mxu0 0
    %3744 = vmatmul.mubr.bf16.gmra.mxu0 %v3685
    %v3745 = vpop.f32.mrf.mxu0
    %v3746 = vadd.f32 %v3639, %v3745
    %v3747 = vpop.f32.mrf.mxu0
    %v3748 = vpop.f32.mrf.mxu0
    %v3749 = vadd.f32 %v3642, %v3748
    %v3750 = vpop.f32.mrf.mxu0
    %3751 = vdwg.mxu0
    %v3752 = vld [vmem:[#allocation2 + $0x1] sm:$0xff]
    %v3753 = vld [vmem:[#allocation2 + $0x11] sm:$0xff]
    %v3754 = vld [vmem:[#allocation2 + $0x21] sm:$0xff]
    %v3755 = vld [vmem:[#allocation2 + $0x31] sm:$0xff]
    %v3756 = vld [vmem:[#allocation2 + $0x41] sm:$0xff]
    %v3757 = vld [vmem:[#allocation2 + $0x51] sm:$0xff]
    %v3758 = vld [vmem:[#allocation2 + $0x61] sm:$0xff]
    %v3759 = vld [vmem:[#allocation2 + $0x71] sm:$0xff]
    %v3760 = vpack.c.bf16 %v3753, %v3752
    %v3761 = vpack.c.bf16 %v3755, %v3754
    %v3762 = vpack.c.bf16 %v3757, %v3756
    %v3763 = vpack.c.bf16 %v3759, %v3758
    %s3764 = scalar_lea.vmem %s5, 80
    %v3765 = vld [vmem:[%s3764] sm:$0xf]
    %v3766 = vld [vmem:[%s3764 + $0x4] sm:$0xf]
    %v3767 = vld [vmem:[%s3764 + $0x8] sm:$0xf]
    %v3768 = vld [vmem:[%s3764 + $0xc] sm:$0xf]
    %v3769 = vld [vmem:[%s3764 + $0x10] sm:$0xf]
    %v3770 = vld [vmem:[%s3764 + $0x14] sm:$0xf]
    %v3771 = vld [vmem:[%s3764 + $0x18] sm:$0xf]
    %v3772 = vld [vmem:[%s3764 + $0x1c] sm:$0xf]
    %v3773 = vld [vmem:[%s3764 + $0x20] sm:$0xf]
    %v3774 = vld [vmem:[%s3764 + $0x24] sm:$0xf]
    %v3785 = vunpack.c.l.b16 %v3765
    %v3786 = vunpack.c.l.b16 %v3766
    %v3787 = vunpack.c.l.b16 %v3767
    %v3788 = vunpack.c.l.b16 %v3768
    %v3789 = vunpack.c.l.b16 %v3769
    %v3790 = vunpack.c.l.b16 %v3770
    %v3791 = vunpack.c.l.b16 %v3771
    %v3792 = vunpack.c.l.b16 %v3772
    %v3793 = vunpack.c.l.b16 %v3773
    %v3794 = vunpack.c.l.b16 %v3774
    %v3795 = vpack.c.b16 %v3786, %v3785
    %v3796 = vpack.c.b16 %v3788, %v3787
    %v3797 = vpack.c.b16 %v3790, %v3789
    %v3798 = vpack.c.b16 %v3792, %v3791
    %v3799 = vpack.c.b16 %v3794, %v3793
    %v3806 = vsel %vm2103, %v3760, 0
    %v3809 = vsel %vm2103, %v3761, 0
    %v3812 = vsel %vm2103, %v3762, 0
    %v3815 = vsel %vm2103, %v3763, 0
    %3817 = vmatprep.subr.bf16.mxu0 0
    %3818 = vmatpush1.bf16.msra.mxu0 0
    %3819 = vmatprep.subr.bf16.mxu0 0
    %3820 = vmatpush1.bf16.msra.mxu0 0
    %3821 = vmatprep.subr.bf16.mxu0 0
    %3822 = vmatpush1.bf16.msra.mxu0 0
    %3823 = vmatprep.subr.bf16.mxu0 0
    %3824 = vmatpush1.bf16.msra.mxu0 %v3799
    %3825 = vmatprep.subr.bf16.mxu0 0
    %3826 = vmatpush1.bf16.msra.mxu0 %v3798
    %3827 = vmatprep.subr.bf16.mxu0 0
    %3828 = vmatpush1.bf16.msra.mxu0 %v3797
    %3829 = vmatprep.subr.bf16.mxu0 0
    %3830 = vmatpush1.bf16.msra.mxu0 %v3796
    %3831 = vmatprep.subr.bf16.mxu0 0
    %3832 = vmatpush1.bf16.msra.mxu0 %v3795
    %3833 = vmatprep.subr.bf16.mxu0 0
    %3834 = vmatpush2.bf16.msra.mxu0 0
    %3835 = vmatprep.subr.bf16.mxu0 0
    %3836 = vmatpush2.bf16.msra.mxu0 0
    %3837 = vmatprep.subr.bf16.mxu0 0
    %3838 = vmatpush2.bf16.msra.mxu0 0
    %3839 = vmatprep.subr.bf16.mxu0 0
    %3840 = vmatpush2.bf16.msra.mxu0 0
    %3841 = vmatprep.subr.bf16.mxu0 0
    %3842 = vmatpush2.bf16.msra.mxu0 0
    %3843 = vmatprep.subr.bf16.mxu0 0
    %3844 = vmatpush2.bf16.msra.mxu0 0
    %3845 = vmatprep.subr.bf16.mxu0 0
    %3846 = vmatpush2.bf16.msra.mxu0 0
    %3847 = vmatprep.subr.bf16.mxu0 0
    %3848 = vmatpush2.bf16.msra.mxu0 0
    %3849 = vmatprep.mubr.bf16.mxu0 0
    %3850 = vmatmul.mubr.bf16.gmra.mxu0 %v3806
    %v3851 = vpop.f32.mrf.mxu0
    %v3852 = vadd.f32 0.0, %v3851
    %v3853 = vpop.f32.mrf.mxu0
    %v3854 = vpop.f32.mrf.mxu0
    %v3855 = vadd.f32 0.0, %v3854
    %v3856 = vpop.f32.mrf.mxu0
    %3857 = vmatprep.mubr.bf16.mxu0 0
    %3858 = vmatmul.mubr.bf16.gmra.mxu0 %v3809
    %v3859 = vpop.f32.mrf.mxu0
    %v3860 = vadd.f32 0.0, %v3859
    %v3861 = vpop.f32.mrf.mxu0
    %v3862 = vpop.f32.mrf.mxu0
    %v3863 = vadd.f32 0.0, %v3862
    %v3864 = vpop.f32.mrf.mxu0
    %3865 = vmatprep.mubr.bf16.mxu0 0
    %3866 = vmatmul.mubr.bf16.gmra.mxu0 %v3812
    %v3867 = vpop.f32.mrf.mxu0
    %v3868 = vadd.f32 0.0, %v3867
    %v3869 = vpop.f32.mrf.mxu0
    %v3870 = vpop.f32.mrf.mxu0
    %v3871 = vadd.f32 0.0, %v3870
    %v3872 = vpop.f32.mrf.mxu0
    %3873 = vmatprep.mubr.bf16.mxu0 0
    %3874 = vmatmul.mubr.bf16.gmra.mxu0 %v3815
    %v3875 = vpop.f32.mrf.mxu0
    %v3876 = vadd.f32 0.0, %v3875
    %v3877 = vpop.f32.mrf.mxu0
    %v3878 = vpop.f32.mrf.mxu0
    %v3879 = vadd.f32 0.0, %v3878
    %v3880 = vpop.f32.mrf.mxu0
    %3881 = vdwg.mxu0
    %v3882 = vadd.f32 %v3722, %v3852
    %v3883 = vadd.f32 %v3725, %v3855
    %v3884 = vadd.f32 %v3730, %v3860
    %v3885 = vadd.f32 %v3733, %v3863
    %v3886 = vadd.f32 %v3738, %v3868
    %v3887 = vadd.f32 %v3741, %v3871
    %v3888 = vadd.f32 %v3746, %v3876
    %v3889 = vadd.f32 %v3749, %v3879
    %v3890 = vld [vmem:[%s1944 + $0x1] sm:$0xff]
    %v3891 = vld [vmem:[%s1944 + $0x11] sm:$0xff]
    %v3892 = vld [vmem:[%s1944 + $0x21] sm:$0xff]
    %v3893 = vld [vmem:[%s1944 + $0x31] sm:$0xff]
    %v3894 = vld [vmem:[%s1944 + $0x41] sm:$0xff]
    %v3895 = vld [vmem:[%s1944 + $0x51] sm:$0xff]
    %v3896 = vld [vmem:[%s1944 + $0x61] sm:$0xff]
    %v3897 = vld [vmem:[%s1944 + $0x71] sm:$0xff]
    %v3898 = vpack.c.bf16 %v3891, %v3890
    %v3899 = vpack.c.bf16 %v3893, %v3892
    %v3900 = vpack.c.bf16 %v3895, %v3894
    %v3901 = vpack.c.bf16 %v3897, %v3896
    %s3902 = scalar_lea.vmem %s5, 120
    %v3903 = vld [vmem:[%s3902] sm:$0xf]
    %v3904 = vld [vmem:[%s3902 + $0x4] sm:$0xf]
    %v3905 = vld [vmem:[%s3902 + $0x8] sm:$0xf]
    %v3906 = vld [vmem:[%s3902 + $0xc] sm:$0xf]
    %v3907 = vld [vmem:[%s3902 + $0x10] sm:$0xf]
    %v3908 = vld [vmem:[%s3902 + $0x14] sm:$0xf]
    %v3909 = vld [vmem:[%s3902 + $0x18] sm:$0xf]
    %v3910 = vld [vmem:[%s3902 + $0x1c] sm:$0xf]
    %v3911 = vld [vmem:[%s3902 + $0x20] sm:$0xf]
    %v3912 = vld [vmem:[%s3902 + $0x24] sm:$0xf]
    %v3923 = vunpack.c.l.b16 %v3903
    %v3924 = vunpack.c.l.b16 %v3904
    %v3925 = vunpack.c.l.b16 %v3905
    %v3926 = vunpack.c.l.b16 %v3906
    %v3927 = vunpack.c.l.b16 %v3907
    %v3928 = vunpack.c.l.b16 %v3908
    %v3929 = vunpack.c.l.b16 %v3909
    %v3930 = vunpack.c.l.b16 %v3910
    %v3931 = vunpack.c.l.b16 %v3911
    %v3932 = vunpack.c.l.b16 %v3912
    %v3933 = vpack.c.b16 %v3924, %v3923
    %v3934 = vpack.c.b16 %v3926, %v3925
    %v3935 = vpack.c.b16 %v3928, %v3927
    %v3936 = vpack.c.b16 %v3930, %v3929
    %v3937 = vpack.c.b16 %v3932, %v3931
    %v3944 = vsel %vm2103, %v3898, 0
    %v3947 = vsel %vm2103, %v3899, 0
    %v3950 = vsel %vm2103, %v3900, 0
    %v3953 = vsel %vm2103, %v3901, 0
    %3955 = vmatprep.subr.bf16.mxu0 0
    %3956 = vmatpush1.bf16.msra.mxu0 0
    %3957 = vmatprep.subr.bf16.mxu0 0
    %3958 = vmatpush1.bf16.msra.mxu0 0
    %3959 = vmatprep.subr.bf16.mxu0 0
    %3960 = vmatpush1.bf16.msra.mxu0 0
    %3961 = vmatprep.subr.bf16.mxu0 0
    %3962 = vmatpush1.bf16.msra.mxu0 %v3937
    %3963 = vmatprep.subr.bf16.mxu0 0
    %3964 = vmatpush1.bf16.msra.mxu0 %v3936
    %3965 = vmatprep.subr.bf16.mxu0 0
    %3966 = vmatpush1.bf16.msra.mxu0 %v3935
    %3967 = vmatprep.subr.bf16.mxu0 0
    %3968 = vmatpush1.bf16.msra.mxu0 %v3934
    %3969 = vmatprep.subr.bf16.mxu0 0
    %3970 = vmatpush1.bf16.msra.mxu0 %v3933
    %3971 = vmatprep.subr.bf16.mxu0 0
    %3972 = vmatpush2.bf16.msra.mxu0 0
    %3973 = vmatprep.subr.bf16.mxu0 0
    %3974 = vmatpush2.bf16.msra.mxu0 0
    %3975 = vmatprep.subr.bf16.mxu0 0
    %3976 = vmatpush2.bf16.msra.mxu0 0
    %3977 = vmatprep.subr.bf16.mxu0 0
    %3978 = vmatpush2.bf16.msra.mxu0 0
    %3979 = vmatprep.subr.bf16.mxu0 0
    %3980 = vmatpush2.bf16.msra.mxu0 0
    %3981 = vmatprep.subr.bf16.mxu0 0
    %3982 = vmatpush2.bf16.msra.mxu0 0
    %3983 = vmatprep.subr.bf16.mxu0 0
    %3984 = vmatpush2.bf16.msra.mxu0 0
    %3985 = vmatprep.subr.bf16.mxu0 0
    %3986 = vmatpush2.bf16.msra.mxu0 0
    %3987 = vmatprep.mubr.bf16.mxu0 0
    %3988 = vmatmul.mubr.bf16.gmra.mxu0 %v3944
    %v3989 = vpop.f32.mrf.mxu0
    %v3990 = vadd.f32 0.0, %v3989
    %v3991 = vpop.f32.mrf.mxu0
    %v3992 = vpop.f32.mrf.mxu0
    %v3993 = vadd.f32 0.0, %v3992
    %v3994 = vpop.f32.mrf.mxu0
    %3995 = vmatprep.mubr.bf16.mxu0 0
    %3996 = vmatmul.mubr.bf16.gmra.mxu0 %v3947
    %v3997 = vpop.f32.mrf.mxu0
    %v3998 = vadd.f32 0.0, %v3997
    %v3999 = vpop.f32.mrf.mxu0
    %v4000 = vpop.f32.mrf.mxu0
    %v4001 = vadd.f32 0.0, %v4000
    %v4002 = vpop.f32.mrf.mxu0
    %4003 = vmatprep.mubr.bf16.mxu0 0
    %4004 = vmatmul.mubr.bf16.gmra.mxu0 %v3950
    %v4005 = vpop.f32.mrf.mxu0
    %v4006 = vadd.f32 0.0, %v4005
    %v4007 = vpop.f32.mrf.mxu0
    %v4008 = vpop.f32.mrf.mxu0
    %v4009 = vadd.f32 0.0, %v4008
    %v4010 = vpop.f32.mrf.mxu0
    %4011 = vmatprep.mubr.bf16.mxu0 0
    %4012 = vmatmul.mubr.bf16.gmra.mxu0 %v3953
    %v4013 = vpop.f32.mrf.mxu0
    %v4014 = vadd.f32 0.0, %v4013
    %v4015 = vpop.f32.mrf.mxu0
    %v4016 = vpop.f32.mrf.mxu0
    %v4017 = vadd.f32 0.0, %v4016
    %v4018 = vpop.f32.mrf.mxu0
    %4019 = vdwg.mxu0
    %v4020 = vadd.f32 %v3882, %v3990
    %v4021 = vadd.f32 %v3883, %v3993
    %v4022 = vadd.f32 %v3884, %v3998
    %v4023 = vadd.f32 %v3885, %v4001
    %v4024 = vadd.f32 %v3886, %v4006
    %v4025 = vadd.f32 %v3887, %v4009
    %v4026 = vadd.f32 %v3888, %v4014
    %v4027 = vadd.f32 %v3889, %v4017
    %v4028 = vld [vmem:[%s1985 + $0x1] sm:$0xff]
    %v4029 = vld [vmem:[%s1985 + $0x11] sm:$0xff]
    %v4030 = vld [vmem:[%s1985 + $0x21] sm:$0xff]
    %v4031 = vld [vmem:[%s1985 + $0x31] sm:$0xff]
    %v4032 = vld [vmem:[%s1985 + $0x41] sm:$0xff]
    %v4033 = vld [vmem:[%s1985 + $0x51] sm:$0xff]
    %v4034 = vld [vmem:[%s1985 + $0x61] sm:$0xff]
    %v4035 = vld [vmem:[%s1985 + $0x71] sm:$0xff]
    %v4036 = vpack.c.bf16 %v4029, %v4028
    %v4037 = vpack.c.bf16 %v4031, %v4030
    %v4038 = vpack.c.bf16 %v4033, %v4032
    %v4039 = vpack.c.bf16 %v4035, %v4034
    %s4040 = scalar_lea.vmem %s5, 160
    %v4041 = vld [vmem:[%s4040] sm:$0xf]
    %v4042 = vld [vmem:[%s4040 + $0x4] sm:$0xf]
    %v4043 = vld [vmem:[%s4040 + $0x8] sm:$0xf]
    %v4044 = vld [vmem:[%s4040 + $0xc] sm:$0xf]
    %v4045 = vld [vmem:[%s4040 + $0x10] sm:$0xf]
    %v4046 = vld [vmem:[%s4040 + $0x14] sm:$0xf]
    %v4047 = vld [vmem:[%s4040 + $0x18] sm:$0xf]
    %v4048 = vld [vmem:[%s4040 + $0x1c] sm:$0xf]
    %v4049 = vld [vmem:[%s4040 + $0x20] sm:$0xf]
    %v4050 = vld [vmem:[%s4040 + $0x24] sm:$0xf]
    %v4061 = vunpack.c.l.b16 %v4041
    %v4062 = vunpack.c.l.b16 %v4042
    %v4063 = vunpack.c.l.b16 %v4043
    %v4064 = vunpack.c.l.b16 %v4044
    %v4065 = vunpack.c.l.b16 %v4045
    %v4066 = vunpack.c.l.b16 %v4046
    %v4067 = vunpack.c.l.b16 %v4047
    %v4068 = vunpack.c.l.b16 %v4048
    %v4069 = vunpack.c.l.b16 %v4049
    %v4070 = vunpack.c.l.b16 %v4050
    %v4071 = vpack.c.b16 %v4062, %v4061
    %v4072 = vpack.c.b16 %v4064, %v4063
    %v4073 = vpack.c.b16 %v4066, %v4065
    %v4074 = vpack.c.b16 %v4068, %v4067
    %v4075 = vpack.c.b16 %v4070, %v4069
    %v4082 = vsel %vm2103, %v4036, 0
    %v4085 = vsel %vm2103, %v4037, 0
    %v4088 = vsel %vm2103, %v4038, 0
    %v4091 = vsel %vm2103, %v4039, 0
    %4093 = vmatprep.subr.bf16.mxu0 0
    %4094 = vmatpush1.bf16.msra.mxu0 0
    %4095 = vmatprep.subr.bf16.mxu0 0
    %4096 = vmatpush1.bf16.msra.mxu0 0
    %4097 = vmatprep.subr.bf16.mxu0 0
    %4098 = vmatpush1.bf16.msra.mxu0 0
    %4099 = vmatprep.subr.bf16.mxu0 0
    %4100 = vmatpush1.bf16.msra.mxu0 %v4075
    %4101 = vmatprep.subr.bf16.mxu0 0
    %4102 = vmatpush1.bf16.msra.mxu0 %v4074
    %4103 = vmatprep.subr.bf16.mxu0 0
    %4104 = vmatpush1.bf16.msra.mxu0 %v4073
    %4105 = vmatprep.subr.bf16.mxu0 0
    %4106 = vmatpush1.bf16.msra.mxu0 %v4072
    %4107 = vmatprep.subr.bf16.mxu0 0
    %4108 = vmatpush1.bf16.msra.mxu0 %v4071
    %4109 = vmatprep.subr.bf16.mxu0 0
    %4110 = vmatpush2.bf16.msra.mxu0 0
    %4111 = vmatprep.subr.bf16.mxu0 0
    %4112 = vmatpush2.bf16.msra.mxu0 0
    %4113 = vmatprep.subr.bf16.mxu0 0
    %4114 = vmatpush2.bf16.msra.mxu0 0
    %4115 = vmatprep.subr.bf16.mxu0 0
    %4116 = vmatpush2.bf16.msra.mxu0 0
    %4117 = vmatprep.subr.bf16.mxu0 0
    %4118 = vmatpush2.bf16.msra.mxu0 0
    %4119 = vmatprep.subr.bf16.mxu0 0
    %4120 = vmatpush2.bf16.msra.mxu0 0
    %4121 = vmatprep.subr.bf16.mxu0 0
    %4122 = vmatpush2.bf16.msra.mxu0 0
    %4123 = vmatprep.subr.bf16.mxu0 0
    %4124 = vmatpush2.bf16.msra.mxu0 0
    %4125 = vmatprep.mubr.bf16.mxu0 0
    %4126 = vmatmul.mubr.bf16.gmra.mxu0 %v4082
    %v4127 = vpop.f32.mrf.mxu0
    %v4128 = vadd.f32 0.0, %v4127
    %v4129 = vpop.f32.mrf.mxu0
    %v4130 = vpop.f32.mrf.mxu0
    %v4131 = vadd.f32 0.0, %v4130
    %v4132 = vpop.f32.mrf.mxu0
    %4133 = vmatprep.mubr.bf16.mxu0 0
    %4134 = vmatmul.mubr.bf16.gmra.mxu0 %v4085
    %v4135 = vpop.f32.mrf.mxu0
    %v4136 = vadd.f32 0.0, %v4135
    %v4137 = vpop.f32.mrf.mxu0
    %v4138 = vpop.f32.mrf.mxu0
    %v4139 = vadd.f32 0.0, %v4138
    %v4140 = vpop.f32.mrf.mxu0
    %4141 = vmatprep.mubr.bf16.mxu0 0
    %4142 = vmatmul.mubr.bf16.gmra.mxu0 %v4088
    %v4143 = vpop.f32.mrf.mxu0
    %v4144 = vadd.f32 0.0, %v4143
    %v4145 = vpop.f32.mrf.mxu0
    %v4146 = vpop.f32.mrf.mxu0
    %v4147 = vadd.f32 0.0, %v4146
    %v4148 = vpop.f32.mrf.mxu0
    %4149 = vmatprep.mubr.bf16.mxu0 0
    %4150 = vmatmul.mubr.bf16.gmra.mxu0 %v4091
    %v4151 = vpop.f32.mrf.mxu0
    %v4152 = vadd.f32 0.0, %v4151
    %v4153 = vpop.f32.mrf.mxu0
    %v4154 = vpop.f32.mrf.mxu0
    %v4155 = vadd.f32 0.0, %v4154
    %v4156 = vpop.f32.mrf.mxu0
    %4157 = vdwg.mxu0
    %v4158 = vadd.f32 %v4020, %v4128
    %v4159 = vadd.f32 %v4021, %v4131
    %v4160 = vadd.f32 %v4022, %v4136
    %v4161 = vadd.f32 %v4023, %v4139
    %v4162 = vadd.f32 %v4024, %v4144
    %v4163 = vadd.f32 %v4025, %v4147
    %v4164 = vadd.f32 %v4026, %v4152
    %v4165 = vadd.f32 %v4027, %v4155
    %v4166 = vld [vmem:[%s2018 + $0x1] sm:$0xff]
    %v4167 = vld [vmem:[%s2018 + $0x11] sm:$0xff]
    %v4168 = vld [vmem:[%s2018 + $0x21] sm:$0xff]
    %v4169 = vld [vmem:[%s2018 + $0x31] sm:$0xff]
    %v4170 = vld [vmem:[%s2018 + $0x41] sm:$0xff]
    %v4171 = vld [vmem:[%s2018 + $0x51] sm:$0xff]
    %v4172 = vld [vmem:[%s2018 + $0x61] sm:$0xff]
    %v4173 = vld [vmem:[%s2018 + $0x71] sm:$0xff]
    %v4174 = vpack.c.bf16 %v4167, %v4166
    %v4175 = vpack.c.bf16 %v4169, %v4168
    %v4176 = vpack.c.bf16 %v4171, %v4170
    %v4177 = vpack.c.bf16 %v4173, %v4172
    %s4178 = scalar_lea.vmem %s5, 200
    %v4179 = vld [vmem:[%s4178] sm:$0xf]
    %v4180 = vld [vmem:[%s4178 + $0x4] sm:$0xf]
    %v4181 = vld [vmem:[%s4178 + $0x8] sm:$0xf]
    %v4182 = vld [vmem:[%s4178 + $0xc] sm:$0xf]
    %v4183 = vld [vmem:[%s4178 + $0x10] sm:$0xf]
    %v4184 = vld [vmem:[%s4178 + $0x14] sm:$0xf]
    %v4185 = vld [vmem:[%s4178 + $0x18] sm:$0xf]
    %v4186 = vld [vmem:[%s4178 + $0x1c] sm:$0xf]
    %v4187 = vld [vmem:[%s4178 + $0x20] sm:$0xf]
    %v4188 = vld [vmem:[%s4178 + $0x24] sm:$0xf]
    %v4199 = vunpack.c.l.b16 %v4179
    %v4200 = vunpack.c.l.b16 %v4180
    %v4201 = vunpack.c.l.b16 %v4181
    %v4202 = vunpack.c.l.b16 %v4182
    %v4203 = vunpack.c.l.b16 %v4183
    %v4204 = vunpack.c.l.b16 %v4184
    %v4205 = vunpack.c.l.b16 %v4185
    %v4206 = vunpack.c.l.b16 %v4186
    %v4207 = vunpack.c.l.b16 %v4187
    %v4208 = vunpack.c.l.b16 %v4188
    %v4209 = vpack.c.b16 %v4200, %v4199
    %v4210 = vpack.c.b16 %v4202, %v4201
    %v4211 = vpack.c.b16 %v4204, %v4203
    %v4212 = vpack.c.b16 %v4206, %v4205
    %v4213 = vpack.c.b16 %v4208, %v4207
    %v4220 = vsel %vm2103, %v4174, 0
    %v4223 = vsel %vm2103, %v4175, 0
    %v4226 = vsel %vm2103, %v4176, 0
    %v4229 = vsel %vm2103, %v4177, 0
    %4231 = vmatprep.subr.bf16.mxu0 0
    %4232 = vmatpush1.bf16.msra.mxu0 0
    %4233 = vmatprep.subr.bf16.mxu0 0
    %4234 = vmatpush1.bf16.msra.mxu0 0
    %4235 = vmatprep.subr.bf16.mxu0 0
    %4236 = vmatpush1.bf16.msra.mxu0 0
    %4237 = vmatprep.subr.bf16.mxu0 0
    %4238 = vmatpush1.bf16.msra.mxu0 %v4213
    %4239 = vmatprep.subr.bf16.mxu0 0
    %4240 = vmatpush1.bf16.msra.mxu0 %v4212
    %4241 = vmatprep.subr.bf16.mxu0 0
    %4242 = vmatpush1.bf16.msra.mxu0 %v4211
    %4243 = vmatprep.subr.bf16.mxu0 0
    %4244 = vmatpush1.bf16.msra.mxu0 %v4210
    %4245 = vmatprep.subr.bf16.mxu0 0
    %4246 = vmatpush1.bf16.msra.mxu0 %v4209
    %4247 = vmatprep.subr.bf16.mxu0 0
    %4248 = vmatpush2.bf16.msra.mxu0 0
    %4249 = vmatprep.subr.bf16.mxu0 0
    %4250 = vmatpush2.bf16.msra.mxu0 0
    %4251 = vmatprep.subr.bf16.mxu0 0
    %4252 = vmatpush2.bf16.msra.mxu0 0
    %4253 = vmatprep.subr.bf16.mxu0 0
    %4254 = vmatpush2.bf16.msra.mxu0 0
    %4255 = vmatprep.subr.bf16.mxu0 0
    %4256 = vmatpush2.bf16.msra.mxu0 0
    %4257 = vmatprep.subr.bf16.mxu0 0
    %4258 = vmatpush2.bf16.msra.mxu0 0
    %4259 = vmatprep.subr.bf16.mxu0 0
    %4260 = vmatpush2.bf16.msra.mxu0 0
    %4261 = vmatprep.subr.bf16.mxu0 0
    %4262 = vmatpush2.bf16.msra.mxu0 0
    %4263 = vmatprep.mubr.bf16.mxu0 0
    %4264 = vmatmul.mubr.bf16.gmra.mxu0 %v4220
    %v4265 = vpop.f32.mrf.mxu0
    %v4266 = vadd.f32 0.0, %v4265
    %v4267 = vpop.f32.mrf.mxu0
    %v4268 = vpop.f32.mrf.mxu0
    %v4269 = vadd.f32 0.0, %v4268
    %v4270 = vpop.f32.mrf.mxu0
    %4271 = vmatprep.mubr.bf16.mxu0 0
    %4272 = vmatmul.mubr.bf16.gmra.mxu0 %v4223
    %v4273 = vpop.f32.mrf.mxu0
    %v4274 = vadd.f32 0.0, %v4273
    %v4275 = vpop.f32.mrf.mxu0
    %v4276 = vpop.f32.mrf.mxu0
    %v4277 = vadd.f32 0.0, %v4276
    %v4278 = vpop.f32.mrf.mxu0
    %4279 = vmatprep.mubr.bf16.mxu0 0
    %4280 = vmatmul.mubr.bf16.gmra.mxu0 %v4226
    %v4281 = vpop.f32.mrf.mxu0
    %v4282 = vadd.f32 0.0, %v4281
    %v4283 = vpop.f32.mrf.mxu0
    %v4284 = vpop.f32.mrf.mxu0
    %v4285 = vadd.f32 0.0, %v4284
    %v4286 = vpop.f32.mrf.mxu0
    %4287 = vmatprep.mubr.bf16.mxu0 0
    %4288 = vmatmul.mubr.bf16.gmra.mxu0 %v4229
    %v4289 = vpop.f32.mrf.mxu0
    %v4290 = vadd.f32 0.0, %v4289
    %v4291 = vpop.f32.mrf.mxu0
    %v4292 = vpop.f32.mrf.mxu0
    %v4293 = vadd.f32 0.0, %v4292
    %v4294 = vpop.f32.mrf.mxu0
    %4295 = vdwg.mxu0
    %v4296 = vadd.f32 %v4158, %v4266
    %v4297 = vadd.f32 %v4159, %v4269
    %v4298 = vadd.f32 %v4160, %v4274
    %v4299 = vadd.f32 %v4161, %v4277
    %v4300 = vadd.f32 %v4162, %v4282
    %v4301 = vadd.f32 %v4163, %v4285
    %v4302 = vadd.f32 %v4164, %v4290
    %v4303 = vadd.f32 %v4165, %v4293
    %v4305 = vlaneseq
    %v4306 = vshrl.u32 %v4305, 7
    %v4307 = vsub.s32 0, %v4306
    %v4308 = vrot.slane %v3492, %v4307
    %v4310 = vadd.f32 %v4296, %v4308
    %v4311 = vadd.f32 %v4297, %v4308
    %v4312 = vadd.f32 %v4298, %v4308
    %v4313 = vadd.f32 %v4299, %v4308
    %v4314 = vadd.f32 %v4300, %v4308
    %v4315 = vadd.f32 %v4301, %v4308
    %v4316 = vadd.f32 %v4302, %v4308
    %v4317 = vadd.f32 %v4303, %v4308
    %v4318 = vmax.f32 %v4310, 0.0
    %v4319 = vmax.f32 %v4311, 0.0
    %v4320 = vmax.f32 %v4312, 0.0
    %v4321 = vmax.f32 %v4313, 0.0
    %v4322 = vmax.f32 %v4314, 0.0
    %v4323 = vmax.f32 %v4315, 0.0
    %v4324 = vmax.f32 %v4316, 0.0
    %v4325 = vmax.f32 %v4317, 0.0
    %4326 = vmatprep.subr.bf16.mxu0 0
    %4327 = vmatpush1.bf16.msra.mxu0 0
    %4328 = vmatprep.subr.bf16.mxu0 0
    %4329 = vmatpush1.bf16.msra.mxu0 0
    %4330 = vmatprep.subr.bf16.mxu0 0
    %4331 = vmatpush1.bf16.msra.mxu0 0
    %4332 = vmatprep.subr.bf16.mxu0 0
    %4333 = vmatpush1.bf16.msra.mxu0 %v3562
    %4334 = vmatprep.subr.bf16.mxu0 0
    %4335 = vmatpush1.bf16.msra.mxu0 %v3561
    %4336 = vmatprep.subr.bf16.mxu0 0
    %4337 = vmatpush1.bf16.msra.mxu0 %v3560
    %4338 = vmatprep.subr.bf16.mxu0 0
    %4339 = vmatpush1.bf16.msra.mxu0 %v3559
    %4340 = vmatprep.subr.bf16.mxu0 0
    %4341 = vmatpush1.bf16.msra.mxu0 %v3558
    %4342 = vmatprep.subr.bf16.mxu0 0
    %4343 = vmatpush2.bf16.msra.mxu0 0
    %4344 = vmatprep.subr.bf16.mxu0 0
    %4345 = vmatpush2.bf16.msra.mxu0 0
    %4346 = vmatprep.subr.bf16.mxu0 0
    %4347 = vmatpush2.bf16.msra.mxu0 0
    %4348 = vmatprep.subr.bf16.mxu0 0
    %4349 = vmatpush2.bf16.msra.mxu0 0
    %4350 = vmatprep.subr.bf16.mxu0 0
    %4351 = vmatpush2.bf16.msra.mxu0 0
    %4352 = vmatprep.subr.bf16.mxu0 0
    %4353 = vmatpush2.bf16.msra.mxu0 0
    %4354 = vmatprep.subr.bf16.mxu0 0
    %4355 = vmatpush2.bf16.msra.mxu0 0
    %4356 = vmatprep.subr.bf16.mxu0 0
    %4357 = vmatpush2.bf16.msra.mxu0 0
    %4358 = vmatprep.mubr.bf16.mxu0 0
    %4359 = vmatmul.mubr.bf16.gmra.mxu0 %v3944
    %v4360 = vpop.f32.mrf.mxu0
    %v4361 = vadd.f32 0.0, %v4360
    %v4362 = vpop.f32.mrf.mxu0
    %v4363 = vpop.f32.mrf.mxu0
    %v4364 = vadd.f32 0.0, %v4363
    %v4365 = vpop.f32.mrf.mxu0
    %4366 = vmatprep.mubr.bf16.mxu0 0
    %4367 = vmatmul.mubr.bf16.gmra.mxu0 %v3947
    %v4368 = vpop.f32.mrf.mxu0
    %v4369 = vadd.f32 0.0, %v4368
    %v4370 = vpop.f32.mrf.mxu0
    %v4371 = vpop.f32.mrf.mxu0
    %v4372 = vadd.f32 0.0, %v4371
    %v4373 = vpop.f32.mrf.mxu0
    %4374 = vmatprep.mubr.bf16.mxu0 0
    %4375 = vmatmul.mubr.bf16.gmra.mxu0 %v3950
    %v4376 = vpop.f32.mrf.mxu0
    %v4377 = vadd.f32 0.0, %v4376
    %v4378 = vpop.f32.mrf.mxu0
    %v4379 = vpop.f32.mrf.mxu0
    %v4380 = vadd.f32 0.0, %v4379
    %v4381 = vpop.f32.mrf.mxu0
    %4382 = vmatprep.mubr.bf16.mxu0 0
    %4383 = vmatmul.mubr.bf16.gmra.mxu0 %v3953
    %v4384 = vpop.f32.mrf.mxu0
    %v4385 = vadd.f32 0.0, %v4384
    %v4386 = vpop.f32.mrf.mxu0
    %v4387 = vpop.f32.mrf.mxu0
    %v4388 = vadd.f32 0.0, %v4387
    %v4389 = vpop.f32.mrf.mxu0
    %4390 = vdwg.mxu0
    %4391 = vmatprep.subr.bf16.mxu0 0
    %4392 = vmatpush1.bf16.msra.mxu0 0
    %4393 = vmatprep.subr.bf16.mxu0 0
    %4394 = vmatpush1.bf16.msra.mxu0 0
    %4395 = vmatprep.subr.bf16.mxu0 0
    %4396 = vmatpush1.bf16.msra.mxu0 0
    %4397 = vmatprep.subr.bf16.mxu0 0
    %4398 = vmatpush1.bf16.msra.mxu0 %v3669
    %4399 = vmatprep.subr.bf16.mxu0 0
    %4400 = vmatpush1.bf16.msra.mxu0 %v3668
    %4401 = vmatprep.subr.bf16.mxu0 0
    %4402 = vmatpush1.bf16.msra.mxu0 %v3667
    %4403 = vmatprep.subr.bf16.mxu0 0
    %4404 = vmatpush1.bf16.msra.mxu0 %v3666
    %4405 = vmatprep.subr.bf16.mxu0 0
    %4406 = vmatpush1.bf16.msra.mxu0 %v3665
    %4407 = vmatprep.subr.bf16.mxu0 0
    %4408 = vmatpush2.bf16.msra.mxu0 0
    %4409 = vmatprep.subr.bf16.mxu0 0
    %4410 = vmatpush2.bf16.msra.mxu0 0
    %4411 = vmatprep.subr.bf16.mxu0 0
    %4412 = vmatpush2.bf16.msra.mxu0 0
    %4413 = vmatprep.subr.bf16.mxu0 0
    %4414 = vmatpush2.bf16.msra.mxu0 0
    %4415 = vmatprep.subr.bf16.mxu0 0
    %4416 = vmatpush2.bf16.msra.mxu0 0
    %4417 = vmatprep.subr.bf16.mxu0 0
    %4418 = vmatpush2.bf16.msra.mxu0 0
    %4419 = vmatprep.subr.bf16.mxu0 0
    %4420 = vmatpush2.bf16.msra.mxu0 0
    %4421 = vmatprep.subr.bf16.mxu0 0
    %4422 = vmatpush2.bf16.msra.mxu0 0
    %4423 = vmatprep.mubr.bf16.mxu0 0
    %4424 = vmatmul.mubr.bf16.gmra.mxu0 %v3806
    %v4425 = vpop.f32.mrf.mxu0
    %v4426 = vadd.f32 %v4361, %v4425
    %v4427 = vpop.f32.mrf.mxu0
    %v4428 = vpop.f32.mrf.mxu0
    %v4429 = vadd.f32 %v4364, %v4428
    %v4430 = vpop.f32.mrf.mxu0
    %4431 = vmatprep.mubr.bf16.mxu0 0
    %4432 = vmatmul.mubr.bf16.gmra.mxu0 %v3809
    %v4433 = vpop.f32.mrf.mxu0
    %v4434 = vadd.f32 %v4369, %v4433
    %v4435 = vpop.f32.mrf.mxu0
    %v4436 = vpop.f32.mrf.mxu0
    %v4437 = vadd.f32 %v4372, %v4436
    %v4438 = vpop.f32.mrf.mxu0
    %4439 = vmatprep.mubr.bf16.mxu0 0
    %4440 = vmatmul.mubr.bf16.gmra.mxu0 %v3812
    %v4441 = vpop.f32.mrf.mxu0
    %v4442 = vadd.f32 %v4377, %v4441
    %v4443 = vpop.f32.mrf.mxu0
    %v4444 = vpop.f32.mrf.mxu0
    %v4445 = vadd.f32 %v4380, %v4444
    %v4446 = vpop.f32.mrf.mxu0
    %4447 = vmatprep.mubr.bf16.mxu0 0
    %4448 = vmatmul.mubr.bf16.gmra.mxu0 %v3815
    %v4449 = vpop.f32.mrf.mxu0
    %v4450 = vadd.f32 %v4385, %v4449
    %v4451 = vpop.f32.mrf.mxu0
    %v4452 = vpop.f32.mrf.mxu0
    %v4453 = vadd.f32 %v4388, %v4452
    %v4454 = vpop.f32.mrf.mxu0
    %4455 = vdwg.mxu0
    %4456 = vmatprep.subr.bf16.mxu0 0
    %4457 = vmatpush1.bf16.msra.mxu0 0
    %4458 = vmatprep.subr.bf16.mxu0 0
    %4459 = vmatpush1.bf16.msra.mxu0 0
    %4460 = vmatprep.subr.bf16.mxu0 0
    %4461 = vmatpush1.bf16.msra.mxu0 0
    %4462 = vmatprep.subr.bf16.mxu0 0
    %4463 = vmatpush1.bf16.msra.mxu0 %v3799
    %4464 = vmatprep.subr.bf16.mxu0 0
    %4465 = vmatpush1.bf16.msra.mxu0 %v3798
    %4466 = vmatprep.subr.bf16.mxu0 0
    %4467 = vmatpush1.bf16.msra.mxu0 %v3797
    %4468 = vmatprep.subr.bf16.mxu0 0
    %4469 = vmatpush1.bf16.msra.mxu0 %v3796
    %4470 = vmatprep.subr.bf16.mxu0 0
    %4471 = vmatpush1.bf16.msra.mxu0 %v3795
    %4472 = vmatprep.subr.bf16.mxu0 0
    %4473 = vmatpush2.bf16.msra.mxu0 0
    %4474 = vmatprep.subr.bf16.mxu0 0
    %4475 = vmatpush2.bf16.msra.mxu0 0
    %4476 = vmatprep.subr.bf16.mxu0 0
    %4477 = vmatpush2.bf16.msra.mxu0 0
    %4478 = vmatprep.subr.bf16.mxu0 0
    %4479 = vmatpush2.bf16.msra.mxu0 0
    %4480 = vmatprep.subr.bf16.mxu0 0
    %4481 = vmatpush2.bf16.msra.mxu0 0
    %4482 = vmatprep.subr.bf16.mxu0 0
    %4483 = vmatpush2.bf16.msra.mxu0 0
    %4484 = vmatprep.subr.bf16.mxu0 0
    %4485 = vmatpush2.bf16.msra.mxu0 0
    %4486 = vmatprep.subr.bf16.mxu0 0
    %4487 = vmatpush2.bf16.msra.mxu0 0
    %4488 = vmatprep.mubr.bf16.mxu0 0
    %4489 = vmatmul.mubr.bf16.gmra.mxu0 %v4082
    %v4490 = vpop.f32.mrf.mxu0
    %v4491 = vadd.f32 0.0, %v4490
    %v4492 = vpop.f32.mrf.mxu0
    %v4493 = vpop.f32.mrf.mxu0
    %v4494 = vadd.f32 0.0, %v4493
    %v4495 = vpop.f32.mrf.mxu0
    %4496 = vmatprep.mubr.bf16.mxu0 0
    %4497 = vmatmul.mubr.bf16.gmra.mxu0 %v4085
    %v4498 = vpop.f32.mrf.mxu0
    %v4499 = vadd.f32 0.0, %v4498
    %v4500 = vpop.f32.mrf.mxu0
    %v4501 = vpop.f32.mrf.mxu0
    %v4502 = vadd.f32 0.0, %v4501
    %v4503 = vpop.f32.mrf.mxu0
    %4504 = vmatprep.mubr.bf16.mxu0 0
    %4505 = vmatmul.mubr.bf16.gmra.mxu0 %v4088
    %v4506 = vpop.f32.mrf.mxu0
    %v4507 = vadd.f32 0.0, %v4506
    %v4508 = vpop.f32.mrf.mxu0
    %v4509 = vpop.f32.mrf.mxu0
    %v4510 = vadd.f32 0.0, %v4509
    %v4511 = vpop.f32.mrf.mxu0
    %4512 = vmatprep.mubr.bf16.mxu0 0
    %4513 = vmatmul.mubr.bf16.gmra.mxu0 %v4091
    %v4514 = vpop.f32.mrf.mxu0
    %v4515 = vadd.f32 0.0, %v4514
    %v4516 = vpop.f32.mrf.mxu0
    %v4517 = vpop.f32.mrf.mxu0
    %v4518 = vadd.f32 0.0, %v4517
    %v4519 = vpop.f32.mrf.mxu0
    %4520 = vdwg.mxu0
    %v4521 = vadd.f32 %v4426, %v4491
    %v4522 = vadd.f32 %v4429, %v4494
    %v4523 = vadd.f32 %v4434, %v4499
    %v4524 = vadd.f32 %v4437, %v4502
    %v4525 = vadd.f32 %v4442, %v4507
    %v4526 = vadd.f32 %v4445, %v4510
    %v4527 = vadd.f32 %v4450, %v4515
    %v4528 = vadd.f32 %v4453, %v4518
    %4529 = vmatprep.subr.bf16.mxu0 0
    %4530 = vmatpush1.bf16.msra.mxu0 0
    %4531 = vmatprep.subr.bf16.mxu0 0
    %4532 = vmatpush1.bf16.msra.mxu0 0
    %4533 = vmatprep.subr.bf16.mxu0 0
    %4534 = vmatpush1.bf16.msra.mxu0 0
    %4535 = vmatprep.subr.bf16.mxu0 0
    %4536 = vmatpush1.bf16.msra.mxu0 %v3937
    %4537 = vmatprep.subr.bf16.mxu0 0
    %4538 = vmatpush1.bf16.msra.mxu0 %v3936
    %4539 = vmatprep.subr.bf16.mxu0 0
    %4540 = vmatpush1.bf16.msra.mxu0 %v3935
    %4541 = vmatprep.subr.bf16.mxu0 0
    %4542 = vmatpush1.bf16.msra.mxu0 %v3934
    %4543 = vmatprep.subr.bf16.mxu0 0
    %4544 = vmatpush1.bf16.msra.mxu0 %v3933
    %4545 = vmatprep.subr.bf16.mxu0 0
    %4546 = vmatpush2.bf16.msra.mxu0 0
    %4547 = vmatprep.subr.bf16.mxu0 0
    %4548 = vmatpush2.bf16.msra.mxu0 0
    %4549 = vmatprep.subr.bf16.mxu0 0
    %4550 = vmatpush2.bf16.msra.mxu0 0
    %4551 = vmatprep.subr.bf16.mxu0 0
    %4552 = vmatpush2.bf16.msra.mxu0 0
    %4553 = vmatprep.subr.bf16.mxu0 0
    %4554 = vmatpush2.bf16.msra.mxu0 0
    %4555 = vmatprep.subr.bf16.mxu0 0
    %4556 = vmatpush2.bf16.msra.mxu0 0
    %4557 = vmatprep.subr.bf16.mxu0 0
    %4558 = vmatpush2.bf16.msra.mxu0 0
    %4559 = vmatprep.subr.bf16.mxu0 0
    %4560 = vmatpush2.bf16.msra.mxu0 0
    %4561 = vmatprep.mubr.bf16.mxu0 0
    %4562 = vmatmul.mubr.bf16.gmra.mxu0 %v4220
    %v4563 = vpop.f32.mrf.mxu0
    %v4564 = vadd.f32 0.0, %v4563
    %v4565 = vpop.f32.mrf.mxu0
    %v4566 = vpop.f32.mrf.mxu0
    %v4567 = vadd.f32 0.0, %v4566
    %v4568 = vpop.f32.mrf.mxu0
    %4569 = vmatprep.mubr.bf16.mxu0 0
    %4570 = vmatmul.mubr.bf16.gmra.mxu0 %v4223
    %v4571 = vpop.f32.mrf.mxu0
    %v4572 = vadd.f32 0.0, %v4571
    %v4573 = vpop.f32.mrf.mxu0
    %v4574 = vpop.f32.mrf.mxu0
    %v4575 = vadd.f32 0.0, %v4574
    %v4576 = vpop.f32.mrf.mxu0
    %4577 = vmatprep.mubr.bf16.mxu0 0
    %4578 = vmatmul.mubr.bf16.gmra.mxu0 %v4226
    %v4579 = vpop.f32.mrf.mxu0
    %v4580 = vadd.f32 0.0, %v4579
    %v4581 = vpop.f32.mrf.mxu0
    %v4582 = vpop.f32.mrf.mxu0
    %v4583 = vadd.f32 0.0, %v4582
    %v4584 = vpop.f32.mrf.mxu0
    %4585 = vmatprep.mubr.bf16.mxu0 0
    %4586 = vmatmul.mubr.bf16.gmra.mxu0 %v4229
    %v4587 = vpop.f32.mrf.mxu0
    %v4588 = vadd.f32 0.0, %v4587
    %v4589 = vpop.f32.mrf.mxu0
    %v4590 = vpop.f32.mrf.mxu0
    %v4591 = vadd.f32 0.0, %v4590
    %v4592 = vpop.f32.mrf.mxu0
    %4593 = vdwg.mxu0
    %v4594 = vadd.f32 %v4521, %v4564
    %v4595 = vadd.f32 %v4522, %v4567
    %v4596 = vadd.f32 %v4523, %v4572
    %v4597 = vadd.f32 %v4524, %v4575
    %v4598 = vadd.f32 %v4525, %v4580
    %v4599 = vadd.f32 %v4526, %v4583
    %v4600 = vadd.f32 %v4527, %v4588
    %v4601 = vadd.f32 %v4528, %v4591
    %v4602 = vld [vmem:[#allocation2 + $0x2] sm:$0xff]
    %v4603 = vld [vmem:[#allocation2 + $0x12] sm:$0xff]
    %v4604 = vld [vmem:[#allocation2 + $0x22] sm:$0xff]
    %v4605 = vld [vmem:[#allocation2 + $0x32] sm:$0xff]
    %v4606 = vld [vmem:[#allocation2 + $0x42] sm:$0xff]
    %v4607 = vld [vmem:[#allocation2 + $0x52] sm:$0xff]
    %v4608 = vld [vmem:[#allocation2 + $0x62] sm:$0xff]
    %v4609 = vld [vmem:[#allocation2 + $0x72] sm:$0xff]
    %v4610 = vpack.c.bf16 %v4603, %v4602
    %v4611 = vpack.c.bf16 %v4605, %v4604
    %v4612 = vpack.c.bf16 %v4607, %v4606
    %v4613 = vpack.c.bf16 %v4609, %v4608
    %v4615 = vsel %vm2103, %v4610, 0
    %v4618 = vsel %vm2103, %v4611, 0
    %v4621 = vsel %vm2103, %v4612, 0
    %v4624 = vsel %vm2103, %v4613, 0
    %4626 = vmatprep.subr.bf16.mxu0 0
    %4627 = vmatpush1.bf16.msra.mxu0 0
    %4628 = vmatprep.subr.bf16.mxu0 0
    %4629 = vmatpush1.bf16.msra.mxu0 0
    %4630 = vmatprep.subr.bf16.mxu0 0
    %4631 = vmatpush1.bf16.msra.mxu0 0
    %4632 = vmatprep.subr.bf16.mxu0 0
    %4633 = vmatpush1.bf16.msra.mxu0 %v4075
    %4634 = vmatprep.subr.bf16.mxu0 0
    %4635 = vmatpush1.bf16.msra.mxu0 %v4074
    %4636 = vmatprep.subr.bf16.mxu0 0
    %4637 = vmatpush1.bf16.msra.mxu0 %v4073
    %4638 = vmatprep.subr.bf16.mxu0 0
    %4639 = vmatpush1.bf16.msra.mxu0 %v4072
    %4640 = vmatprep.subr.bf16.mxu0 0
    %4641 = vmatpush1.bf16.msra.mxu0 %v4071
    %4642 = vmatprep.subr.bf16.mxu0 0
    %4643 = vmatpush2.bf16.msra.mxu0 0
    %4644 = vmatprep.subr.bf16.mxu0 0
    %4645 = vmatpush2.bf16.msra.mxu0 0
    %4646 = vmatprep.subr.bf16.mxu0 0
    %4647 = vmatpush2.bf16.msra.mxu0 0
    %4648 = vmatprep.subr.bf16.mxu0 0
    %4649 = vmatpush2.bf16.msra.mxu0 0
    %4650 = vmatprep.subr.bf16.mxu0 0
    %4651 = vmatpush2.bf16.msra.mxu0 0
    %4652 = vmatprep.subr.bf16.mxu0 0
    %4653 = vmatpush2.bf16.msra.mxu0 0
    %4654 = vmatprep.subr.bf16.mxu0 0
    %4655 = vmatpush2.bf16.msra.mxu0 0
    %4656 = vmatprep.subr.bf16.mxu0 0
    %4657 = vmatpush2.bf16.msra.mxu0 0
    %4658 = vmatprep.mubr.bf16.mxu0 0
    %4659 = vmatmul.mubr.bf16.gmra.mxu0 %v4615
    %v4660 = vpop.f32.mrf.mxu0
    %v4661 = vadd.f32 0.0, %v4660
    %v4662 = vpop.f32.mrf.mxu0
    %v4663 = vpop.f32.mrf.mxu0
    %v4664 = vadd.f32 0.0, %v4663
    %v4665 = vpop.f32.mrf.mxu0
    %4666 = vmatprep.mubr.bf16.mxu0 0
    %4667 = vmatmul.mubr.bf16.gmra.mxu0 %v4618
    %v4668 = vpop.f32.mrf.mxu0
    %v4669 = vadd.f32 0.0, %v4668
    %v4670 = vpop.f32.mrf.mxu0
    %v4671 = vpop.f32.mrf.mxu0
    %v4672 = vadd.f32 0.0, %v4671
    %v4673 = vpop.f32.mrf.mxu0
    %4674 = vmatprep.mubr.bf16.mxu0 0
    %4675 = vmatmul.mubr.bf16.gmra.mxu0 %v4621
    %v4676 = vpop.f32.mrf.mxu0
    %v4677 = vadd.f32 0.0, %v4676
    %v4678 = vpop.f32.mrf.mxu0
    %v4679 = vpop.f32.mrf.mxu0
    %v4680 = vadd.f32 0.0, %v4679
    %v4681 = vpop.f32.mrf.mxu0
    %4682 = vmatprep.mubr.bf16.mxu0 0
    %4683 = vmatmul.mubr.bf16.gmra.mxu0 %v4624
    %v4684 = vpop.f32.mrf.mxu0
    %v4685 = vadd.f32 0.0, %v4684
    %v4686 = vpop.f32.mrf.mxu0
    %v4687 = vpop.f32.mrf.mxu0
    %v4688 = vadd.f32 0.0, %v4687
    %v4689 = vpop.f32.mrf.mxu0
    %4690 = vdwg.mxu0
    %v4691 = vadd.f32 %v4594, %v4661
    %v4692 = vadd.f32 %v4595, %v4664
    %v4693 = vadd.f32 %v4596, %v4669
    %v4694 = vadd.f32 %v4597, %v4672
    %v4695 = vadd.f32 %v4598, %v4677
    %v4696 = vadd.f32 %v4599, %v4680
    %v4697 = vadd.f32 %v4600, %v4685
    %v4698 = vadd.f32 %v4601, %v4688
    %v4699 = vld [vmem:[%s1944 + $0x2] sm:$0xff]
    %v4700 = vld [vmem:[%s1944 + $0x12] sm:$0xff]
    %v4701 = vld [vmem:[%s1944 + $0x22] sm:$0xff]
    %v4702 = vld [vmem:[%s1944 + $0x32] sm:$0xff]
    %v4703 = vld [vmem:[%s1944 + $0x42] sm:$0xff]
    %v4704 = vld [vmem:[%s1944 + $0x52] sm:$0xff]
    %v4705 = vld [vmem:[%s1944 + $0x62] sm:$0xff]
    %v4706 = vld [vmem:[%s1944 + $0x72] sm:$0xff]
    %v4707 = vpack.c.bf16 %v4700, %v4699
    %v4708 = vpack.c.bf16 %v4702, %v4701
    %v4709 = vpack.c.bf16 %v4704, %v4703
    %v4710 = vpack.c.bf16 %v4706, %v4705
    %v4712 = vsel %vm2103, %v4707, 0
    %v4715 = vsel %vm2103, %v4708, 0
    %v4718 = vsel %vm2103, %v4709, 0
    %v4721 = vsel %vm2103, %v4710, 0
    %4723 = vmatprep.subr.bf16.mxu0 0
    %4724 = vmatpush1.bf16.msra.mxu0 0
    %4725 = vmatprep.subr.bf16.mxu0 0
    %4726 = vmatpush1.bf16.msra.mxu0 0
    %4727 = vmatprep.subr.bf16.mxu0 0
    %4728 = vmatpush1.bf16.msra.mxu0 0
    %4729 = vmatprep.subr.bf16.mxu0 0
    %4730 = vmatpush1.bf16.msra.mxu0 %v4213
    %4731 = vmatprep.subr.bf16.mxu0 0
    %4732 = vmatpush1.bf16.msra.mxu0 %v4212
    %4733 = vmatprep.subr.bf16.mxu0 0
    %4734 = vmatpush1.bf16.msra.mxu0 %v4211
    %4735 = vmatprep.subr.bf16.mxu0 0
    %4736 = vmatpush1.bf16.msra.mxu0 %v4210
    %4737 = vmatprep.subr.bf16.mxu0 0
    %4738 = vmatpush1.bf16.msra.mxu0 %v4209
    %4739 = vmatprep.subr.bf16.mxu0 0
    %4740 = vmatpush2.bf16.msra.mxu0 0
    %4741 = vmatprep.subr.bf16.mxu0 0
    %4742 = vmatpush2.bf16.msra.mxu0 0
    %4743 = vmatprep.subr.bf16.mxu0 0
    %4744 = vmatpush2.bf16.msra.mxu0 0
    %4745 = vmatprep.subr.bf16.mxu0 0
    %4746 = vmatpush2.bf16.msra.mxu0 0
    %4747 = vmatprep.subr.bf16.mxu0 0
    %4748 = vmatpush2.bf16.msra.mxu0 0
    %4749 = vmatprep.subr.bf16.mxu0 0
    %4750 = vmatpush2.bf16.msra.mxu0 0
    %4751 = vmatprep.subr.bf16.mxu0 0
    %4752 = vmatpush2.bf16.msra.mxu0 0
    %4753 = vmatprep.subr.bf16.mxu0 0
    %4754 = vmatpush2.bf16.msra.mxu0 0
    %4755 = vmatprep.mubr.bf16.mxu0 0
    %4756 = vmatmul.mubr.bf16.gmra.mxu0 %v4712
    %v4757 = vpop.f32.mrf.mxu0
    %v4758 = vadd.f32 0.0, %v4757
    %v4759 = vpop.f32.mrf.mxu0
    %v4760 = vpop.f32.mrf.mxu0
    %v4761 = vadd.f32 0.0, %v4760
    %v4762 = vpop.f32.mrf.mxu0
    %4763 = vmatprep.mubr.bf16.mxu0 0
    %4764 = vmatmul.mubr.bf16.gmra.mxu0 %v4715
    %v4765 = vpop.f32.mrf.mxu0
    %v4766 = vadd.f32 0.0, %v4765
    %v4767 = vpop.f32.mrf.mxu0
    %v4768 = vpop.f32.mrf.mxu0
    %v4769 = vadd.f32 0.0, %v4768
    %v4770 = vpop.f32.mrf.mxu0
    %4771 = vmatprep.mubr.bf16.mxu0 0
    %4772 = vmatmul.mubr.bf16.gmra.mxu0 %v4718
    %v4773 = vpop.f32.mrf.mxu0
    %v4774 = vadd.f32 0.0, %v4773
    %v4775 = vpop.f32.mrf.mxu0
    %v4776 = vpop.f32.mrf.mxu0
    %v4777 = vadd.f32 0.0, %v4776
    %v4778 = vpop.f32.mrf.mxu0
    %4779 = vmatprep.mubr.bf16.mxu0 0
    %4780 = vmatmul.mubr.bf16.gmra.mxu0 %v4721
    %v4781 = vpop.f32.mrf.mxu0
    %v4782 = vadd.f32 0.0, %v4781
    %v4783 = vpop.f32.mrf.mxu0
    %v4784 = vpop.f32.mrf.mxu0
    %v4785 = vadd.f32 0.0, %v4784
    %v4786 = vpop.f32.mrf.mxu0
    %4787 = vdwg.mxu0
    %v4788 = vadd.f32 %v4691, %v4758
    %v4789 = vadd.f32 %v4692, %v4761
    %v4790 = vadd.f32 %v4693, %v4766
    %v4791 = vadd.f32 %v4694, %v4769
    %v4792 = vadd.f32 %v4695, %v4774
    %v4793 = vadd.f32 %v4696, %v4777
    %v4794 = vadd.f32 %v4697, %v4782
    %v4795 = vadd.f32 %v4698, %v4785
    %v4796 = vadd.f32 %v4788, %v4308
    %v4797 = vadd.f32 %v4789, %v4308
    %v4798 = vadd.f32 %v4790, %v4308
    %v4799 = vadd.f32 %v4791, %v4308
    %v4800 = vadd.f32 %v4792, %v4308
    %v4801 = vadd.f32 %v4793, %v4308
    %v4802 = vadd.f32 %v4794, %v4308
    %v4803 = vadd.f32 %v4795, %v4308
    %v4804 = vmax.f32 %v4796, 0.0
    %v4805 = vmax.f32 %v4797, 0.0
    %v4806 = vmax.f32 %v4798, 0.0
    %v4807 = vmax.f32 %v4799, 0.0
    %v4808 = vmax.f32 %v4800, 0.0
    %v4809 = vmax.f32 %v4801, 0.0
    %v4810 = vmax.f32 %v4802, 0.0
    %v4811 = vmax.f32 %v4803, 0.0
    %4820 = vrot.lane.b32.xlu0 %v4318, 8
    %v4821 = vpop.permute.xlu0 %4820
    %4822 = vrot.lane.b32.xlu0 %v4319, 8
    %v4823 = vpop.permute.xlu0 %4822
    %4824 = vrot.lane.b32.xlu0 %v4320, 8
    %v4825 = vpop.permute.xlu0 %4824
    %4826 = vrot.lane.b32.xlu0 %v4321, 8
    %v4827 = vpop.permute.xlu0 %4826
    %4828 = vrot.lane.b32.xlu0 %v4322, 8
    %v4829 = vpop.permute.xlu0 %4828
    %4830 = vrot.lane.b32.xlu0 %v4323, 8
    %v4831 = vpop.permute.xlu0 %4830
    %4832 = vrot.lane.b32.xlu0 %v4324, 8
    %v4833 = vpop.permute.xlu0 %4832
    %4834 = vrot.lane.b32.xlu0 %v4325, 8
    %v4835 = vpop.permute.xlu0 %4834
    %4844 = vst.msk [vmem:[#allocation2 + $0x1] sm:$0xff] %vm1911, %v4821
    %4845 = vst.msk [vmem:[#allocation2 + $0x11] sm:$0xff] %vm1911, %v4823
    %4846 = vst.msk [vmem:[#allocation2 + $0x21] sm:$0xff] %vm1911, %v4825
    %4847 = vst.msk [vmem:[#allocation2 + $0x31] sm:$0xff] %vm1911, %v4827
    %4848 = vst.msk [vmem:[#allocation2 + $0x41] sm:$0xff] %vm1911, %v4829
    %4849 = vst.msk [vmem:[#allocation2 + $0x51] sm:$0xff] %vm1911, %v4831
    %4850 = vst.msk [vmem:[#allocation2 + $0x61] sm:$0xff] %vm1911, %v4833
    %4851 = vst.msk [vmem:[#allocation2 + $0x71] sm:$0xff] %vm1911, %v4835
    %4852 = vrot.lane.b32.xlu0 %v4318, 72
    %v4853 = vpop.permute.xlu0 %4852
    %4854 = vrot.lane.b32.xlu0 %v4319, 72
    %v4855 = vpop.permute.xlu0 %4854
    %4856 = vrot.lane.b32.xlu0 %v4320, 72
    %v4857 = vpop.permute.xlu0 %4856
    %4858 = vrot.lane.b32.xlu0 %v4321, 72
    %v4859 = vpop.permute.xlu0 %4858
    %4860 = vrot.lane.b32.xlu0 %v4322, 72
    %v4861 = vpop.permute.xlu0 %4860
    %4862 = vrot.lane.b32.xlu0 %v4323, 72
    %v4863 = vpop.permute.xlu0 %4862
    %4864 = vrot.lane.b32.xlu0 %v4324, 72
    %v4865 = vpop.permute.xlu0 %4864
    %4866 = vrot.lane.b32.xlu0 %v4325, 72
    %v4867 = vpop.permute.xlu0 %4866
    %4876 = vst.msk [vmem:[%s1944 + $0x1] sm:$0xff] %vm1911, %v4853
    %4877 = vst.msk [vmem:[%s1944 + $0x11] sm:$0xff] %vm1911, %v4855
    %4878 = vst.msk [vmem:[%s1944 + $0x21] sm:$0xff] %vm1911, %v4857
    %4879 = vst.msk [vmem:[%s1944 + $0x31] sm:$0xff] %vm1911, %v4859
    %4880 = vst.msk [vmem:[%s1944 + $0x41] sm:$0xff] %vm1911, %v4861
    %4881 = vst.msk [vmem:[%s1944 + $0x51] sm:$0xff] %vm1911, %v4863
    %4882 = vst.msk [vmem:[%s1944 + $0x61] sm:$0xff] %vm1911, %v4865
    %4883 = vst.msk [vmem:[%s1944 + $0x71] sm:$0xff] %vm1911, %v4867
    %4892 = vrot.lane.b32.xlu0 %v4804, 8
    %v4893 = vpop.permute.xlu0 %4892
    %4894 = vrot.lane.b32.xlu0 %v4805, 8
    %v4895 = vpop.permute.xlu0 %4894
    %4896 = vrot.lane.b32.xlu0 %v4806, 8
    %v4897 = vpop.permute.xlu0 %4896
    %4898 = vrot.lane.b32.xlu0 %v4807, 8
    %v4899 = vpop.permute.xlu0 %4898
    %4900 = vrot.lane.b32.xlu0 %v4808, 8
    %v4901 = vpop.permute.xlu0 %4900
    %4902 = vrot.lane.b32.xlu0 %v4809, 8
    %v4903 = vpop.permute.xlu0 %4902
    %4904 = vrot.lane.b32.xlu0 %v4810, 8
    %v4905 = vpop.permute.xlu0 %4904
    %4906 = vrot.lane.b32.xlu0 %v4811, 8
    %v4907 = vpop.permute.xlu0 %4906
    %4916 = vst.msk [vmem:[%s1985 + $0x1] sm:$0xff] %vm1911, %v4893
    %4917 = vst.msk [vmem:[%s1985 + $0x11] sm:$0xff] %vm1911, %v4895
    %4918 = vst.msk [vmem:[%s1985 + $0x21] sm:$0xff] %vm1911, %v4897
    %4919 = vst.msk [vmem:[%s1985 + $0x31] sm:$0xff] %vm1911, %v4899
    %4920 = vst.msk [vmem:[%s1985 + $0x41] sm:$0xff] %vm1911, %v4901
    %4921 = vst.msk [vmem:[%s1985 + $0x51] sm:$0xff] %vm1911, %v4903
    %4922 = vst.msk [vmem:[%s1985 + $0x61] sm:$0xff] %vm1911, %v4905
    %4923 = vst.msk [vmem:[%s1985 + $0x71] sm:$0xff] %vm1911, %v4907
    %4924 = vrot.lane.b32.xlu0 %v4804, 72
    %v4925 = vpop.permute.xlu0 %4924
    %4926 = vrot.lane.b32.xlu0 %v4805, 72
    %v4927 = vpop.permute.xlu0 %4926
    %4928 = vrot.lane.b32.xlu0 %v4806, 72
    %v4929 = vpop.permute.xlu0 %4928
    %4930 = vrot.lane.b32.xlu0 %v4807, 72
    %v4931 = vpop.permute.xlu0 %4930
    %4932 = vrot.lane.b32.xlu0 %v4808, 72
    %v4933 = vpop.permute.xlu0 %4932
    %4934 = vrot.lane.b32.xlu0 %v4809, 72
    %v4935 = vpop.permute.xlu0 %4934
    %4936 = vrot.lane.b32.xlu0 %v4810, 72
    %v4937 = vpop.permute.xlu0 %4936
    %4938 = vrot.lane.b32.xlu0 %v4811, 72
    %v4939 = vpop.permute.xlu0 %4938
    %4948 = vst.msk [vmem:[%s2018 + $0x1] sm:$0xff] %vm1911, %v4925
    %4949 = vst.msk [vmem:[%s2018 + $0x11] sm:$0xff] %vm1911, %v4927
    %4950 = vst.msk [vmem:[%s2018 + $0x21] sm:$0xff] %vm1911, %v4929
    %4951 = vst.msk [vmem:[%s2018 + $0x31] sm:$0xff] %vm1911, %v4931
    %4952 = vst.msk [vmem:[%s2018 + $0x41] sm:$0xff] %vm1911, %v4933
    %4953 = vst.msk [vmem:[%s2018 + $0x51] sm:$0xff] %vm1911, %v4935
    %4954 = vst.msk [vmem:[%s2018 + $0x61] sm:$0xff] %vm1911, %v4937
    %4955 = vst.msk [vmem:[%s2018 + $0x71] sm:$0xff] %vm1911, %v4939
    %v4956 = vld [vmem:[%s8] sm:$0x3]
    %v4957 = vld [vmem:[%s1985] sm:$0xff]
    %v4958 = vld [vmem:[%s1985 + $0x10] sm:$0xff]
    %v4959 = vld [vmem:[%s1985 + $0x20] sm:$0xff]
    %v4960 = vld [vmem:[%s1985 + $0x30] sm:$0xff]
    %v4961 = vld [vmem:[%s1985 + $0x40] sm:$0xff]
    %v4962 = vld [vmem:[%s1985 + $0x50] sm:$0xff]
    %v4963 = vld [vmem:[%s1985 + $0x60] sm:$0xff]
    %v4964 = vld [vmem:[%s1985 + $0x70] sm:$0xff]
    %v4965 = vpack.c.bf16 %v4958, %v4957
    %v4966 = vpack.c.bf16 %v4960, %v4959
    %v4967 = vpack.c.bf16 %v4962, %v4961
    %v4968 = vpack.c.bf16 %v4964, %v4963
    %v4969 = vld [vmem:[%s7] sm:$0xff]
    %v4970 = vld [vmem:[%s7 + $0x8] sm:$0xff]
    %v4971 = vld [vmem:[%s7 + $0x10] sm:$0xff]
    %v4972 = vld [vmem:[%s7 + $0x18] sm:$0xff]
    %v4973 = vld [vmem:[%s7 + $0x20] sm:$0xff]
    %v4974 = vld [vmem:[%s7 + $0x28] sm:$0xff]
    %v4975 = vld [vmem:[%s7 + $0x30] sm:$0xff]
    %v4976 = vld [vmem:[%s7 + $0x38] sm:$0xff]
    %v4977 = vld [vmem:[%s7 + $0x40] sm:$0xff]
    %v4978 = vld [vmem:[%s7 + $0x48] sm:$0xff]
    %v4979 = vld [vmem:[%s2018] sm:$0xff]
    %v4980 = vld [vmem:[%s2018 + $0x10] sm:$0xff]
    %v4981 = vld [vmem:[%s2018 + $0x20] sm:$0xff]
    %v4982 = vld [vmem:[%s2018 + $0x30] sm:$0xff]
    %v4983 = vld [vmem:[%s2018 + $0x40] sm:$0xff]
    %v4984 = vld [vmem:[%s2018 + $0x50] sm:$0xff]
    %v4985 = vld [vmem:[%s2018 + $0x60] sm:$0xff]
    %v4986 = vld [vmem:[%s2018 + $0x70] sm:$0xff]
    %v4987 = vpack.c.bf16 %v4980, %v4979
    %v4988 = vpack.c.bf16 %v4982, %v4981
    %v4989 = vpack.c.bf16 %v4984, %v4983
    %v4990 = vpack.c.bf16 %v4986, %v4985
    %s4991 = scalar_lea.vmem %s7, 80
    %v4992 = vld [vmem:[%s4991] sm:$0xff]
    %v4993 = vld [vmem:[%s4991 + $0x8] sm:$0xff]
    %v4994 = vld [vmem:[%s4991 + $0x10] sm:$0xff]
    %v4995 = vld [vmem:[%s4991 + $0x18] sm:$0xff]
    %v4996 = vld [vmem:[%s4991 + $0x20] sm:$0xff]
    %v4997 = vld [vmem:[%s4991 + $0x28] sm:$0xff]
    %v4998 = vld [vmem:[%s4991 + $0x30] sm:$0xff]
    %v4999 = vld [vmem:[%s4991 + $0x38] sm:$0xff]
    %v5000 = vld [vmem:[%s4991 + $0x40] sm:$0xff]
    %v5001 = vld [vmem:[%s4991 + $0x48] sm:$0xff]
    %v5012 = vunpack.c.l.b16 %v4992
    %v5013 = vunpack.c.h.b16 %v4992
    %v5014 = vunpack.c.l.b16 %v4993
    %v5015 = vunpack.c.h.b16 %v4993
    %v5016 = vunpack.c.l.b16 %v4994
    %v5017 = vunpack.c.h.b16 %v4994
    %v5018 = vunpack.c.l.b16 %v4995
    %v5019 = vunpack.c.h.b16 %v4995
    %v5020 = vunpack.c.l.b16 %v4996
    %v5021 = vunpack.c.h.b16 %v4996
    %v5022 = vunpack.c.l.b16 %v4997
    %v5023 = vunpack.c.h.b16 %v4997
    %v5024 = vunpack.c.l.b16 %v4998
    %v5025 = vunpack.c.h.b16 %v4998
    %v5026 = vunpack.c.l.b16 %v4999
    %v5027 = vunpack.c.h.b16 %v4999
    %v5028 = vunpack.c.l.b16 %v5000
    %v5029 = vunpack.c.h.b16 %v5000
    %v5030 = vunpack.c.l.b16 %v5001
    %v5031 = vunpack.c.h.b16 %v5001
    %v5032 = vpack.c.b16 %v5014, %v5012
    %v5033 = vpack.c.b16 %v5015, %v5013
    %v5034 = vpack.c.b16 %v5018, %v5016
    %v5035 = vpack.c.b16 %v5019, %v5017
    %v5036 = vpack.c.b16 %v5022, %v5020
    %v5037 = vpack.c.b16 %v5023, %v5021
    %v5038 = vpack.c.b16 %v5026, %v5024
    %v5039 = vpack.c.b16 %v5027, %v5025
    %v5040 = vpack.c.b16 %v5030, %v5028
    %v5041 = vpack.c.b16 %v5031, %v5029
    %v5053 = vsel %vm2103, %v4987, 0
    %v5056 = vsel %vm2103, %v4988, 0
    %v5059 = vsel %vm2103, %v4989, 0
    %v5062 = vsel %vm2103, %v4990, 0
    %5064 = vmatprep.subr.bf16.mxu0 0
    %5065 = vmatpush1.bf16.msra.mxu0 0
    %5066 = vmatprep.subr.bf16.mxu0 0
    %5067 = vmatpush1.bf16.msra.mxu0 0
    %5068 = vmatprep.subr.bf16.mxu0 0
    %5069 = vmatpush1.bf16.msra.mxu0 0
    %5070 = vmatprep.subr.bf16.mxu0 %v5041
    %5071 = vmatpush1.bf16.msra.mxu0 %v5040
    %5072 = vmatprep.subr.bf16.mxu0 %v5039
    %5073 = vmatpush1.bf16.msra.mxu0 %v5038
    %5074 = vmatprep.subr.bf16.mxu0 %v5037
    %5075 = vmatpush1.bf16.msra.mxu0 %v5036
    %5076 = vmatprep.subr.bf16.mxu0 %v5035
    %5077 = vmatpush1.bf16.msra.mxu0 %v5034
    %5078 = vmatprep.subr.bf16.mxu0 %v5033
    %5079 = vmatpush1.bf16.msra.mxu0 %v5032
    %5080 = vmatprep.subr.bf16.mxu0 0
    %5081 = vmatpush2.bf16.msra.mxu0 0
    %5082 = vmatprep.subr.bf16.mxu0 0
    %5083 = vmatpush2.bf16.msra.mxu0 0
    %5084 = vmatprep.subr.bf16.mxu0 0
    %5085 = vmatpush2.bf16.msra.mxu0 0
    %5086 = vmatprep.subr.bf16.mxu0 0
    %5087 = vmatpush2.bf16.msra.mxu0 0
    %5088 = vmatprep.subr.bf16.mxu0 0
    %5089 = vmatpush2.bf16.msra.mxu0 0
    %5090 = vmatprep.subr.bf16.mxu0 0
    %5091 = vmatpush2.bf16.msra.mxu0 0
    %5092 = vmatprep.subr.bf16.mxu0 0
    %5093 = vmatpush2.bf16.msra.mxu0 0
    %5094 = vmatprep.subr.bf16.mxu0 0
    %5095 = vmatpush2.bf16.msra.mxu0 0
    %5096 = vmatprep.mubr.bf16.mxu0 0
    %5097 = vmatmul.mubr.bf16.gmra.mxu0 %v5053
    %v5098 = vpop.f32.mrf.mxu0
    %v5099 = vadd.f32 0.0, %v5098
    %v5100 = vpop.f32.mrf.mxu0
    %v5101 = vadd.f32 0.0, %v5100
    %v5102 = vpop.f32.mrf.mxu0
    %v5103 = vadd.f32 0.0, %v5102
    %v5104 = vpop.f32.mrf.mxu0
    %v5105 = vadd.f32 0.0, %v5104
    %5106 = vmatprep.mubr.bf16.mxu0 0
    %5107 = vmatmul.mubr.bf16.gmra.mxu0 %v5056
    %v5108 = vpop.f32.mrf.mxu0
    %v5109 = vadd.f32 0.0, %v5108
    %v5110 = vpop.f32.mrf.mxu0
    %v5111 = vadd.f32 0.0, %v5110
    %v5112 = vpop.f32.mrf.mxu0
    %v5113 = vadd.f32 0.0, %v5112
    %v5114 = vpop.f32.mrf.mxu0
    %v5115 = vadd.f32 0.0, %v5114
    %5116 = vmatprep.mubr.bf16.mxu0 0
    %5117 = vmatmul.mubr.bf16.gmra.mxu0 %v5059
    %v5118 = vpop.f32.mrf.mxu0
    %v5119 = vadd.f32 0.0, %v5118
    %v5120 = vpop.f32.mrf.mxu0
    %v5121 = vadd.f32 0.0, %v5120
    %v5122 = vpop.f32.mrf.mxu0
    %v5123 = vadd.f32 0.0, %v5122
    %v5124 = vpop.f32.mrf.mxu0
    %v5125 = vadd.f32 0.0, %v5124
    %5126 = vmatprep.mubr.bf16.mxu0 0
    %5127 = vmatmul.mubr.bf16.gmra.mxu0 %v5062
    %v5128 = vpop.f32.mrf.mxu0
    %v5129 = vadd.f32 0.0, %v5128
    %v5130 = vpop.f32.mrf.mxu0
    %v5131 = vadd.f32 0.0, %v5130
    %v5132 = vpop.f32.mrf.mxu0
    %v5133 = vadd.f32 0.0, %v5132
    %v5134 = vpop.f32.mrf.mxu0
    %v5135 = vadd.f32 0.0, %v5134
    %5136 = vdwg.mxu0
    %v5147 = vunpack.c.l.b16 %v4969
    %v5148 = vunpack.c.h.b16 %v4969
    %v5149 = vunpack.c.l.b16 %v4970
    %v5150 = vunpack.c.h.b16 %v4970
    %v5151 = vunpack.c.l.b16 %v4971
    %v5152 = vunpack.c.h.b16 %v4971
    %v5153 = vunpack.c.l.b16 %v4972
    %v5154 = vunpack.c.h.b16 %v4972
    %v5155 = vunpack.c.l.b16 %v4973
    %v5156 = vunpack.c.h.b16 %v4973
    %v5157 = vunpack.c.l.b16 %v4974
    %v5158 = vunpack.c.h.b16 %v4974
    %v5159 = vunpack.c.l.b16 %v4975
    %v5160 = vunpack.c.h.b16 %v4975
    %v5161 = vunpack.c.l.b16 %v4976
    %v5162 = vunpack.c.h.b16 %v4976
    %v5163 = vunpack.c.l.b16 %v4977
    %v5164 = vunpack.c.h.b16 %v4977
    %v5165 = vunpack.c.l.b16 %v4978
    %v5166 = vunpack.c.h.b16 %v4978
    %v5167 = vpack.c.b16 %v5149, %v5147
    %v5168 = vpack.c.b16 %v5150, %v5148
    %v5169 = vpack.c.b16 %v5153, %v5151
    %v5170 = vpack.c.b16 %v5154, %v5152
    %v5171 = vpack.c.b16 %v5157, %v5155
    %v5172 = vpack.c.b16 %v5158, %v5156
    %v5173 = vpack.c.b16 %v5161, %v5159
    %v5174 = vpack.c.b16 %v5162, %v5160
    %v5175 = vpack.c.b16 %v5165, %v5163
    %v5176 = vpack.c.b16 %v5166, %v5164
    %v5188 = vsel %vm2103, %v4965, 0
    %v5191 = vsel %vm2103, %v4966, 0
    %v5194 = vsel %vm2103, %v4967, 0
    %v5197 = vsel %vm2103, %v4968, 0
    %5199 = vmatprep.subr.bf16.mxu0 0
    %5200 = vmatpush1.bf16.msra.mxu0 0
    %5201 = vmatprep.subr.bf16.mxu0 0
    %5202 = vmatpush1.bf16.msra.mxu0 0
    %5203 = vmatprep.subr.bf16.mxu0 0
    %5204 = vmatpush1.bf16.msra.mxu0 0
    %5205 = vmatprep.subr.bf16.mxu0 %v5176
    %5206 = vmatpush1.bf16.msra.mxu0 %v5175
    %5207 = vmatprep.subr.bf16.mxu0 %v5174
    %5208 = vmatpush1.bf16.msra.mxu0 %v5173
    %5209 = vmatprep.subr.bf16.mxu0 %v5172
    %5210 = vmatpush1.bf16.msra.mxu0 %v5171
    %5211 = vmatprep.subr.bf16.mxu0 %v5170
    %5212 = vmatpush1.bf16.msra.mxu0 %v5169
    %5213 = vmatprep.subr.bf16.mxu0 %v5168
    %5214 = vmatpush1.bf16.msra.mxu0 %v5167
    %5215 = vmatprep.subr.bf16.mxu0 0
    %5216 = vmatpush2.bf16.msra.mxu0 0
    %5217 = vmatprep.subr.bf16.mxu0 0
    %5218 = vmatpush2.bf16.msra.mxu0 0
    %5219 = vmatprep.subr.bf16.mxu0 0
    %5220 = vmatpush2.bf16.msra.mxu0 0
    %5221 = vmatprep.subr.bf16.mxu0 0
    %5222 = vmatpush2.bf16.msra.mxu0 0
    %5223 = vmatprep.subr.bf16.mxu0 0
    %5224 = vmatpush2.bf16.msra.mxu0 0
    %5225 = vmatprep.subr.bf16.mxu0 0
    %5226 = vmatpush2.bf16.msra.mxu0 0
    %5227 = vmatprep.subr.bf16.mxu0 0
    %5228 = vmatpush2.bf16.msra.mxu0 0
    %5229 = vmatprep.subr.bf16.mxu0 0
    %5230 = vmatpush2.bf16.msra.mxu0 0
    %5231 = vmatprep.mubr.bf16.mxu0 0
    %5232 = vmatmul.mubr.bf16.gmra.mxu0 %v5188
    %v5233 = vpop.f32.mrf.mxu0
    %v5234 = vadd.f32 %v5099, %v5233
    %v5235 = vpop.f32.mrf.mxu0
    %v5236 = vadd.f32 %v5101, %v5235
    %v5237 = vpop.f32.mrf.mxu0
    %v5238 = vadd.f32 %v5103, %v5237
    %v5239 = vpop.f32.mrf.mxu0
    %v5240 = vadd.f32 %v5105, %v5239
    %5241 = vmatprep.mubr.bf16.mxu0 0
    %5242 = vmatmul.mubr.bf16.gmra.mxu0 %v5191
    %v5243 = vpop.f32.mrf.mxu0
    %v5244 = vadd.f32 %v5109, %v5243
    %v5245 = vpop.f32.mrf.mxu0
    %v5246 = vadd.f32 %v5111, %v5245
    %v5247 = vpop.f32.mrf.mxu0
    %v5248 = vadd.f32 %v5113, %v5247
    %v5249 = vpop.f32.mrf.mxu0
    %v5250 = vadd.f32 %v5115, %v5249
    %5251 = vmatprep.mubr.bf16.mxu0 0
    %5252 = vmatmul.mubr.bf16.gmra.mxu0 %v5194
    %v5253 = vpop.f32.mrf.mxu0
    %v5254 = vadd.f32 %v5119, %v5253
    %v5255 = vpop.f32.mrf.mxu0
    %v5256 = vadd.f32 %v5121, %v5255
    %v5257 = vpop.f32.mrf.mxu0
    %v5258 = vadd.f32 %v5123, %v5257
    %v5259 = vpop.f32.mrf.mxu0
    %v5260 = vadd.f32 %v5125, %v5259
    %5261 = vmatprep.mubr.bf16.mxu0 0
    %5262 = vmatmul.mubr.bf16.gmra.mxu0 %v5197
    %v5263 = vpop.f32.mrf.mxu0
    %v5264 = vadd.f32 %v5129, %v5263
    %v5265 = vpop.f32.mrf.mxu0
    %v5266 = vadd.f32 %v5131, %v5265
    %v5267 = vpop.f32.mrf.mxu0
    %v5268 = vadd.f32 %v5133, %v5267
    %v5269 = vpop.f32.mrf.mxu0
    %v5270 = vadd.f32 %v5135, %v5269
    %5271 = vdwg.mxu0
    %v5272 = vld [vmem:[#allocation2 + $0x1] sm:$0xff]
    %v5273 = vld [vmem:[#allocation2 + $0x11] sm:$0xff]
    %v5274 = vld [vmem:[#allocation2 + $0x21] sm:$0xff]
    %v5275 = vld [vmem:[#allocation2 + $0x31] sm:$0xff]
    %v5276 = vld [vmem:[#allocation2 + $0x41] sm:$0xff]
    %v5277 = vld [vmem:[#allocation2 + $0x51] sm:$0xff]
    %v5278 = vld [vmem:[#allocation2 + $0x61] sm:$0xff]
    %v5279 = vld [vmem:[#allocation2 + $0x71] sm:$0xff]
    %v5280 = vpack.c.bf16 %v5273, %v5272
    %v5281 = vpack.c.bf16 %v5275, %v5274
    %v5282 = vpack.c.bf16 %v5277, %v5276
    %v5283 = vpack.c.bf16 %v5279, %v5278
    %s5284 = scalar_lea.vmem %s7, 160
    %v5285 = vld [vmem:[%s5284] sm:$0xff]
    %v5286 = vld [vmem:[%s5284 + $0x8] sm:$0xff]
    %v5287 = vld [vmem:[%s5284 + $0x10] sm:$0xff]
    %v5288 = vld [vmem:[%s5284 + $0x18] sm:$0xff]
    %v5289 = vld [vmem:[%s5284 + $0x20] sm:$0xff]
    %v5290 = vld [vmem:[%s5284 + $0x28] sm:$0xff]
    %v5291 = vld [vmem:[%s5284 + $0x30] sm:$0xff]
    %v5292 = vld [vmem:[%s5284 + $0x38] sm:$0xff]
    %v5293 = vld [vmem:[%s5284 + $0x40] sm:$0xff]
    %v5294 = vld [vmem:[%s5284 + $0x48] sm:$0xff]
    %v5305 = vunpack.c.l.b16 %v5285
    %v5306 = vunpack.c.h.b16 %v5285
    %v5307 = vunpack.c.l.b16 %v5286
    %v5308 = vunpack.c.h.b16 %v5286
    %v5309 = vunpack.c.l.b16 %v5287
    %v5310 = vunpack.c.h.b16 %v5287
    %v5311 = vunpack.c.l.b16 %v5288
    %v5312 = vunpack.c.h.b16 %v5288
    %v5313 = vunpack.c.l.b16 %v5289
    %v5314 = vunpack.c.h.b16 %v5289
    %v5315 = vunpack.c.l.b16 %v5290
    %v5316 = vunpack.c.h.b16 %v5290
    %v5317 = vunpack.c.l.b16 %v5291
    %v5318 = vunpack.c.h.b16 %v5291
    %v5319 = vunpack.c.l.b16 %v5292
    %v5320 = vunpack.c.h.b16 %v5292
    %v5321 = vunpack.c.l.b16 %v5293
    %v5322 = vunpack.c.h.b16 %v5293
    %v5323 = vunpack.c.l.b16 %v5294
    %v5324 = vunpack.c.h.b16 %v5294
    %v5325 = vpack.c.b16 %v5307, %v5305
    %v5326 = vpack.c.b16 %v5308, %v5306
    %v5327 = vpack.c.b16 %v5311, %v5309
    %v5328 = vpack.c.b16 %v5312, %v5310
    %v5329 = vpack.c.b16 %v5315, %v5313
    %v5330 = vpack.c.b16 %v5316, %v5314
    %v5331 = vpack.c.b16 %v5319, %v5317
    %v5332 = vpack.c.b16 %v5320, %v5318
    %v5333 = vpack.c.b16 %v5323, %v5321
    %v5334 = vpack.c.b16 %v5324, %v5322
    %v5346 = vsel %vm2103, %v5280, 0
    %v5349 = vsel %vm2103, %v5281, 0
    %v5352 = vsel %vm2103, %v5282, 0
    %v5355 = vsel %vm2103, %v5283, 0
    %5357 = vmatprep.subr.bf16.mxu0 0
    %5358 = vmatpush1.bf16.msra.mxu0 0
    %5359 = vmatprep.subr.bf16.mxu0 0
    %5360 = vmatpush1.bf16.msra.mxu0 0
    %5361 = vmatprep.subr.bf16.mxu0 0
    %5362 = vmatpush1.bf16.msra.mxu0 0
    %5363 = vmatprep.subr.bf16.mxu0 %v5334
    %5364 = vmatpush1.bf16.msra.mxu0 %v5333
    %5365 = vmatprep.subr.bf16.mxu0 %v5332
    %5366 = vmatpush1.bf16.msra.mxu0 %v5331
    %5367 = vmatprep.subr.bf16.mxu0 %v5330
    %5368 = vmatpush1.bf16.msra.mxu0 %v5329
    %5369 = vmatprep.subr.bf16.mxu0 %v5328
    %5370 = vmatpush1.bf16.msra.mxu0 %v5327
    %5371 = vmatprep.subr.bf16.mxu0 %v5326
    %5372 = vmatpush1.bf16.msra.mxu0 %v5325
    %5373 = vmatprep.subr.bf16.mxu0 0
    %5374 = vmatpush2.bf16.msra.mxu0 0
    %5375 = vmatprep.subr.bf16.mxu0 0
    %5376 = vmatpush2.bf16.msra.mxu0 0
    %5377 = vmatprep.subr.bf16.mxu0 0
    %5378 = vmatpush2.bf16.msra.mxu0 0
    %5379 = vmatprep.subr.bf16.mxu0 0
    %5380 = vmatpush2.bf16.msra.mxu0 0
    %5381 = vmatprep.subr.bf16.mxu0 0
    %5382 = vmatpush2.bf16.msra.mxu0 0
    %5383 = vmatprep.subr.bf16.mxu0 0
    %5384 = vmatpush2.bf16.msra.mxu0 0
    %5385 = vmatprep.subr.bf16.mxu0 0
    %5386 = vmatpush2.bf16.msra.mxu0 0
    %5387 = vmatprep.subr.bf16.mxu0 0
    %5388 = vmatpush2.bf16.msra.mxu0 0
    %5389 = vmatprep.mubr.bf16.mxu0 0
    %5390 = vmatmul.mubr.bf16.gmra.mxu0 %v5346
    %v5391 = vpop.f32.mrf.mxu0
    %v5392 = vadd.f32 0.0, %v5391
    %v5393 = vpop.f32.mrf.mxu0
    %v5394 = vadd.f32 0.0, %v5393
    %v5395 = vpop.f32.mrf.mxu0
    %v5396 = vadd.f32 0.0, %v5395
    %v5397 = vpop.f32.mrf.mxu0
    %v5398 = vadd.f32 0.0, %v5397
    %5399 = vmatprep.mubr.bf16.mxu0 0
    %5400 = vmatmul.mubr.bf16.gmra.mxu0 %v5349
    %v5401 = vpop.f32.mrf.mxu0
    %v5402 = vadd.f32 0.0, %v5401
    %v5403 = vpop.f32.mrf.mxu0
    %v5404 = vadd.f32 0.0, %v5403
    %v5405 = vpop.f32.mrf.mxu0
    %v5406 = vadd.f32 0.0, %v5405
    %v5407 = vpop.f32.mrf.mxu0
    %v5408 = vadd.f32 0.0, %v5407
    %5409 = vmatprep.mubr.bf16.mxu0 0
    %5410 = vmatmul.mubr.bf16.gmra.mxu0 %v5352
    %v5411 = vpop.f32.mrf.mxu0
    %v5412 = vadd.f32 0.0, %v5411
    %v5413 = vpop.f32.mrf.mxu0
    %v5414 = vadd.f32 0.0, %v5413
    %v5415 = vpop.f32.mrf.mxu0
    %v5416 = vadd.f32 0.0, %v5415
    %v5417 = vpop.f32.mrf.mxu0
    %v5418 = vadd.f32 0.0, %v5417
    %5419 = vmatprep.mubr.bf16.mxu0 0
    %5420 = vmatmul.mubr.bf16.gmra.mxu0 %v5355
    %v5421 = vpop.f32.mrf.mxu0
    %v5422 = vadd.f32 0.0, %v5421
    %v5423 = vpop.f32.mrf.mxu0
    %v5424 = vadd.f32 0.0, %v5423
    %v5425 = vpop.f32.mrf.mxu0
    %v5426 = vadd.f32 0.0, %v5425
    %v5427 = vpop.f32.mrf.mxu0
    %v5428 = vadd.f32 0.0, %v5427
    %5429 = vdwg.mxu0
    %v5430 = vadd.f32 %v5234, %v5392
    %v5431 = vadd.f32 %v5236, %v5394
    %v5432 = vadd.f32 %v5238, %v5396
    %v5433 = vadd.f32 %v5240, %v5398
    %v5434 = vadd.f32 %v5244, %v5402
    %v5435 = vadd.f32 %v5246, %v5404
    %v5436 = vadd.f32 %v5248, %v5406
    %v5437 = vadd.f32 %v5250, %v5408
    %v5438 = vadd.f32 %v5254, %v5412
    %v5439 = vadd.f32 %v5256, %v5414
    %v5440 = vadd.f32 %v5258, %v5416
    %v5441 = vadd.f32 %v5260, %v5418
    %v5442 = vadd.f32 %v5264, %v5422
    %v5443 = vadd.f32 %v5266, %v5424
    %v5444 = vadd.f32 %v5268, %v5426
    %v5445 = vadd.f32 %v5270, %v5428
    %v5446 = vld [vmem:[%s1944 + $0x1] sm:$0xff]
    %v5447 = vld [vmem:[%s1944 + $0x11] sm:$0xff]
    %v5448 = vld [vmem:[%s1944 + $0x21] sm:$0xff]
    %v5449 = vld [vmem:[%s1944 + $0x31] sm:$0xff]
    %v5450 = vld [vmem:[%s1944 + $0x41] sm:$0xff]
    %v5451 = vld [vmem:[%s1944 + $0x51] sm:$0xff]
    %v5452 = vld [vmem:[%s1944 + $0x61] sm:$0xff]
    %v5453 = vld [vmem:[%s1944 + $0x71] sm:$0xff]
    %v5454 = vpack.c.bf16 %v5447, %v5446
    %v5455 = vpack.c.bf16 %v5449, %v5448
    %v5456 = vpack.c.bf16 %v5451, %v5450
    %v5457 = vpack.c.bf16 %v5453, %v5452
    %s5458 = scalar_lea.vmem %s7, 240
    %v5459 = vld [vmem:[%s5458] sm:$0xff]
    %v5460 = vld [vmem:[%s5458 + $0x8] sm:$0xff]
    %v5461 = vld [vmem:[%s5458 + $0x10] sm:$0xff]
    %v5462 = vld [vmem:[%s5458 + $0x18] sm:$0xff]
    %v5463 = vld [vmem:[%s5458 + $0x20] sm:$0xff]
    %v5464 = vld [vmem:[%s5458 + $0x28] sm:$0xff]
    %v5465 = vld [vmem:[%s5458 + $0x30] sm:$0xff]
    %v5466 = vld [vmem:[%s5458 + $0x38] sm:$0xff]
    %v5467 = vld [vmem:[%s5458 + $0x40] sm:$0xff]
    %v5468 = vld [vmem:[%s5458 + $0x48] sm:$0xff]
    %v5479 = vunpack.c.l.b16 %v5459
    %v5480 = vunpack.c.h.b16 %v5459
    %v5481 = vunpack.c.l.b16 %v5460
    %v5482 = vunpack.c.h.b16 %v5460
    %v5483 = vunpack.c.l.b16 %v5461
    %v5484 = vunpack.c.h.b16 %v5461
    %v5485 = vunpack.c.l.b16 %v5462
    %v5486 = vunpack.c.h.b16 %v5462
    %v5487 = vunpack.c.l.b16 %v5463
    %v5488 = vunpack.c.h.b16 %v5463
    %v5489 = vunpack.c.l.b16 %v5464
    %v5490 = vunpack.c.h.b16 %v5464
    %v5491 = vunpack.c.l.b16 %v5465
    %v5492 = vunpack.c.h.b16 %v5465
    %v5493 = vunpack.c.l.b16 %v5466
    %v5494 = vunpack.c.h.b16 %v5466
    %v5495 = vunpack.c.l.b16 %v5467
    %v5496 = vunpack.c.h.b16 %v5467
    %v5497 = vunpack.c.l.b16 %v5468
    %v5498 = vunpack.c.h.b16 %v5468
    %v5499 = vpack.c.b16 %v5481, %v5479
    %v5500 = vpack.c.b16 %v5482, %v5480
    %v5501 = vpack.c.b16 %v5485, %v5483
    %v5502 = vpack.c.b16 %v5486, %v5484
    %v5503 = vpack.c.b16 %v5489, %v5487
    %v5504 = vpack.c.b16 %v5490, %v5488
    %v5505 = vpack.c.b16 %v5493, %v5491
    %v5506 = vpack.c.b16 %v5494, %v5492
    %v5507 = vpack.c.b16 %v5497, %v5495
    %v5508 = vpack.c.b16 %v5498, %v5496
    %v5520 = vsel %vm2103, %v5454, 0
    %v5523 = vsel %vm2103, %v5455, 0
    %v5526 = vsel %vm2103, %v5456, 0
    %v5529 = vsel %vm2103, %v5457, 0
    %5531 = vmatprep.subr.bf16.mxu0 0
    %5532 = vmatpush1.bf16.msra.mxu0 0
    %5533 = vmatprep.subr.bf16.mxu0 0
    %5534 = vmatpush1.bf16.msra.mxu0 0
    %5535 = vmatprep.subr.bf16.mxu0 0
    %5536 = vmatpush1.bf16.msra.mxu0 0
    %5537 = vmatprep.subr.bf16.mxu0 %v5508
    %5538 = vmatpush1.bf16.msra.mxu0 %v5507
    %5539 = vmatprep.subr.bf16.mxu0 %v5506
    %5540 = vmatpush1.bf16.msra.mxu0 %v5505
    %5541 = vmatprep.subr.bf16.mxu0 %v5504
    %5542 = vmatpush1.bf16.msra.mxu0 %v5503
    %5543 = vmatprep.subr.bf16.mxu0 %v5502
    %5544 = vmatpush1.bf16.msra.mxu0 %v5501
    %5545 = vmatprep.subr.bf16.mxu0 %v5500
    %5546 = vmatpush1.bf16.msra.mxu0 %v5499
    %5547 = vmatprep.subr.bf16.mxu0 0
    %5548 = vmatpush2.bf16.msra.mxu0 0
    %5549 = vmatprep.subr.bf16.mxu0 0
    %5550 = vmatpush2.bf16.msra.mxu0 0
    %5551 = vmatprep.subr.bf16.mxu0 0
    %5552 = vmatpush2.bf16.msra.mxu0 0
    %5553 = vmatprep.subr.bf16.mxu0 0
    %5554 = vmatpush2.bf16.msra.mxu0 0
    %5555 = vmatprep.subr.bf16.mxu0 0
    %5556 = vmatpush2.bf16.msra.mxu0 0
    %5557 = vmatprep.subr.bf16.mxu0 0
    %5558 = vmatpush2.bf16.msra.mxu0 0
    %5559 = vmatprep.subr.bf16.mxu0 0
    %5560 = vmatpush2.bf16.msra.mxu0 0
    %5561 = vmatprep.subr.bf16.mxu0 0
    %5562 = vmatpush2.bf16.msra.mxu0 0
    %5563 = vmatprep.mubr.bf16.mxu0 0
    %5564 = vmatmul.mubr.bf16.gmra.mxu0 %v5520
    %v5565 = vpop.f32.mrf.mxu0
    %v5566 = vadd.f32 0.0, %v5565
    %v5567 = vpop.f32.mrf.mxu0
    %v5568 = vadd.f32 0.0, %v5567
    %v5569 = vpop.f32.mrf.mxu0
    %v5570 = vadd.f32 0.0, %v5569
    %v5571 = vpop.f32.mrf.mxu0
    %v5572 = vadd.f32 0.0, %v5571
    %5573 = vmatprep.mubr.bf16.mxu0 0
    %5574 = vmatmul.mubr.bf16.gmra.mxu0 %v5523
    %v5575 = vpop.f32.mrf.mxu0
    %v5576 = vadd.f32 0.0, %v5575
    %v5577 = vpop.f32.mrf.mxu0
    %v5578 = vadd.f32 0.0, %v5577
    %v5579 = vpop.f32.mrf.mxu0
    %v5580 = vadd.f32 0.0, %v5579
    %v5581 = vpop.f32.mrf.mxu0
    %v5582 = vadd.f32 0.0, %v5581
    %5583 = vmatprep.mubr.bf16.mxu0 0
    %5584 = vmatmul.mubr.bf16.gmra.mxu0 %v5526
    %v5585 = vpop.f32.mrf.mxu0
    %v5586 = vadd.f32 0.0, %v5585
    %v5587 = vpop.f32.mrf.mxu0
    %v5588 = vadd.f32 0.0, %v5587
    %v5589 = vpop.f32.mrf.mxu0
    %v5590 = vadd.f32 0.0, %v5589
    %v5591 = vpop.f32.mrf.mxu0
    %v5592 = vadd.f32 0.0, %v5591
    %5593 = vmatprep.mubr.bf16.mxu0 0
    %5594 = vmatmul.mubr.bf16.gmra.mxu0 %v5529
    %v5595 = vpop.f32.mrf.mxu0
    %v5596 = vadd.f32 0.0, %v5595
    %v5597 = vpop.f32.mrf.mxu0
    %v5598 = vadd.f32 0.0, %v5597
    %v5599 = vpop.f32.mrf.mxu0
    %v5600 = vadd.f32 0.0, %v5599
    %v5601 = vpop.f32.mrf.mxu0
    %v5602 = vadd.f32 0.0, %v5601
    %5603 = vdwg.mxu0
    %v5604 = vadd.f32 %v5430, %v5566
    %v5605 = vadd.f32 %v5431, %v5568
    %v5606 = vadd.f32 %v5432, %v5570
    %v5607 = vadd.f32 %v5433, %v5572
    %v5608 = vadd.f32 %v5434, %v5576
    %v5609 = vadd.f32 %v5435, %v5578
    %v5610 = vadd.f32 %v5436, %v5580
    %v5611 = vadd.f32 %v5437, %v5582
    %v5612 = vadd.f32 %v5438, %v5586
    %v5613 = vadd.f32 %v5439, %v5588
    %v5614 = vadd.f32 %v5440, %v5590
    %v5615 = vadd.f32 %v5441, %v5592
    %v5616 = vadd.f32 %v5442, %v5596
    %v5617 = vadd.f32 %v5443, %v5598
    %v5618 = vadd.f32 %v5444, %v5600
    %v5619 = vadd.f32 %v5445, %v5602
    %v5620 = vld [vmem:[%s1985 + $0x1] sm:$0xff]
    %v5621 = vld [vmem:[%s1985 + $0x11] sm:$0xff]
    %v5622 = vld [vmem:[%s1985 + $0x21] sm:$0xff]
    %v5623 = vld [vmem:[%s1985 + $0x31] sm:$0xff]
    %v5624 = vld [vmem:[%s1985 + $0x41] sm:$0xff]
    %v5625 = vld [vmem:[%s1985 + $0x51] sm:$0xff]
    %v5626 = vld [vmem:[%s1985 + $0x61] sm:$0xff]
    %v5627 = vld [vmem:[%s1985 + $0x71] sm:$0xff]
    %v5628 = vpack.c.bf16 %v5621, %v5620
    %v5629 = vpack.c.bf16 %v5623, %v5622
    %v5630 = vpack.c.bf16 %v5625, %v5624
    %v5631 = vpack.c.bf16 %v5627, %v5626
    %s5632 = scalar_lea.vmem %s7, 320
    %v5633 = vld [vmem:[%s5632] sm:$0xff]
    %v5634 = vld [vmem:[%s5632 + $0x8] sm:$0xff]
    %v5635 = vld [vmem:[%s5632 + $0x10] sm:$0xff]
    %v5636 = vld [vmem:[%s5632 + $0x18] sm:$0xff]
    %v5637 = vld [vmem:[%s5632 + $0x20] sm:$0xff]
    %v5638 = vld [vmem:[%s5632 + $0x28] sm:$0xff]
    %v5639 = vld [vmem:[%s5632 + $0x30] sm:$0xff]
    %v5640 = vld [vmem:[%s5632 + $0x38] sm:$0xff]
    %v5641 = vld [vmem:[%s5632 + $0x40] sm:$0xff]
    %v5642 = vld [vmem:[%s5632 + $0x48] sm:$0xff]
    %v5653 = vunpack.c.l.b16 %v5633
    %v5654 = vunpack.c.h.b16 %v5633
    %v5655 = vunpack.c.l.b16 %v5634
    %v5656 = vunpack.c.h.b16 %v5634
    %v5657 = vunpack.c.l.b16 %v5635
    %v5658 = vunpack.c.h.b16 %v5635
    %v5659 = vunpack.c.l.b16 %v5636
    %v5660 = vunpack.c.h.b16 %v5636
    %v5661 = vunpack.c.l.b16 %v5637
    %v5662 = vunpack.c.h.b16 %v5637
    %v5663 = vunpack.c.l.b16 %v5638
    %v5664 = vunpack.c.h.b16 %v5638
    %v5665 = vunpack.c.l.b16 %v5639
    %v5666 = vunpack.c.h.b16 %v5639
    %v5667 = vunpack.c.l.b16 %v5640
    %v5668 = vunpack.c.h.b16 %v5640
    %v5669 = vunpack.c.l.b16 %v5641
    %v5670 = vunpack.c.h.b16 %v5641
    %v5671 = vunpack.c.l.b16 %v5642
    %v5672 = vunpack.c.h.b16 %v5642
    %v5673 = vpack.c.b16 %v5655, %v5653
    %v5674 = vpack.c.b16 %v5656, %v5654
    %v5675 = vpack.c.b16 %v5659, %v5657
    %v5676 = vpack.c.b16 %v5660, %v5658
    %v5677 = vpack.c.b16 %v5663, %v5661
    %v5678 = vpack.c.b16 %v5664, %v5662
    %v5679 = vpack.c.b16 %v5667, %v5665
    %v5680 = vpack.c.b16 %v5668, %v5666
    %v5681 = vpack.c.b16 %v5671, %v5669
    %v5682 = vpack.c.b16 %v5672, %v5670
    %v5694 = vsel %vm2103, %v5628, 0
    %v5697 = vsel %vm2103, %v5629, 0
    %v5700 = vsel %vm2103, %v5630, 0
    %v5703 = vsel %vm2103, %v5631, 0
    %5705 = vmatprep.subr.bf16.mxu0 0
    %5706 = vmatpush1.bf16.msra.mxu0 0
    %5707 = vmatprep.subr.bf16.mxu0 0
    %5708 = vmatpush1.bf16.msra.mxu0 0
    %5709 = vmatprep.subr.bf16.mxu0 0
    %5710 = vmatpush1.bf16.msra.mxu0 0
    %5711 = vmatprep.subr.bf16.mxu0 %v5682
    %5712 = vmatpush1.bf16.msra.mxu0 %v5681
    %5713 = vmatprep.subr.bf16.mxu0 %v5680
    %5714 = vmatpush1.bf16.msra.mxu0 %v5679
    %5715 = vmatprep.subr.bf16.mxu0 %v5678
    %5716 = vmatpush1.bf16.msra.mxu0 %v5677
    %5717 = vmatprep.subr.bf16.mxu0 %v5676
    %5718 = vmatpush1.bf16.msra.mxu0 %v5675
    %5719 = vmatprep.subr.bf16.mxu0 %v5674
    %5720 = vmatpush1.bf16.msra.mxu0 %v5673
    %5721 = vmatprep.subr.bf16.mxu0 0
    %5722 = vmatpush2.bf16.msra.mxu0 0
    %5723 = vmatprep.subr.bf16.mxu0 0
    %5724 = vmatpush2.bf16.msra.mxu0 0
    %5725 = vmatprep.subr.bf16.mxu0 0
    %5726 = vmatpush2.bf16.msra.mxu0 0
    %5727 = vmatprep.subr.bf16.mxu0 0
    %5728 = vmatpush2.bf16.msra.mxu0 0
    %5729 = vmatprep.subr.bf16.mxu0 0
    %5730 = vmatpush2.bf16.msra.mxu0 0
    %5731 = vmatprep.subr.bf16.mxu0 0
    %5732 = vmatpush2.bf16.msra.mxu0 0
    %5733 = vmatprep.subr.bf16.mxu0 0
    %5734 = vmatpush2.bf16.msra.mxu0 0
    %5735 = vmatprep.subr.bf16.mxu0 0
    %5736 = vmatpush2.bf16.msra.mxu0 0
    %5737 = vmatprep.mubr.bf16.mxu0 0
    %5738 = vmatmul.mubr.bf16.gmra.mxu0 %v5694
    %v5739 = vpop.f32.mrf.mxu0
    %v5740 = vadd.f32 0.0, %v5739
    %v5741 = vpop.f32.mrf.mxu0
    %v5742 = vadd.f32 0.0, %v5741
    %v5743 = vpop.f32.mrf.mxu0
    %v5744 = vadd.f32 0.0, %v5743
    %v5745 = vpop.f32.mrf.mxu0
    %v5746 = vadd.f32 0.0, %v5745
    %5747 = vmatprep.mubr.bf16.mxu0 0
    %5748 = vmatmul.mubr.bf16.gmra.mxu0 %v5697
    %v5749 = vpop.f32.mrf.mxu0
    %v5750 = vadd.f32 0.0, %v5749
    %v5751 = vpop.f32.mrf.mxu0
    %v5752 = vadd.f32 0.0, %v5751
    %v5753 = vpop.f32.mrf.mxu0
    %v5754 = vadd.f32 0.0, %v5753
    %v5755 = vpop.f32.mrf.mxu0
    %v5756 = vadd.f32 0.0, %v5755
    %5757 = vmatprep.mubr.bf16.mxu0 0
    %5758 = vmatmul.mubr.bf16.gmra.mxu0 %v5700
    %v5759 = vpop.f32.mrf.mxu0
    %v5760 = vadd.f32 0.0, %v5759
    %v5761 = vpop.f32.mrf.mxu0
    %v5762 = vadd.f32 0.0, %v5761
    %v5763 = vpop.f32.mrf.mxu0
    %v5764 = vadd.f32 0.0, %v5763
    %v5765 = vpop.f32.mrf.mxu0
    %v5766 = vadd.f32 0.0, %v5765
    %5767 = vmatprep.mubr.bf16.mxu0 0
    %5768 = vmatmul.mubr.bf16.gmra.mxu0 %v5703
    %v5769 = vpop.f32.mrf.mxu0
    %v5770 = vadd.f32 0.0, %v5769
    %v5771 = vpop.f32.mrf.mxu0
    %v5772 = vadd.f32 0.0, %v5771
    %v5773 = vpop.f32.mrf.mxu0
    %v5774 = vadd.f32 0.0, %v5773
    %v5775 = vpop.f32.mrf.mxu0
    %v5776 = vadd.f32 0.0, %v5775
    %5777 = vdwg.mxu0
    %v5778 = vadd.f32 %v5604, %v5740
    %v5779 = vadd.f32 %v5605, %v5742
    %v5780 = vadd.f32 %v5606, %v5744
    %v5781 = vadd.f32 %v5607, %v5746
    %v5782 = vadd.f32 %v5608, %v5750
    %v5783 = vadd.f32 %v5609, %v5752
    %v5784 = vadd.f32 %v5610, %v5754
    %v5785 = vadd.f32 %v5611, %v5756
    %v5786 = vadd.f32 %v5612, %v5760
    %v5787 = vadd.f32 %v5613, %v5762
    %v5788 = vadd.f32 %v5614, %v5764
    %v5789 = vadd.f32 %v5615, %v5766
    %v5790 = vadd.f32 %v5616, %v5770
    %v5791 = vadd.f32 %v5617, %v5772
    %v5792 = vadd.f32 %v5618, %v5774
    %v5793 = vadd.f32 %v5619, %v5776
    %v5794 = vld [vmem:[%s2018 + $0x1] sm:$0xff]
    %v5795 = vld [vmem:[%s2018 + $0x11] sm:$0xff]
    %v5796 = vld [vmem:[%s2018 + $0x21] sm:$0xff]
    %v5797 = vld [vmem:[%s2018 + $0x31] sm:$0xff]
    %v5798 = vld [vmem:[%s2018 + $0x41] sm:$0xff]
    %v5799 = vld [vmem:[%s2018 + $0x51] sm:$0xff]
    %v5800 = vld [vmem:[%s2018 + $0x61] sm:$0xff]
    %v5801 = vld [vmem:[%s2018 + $0x71] sm:$0xff]
    %v5802 = vpack.c.bf16 %v5795, %v5794
    %v5803 = vpack.c.bf16 %v5797, %v5796
    %v5804 = vpack.c.bf16 %v5799, %v5798
    %v5805 = vpack.c.bf16 %v5801, %v5800
    %s5806 = scalar_lea.vmem %s7, 400
    %v5807 = vld [vmem:[%s5806] sm:$0xff]
    %v5808 = vld [vmem:[%s5806 + $0x8] sm:$0xff]
    %v5809 = vld [vmem:[%s5806 + $0x10] sm:$0xff]
    %v5810 = vld [vmem:[%s5806 + $0x18] sm:$0xff]
    %v5811 = vld [vmem:[%s5806 + $0x20] sm:$0xff]
    %v5812 = vld [vmem:[%s5806 + $0x28] sm:$0xff]
    %v5813 = vld [vmem:[%s5806 + $0x30] sm:$0xff]
    %v5814 = vld [vmem:[%s5806 + $0x38] sm:$0xff]
    %v5815 = vld [vmem:[%s5806 + $0x40] sm:$0xff]
    %v5816 = vld [vmem:[%s5806 + $0x48] sm:$0xff]
    %v5827 = vunpack.c.l.b16 %v5807
    %v5828 = vunpack.c.h.b16 %v5807
    %v5829 = vunpack.c.l.b16 %v5808
    %v5830 = vunpack.c.h.b16 %v5808
    %v5831 = vunpack.c.l.b16 %v5809
    %v5832 = vunpack.c.h.b16 %v5809
    %v5833 = vunpack.c.l.b16 %v5810
    %v5834 = vunpack.c.h.b16 %v5810
    %v5835 = vunpack.c.l.b16 %v5811
    %v5836 = vunpack.c.h.b16 %v5811
    %v5837 = vunpack.c.l.b16 %v5812
    %v5838 = vunpack.c.h.b16 %v5812
    %v5839 = vunpack.c.l.b16 %v5813
    %v5840 = vunpack.c.h.b16 %v5813
    %v5841 = vunpack.c.l.b16 %v5814
    %v5842 = vunpack.c.h.b16 %v5814
    %v5843 = vunpack.c.l.b16 %v5815
    %v5844 = vunpack.c.h.b16 %v5815
    %v5845 = vunpack.c.l.b16 %v5816
    %v5846 = vunpack.c.h.b16 %v5816
    %v5847 = vpack.c.b16 %v5829, %v5827
    %v5848 = vpack.c.b16 %v5830, %v5828
    %v5849 = vpack.c.b16 %v5833, %v5831
    %v5850 = vpack.c.b16 %v5834, %v5832
    %v5851 = vpack.c.b16 %v5837, %v5835
    %v5852 = vpack.c.b16 %v5838, %v5836
    %v5853 = vpack.c.b16 %v5841, %v5839
    %v5854 = vpack.c.b16 %v5842, %v5840
    %v5855 = vpack.c.b16 %v5845, %v5843
    %v5856 = vpack.c.b16 %v5846, %v5844
    %v5868 = vsel %vm2103, %v5802, 0
    %v5871 = vsel %vm2103, %v5803, 0
    %v5874 = vsel %vm2103, %v5804, 0
    %v5877 = vsel %vm2103, %v5805, 0
    %5879 = vmatprep.subr.bf16.mxu0 0
    %5880 = vmatpush1.bf16.msra.mxu0 0
    %5881 = vmatprep.subr.bf16.mxu0 0
    %5882 = vmatpush1.bf16.msra.mxu0 0
    %5883 = vmatprep.subr.bf16.mxu0 0
    %5884 = vmatpush1.bf16.msra.mxu0 0
    %5885 = vmatprep.subr.bf16.mxu0 %v5856
    %5886 = vmatpush1.bf16.msra.mxu0 %v5855
    %5887 = vmatprep.subr.bf16.mxu0 %v5854
    %5888 = vmatpush1.bf16.msra.mxu0 %v5853
    %5889 = vmatprep.subr.bf16.mxu0 %v5852
    %5890 = vmatpush1.bf16.msra.mxu0 %v5851
    %5891 = vmatprep.subr.bf16.mxu0 %v5850
    %5892 = vmatpush1.bf16.msra.mxu0 %v5849
    %5893 = vmatprep.subr.bf16.mxu0 %v5848
    %5894 = vmatpush1.bf16.msra.mxu0 %v5847
    %5895 = vmatprep.subr.bf16.mxu0 0
    %5896 = vmatpush2.bf16.msra.mxu0 0
    %5897 = vmatprep.subr.bf16.mxu0 0
    %5898 = vmatpush2.bf16.msra.mxu0 0
    %5899 = vmatprep.subr.bf16.mxu0 0
    %5900 = vmatpush2.bf16.msra.mxu0 0
    %5901 = vmatprep.subr.bf16.mxu0 0
    %5902 = vmatpush2.bf16.msra.mxu0 0
    %5903 = vmatprep.subr.bf16.mxu0 0
    %5904 = vmatpush2.bf16.msra.mxu0 0
    %5905 = vmatprep.subr.bf16.mxu0 0
    %5906 = vmatpush2.bf16.msra.mxu0 0
    %5907 = vmatprep.subr.bf16.mxu0 0
    %5908 = vmatpush2.bf16.msra.mxu0 0
    %5909 = vmatprep.subr.bf16.mxu0 0
    %5910 = vmatpush2.bf16.msra.mxu0 0
    %5911 = vmatprep.mubr.bf16.mxu0 0
    %5912 = vmatmul.mubr.bf16.gmra.mxu0 %v5868
    %v5913 = vpop.f32.mrf.mxu0
    %v5914 = vadd.f32 0.0, %v5913
    %v5915 = vpop.f32.mrf.mxu0
    %v5916 = vadd.f32 0.0, %v5915
    %v5917 = vpop.f32.mrf.mxu0
    %v5918 = vadd.f32 0.0, %v5917
    %v5919 = vpop.f32.mrf.mxu0
    %v5920 = vadd.f32 0.0, %v5919
    %5921 = vmatprep.mubr.bf16.mxu0 0
    %5922 = vmatmul.mubr.bf16.gmra.mxu0 %v5871
    %v5923 = vpop.f32.mrf.mxu0
    %v5924 = vadd.f32 0.0, %v5923
    %v5925 = vpop.f32.mrf.mxu0
    %v5926 = vadd.f32 0.0, %v5925
    %v5927 = vpop.f32.mrf.mxu0
    %v5928 = vadd.f32 0.0, %v5927
    %v5929 = vpop.f32.mrf.mxu0
    %v5930 = vadd.f32 0.0, %v5929
    %5931 = vmatprep.mubr.bf16.mxu0 0
    %5932 = vmatmul.mubr.bf16.gmra.mxu0 %v5874
    %v5933 = vpop.f32.mrf.mxu0
    %v5934 = vadd.f32 0.0, %v5933
    %v5935 = vpop.f32.mrf.mxu0
    %v5936 = vadd.f32 0.0, %v5935
    %v5937 = vpop.f32.mrf.mxu0
    %v5938 = vadd.f32 0.0, %v5937
    %v5939 = vpop.f32.mrf.mxu0
    %v5940 = vadd.f32 0.0, %v5939
    %5941 = vmatprep.mubr.bf16.mxu0 0
    %5942 = vmatmul.mubr.bf16.gmra.mxu0 %v5877
    %v5943 = vpop.f32.mrf.mxu0
    %v5944 = vadd.f32 0.0, %v5943
    %v5945 = vpop.f32.mrf.mxu0
    %v5946 = vadd.f32 0.0, %v5945
    %v5947 = vpop.f32.mrf.mxu0
    %v5948 = vadd.f32 0.0, %v5947
    %v5949 = vpop.f32.mrf.mxu0
    %v5950 = vadd.f32 0.0, %v5949
    %5951 = vdwg.mxu0
    %v5952 = vadd.f32 %v5778, %v5914
    %v5953 = vadd.f32 %v5779, %v5916
    %v5954 = vadd.f32 %v5780, %v5918
    %v5955 = vadd.f32 %v5781, %v5920
    %v5956 = vadd.f32 %v5782, %v5924
    %v5957 = vadd.f32 %v5783, %v5926
    %v5958 = vadd.f32 %v5784, %v5928
    %v5959 = vadd.f32 %v5785, %v5930
    %v5960 = vadd.f32 %v5786, %v5934
    %v5961 = vadd.f32 %v5787, %v5936
    %v5962 = vadd.f32 %v5788, %v5938
    %v5963 = vadd.f32 %v5789, %v5940
    %v5964 = vadd.f32 %v5790, %v5944
    %v5965 = vadd.f32 %v5791, %v5946
    %v5966 = vadd.f32 %v5792, %v5948
    %v5967 = vadd.f32 %v5793, %v5950
    %v5969 = vlaneseq
    %v5970 = vshrl.u32 %v5969, 7
    %v5971 = vsub.s32 0, %v5970
    %v5972 = vrot.slane %v4956, %v5971
    %v5973 = vlaneseq
    %v5974 = vshrl.u32 %v5973, 7
    %v5975 = vsub.s32 1, %v5974
    %v5976 = vrot.slane %v4956, %v5975
    %v5979 = vadd.f32 %v5952, %v5972
    %v5980 = vadd.f32 %v5953, %v5976
    %v5981 = vadd.f32 %v5954, %v5972
    %v5982 = vadd.f32 %v5955, %v5976
    %v5983 = vadd.f32 %v5956, %v5972
    %v5984 = vadd.f32 %v5957, %v5976
    %v5985 = vadd.f32 %v5958, %v5972
    %v5986 = vadd.f32 %v5959, %v5976
    %v5987 = vadd.f32 %v5960, %v5972
    %v5988 = vadd.f32 %v5961, %v5976
    %v5989 = vadd.f32 %v5962, %v5972
    %v5990 = vadd.f32 %v5963, %v5976
    %v5991 = vadd.f32 %v5964, %v5972
    %v5992 = vadd.f32 %v5965, %v5976
    %v5993 = vadd.f32 %v5966, %v5972
    %v5994 = vadd.f32 %v5967, %v5976
    %v5995 = vmax.f32 %v5979, 0.0
    %v5996 = vmax.f32 %v5980, 0.0
    %v5997 = vmax.f32 %v5981, 0.0
    %v5998 = vmax.f32 %v5982, 0.0
    %v5999 = vmax.f32 %v5983, 0.0
    %v6000 = vmax.f32 %v5984, 0.0
    %v6001 = vmax.f32 %v5985, 0.0
    %v6002 = vmax.f32 %v5986, 0.0
    %v6003 = vmax.f32 %v5987, 0.0
    %v6004 = vmax.f32 %v5988, 0.0
    %v6005 = vmax.f32 %v5989, 0.0
    %v6006 = vmax.f32 %v5990, 0.0
    %v6007 = vmax.f32 %v5991, 0.0
    %v6008 = vmax.f32 %v5992, 0.0
    %v6009 = vmax.f32 %v5993, 0.0
    %v6010 = vmax.f32 %v5994, 0.0
    %6011 = vmatprep.subr.bf16.mxu0 0
    %6012 = vmatpush1.bf16.msra.mxu0 0
    %6013 = vmatprep.subr.bf16.mxu0 0
    %6014 = vmatpush1.bf16.msra.mxu0 0
    %6015 = vmatprep.subr.bf16.mxu0 0
    %6016 = vmatpush1.bf16.msra.mxu0 0
    %6017 = vmatprep.subr.bf16.mxu0 %v5041
    %6018 = vmatpush1.bf16.msra.mxu0 %v5040
    %6019 = vmatprep.subr.bf16.mxu0 %v5039
    %6020 = vmatpush1.bf16.msra.mxu0 %v5038
    %6021 = vmatprep.subr.bf16.mxu0 %v5037
    %6022 = vmatpush1.bf16.msra.mxu0 %v5036
    %6023 = vmatprep.subr.bf16.mxu0 %v5035
    %6024 = vmatpush1.bf16.msra.mxu0 %v5034
    %6025 = vmatprep.subr.bf16.mxu0 %v5033
    %6026 = vmatpush1.bf16.msra.mxu0 %v5032
    %6027 = vmatprep.subr.bf16.mxu0 0
    %6028 = vmatpush2.bf16.msra.mxu0 0
    %6029 = vmatprep.subr.bf16.mxu0 0
    %6030 = vmatpush2.bf16.msra.mxu0 0
    %6031 = vmatprep.subr.bf16.mxu0 0
    %6032 = vmatpush2.bf16.msra.mxu0 0
    %6033 = vmatprep.subr.bf16.mxu0 0
    %6034 = vmatpush2.bf16.msra.mxu0 0
    %6035 = vmatprep.subr.bf16.mxu0 0
    %6036 = vmatpush2.bf16.msra.mxu0 0
    %6037 = vmatprep.subr.bf16.mxu0 0
    %6038 = vmatpush2.bf16.msra.mxu0 0
    %6039 = vmatprep.subr.bf16.mxu0 0
    %6040 = vmatpush2.bf16.msra.mxu0 0
    %6041 = vmatprep.subr.bf16.mxu0 0
    %6042 = vmatpush2.bf16.msra.mxu0 0
    %6043 = vmatprep.mubr.bf16.mxu0 0
    %6044 = vmatmul.mubr.bf16.gmra.mxu0 %v5520
    %v6045 = vpop.f32.mrf.mxu0
    %v6046 = vadd.f32 0.0, %v6045
    %v6047 = vpop.f32.mrf.mxu0
    %v6048 = vadd.f32 0.0, %v6047
    %v6049 = vpop.f32.mrf.mxu0
    %v6050 = vadd.f32 0.0, %v6049
    %v6051 = vpop.f32.mrf.mxu0
    %v6052 = vadd.f32 0.0, %v6051
    %6053 = vmatprep.mubr.bf16.mxu0 0
    %6054 = vmatmul.mubr.bf16.gmra.mxu0 %v5523
    %v6055 = vpop.f32.mrf.mxu0
    %v6056 = vadd.f32 0.0, %v6055
    %v6057 = vpop.f32.mrf.mxu0
    %v6058 = vadd.f32 0.0, %v6057
    %v6059 = vpop.f32.mrf.mxu0
    %v6060 = vadd.f32 0.0, %v6059
    %v6061 = vpop.f32.mrf.mxu0
    %v6062 = vadd.f32 0.0, %v6061
    %6063 = vmatprep.mubr.bf16.mxu0 0
    %6064 = vmatmul.mubr.bf16.gmra.mxu0 %v5526
    %v6065 = vpop.f32.mrf.mxu0
    %v6066 = vadd.f32 0.0, %v6065
    %v6067 = vpop.f32.mrf.mxu0
    %v6068 = vadd.f32 0.0, %v6067
    %v6069 = vpop.f32.mrf.mxu0
    %v6070 = vadd.f32 0.0, %v6069
    %v6071 = vpop.f32.mrf.mxu0
    %v6072 = vadd.f32 0.0, %v6071
    %6073 = vmatprep.mubr.bf16.mxu0 0
    %6074 = vmatmul.mubr.bf16.gmra.mxu0 %v5529
    %v6075 = vpop.f32.mrf.mxu0
    %v6076 = vadd.f32 0.0, %v6075
    %v6077 = vpop.f32.mrf.mxu0
    %v6078 = vadd.f32 0.0, %v6077
    %v6079 = vpop.f32.mrf.mxu0
    %v6080 = vadd.f32 0.0, %v6079
    %v6081 = vpop.f32.mrf.mxu0
    %v6082 = vadd.f32 0.0, %v6081
    %6083 = vdwg.mxu0
    %6084 = vmatprep.subr.bf16.mxu0 0
    %6085 = vmatpush1.bf16.msra.mxu0 0
    %6086 = vmatprep.subr.bf16.mxu0 0
    %6087 = vmatpush1.bf16.msra.mxu0 0
    %6088 = vmatprep.subr.bf16.mxu0 0
    %6089 = vmatpush1.bf16.msra.mxu0 0
    %6090 = vmatprep.subr.bf16.mxu0 %v5176
    %6091 = vmatpush1.bf16.msra.mxu0 %v5175
    %6092 = vmatprep.subr.bf16.mxu0 %v5174
    %6093 = vmatpush1.bf16.msra.mxu0 %v5173
    %6094 = vmatprep.subr.bf16.mxu0 %v5172
    %6095 = vmatpush1.bf16.msra.mxu0 %v5171
    %6096 = vmatprep.subr.bf16.mxu0 %v5170
    %6097 = vmatpush1.bf16.msra.mxu0 %v5169
    %6098 = vmatprep.subr.bf16.mxu0 %v5168
    %6099 = vmatpush1.bf16.msra.mxu0 %v5167
    %6100 = vmatprep.subr.bf16.mxu0 0
    %6101 = vmatpush2.bf16.msra.mxu0 0
    %6102 = vmatprep.subr.bf16.mxu0 0
    %6103 = vmatpush2.bf16.msra.mxu0 0
    %6104 = vmatprep.subr.bf16.mxu0 0
    %6105 = vmatpush2.bf16.msra.mxu0 0
    %6106 = vmatprep.subr.bf16.mxu0 0
    %6107 = vmatpush2.bf16.msra.mxu0 0
    %6108 = vmatprep.subr.bf16.mxu0 0
    %6109 = vmatpush2.bf16.msra.mxu0 0
    %6110 = vmatprep.subr.bf16.mxu0 0
    %6111 = vmatpush2.bf16.msra.mxu0 0
    %6112 = vmatprep.subr.bf16.mxu0 0
    %6113 = vmatpush2.bf16.msra.mxu0 0
    %6114 = vmatprep.subr.bf16.mxu0 0
    %6115 = vmatpush2.bf16.msra.mxu0 0
    %6116 = vmatprep.mubr.bf16.mxu0 0
    %6117 = vmatmul.mubr.bf16.gmra.mxu0 %v5346
    %v6118 = vpop.f32.mrf.mxu0
    %v6119 = vadd.f32 %v6046, %v6118
    %v6120 = vpop.f32.mrf.mxu0
    %v6121 = vadd.f32 %v6048, %v6120
    %v6122 = vpop.f32.mrf.mxu0
    %v6123 = vadd.f32 %v6050, %v6122
    %v6124 = vpop.f32.mrf.mxu0
    %v6125 = vadd.f32 %v6052, %v6124
    %6126 = vmatprep.mubr.bf16.mxu0 0
    %6127 = vmatmul.mubr.bf16.gmra.mxu0 %v5349
    %v6128 = vpop.f32.mrf.mxu0
    %v6129 = vadd.f32 %v6056, %v6128
    %v6130 = vpop.f32.mrf.mxu0
    %v6131 = vadd.f32 %v6058, %v6130
    %v6132 = vpop.f32.mrf.mxu0
    %v6133 = vadd.f32 %v6060, %v6132
    %v6134 = vpop.f32.mrf.mxu0
    %v6135 = vadd.f32 %v6062, %v6134
    %6136 = vmatprep.mubr.bf16.mxu0 0
    %6137 = vmatmul.mubr.bf16.gmra.mxu0 %v5352
    %v6138 = vpop.f32.mrf.mxu0
    %v6139 = vadd.f32 %v6066, %v6138
    %v6140 = vpop.f32.mrf.mxu0
    %v6141 = vadd.f32 %v6068, %v6140
    %v6142 = vpop.f32.mrf.mxu0
    %v6143 = vadd.f32 %v6070, %v6142
    %v6144 = vpop.f32.mrf.mxu0
    %v6145 = vadd.f32 %v6072, %v6144
    %6146 = vmatprep.mubr.bf16.mxu0 0
    %6147 = vmatmul.mubr.bf16.gmra.mxu0 %v5355
    %v6148 = vpop.f32.mrf.mxu0
    %v6149 = vadd.f32 %v6076, %v6148
    %v6150 = vpop.f32.mrf.mxu0
    %v6151 = vadd.f32 %v6078, %v6150
    %v6152 = vpop.f32.mrf.mxu0
    %v6153 = vadd.f32 %v6080, %v6152
    %v6154 = vpop.f32.mrf.mxu0
    %v6155 = vadd.f32 %v6082, %v6154
    %6156 = vdwg.mxu0
    %6157 = vmatprep.subr.bf16.mxu0 0
    %6158 = vmatpush1.bf16.msra.mxu0 0
    %6159 = vmatprep.subr.bf16.mxu0 0
    %6160 = vmatpush1.bf16.msra.mxu0 0
    %6161 = vmatprep.subr.bf16.mxu0 0
    %6162 = vmatpush1.bf16.msra.mxu0 0
    %6163 = vmatprep.subr.bf16.mxu0 %v5334
    %6164 = vmatpush1.bf16.msra.mxu0 %v5333
    %6165 = vmatprep.subr.bf16.mxu0 %v5332
    %6166 = vmatpush1.bf16.msra.mxu0 %v5331
    %6167 = vmatprep.subr.bf16.mxu0 %v5330
    %6168 = vmatpush1.bf16.msra.mxu0 %v5329
    %6169 = vmatprep.subr.bf16.mxu0 %v5328
    %6170 = vmatpush1.bf16.msra.mxu0 %v5327
    %6171 = vmatprep.subr.bf16.mxu0 %v5326
    %6172 = vmatpush1.bf16.msra.mxu0 %v5325
    %6173 = vmatprep.subr.bf16.mxu0 0
    %6174 = vmatpush2.bf16.msra.mxu0 0
    %6175 = vmatprep.subr.bf16.mxu0 0
    %6176 = vmatpush2.bf16.msra.mxu0 0
    %6177 = vmatprep.subr.bf16.mxu0 0
    %6178 = vmatpush2.bf16.msra.mxu0 0
    %6179 = vmatprep.subr.bf16.mxu0 0
    %6180 = vmatpush2.bf16.msra.mxu0 0
    %6181 = vmatprep.subr.bf16.mxu0 0
    %6182 = vmatpush2.bf16.msra.mxu0 0
    %6183 = vmatprep.subr.bf16.mxu0 0
    %6184 = vmatpush2.bf16.msra.mxu0 0
    %6185 = vmatprep.subr.bf16.mxu0 0
    %6186 = vmatpush2.bf16.msra.mxu0 0
    %6187 = vmatprep.subr.bf16.mxu0 0
    %6188 = vmatpush2.bf16.msra.mxu0 0
    %6189 = vmatprep.mubr.bf16.mxu0 0
    %6190 = vmatmul.mubr.bf16.gmra.mxu0 %v5694
    %v6191 = vpop.f32.mrf.mxu0
    %v6192 = vadd.f32 0.0, %v6191
    %v6193 = vpop.f32.mrf.mxu0
    %v6194 = vadd.f32 0.0, %v6193
    %v6195 = vpop.f32.mrf.mxu0
    %v6196 = vadd.f32 0.0, %v6195
    %v6197 = vpop.f32.mrf.mxu0
    %v6198 = vadd.f32 0.0, %v6197
    %6199 = vmatprep.mubr.bf16.mxu0 0
    %6200 = vmatmul.mubr.bf16.gmra.mxu0 %v5697
    %v6201 = vpop.f32.mrf.mxu0
    %v6202 = vadd.f32 0.0, %v6201
    %v6203 = vpop.f32.mrf.mxu0
    %v6204 = vadd.f32 0.0, %v6203
    %v6205 = vpop.f32.mrf.mxu0
    %v6206 = vadd.f32 0.0, %v6205
    %v6207 = vpop.f32.mrf.mxu0
    %v6208 = vadd.f32 0.0, %v6207
    %6209 = vmatprep.mubr.bf16.mxu0 0
    %6210 = vmatmul.mubr.bf16.gmra.mxu0 %v5700
    %v6211 = vpop.f32.mrf.mxu0
    %v6212 = vadd.f32 0.0, %v6211
    %v6213 = vpop.f32.mrf.mxu0
    %v6214 = vadd.f32 0.0, %v6213
    %v6215 = vpop.f32.mrf.mxu0
    %v6216 = vadd.f32 0.0, %v6215
    %v6217 = vpop.f32.mrf.mxu0
    %v6218 = vadd.f32 0.0, %v6217
    %6219 = vmatprep.mubr.bf16.mxu0 0
    %6220 = vmatmul.mubr.bf16.gmra.mxu0 %v5703
    %v6221 = vpop.f32.mrf.mxu0
    %v6222 = vadd.f32 0.0, %v6221
    %v6223 = vpop.f32.mrf.mxu0
    %v6224 = vadd.f32 0.0, %v6223
    %v6225 = vpop.f32.mrf.mxu0
    %v6226 = vadd.f32 0.0, %v6225
    %v6227 = vpop.f32.mrf.mxu0
    %v6228 = vadd.f32 0.0, %v6227
    %6229 = vdwg.mxu0
    %v6230 = vadd.f32 %v6119, %v6192
    %v6231 = vadd.f32 %v6121, %v6194
    %v6232 = vadd.f32 %v6123, %v6196
    %v6233 = vadd.f32 %v6125, %v6198
    %v6234 = vadd.f32 %v6129, %v6202
    %v6235 = vadd.f32 %v6131, %v6204
    %v6236 = vadd.f32 %v6133, %v6206
    %v6237 = vadd.f32 %v6135, %v6208
    %v6238 = vadd.f32 %v6139, %v6212
    %v6239 = vadd.f32 %v6141, %v6214
    %v6240 = vadd.f32 %v6143, %v6216
    %v6241 = vadd.f32 %v6145, %v6218
    %v6242 = vadd.f32 %v6149, %v6222
    %v6243 = vadd.f32 %v6151, %v6224
    %v6244 = vadd.f32 %v6153, %v6226
    %v6245 = vadd.f32 %v6155, %v6228
    %6246 = vmatprep.subr.bf16.mxu0 0
    %6247 = vmatpush1.bf16.msra.mxu0 0
    %6248 = vmatprep.subr.bf16.mxu0 0
    %6249 = vmatpush1.bf16.msra.mxu0 0
    %6250 = vmatprep.subr.bf16.mxu0 0
    %6251 = vmatpush1.bf16.msra.mxu0 0
    %6252 = vmatprep.subr.bf16.mxu0 %v5508
    %6253 = vmatpush1.bf16.msra.mxu0 %v5507
    %6254 = vmatprep.subr.bf16.mxu0 %v5506
    %6255 = vmatpush1.bf16.msra.mxu0 %v5505
    %6256 = vmatprep.subr.bf16.mxu0 %v5504
    %6257 = vmatpush1.bf16.msra.mxu0 %v5503
    %6258 = vmatprep.subr.bf16.mxu0 %v5502
    %6259 = vmatpush1.bf16.msra.mxu0 %v5501
    %6260 = vmatprep.subr.bf16.mxu0 %v5500
    %6261 = vmatpush1.bf16.msra.mxu0 %v5499
    %6262 = vmatprep.subr.bf16.mxu0 0
    %6263 = vmatpush2.bf16.msra.mxu0 0
    %6264 = vmatprep.subr.bf16.mxu0 0
    %6265 = vmatpush2.bf16.msra.mxu0 0
    %6266 = vmatprep.subr.bf16.mxu0 0
    %6267 = vmatpush2.bf16.msra.mxu0 0
    %6268 = vmatprep.subr.bf16.mxu0 0
    %6269 = vmatpush2.bf16.msra.mxu0 0
    %6270 = vmatprep.subr.bf16.mxu0 0
    %6271 = vmatpush2.bf16.msra.mxu0 0
    %6272 = vmatprep.subr.bf16.mxu0 0
    %6273 = vmatpush2.bf16.msra.mxu0 0
    %6274 = vmatprep.subr.bf16.mxu0 0
    %6275 = vmatpush2.bf16.msra.mxu0 0
    %6276 = vmatprep.subr.bf16.mxu0 0
    %6277 = vmatpush2.bf16.msra.mxu0 0
    %6278 = vmatprep.mubr.bf16.mxu0 0
    %6279 = vmatmul.mubr.bf16.gmra.mxu0 %v5868
    %v6280 = vpop.f32.mrf.mxu0
    %v6281 = vadd.f32 0.0, %v6280
    %v6282 = vpop.f32.mrf.mxu0
    %v6283 = vadd.f32 0.0, %v6282
    %v6284 = vpop.f32.mrf.mxu0
    %v6285 = vadd.f32 0.0, %v6284
    %v6286 = vpop.f32.mrf.mxu0
    %v6287 = vadd.f32 0.0, %v6286
    %6288 = vmatprep.mubr.bf16.mxu0 0
    %6289 = vmatmul.mubr.bf16.gmra.mxu0 %v5871
    %v6290 = vpop.f32.mrf.mxu0
    %v6291 = vadd.f32 0.0, %v6290
    %v6292 = vpop.f32.mrf.mxu0
    %v6293 = vadd.f32 0.0, %v6292
    %v6294 = vpop.f32.mrf.mxu0
    %v6295 = vadd.f32 0.0, %v6294
    %v6296 = vpop.f32.mrf.mxu0
    %v6297 = vadd.f32 0.0, %v6296
    %6298 = vmatprep.mubr.bf16.mxu0 0
    %6299 = vmatmul.mubr.bf16.gmra.mxu0 %v5874
    %v6300 = vpop.f32.mrf.mxu0
    %v6301 = vadd.f32 0.0, %v6300
    %v6302 = vpop.f32.mrf.mxu0
    %v6303 = vadd.f32 0.0, %v6302
    %v6304 = vpop.f32.mrf.mxu0
    %v6305 = vadd.f32 0.0, %v6304
    %v6306 = vpop.f32.mrf.mxu0
    %v6307 = vadd.f32 0.0, %v6306
    %6308 = vmatprep.mubr.bf16.mxu0 0
    %6309 = vmatmul.mubr.bf16.gmra.mxu0 %v5877
    %v6310 = vpop.f32.mrf.mxu0
    %v6311 = vadd.f32 0.0, %v6310
    %v6312 = vpop.f32.mrf.mxu0
    %v6313 = vadd.f32 0.0, %v6312
    %v6314 = vpop.f32.mrf.mxu0
    %v6315 = vadd.f32 0.0, %v6314
    %v6316 = vpop.f32.mrf.mxu0
    %v6317 = vadd.f32 0.0, %v6316
    %6318 = vdwg.mxu0
    %v6319 = vadd.f32 %v6230, %v6281
    %v6320 = vadd.f32 %v6231, %v6283
    %v6321 = vadd.f32 %v6232, %v6285
    %v6322 = vadd.f32 %v6233, %v6287
    %v6323 = vadd.f32 %v6234, %v6291
    %v6324 = vadd.f32 %v6235, %v6293
    %v6325 = vadd.f32 %v6236, %v6295
    %v6326 = vadd.f32 %v6237, %v6297
    %v6327 = vadd.f32 %v6238, %v6301
    %v6328 = vadd.f32 %v6239, %v6303
    %v6329 = vadd.f32 %v6240, %v6305
    %v6330 = vadd.f32 %v6241, %v6307
    %v6331 = vadd.f32 %v6242, %v6311
    %v6332 = vadd.f32 %v6243, %v6313
    %v6333 = vadd.f32 %v6244, %v6315
    %v6334 = vadd.f32 %v6245, %v6317
    %v6335 = vld [vmem:[#allocation2 + $0x2] sm:$0xff]
    %v6336 = vld [vmem:[#allocation2 + $0x12] sm:$0xff]
    %v6337 = vld [vmem:[#allocation2 + $0x22] sm:$0xff]
    %v6338 = vld [vmem:[#allocation2 + $0x32] sm:$0xff]
    %v6339 = vld [vmem:[#allocation2 + $0x42] sm:$0xff]
    %v6340 = vld [vmem:[#allocation2 + $0x52] sm:$0xff]
    %v6341 = vld [vmem:[#allocation2 + $0x62] sm:$0xff]
    %v6342 = vld [vmem:[#allocation2 + $0x72] sm:$0xff]
    %v6343 = vpack.c.bf16 %v6336, %v6335
    %v6344 = vpack.c.bf16 %v6338, %v6337
    %v6345 = vpack.c.bf16 %v6340, %v6339
    %v6346 = vpack.c.bf16 %v6342, %v6341
    %v6348 = vsel %vm2103, %v6343, 0
    %v6351 = vsel %vm2103, %v6344, 0
    %v6354 = vsel %vm2103, %v6345, 0
    %v6357 = vsel %vm2103, %v6346, 0
    %6359 = vmatprep.subr.bf16.mxu0 0
    %6360 = vmatpush1.bf16.msra.mxu0 0
    %6361 = vmatprep.subr.bf16.mxu0 0
    %6362 = vmatpush1.bf16.msra.mxu0 0
    %6363 = vmatprep.subr.bf16.mxu0 0
    %6364 = vmatpush1.bf16.msra.mxu0 0
    %6365 = vmatprep.subr.bf16.mxu0 %v5682
    %6366 = vmatpush1.bf16.msra.mxu0 %v5681
    %6367 = vmatprep.subr.bf16.mxu0 %v5680
    %6368 = vmatpush1.bf16.msra.mxu0 %v5679
    %6369 = vmatprep.subr.bf16.mxu0 %v5678
    %6370 = vmatpush1.bf16.msra.mxu0 %v5677
    %6371 = vmatprep.subr.bf16.mxu0 %v5676
    %6372 = vmatpush1.bf16.msra.mxu0 %v5675
    %6373 = vmatprep.subr.bf16.mxu0 %v5674
    %6374 = vmatpush1.bf16.msra.mxu0 %v5673
    %6375 = vmatprep.subr.bf16.mxu0 0
    %6376 = vmatpush2.bf16.msra.mxu0 0
    %6377 = vmatprep.subr.bf16.mxu0 0
    %6378 = vmatpush2.bf16.msra.mxu0 0
    %6379 = vmatprep.subr.bf16.mxu0 0
    %6380 = vmatpush2.bf16.msra.mxu0 0
    %6381 = vmatprep.subr.bf16.mxu0 0
    %6382 = vmatpush2.bf16.msra.mxu0 0
    %6383 = vmatprep.subr.bf16.mxu0 0
    %6384 = vmatpush2.bf16.msra.mxu0 0
    %6385 = vmatprep.subr.bf16.mxu0 0
    %6386 = vmatpush2.bf16.msra.mxu0 0
    %6387 = vmatprep.subr.bf16.mxu0 0
    %6388 = vmatpush2.bf16.msra.mxu0 0
    %6389 = vmatprep.subr.bf16.mxu0 0
    %6390 = vmatpush2.bf16.msra.mxu0 0
    %6391 = vmatprep.mubr.bf16.mxu0 0
    %6392 = vmatmul.mubr.bf16.gmra.mxu0 %v6348
    %v6393 = vpop.f32.mrf.mxu0
    %v6394 = vadd.f32 0.0, %v6393
    %v6395 = vpop.f32.mrf.mxu0
    %v6396 = vadd.f32 0.0, %v6395
    %v6397 = vpop.f32.mrf.mxu0
    %v6398 = vadd.f32 0.0, %v6397
    %v6399 = vpop.f32.mrf.mxu0
    %v6400 = vadd.f32 0.0, %v6399
    %6401 = vmatprep.mubr.bf16.mxu0 0
    %6402 = vmatmul.mubr.bf16.gmra.mxu0 %v6351
    %v6403 = vpop.f32.mrf.mxu0
    %v6404 = vadd.f32 0.0, %v6403
    %v6405 = vpop.f32.mrf.mxu0
    %v6406 = vadd.f32 0.0, %v6405
    %v6407 = vpop.f32.mrf.mxu0
    %v6408 = vadd.f32 0.0, %v6407
    %v6409 = vpop.f32.mrf.mxu0
    %v6410 = vadd.f32 0.0, %v6409
    %6411 = vmatprep.mubr.bf16.mxu0 0
    %6412 = vmatmul.mubr.bf16.gmra.mxu0 %v6354
    %v6413 = vpop.f32.mrf.mxu0
    %v6414 = vadd.f32 0.0, %v6413
    %v6415 = vpop.f32.mrf.mxu0
    %v6416 = vadd.f32 0.0, %v6415
    %v6417 = vpop.f32.mrf.mxu0
    %v6418 = vadd.f32 0.0, %v6417
    %v6419 = vpop.f32.mrf.mxu0
    %v6420 = vadd.f32 0.0, %v6419
    %6421 = vmatprep.mubr.bf16.mxu0 0
    %6422 = vmatmul.mubr.bf16.gmra.mxu0 %v6357
    %v6423 = vpop.f32.mrf.mxu0
    %v6424 = vadd.f32 0.0, %v6423
    %v6425 = vpop.f32.mrf.mxu0
    %v6426 = vadd.f32 0.0, %v6425
    %v6427 = vpop.f32.mrf.mxu0
    %v6428 = vadd.f32 0.0, %v6427
    %v6429 = vpop.f32.mrf.mxu0
    %v6430 = vadd.f32 0.0, %v6429
    %6431 = vdwg.mxu0
    %v6432 = vadd.f32 %v6319, %v6394
    %v6433 = vadd.f32 %v6320, %v6396
    %v6434 = vadd.f32 %v6321, %v6398
    %v6435 = vadd.f32 %v6322, %v6400
    %v6436 = vadd.f32 %v6323, %v6404
    %v6437 = vadd.f32 %v6324, %v6406
    %v6438 = vadd.f32 %v6325, %v6408
    %v6439 = vadd.f32 %v6326, %v6410
    %v6440 = vadd.f32 %v6327, %v6414
    %v6441 = vadd.f32 %v6328, %v6416
    %v6442 = vadd.f32 %v6329, %v6418
    %v6443 = vadd.f32 %v6330, %v6420
    %v6444 = vadd.f32 %v6331, %v6424
    %v6445 = vadd.f32 %v6332, %v6426
    %v6446 = vadd.f32 %v6333, %v6428
    %v6447 = vadd.f32 %v6334, %v6430
    %v6448 = vld [vmem:[%s1944 + $0x2] sm:$0xff]
    %v6449 = vld [vmem:[%s1944 + $0x12] sm:$0xff]
    %v6450 = vld [vmem:[%s1944 + $0x22] sm:$0xff]
    %v6451 = vld [vmem:[%s1944 + $0x32] sm:$0xff]
    %v6452 = vld [vmem:[%s1944 + $0x42] sm:$0xff]
    %v6453 = vld [vmem:[%s1944 + $0x52] sm:$0xff]
    %v6454 = vld [vmem:[%s1944 + $0x62] sm:$0xff]
    %v6455 = vld [vmem:[%s1944 + $0x72] sm:$0xff]
    %v6456 = vpack.c.bf16 %v6449, %v6448
    %v6457 = vpack.c.bf16 %v6451, %v6450
    %v6458 = vpack.c.bf16 %v6453, %v6452
    %v6459 = vpack.c.bf16 %v6455, %v6454
    %v6461 = vsel %vm2103, %v6456, 0
    %v6464 = vsel %vm2103, %v6457, 0
    %v6467 = vsel %vm2103, %v6458, 0
    %v6470 = vsel %vm2103, %v6459, 0
    %6472 = vmatprep.subr.bf16.mxu0 0
    %6473 = vmatpush1.bf16.msra.mxu0 0
    %6474 = vmatprep.subr.bf16.mxu0 0
    %6475 = vmatpush1.bf16.msra.mxu0 0
    %6476 = vmatprep.subr.bf16.mxu0 0
    %6477 = vmatpush1.bf16.msra.mxu0 0
    %6478 = vmatprep.subr.bf16.mxu0 %v5856
    %6479 = vmatpush1.bf16.msra.mxu0 %v5855
    %6480 = vmatprep.subr.bf16.mxu0 %v5854
    %6481 = vmatpush1.bf16.msra.mxu0 %v5853
    %6482 = vmatprep.subr.bf16.mxu0 %v5852
    %6483 = vmatpush1.bf16.msra.mxu0 %v5851
    %6484 = vmatprep.subr.bf16.mxu0 %v5850
    %6485 = vmatpush1.bf16.msra.mxu0 %v5849
    %6486 = vmatprep.subr.bf16.mxu0 %v5848
    %6487 = vmatpush1.bf16.msra.mxu0 %v5847
    %6488 = vmatprep.subr.bf16.mxu0 0
    %6489 = vmatpush2.bf16.msra.mxu0 0
    %6490 = vmatprep.subr.bf16.mxu0 0
    %6491 = vmatpush2.bf16.msra.mxu0 0
    %6492 = vmatprep.subr.bf16.mxu0 0
    %6493 = vmatpush2.bf16.msra.mxu0 0
    %6494 = vmatprep.subr.bf16.mxu0 0
    %6495 = vmatpush2.bf16.msra.mxu0 0
    %6496 = vmatprep.subr.bf16.mxu0 0
    %6497 = vmatpush2.bf16.msra.mxu0 0
    %6498 = vmatprep.subr.bf16.mxu0 0
    %6499 = vmatpush2.bf16.msra.mxu0 0
    %6500 = vmatprep.subr.bf16.mxu0 0
    %6501 = vmatpush2.bf16.msra.mxu0 0
    %6502 = vmatprep.subr.bf16.mxu0 0
    %6503 = vmatpush2.bf16.msra.mxu0 0
    %6504 = vmatprep.mubr.bf16.mxu0 0
    %6505 = vmatmul.mubr.bf16.gmra.mxu0 %v6461
    %v6506 = vpop.f32.mrf.mxu0
    %v6507 = vadd.f32 0.0, %v6506
    %v6508 = vpop.f32.mrf.mxu0
    %v6509 = vadd.f32 0.0, %v6508
    %v6510 = vpop.f32.mrf.mxu0
    %v6511 = vadd.f32 0.0, %v6510
    %v6512 = vpop.f32.mrf.mxu0
    %v6513 = vadd.f32 0.0, %v6512
    %6514 = vmatprep.mubr.bf16.mxu0 0
    %6515 = vmatmul.mubr.bf16.gmra.mxu0 %v6464
    %v6516 = vpop.f32.mrf.mxu0
    %v6517 = vadd.f32 0.0, %v6516
    %v6518 = vpop.f32.mrf.mxu0
    %v6519 = vadd.f32 0.0, %v6518
    %v6520 = vpop.f32.mrf.mxu0
    %v6521 = vadd.f32 0.0, %v6520
    %v6522 = vpop.f32.mrf.mxu0
    %v6523 = vadd.f32 0.0, %v6522
    %6524 = vmatprep.mubr.bf16.mxu0 0
    %6525 = vmatmul.mubr.bf16.gmra.mxu0 %v6467
    %v6526 = vpop.f32.mrf.mxu0
    %v6527 = vadd.f32 0.0, %v6526
    %v6528 = vpop.f32.mrf.mxu0
    %v6529 = vadd.f32 0.0, %v6528
    %v6530 = vpop.f32.mrf.mxu0
    %v6531 = vadd.f32 0.0, %v6530
    %v6532 = vpop.f32.mrf.mxu0
    %v6533 = vadd.f32 0.0, %v6532
    %6534 = vmatprep.mubr.bf16.mxu0 0
    %6535 = vmatmul.mubr.bf16.gmra.mxu0 %v6470
    %v6536 = vpop.f32.mrf.mxu0
    %v6537 = vadd.f32 0.0, %v6536
    %v6538 = vpop.f32.mrf.mxu0
    %v6539 = vadd.f32 0.0, %v6538
    %v6540 = vpop.f32.mrf.mxu0
    %v6541 = vadd.f32 0.0, %v6540
    %v6542 = vpop.f32.mrf.mxu0
    %v6543 = vadd.f32 0.0, %v6542
    %6544 = vdwg.mxu0
    %v6545 = vadd.f32 %v6432, %v6507
    %v6546 = vadd.f32 %v6433, %v6509
    %v6547 = vadd.f32 %v6434, %v6511
    %v6548 = vadd.f32 %v6435, %v6513
    %v6549 = vadd.f32 %v6436, %v6517
    %v6550 = vadd.f32 %v6437, %v6519
    %v6551 = vadd.f32 %v6438, %v6521
    %v6552 = vadd.f32 %v6439, %v6523
    %v6553 = vadd.f32 %v6440, %v6527
    %v6554 = vadd.f32 %v6441, %v6529
    %v6555 = vadd.f32 %v6442, %v6531
    %v6556 = vadd.f32 %v6443, %v6533
    %v6557 = vadd.f32 %v6444, %v6537
    %v6558 = vadd.f32 %v6445, %v6539
    %v6559 = vadd.f32 %v6446, %v6541
    %v6560 = vadd.f32 %v6447, %v6543
    %v6561 = vadd.f32 %v6545, %v5972
    %v6562 = vadd.f32 %v6546, %v5976
    %v6563 = vadd.f32 %v6547, %v5972
    %v6564 = vadd.f32 %v6548, %v5976
    %v6565 = vadd.f32 %v6549, %v5972
    %v6566 = vadd.f32 %v6550, %v5976
    %v6567 = vadd.f32 %v6551, %v5972
    %v6568 = vadd.f32 %v6552, %v5976
    %v6569 = vadd.f32 %v6553, %v5972
    %v6570 = vadd.f32 %v6554, %v5976
    %v6571 = vadd.f32 %v6555, %v5972
    %v6572 = vadd.f32 %v6556, %v5976
    %v6573 = vadd.f32 %v6557, %v5972
    %v6574 = vadd.f32 %v6558, %v5976
    %v6575 = vadd.f32 %v6559, %v5972
    %v6576 = vadd.f32 %v6560, %v5976
    %v6577 = vmax.f32 %v6561, 0.0
    %v6578 = vmax.f32 %v6562, 0.0
    %v6579 = vmax.f32 %v6563, 0.0
    %v6580 = vmax.f32 %v6564, 0.0
    %v6581 = vmax.f32 %v6565, 0.0
    %v6582 = vmax.f32 %v6566, 0.0
    %v6583 = vmax.f32 %v6567, 0.0
    %v6584 = vmax.f32 %v6568, 0.0
    %v6585 = vmax.f32 %v6569, 0.0
    %v6586 = vmax.f32 %v6570, 0.0
    %v6587 = vmax.f32 %v6571, 0.0
    %v6588 = vmax.f32 %v6572, 0.0
    %v6589 = vmax.f32 %v6573, 0.0
    %v6590 = vmax.f32 %v6574, 0.0
    %v6591 = vmax.f32 %v6575, 0.0
    %v6592 = vmax.f32 %v6576, 0.0
    %v6593 = vmax.f32 %v5995, %v5996
    %v6594 = vmax.f32 %v5997, %v5998
    %v6595 = vmax.f32 %v5999, %v6000
    %v6596 = vmax.f32 %v6001, %v6002
    %v6597 = vmax.f32 %v6003, %v6004
    %v6598 = vmax.f32 %v6005, %v6006
    %v6599 = vmax.f32 %v6007, %v6008
    %v6600 = vmax.f32 %v6009, %v6010
    %v6601 = vmax.f32 %v6577, %v6578
    %v6602 = vmax.f32 %v6579, %v6580
    %v6603 = vmax.f32 %v6581, %v6582
    %v6604 = vmax.f32 %v6583, %v6584
    %v6605 = vmax.f32 %v6585, %v6586
    %v6606 = vmax.f32 %v6587, %v6588
    %v6607 = vmax.f32 %v6589, %v6590
    %v6608 = vmax.f32 %v6591, %v6592
    %v6609 = vmax.f32 %v6593, %v6601
    %v6610 = vmax.f32 %v6594, %v6602
    %v6611 = vmax.f32 %v6595, %v6603
    %v6612 = vmax.f32 %v6596, %v6604
    %v6613 = vmax.f32 %v6597, %v6605
    %v6614 = vmax.f32 %v6598, %v6606
    %v6615 = vmax.f32 %v6599, %v6607
    %v6616 = vmax.f32 %v6600, %v6608
    %v6617 = vadd.f32 %v6609, %v1871
    %v6618 = vadd.f32 %v6610, %v1872
    %v6619 = vadd.f32 %v6611, %v1873
    %v6620 = vadd.f32 %v6612, %v1874
    %v6621 = vadd.f32 %v6613, %v1875
    %v6622 = vadd.f32 %v6614, %v1876
    %v6623 = vadd.f32 %v6615, %v1877
    %v6624 = vadd.f32 %v6616, %v1878
    %v6625 = vld [vmem:[%s11] sm:$0x1]
    %v6627 = vlaneseq
    %v6628 = vshrl.u32 %v6627, 7
    %v6629 = vsub.s32 0, %v6628
    %v6630 = vrot.slane %v6625, %v6629
    %v6632 = vmul.f32 %v6617, %v6630
    %v6633 = vmul.f32 %v6618, %v6630
    %v6634 = vmul.f32 %v6619, %v6630
    %v6635 = vmul.f32 %v6620, %v6630
    %v6636 = vmul.f32 %v6621, %v6630
    %v6637 = vmul.f32 %v6622, %v6630
    %v6638 = vmul.f32 %v6623, %v6630
    %v6639 = vmul.f32 %v6624, %v6630
    %v6640 = vld [vmem:[%s12] sm:$0x1]
    %v6642 = vlaneseq
    %v6643 = vshrl.u32 %v6642, 7
    %v6644 = vsub.s32 0, %v6643
    %v6645 = vrot.slane %v6640, %v6644
    %v6647 = vadd.f32 %v6632, %v6645
    %v6648 = vadd.f32 %v6633, %v6645
    %v6649 = vadd.f32 %v6634, %v6645
    %v6650 = vadd.f32 %v6635, %v6645
    %v6651 = vadd.f32 %v6636, %v6645
    %v6652 = vadd.f32 %v6637, %v6645
    %v6653 = vadd.f32 %v6638, %v6645
    %v6654 = vadd.f32 %v6639, %v6645
    %6655 = vst [vmem:[#allocation6] sm:$0xff] %v6647
    %6656 = vst [vmem:[#allocation6 + $0x8] sm:$0xff] %v6648
    %6657 = vst [vmem:[#allocation6 + $0x10] sm:$0xff] %v6649
    %6658 = vst [vmem:[#allocation6 + $0x18] sm:$0xff] %v6650
    %6659 = vst [vmem:[#allocation6 + $0x20] sm:$0xff] %v6651
    %6660 = vst [vmem:[#allocation6 + $0x28] sm:$0xff] %v6652
    %6661 = vst [vmem:[#allocation6 + $0x30] sm:$0xff] %v6653
    %6662 = vst [vmem:[#allocation6 + $0x38] sm:$0xff] %v6654
    // Predicated region
    $region58: #{tpu_custom_call.1} parent=1 // pred_check
      _
    $region59: #{tpu_custom_call.1} parent=1 // pred_check_branch
      %6664 = sbr.rel (0) target = $region61
    $region60: #{tpu_custom_call.1} parent=1 // pred_region
      %s6666 = ssub.s32 1024, 1024
      %6667 = vsyncadd [#allocation5], %s6666
      %s6668 = sshll.u32 [#allocation6], 4
      %s6669 = int_to_ptr.vmem [resolvable:$true] %s6668
      %6674 = dma.vmem_to_hbm [thread:$0]  %s6669, 1024, %s13, [#allocation5], 128, 128, 8
    $region61: #{tpu_custom_call.1} parent=1 // pred_fallthru
      _
    // Predicated region
    $region62: #{tpu_custom_call.1} parent=1 // pred_check
      _
    $region63: #{tpu_custom_call.1} parent=1 // pred_check_branch
      %6676 = sbr.rel (0) target = $region65
    $region64: #{tpu_custom_call.1} parent=1 // pred_region
      %6677 = dma.done [#allocation5], 1024
    $region65: #{tpu_custom_call.1} parent=1 // pred_fallthru
      _
    %6678 = vsyncpa [#allocation4], 1
    %6679 = vsyncpa [#allocation5], 1

</llo_original>
